<compile_context>
chip_gen: v5e
topology: v5e:2x2
jax: 0.10.0
libtpu: 0.0.40
codegen_flags: <defaults>
</compile_context>

<pallas_src>
import jax
import jax.numpy as jnp
from jax import lax
from jax.experimental import pallas as pl
from jax.experimental.pallas import tpu as pltpu

_SELU_ALPHA = 1.6732632423543772
_SELU_SCALE = 1.0507009873554805
_LEAKY_SLOPE = 0.2          # DGL GATConv default negative_slope
_MASK_VAL = -1e30           # additive mask for non-edges
_MASK_FLOOR = -0.5e30       # clamp for row max -> zero-in-degree rows give 0
_NT_DIMS = (((1,), (1,)), ((), ()))   # A @ B^T contraction (flash-attn style)


def _selu(x):
    return _SELU_SCALE * jnp.where(x > 0, x, _SELU_ALPHA * (jnp.exp(x) - 1.0))


# ---------------------------------------------------------------------------
# Per-layer kernel: GATConv over one dst-row tile for all prefix channels.
# The last layer also fuses mean-over-channels + classifier Linear + Softmax.
# ---------------------------------------------------------------------------
def _make_layer_kernel(c_in, f_in, num_head, f_out, tile_m, is_last):
    H, F = num_head, f_out
    HF = H * F

    def kernel(*refs):
        if is_last:
            (h_ref, adj_ref, w_ref, alw_ref, arw_ref, b_ref,
             wc_ref, bc_ref, o_ref) = refs
        else:
            h_ref, adj_ref, w_ref, alw_ref, arw_ref, b_ref, o_ref = refs

        row0 = pl.multiple_of(pl.program_id(0) * tile_m, tile_m)
        adj_add = adj_ref[...].astype(jnp.float32)   # (tile_m, N) additive mask
        w = w_ref[...]                               # (f_in, HF)  bf16, packed fc
        alw = alw_ref[...]                           # (H, f_in)   bf16, attn_l folded
        arw = arw_ref[...]                           # (H, f_in)   bf16, attn_r folded
        bias = b_ref[...]                            # (1, HF)     f32

        out_parts = []
        hsum = None
        # TODO(synk): switch to lax.fori_loop over a stacked channel buffer if
        #             c_in (= num_head ** layer_index) ever grows large.
        for c in range(c_in):
            col = c * f_in
            h_src = h_ref[:, col:col + f_in].astype(jnp.bfloat16)           # (N, f_in)
            h_dst = h_ref[pl.ds(row0, tile_m),
                          col:col + f_in].astype(jnp.bfloat16)              # (tile_m, f_in)

            # all heads in one lane-dense matmul (bf16 MXU, f32 accumulate)
            feat_src = jnp.dot(h_src, w,
                               preferred_element_type=jnp.float32)          # (N, HF)
            # attention terms, already head-major (no in-kernel transpose)
            el = lax.dot_general(alw, h_src, _NT_DIMS,
                                 preferred_element_type=jnp.float32)        # (H, N)
            er = lax.dot_general(arw, h_dst, _NT_DIMS,
                                 preferred_element_type=jnp.float32)        # (H, tile_m)

            # head-batched attention softmax on one (H, tile_m, N) slab
            e = er[:, :, None] + el[:, None, :]
            e = jnp.maximum(e, _LEAKY_SLOPE * e)                            # leaky relu
            e = e + adj_add[None, :, :]
            m = jnp.maximum(jnp.max(e, axis=-1, keepdims=True),
                            jnp.float32(_MASK_FLOOR))                       # zero-in-deg safe
            p = jnp.exp(e - m)
            denom = jnp.sum(p, axis=-1, keepdims=True)
            inv = pl.reciprocal(jnp.maximum(denom, jnp.float32(1e-20)),
                                approx=True)                                # (H, tile_m, 1)

            p_b = p.astype(jnp.bfloat16)
            f_b = feat_src.astype(jnp.bfloat16)
            heads = []
            for hh in range(H):
                agg = jnp.dot(p_b[hh], f_b[:, hh * F:(hh + 1) * F],
                              preferred_element_type=jnp.float32)           # (tile_m, F)
                heads.append(agg * inv[hh])          # normalize AFTER the matmul
            # bias + SELU once on the lane-dense (tile_m, H*F) slab
            out_c = _selu(jnp.concatenate(heads, axis=-1) + bias)

            if is_last:
                for hh in range(H):                  # accumulate head/prefix mean
                    s = out_c[:, hh * F:(hh + 1) * F]
                    hsum = s if hsum is None else hsum + s
            else:
                out_parts.append(out_c)

        if is_last:
            hmean = hsum * jnp.float32(1.0 / (c_in * H))                     # (tile_m, F)
            logits = jnp.dot(hmean, wc_ref[...],
                             preferred_element_type=jnp.float32) + bc_ref[...]
            mm = jnp.max(logits, axis=-1, keepdims=True)
            pp = jnp.exp(logits - mm)
            # exact divide so output rows sum to 1 within tight tolerance;
            # padded classes got a -1e30 bias and contribute exactly 0.
            o_ref[...] = (pp / jnp.sum(pp, axis=-1, keepdims=True)).astype(o_ref.dtype)
        else:
            o_ref[...] = jnp.concatenate(out_parts, axis=-1).astype(o_ref.dtype)

    return kernel


# ---------------------------------------------------------------------------
# Host-side parameter packing (exact algebra, done once per forward)
# ---------------------------------------------------------------------------
def _pack_layer(layer):
    W = layer["W"]            # (H, F_in, F_out)
    al = layer["attn_l"]      # (H, F_out)
    ar = layer["attn_r"]      # (H, F_out)
    b = layer["bias"]         # (H, F_out)
    H, F_in, F_out = W.shape
    W_packed = jnp.transpose(W, (1, 0, 2)).reshape(F_in, H * F_out)   # (F_in, H*F)
    ALW = jnp.einsum("hf,hkf->hk", al, W)                             # (H, F_in)
    ARW = jnp.einsum("hf,hkf->hk", ar, W)                             # (H, F_in)
    return (W_packed.astype(jnp.bfloat16), ALW.astype(jnp.bfloat16),
            ARW.astype(jnp.bfloat16),
            b.reshape(1, H * F_out).astype(jnp.float32))


def _pick_tile_m(n, target=128):
    # 128 suits v5e's 128-wide MXU / 1 vst slot; bump target to 256 on v6e/v7x.
    if n <= target:
        return n
    for t in (target, 64, 32, 16, 8):
        if n % t == 0:
            return t
    return n


def gat_forward(x, adj, params, *, tile_m_target=128):
    """x: (N, in_feats) node features; adj: (N, N) 0/1 adjacency (adj[dst, src]);
    params: dict from init_params.  Returns (N, n_classes) softmax probs."""
    N = x.shape[0]
    layers = params["layers"]
    n_layers = len(layers)
    H = layers[0]["W"].shape[0]
    Wc, bc = params["Wc"], params["bc"]            # (n_hidden, C), (1, C)
    F_last = layers[-1]["W"].shape[2]
    C = Wc.shape[1]
    CPAD = max(128, pl.cdiv(C, 128) * 128)

    tile_m = _pick_tile_m(N, tile_m_target)
    grid = (N // tile_m,)

    # additive mask (0 where edge, -1e30 where not); bf16 halves HBM/VMEM for
    # the largest buffer, the in-kernel add upcasts to f32.
    adj_add = jnp.where(adj > 0, 0.0, _MASK_VAL).astype(jnp.bfloat16)

    # classifier padded to a lane-dense 128-wide output; padded logits get a
    # -1e30 bias so they contribute exactly 0 to the softmax.
    Wc_pad = jnp.zeros((F_last, CPAD), jnp.float32).at[:, :C].set(Wc)
    bc_pad = jnp.full((1, CPAD), _MASK_VAL, jnp.float32).at[:, :C].set(bc)

    cparams = pltpu.CompilerParams(dimension_semantics=("parallel",),
                                   vmem_limit_bytes=32 * 1024 * 1024)

    h = x.astype(jnp.float32)
    c_in = 1                                        # prefix channels = H ** layer
    for li, layer in enumerate(layers):
        W_packed, ALW, ARW, bias = _pack_layer(layer)
        _, f_in, f_out = layer["W"].shape
        is_last = li == n_layers - 1

        ins = [h, adj_add, W_packed, ALW, ARW, bias]
        in_specs = [
            pl.BlockSpec((N, c_in * f_in), lambda i: (0, 0)),   # src feats resident
            pl.BlockSpec((tile_m, N), lambda i: (i, 0)),        # streamed dst-row mask
            pl.BlockSpec(W_packed.shape, lambda i: (0, 0)),
            pl.BlockSpec(ALW.shape, lambda i: (0, 0)),
            pl.BlockSpec(ARW.shape, lambda i: (0, 0)),
            pl.BlockSpec(bias.shape, lambda i: (0, 0)),
        ]
        if is_last:
            ins += [Wc_pad, bc_pad]
            in_specs += [pl.BlockSpec(Wc_pad.shape, lambda i: (0, 0)),
                         pl.BlockSpec(bc_pad.shape, lambda i: (0, 0))]
            out_w = CPAD
        else:
            out_w = c_in * H * f_out

        h = pl.pallas_call(
            _make_layer_kernel(c_in, f_in, H, f_out, tile_m, is_last),
            out_shape=jax.ShapeDtypeStruct((N, out_w), jnp.float32),
            grid=grid,
            in_specs=in_specs,
            out_specs=pl.BlockSpec((tile_m, out_w), lambda i: (i, 0)),
            compiler_params=cparams,
        )(*ins)
        c_in *= H

    return h[:, :C]


# ---------------------------------------------------------------------------
# Parameter init (torch-like shapes; fc weight stored as (H, F_in, F_out))
# ---------------------------------------------------------------------------
def init_params(key, in_feats, n_hidden, n_classes, n_layers, num_head):
    params = {"layers": []}
    f_in = in_feats
    for _ in range(n_layers):
        key, k1, k2, k3, k4 = jax.random.split(key, 5)
        params["layers"].append(dict(
            W=jax.random.normal(k1, (num_head, f_in, n_hidden), jnp.float32)
              * (1.0 / jnp.sqrt(f_in)),
            attn_l=jax.random.normal(k2, (num_head, n_hidden), jnp.float32) * 0.1,
            attn_r=jax.random.normal(k3, (num_head, n_hidden), jnp.float32) * 0.1,
            bias=jax.random.normal(k4, (num_head, n_hidden), jnp.float32) * 0.01,
        ))
        f_in = n_hidden
    key, k1, k2 = jax.random.split(key, 3)
    # torch Linear weight is (n_classes, n_hidden); we store its transpose.
    params["Wc"] = jax.random.normal(k1, (n_hidden, n_classes), jnp.float32) * 0.1
    params["bc"] = jax.random.normal(k2, (1, n_classes), jnp.float32) * 0.01
    return params


if __name__ == "__main__":
    N, in_feats, n_hidden, n_classes = 256, 32, 32, 4
    n_layers, num_head = 2, 2

    key = jax.random.PRNGKey(0)
    kx, ka, kp = jax.random.split(key, 3)
    x = jax.random.normal(kx, (N, in_feats), jnp.float32)
    # dense adjacency mask (dst, src); self-loops guarantee in-degree >= 1
    adj = (jax.random.uniform(ka, (N, N)) < 0.05).astype(jnp.float32)
    adj = jnp.maximum(adj, jnp.eye(N, dtype=jnp.float32))

    params = init_params(kp, in_feats, n_hidden, n_classes, n_layers, num_head)

    fwd = jax.jit(gat_forward)
    out = jax.block_until_ready(fwd(x, adj, params))
    assert out.shape == (N, n_classes)
    assert bool(jnp.all(jnp.isfinite(out)))
    # rows of a softmax should sum to ~1 (padded classes contribute exactly 0)
    assert bool(jnp.allclose(jnp.sum(out, axis=1), 1.0, atol=1e-5))
    print("KERNEL_OK")
</pallas_src>

<mosaic_0001>
module attributes {stable_mosaic.version = 11 : i64} {
  func.func @kernel(%arg0: i32, %arg1: memref<256x32xf32, #tpu.memory_space<vmem>>, %arg2: memref<128x256xbf16, #tpu.memory_space<vmem>>, %arg3: memref<32x64xbf16, #tpu.memory_space<vmem>>, %arg4: memref<2x32xbf16, #tpu.memory_space<vmem>>, %arg5: memref<2x32xbf16, #tpu.memory_space<vmem>>, %arg6: memref<1x64xf32, #tpu.memory_space<vmem>>, %arg7: memref<128x64xf32, #tpu.memory_space<vmem>>) attributes {dimension_semantics = [#tpu.dimension_semantics<parallel>], iteration_bounds = array<i64: 2>, scalar_prefetch = 0 : i64, scratch_operands = 0 : i64, tpu.core_type = #tpu.core_type<tc>, window_params = [{pipeline_mode = #tpu.pipeline_mode<synchronous>, transform_indices = @transform_0, window_bounds = array<i64: 256, 32>}, {transform_indices = @transform_1, window_bounds = array<i64: 128, 256>}, {pipeline_mode = #tpu.pipeline_mode<synchronous>, transform_indices = @transform_2, window_bounds = array<i64: 32, 64>}, {pipeline_mode = #tpu.pipeline_mode<synchronous>, transform_indices = @transform_3, window_bounds = array<i64: 2, 32>}, {pipeline_mode = #tpu.pipeline_mode<synchronous>, transform_indices = @transform_4, window_bounds = array<i64: 2, 32>}, {pipeline_mode = #tpu.pipeline_mode<synchronous>, transform_indices = @transform_5, window_bounds = array<i64: 1, 64>}, {transform_indices = @transform_6, window_bounds = array<i64: 128, 64>}]} {
    %c128_i32 = arith.constant 128 : i32
    %0 = arith.muli %arg0, %c128_i32 : i32
    %1 = tpu.assume_multiple %0, 128 : i32
    %c0 = arith.constant 0 : index
    %c0_0 = arith.constant 0 : index
    %2 = vector.load %arg2[%c0, %c0_0] : memref<128x256xbf16, #tpu.memory_space<vmem>>, vector<128x256xbf16>
    %3 = arith.extf %2 : vector<128x256xbf16> to vector<128x256xf32>
    %c0_1 = arith.constant 0 : index
    %c0_2 = arith.constant 0 : index
    %4 = vector.load %arg3[%c0_1, %c0_2] : memref<32x64xbf16, #tpu.memory_space<vmem>>, vector<32x64xbf16>
    %c0_3 = arith.constant 0 : index
    %c0_4 = arith.constant 0 : index
    %5 = vector.load %arg4[%c0_3, %c0_4] : memref<2x32xbf16, #tpu.memory_space<vmem>>, vector<2x32xbf16>
    %c0_5 = arith.constant 0 : index
    %c0_6 = arith.constant 0 : index
    %6 = vector.load %arg5[%c0_5, %c0_6] : memref<2x32xbf16, #tpu.memory_space<vmem>>, vector<2x32xbf16>
    %c0_7 = arith.constant 0 : index
    %c0_8 = arith.constant 0 : index
    %7 = vector.load %arg6[%c0_7, %c0_8] : memref<1x64xf32, #tpu.memory_space<vmem>>, vector<1x64xf32>
    %c0_9 = arith.constant 0 : index
    %c0_10 = arith.constant 0 : index
    %8 = vector.load %arg1[%c0_9, %c0_10] : memref<256x32xf32, #tpu.memory_space<vmem>>, vector<256x32xf32>
    %9 = arith.truncf %8 : vector<256x32xf32> to vector<256x32xbf16>
    %10 = arith.index_cast %1 : i32 to index
    %c0_11 = arith.constant 0 : index
    %11 = vector.load %arg1[%10, %c0_11] : memref<256x32xf32, #tpu.memory_space<vmem>>, vector<128x32xf32>
    %12 = arith.truncf %11 : vector<128x32xf32> to vector<128x32xbf16>
    %cst = arith.constant dense<0.000000e+00> : vector<256x64xf32>
    %13 = tpu.matmul %9, %4, %cst {dimension_numbers = #tpu.dot_dimension_numbers<[1], [0], [0], [1], [0, 0, 1, 1], [], []>} : vector<256x32xbf16>, vector<32x64xbf16>, vector<256x64xf32> -> vector<256x64xf32>
    %cst_12 = arith.constant dense<0.000000e+00> : vector<2x256xf32>
    %14 = tpu.matmul %5, %9, %cst_12 {dimension_numbers = #tpu.dot_dimension_numbers<[1], [1], [0], [0], [0, 0, 1, 0], [], []>} : vector<2x32xbf16>, vector<256x32xbf16>, vector<2x256xf32> -> vector<2x256xf32>
    %cst_13 = arith.constant dense<0.000000e+00> : vector<2x128xf32>
    %15 = tpu.matmul %6, %12, %cst_13 {dimension_numbers = #tpu.dot_dimension_numbers<[1], [1], [0], [0], [0, 0, 1, 0], [], []>} : vector<2x32xbf16>, vector<128x32xbf16>, vector<2x128xf32> -> vector<2x128xf32>
    %16 = vector.shape_cast %15 : vector<2x128xf32> to vector<2x128x1xf32>
    %17 = vector.shape_cast %14 : vector<2x256xf32> to vector<2x1x256xf32>
    %18 = vector.broadcast %16 : vector<2x128x1xf32> to vector<2x128x256xf32>
    %19 = vector.broadcast %17 : vector<2x1x256xf32> to vector<2x128x256xf32>
    %20 = arith.addf %18, %19 : vector<2x128x256xf32>
    %cst_14 = arith.constant 2.000000e-01 : f32
    %21 = vector.broadcast %cst_14 : f32 to vector<2x128x256xf32>
    %22 = arith.mulf %21, %20 : vector<2x128x256xf32>
    %23 = arith.maximumf %20, %22 : vector<2x128x256xf32>
    %24 = vector.shape_cast %3 : vector<128x256xf32> to vector<1x128x256xf32>
    %25 = vector.broadcast %24 : vector<1x128x256xf32> to vector<2x128x256xf32>
    %26 = arith.addf %23, %25 : vector<2x128x256xf32>
    %cst_15 = arith.constant dense<0xFF800000> : vector<2x128xf32>
    %27 = vector.multi_reduction <maximumf>, %26, %cst_15 [2] : vector<2x128x256xf32> to vector<2x128xf32>
    %28 = vector.shape_cast %27 : vector<2x128xf32> to vector<2x128x1xf32>
    %cst_16 = arith.constant -5.000000e+29 : f32
    %29 = vector.broadcast %cst_16 : f32 to vector<2x128x1xf32>
    %30 = arith.maximumf %28, %29 : vector<2x128x1xf32>
    %31 = vector.broadcast %30 : vector<2x128x1xf32> to vector<2x128x256xf32>
    %32 = arith.subf %26, %31 : vector<2x128x256xf32>
    %33 = math.exp %32 : vector<2x128x256xf32>
    %cst_17 = arith.constant dense<0.000000e+00> : vector<2x128xf32>
    %34 = vector.multi_reduction <add>, %33, %cst_17 [2] : vector<2x128x256xf32> to vector<2x128xf32>
    %35 = vector.shape_cast %34 : vector<2x128xf32> to vector<2x128x1xf32>
    %cst_18 = arith.constant 9.99999968E-21 : f32
    %36 = vector.broadcast %cst_18 : f32 to vector<2x128x1xf32>
    %37 = arith.maximumf %35, %36 : vector<2x128x1xf32>
    %38 = tpu.reciprocal %37 {approx = true} : vector<2x128x1xf32> -> vector<2x128x1xf32>
    %39 = arith.truncf %33 : vector<2x128x256xf32> to vector<2x128x256xbf16>
    %40 = arith.truncf %13 : vector<256x64xf32> to vector<256x64xbf16>
    %41 = vector.extract_strided_slice %39 {offsets = [0, 0, 0], sizes = [1, 128, 256], strides = [1, 1, 1]} : vector<2x128x256xbf16> to vector<1x128x256xbf16>
    %42 = vector.shape_cast %41 : vector<1x128x256xbf16> to vector<128x256xbf16>
    %43 = vector.extract_strided_slice %40 {offsets = [0, 0], sizes = [256, 32], strides = [1, 1]} : vector<256x64xbf16> to vector<256x32xbf16>
    %cst_19 = arith.constant dense<0.000000e+00> : vector<128x32xf32>
    %44 = tpu.matmul %42, %43, %cst_19 {dimension_numbers = #tpu.dot_dimension_numbers<[1], [0], [0], [1], [0, 0, 1, 1], [], []>} : vector<128x256xbf16>, vector<256x32xbf16>, vector<128x32xf32> -> vector<128x32xf32>
    %45 = vector.extract_strided_slice %38 {offsets = [0, 0, 0], sizes = [1, 128, 1], strides = [1, 1, 1]} : vector<2x128x1xf32> to vector<1x128x1xf32>
    %46 = vector.shape_cast %45 : vector<1x128x1xf32> to vector<128x1xf32>
    %47 = vector.broadcast %46 : vector<128x1xf32> to vector<128x32xf32>
    %48 = arith.mulf %44, %47 : vector<128x32xf32>
    %49 = vector.extract_strided_slice %39 {offsets = [1, 0, 0], sizes = [1, 128, 256], strides = [1, 1, 1]} : vector<2x128x256xbf16> to vector<1x128x256xbf16>
    %50 = vector.shape_cast %49 : vector<1x128x256xbf16> to vector<128x256xbf16>
    %51 = vector.extract_strided_slice %40 {offsets = [0, 32], sizes = [256, 32], strides = [1, 1]} : vector<256x64xbf16> to vector<256x32xbf16>
    %cst_20 = arith.constant dense<0.000000e+00> : vector<128x32xf32>
    %52 = tpu.matmul %50, %51, %cst_20 {dimension_numbers = #tpu.dot_dimension_numbers<[1], [0], [0], [1], [0, 0, 1, 1], [], []>} : vector<128x256xbf16>, vector<256x32xbf16>, vector<128x32xf32> -> vector<128x32xf32>
    %53 = vector.extract_strided_slice %38 {offsets = [1, 0, 0], sizes = [1, 128, 1], strides = [1, 1, 1]} : vector<2x128x1xf32> to vector<1x128x1xf32>
    %54 = vector.shape_cast %53 : vector<1x128x1xf32> to vector<128x1xf32>
    %55 = vector.broadcast %54 : vector<128x1xf32> to vector<128x32xf32>
    %56 = arith.mulf %52, %55 : vector<128x32xf32>
    %57 = tpu.concatenate %48, %56 in 1 : vector<128x32xf32>, vector<128x32xf32> -> vector<128x64xf32>
    %58 = vector.broadcast %7 : vector<1x64xf32> to vector<128x64xf32>
    %59 = arith.addf %57, %58 : vector<128x64xf32>
    %cst_21 = arith.constant 0.000000e+00 : f32
    %60 = vector.broadcast %cst_21 : f32 to vector<128x64xf32>
    %61 = arith.cmpf ogt, %59, %60 : vector<128x64xf32>
    %62 = math.exp %59 : vector<128x64xf32>
    %cst_22 = arith.constant 1.000000e+00 : f32
    %63 = vector.broadcast %cst_22 : f32 to vector<128x64xf32>
    %64 = arith.subf %62, %63 : vector<128x64xf32>
    %cst_23 = arith.constant 1.67326319 : f32
    %65 = vector.broadcast %cst_23 : f32 to vector<128x64xf32>
    %66 = arith.mulf %65, %64 : vector<128x64xf32>
    %67 = arith.select %61, %59, %66 : vector<128x64xi1>, vector<128x64xf32>
    %cst_24 = arith.constant 1.05070102 : f32
    %68 = vector.broadcast %cst_24 : f32 to vector<128x64xf32>
    %69 = arith.mulf %68, %67 : vector<128x64xf32>
    %c0_25 = arith.constant 0 : index
    %c0_26 = arith.constant 0 : index
    %70 = vector.load %arg7[%c0_25, %c0_26] : memref<128x64xf32, #tpu.memory_space<vmem>>, vector<128x64xf32>
    tpu.vector_store %arg7[%c0_25, %c0_26], %69 {strides = array<i32>} : memref<128x64xf32, #tpu.memory_space<vmem>>, vector<128x64xf32>,
    return
  }
  func.func @transform_0(%arg0: i32) -> (i32, i32) {
    %c0_i32 = arith.constant 0 : i32
    %c0_i32_0 = arith.constant 0 : i32
    %c0_i32_1 = arith.constant 0 : i32
    return %c0_i32, %c0_i32_0 : i32, i32
  }
  func.func @transform_1(%arg0: i32) -> (i32, i32) {
    %c0_i32 = arith.constant 0 : i32
    %c0_i32_0 = arith.constant 0 : i32
    return %arg0, %c0_i32 : i32, i32
  }
  func.func @transform_2(%arg0: i32) -> (i32, i32) {
    %c0_i32 = arith.constant 0 : i32
    %c0_i32_0 = arith.constant 0 : i32
    %c0_i32_1 = arith.constant 0 : i32
    return %c0_i32, %c0_i32_0 : i32, i32
  }
  func.func @transform_3(%arg0: i32) -> (i32, i32) {
    %c0_i32 = arith.constant 0 : i32
    %c0_i32_0 = arith.constant 0 : i32
    %c0_i32_1 = arith.constant 0 : i32
    return %c0_i32, %c0_i32_0 : i32, i32
  }
  func.func @transform_4(%arg0: i32) -> (i32, i32) {
    %c0_i32 = arith.constant 0 : i32
    %c0_i32_0 = arith.constant 0 : i32
    %c0_i32_1 = arith.constant 0 : i32
    return %c0_i32, %c0_i32_0 : i32, i32
  }
  func.func @transform_5(%arg0: i32) -> (i32, i32) {
    %c0_i32 = arith.constant 0 : i32
    %c0_i32_0 = arith.constant 0 : i32
    %c0_i32_1 = arith.constant 0 : i32
    return %c0_i32, %c0_i32_0 : i32, i32
  }
  func.func @transform_6(%arg0: i32) -> (i32, i32) {
    %c0_i32 = arith.constant 0 : i32
    %c0_i32_0 = arith.constant 0 : i32
    return %arg0, %c0_i32 : i32, i32
  }
}

module attributes {stable_mosaic.version = 11 : i64} {
  func.func @kernel(%arg0: i32, %arg1: memref<256x64xf32, #tpu.memory_space<vmem>>, %arg2: memref<128x256xbf16, #tpu.memory_space<vmem>>, %arg3: memref<32x64xbf16, #tpu.memory_space<vmem>>, %arg4: memref<2x32xbf16, #tpu.memory_space<vmem>>, %arg5: memref<2x32xbf16, #tpu.memory_space<vmem>>, %arg6: memref<1x64xf32, #tpu.memory_space<vmem>>, %arg7: memref<32x128xf32, #tpu.memory_space<vmem>>, %arg8: memref<1x128xf32, #tpu.memory_space<vmem>>, %arg9: memref<128x128xf32, #tpu.memory_space<vmem>>) attributes {dimension_semantics = [#tpu.dimension_semantics<parallel>], iteration_bounds = array<i64: 2>, scalar_prefetch = 0 : i64, scratch_operands = 0 : i64, tpu.core_type = #tpu.core_type<tc>, window_params = [{pipeline_mode = #tpu.pipeline_mode<synchronous>, transform_indices = @transform_0, window_bounds = array<i64: 256, 64>}, {transform_indices = @transform_1, window_bounds = array<i64: 128, 256>}, {pipeline_mode = #tpu.pipeline_mode<synchronous>, transform_indices = @transform_2, window_bounds = array<i64: 32, 64>}, {pipeline_mode = #tpu.pipeline_mode<synchronous>, transform_indices = @transform_3, window_bounds = array<i64: 2, 32>}, {pipeline_mode = #tpu.pipeline_mode<synchronous>, transform_indices = @transform_4, window_bounds = array<i64: 2, 32>}, {pipeline_mode = #tpu.pipeline_mode<synchronous>, transform_indices = @transform_5, window_bounds = array<i64: 1, 64>}, {pipeline_mode = #tpu.pipeline_mode<synchronous>, transform_indices = @transform_6, window_bounds = array<i64: 32, 128>}, {pipeline_mode = #tpu.pipeline_mode<synchronous>, transform_indices = @transform_7, window_bounds = array<i64: 1, 128>}, {transform_indices = @transform_8, window_bounds = array<i64: 128, 128>}]} {
    %c128_i32 = arith.constant 128 : i32
    %0 = arith.muli %arg0, %c128_i32 : i32
    %1 = tpu.assume_multiple %0, 128 : i32
    %c0 = arith.constant 0 : index
    %c0_0 = arith.constant 0 : index
    %2 = vector.load %arg2[%c0, %c0_0] : memref<128x256xbf16, #tpu.memory_space<vmem>>, vector<128x256xbf16>
    %3 = arith.extf %2 : vector<128x256xbf16> to vector<128x256xf32>
    %c0_1 = arith.constant 0 : index
    %c0_2 = arith.constant 0 : index
    %4 = vector.load %arg3[%c0_1, %c0_2] : memref<32x64xbf16, #tpu.memory_space<vmem>>, vector<32x64xbf16>
    %c0_3 = arith.constant 0 : index
    %c0_4 = arith.constant 0 : index
    %5 = vector.load %arg4[%c0_3, %c0_4] : memref<2x32xbf16, #tpu.memory_space<vmem>>, vector<2x32xbf16>
    %c0_5 = arith.constant 0 : index
    %c0_6 = arith.constant 0 : index
    %6 = vector.load %arg5[%c0_5, %c0_6] : memref<2x32xbf16, #tpu.memory_space<vmem>>, vector<2x32xbf16>
    %c0_7 = arith.constant 0 : index
    %c0_8 = arith.constant 0 : index
    %7 = vector.load %arg6[%c0_7, %c0_8] : memref<1x64xf32, #tpu.memory_space<vmem>>, vector<1x64xf32>
    %c0_9 = arith.constant 0 : index
    %c0_10 = arith.constant 0 : index
    %8 = vector.load %arg1[%c0_9, %c0_10] : memref<256x64xf32, #tpu.memory_space<vmem>>, vector<256x32xf32>
    %9 = arith.truncf %8 : vector<256x32xf32> to vector<256x32xbf16>
    %10 = arith.index_cast %1 : i32 to index
    %c0_11 = arith.constant 0 : index
    %11 = vector.load %arg1[%10, %c0_11] : memref<256x64xf32, #tpu.memory_space<vmem>>, vector<128x32xf32>
    %12 = arith.truncf %11 : vector<128x32xf32> to vector<128x32xbf16>
    %cst = arith.constant dense<0.000000e+00> : vector<256x64xf32>
    %13 = tpu.matmul %9, %4, %cst {dimension_numbers = #tpu.dot_dimension_numbers<[1], [0], [0], [1], [0, 0, 1, 1], [], []>} : vector<256x32xbf16>, vector<32x64xbf16>, vector<256x64xf32> -> vector<256x64xf32>
    %cst_12 = arith.constant dense<0.000000e+00> : vector<2x256xf32>
    %14 = tpu.matmul %5, %9, %cst_12 {dimension_numbers = #tpu.dot_dimension_numbers<[1], [1], [0], [0], [0, 0, 1, 0], [], []>} : vector<2x32xbf16>, vector<256x32xbf16>, vector<2x256xf32> -> vector<2x256xf32>
    %cst_13 = arith.constant dense<0.000000e+00> : vector<2x128xf32>
    %15 = tpu.matmul %6, %12, %cst_13 {dimension_numbers = #tpu.dot_dimension_numbers<[1], [1], [0], [0], [0, 0, 1, 0], [], []>} : vector<2x32xbf16>, vector<128x32xbf16>, vector<2x128xf32> -> vector<2x128xf32>
    %16 = vector.shape_cast %15 : vector<2x128xf32> to vector<2x128x1xf32>
    %17 = vector.shape_cast %14 : vector<2x256xf32> to vector<2x1x256xf32>
    %18 = vector.broadcast %16 : vector<2x128x1xf32> to vector<2x128x256xf32>
    %19 = vector.broadcast %17 : vector<2x1x256xf32> to vector<2x128x256xf32>
    %20 = arith.addf %18, %19 : vector<2x128x256xf32>
    %cst_14 = arith.constant 2.000000e-01 : f32
    %21 = vector.broadcast %cst_14 : f32 to vector<2x128x256xf32>
    %22 = arith.mulf %21, %20 : vector<2x128x256xf32>
    %23 = arith.maximumf %20, %22 : vector<2x128x256xf32>
    %24 = vector.shape_cast %3 : vector<128x256xf32> to vector<1x128x256xf32>
    %25 = vector.broadcast %24 : vector<1x128x256xf32> to vector<2x128x256xf32>
    %26 = arith.addf %23, %25 : vector<2x128x256xf32>
    %cst_15 = arith.constant dense<0xFF800000> : vector<2x128xf32>
    %27 = vector.multi_reduction <maximumf>, %26, %cst_15 [2] : vector<2x128x256xf32> to vector<2x128xf32>
    %28 = vector.shape_cast %27 : vector<2x128xf32> to vector<2x128x1xf32>
    %cst_16 = arith.constant -5.000000e+29 : f32
    %29 = vector.broadcast %cst_16 : f32 to vector<2x128x1xf32>
    %30 = arith.maximumf %28, %29 : vector<2x128x1xf32>
    %31 = vector.broadcast %30 : vector<2x128x1xf32> to vector<2x128x256xf32>
    %32 = arith.subf %26, %31 : vector<2x128x256xf32>
    %33 = math.exp %32 : vector<2x128x256xf32>
    %cst_17 = arith.constant dense<0.000000e+00> : vector<2x128xf32>
    %34 = vector.multi_reduction <add>, %33, %cst_17 [2] : vector<2x128x256xf32> to vector<2x128xf32>
    %35 = vector.shape_cast %34 : vector<2x128xf32> to vector<2x128x1xf32>
    %cst_18 = arith.constant 9.99999968E-21 : f32
    %36 = vector.broadcast %cst_18 : f32 to vector<2x128x1xf32>
    %37 = arith.maximumf %35, %36 : vector<2x128x1xf32>
    %38 = tpu.reciprocal %37 {approx = true} : vector<2x128x1xf32> -> vector<2x128x1xf32>
    %39 = arith.truncf %33 : vector<2x128x256xf32> to vector<2x128x256xbf16>
    %40 = arith.truncf %13 : vector<256x64xf32> to vector<256x64xbf16>
    %41 = vector.extract_strided_slice %39 {offsets = [0, 0, 0], sizes = [1, 128, 256], strides = [1, 1, 1]} : vector<2x128x256xbf16> to vector<1x128x256xbf16>
    %42 = vector.shape_cast %41 : vector<1x128x256xbf16> to vector<128x256xbf16>
    %43 = vector.extract_strided_slice %40 {offsets = [0, 0], sizes = [256, 32], strides = [1, 1]} : vector<256x64xbf16> to vector<256x32xbf16>
    %cst_19 = arith.constant dense<0.000000e+00> : vector<128x32xf32>
    %44 = tpu.matmul %42, %43, %cst_19 {dimension_numbers = #tpu.dot_dimension_numbers<[1], [0], [0], [1], [0, 0, 1, 1], [], []>} : vector<128x256xbf16>, vector<256x32xbf16>, vector<128x32xf32> -> vector<128x32xf32>
    %45 = vector.extract_strided_slice %38 {offsets = [0, 0, 0], sizes = [1, 128, 1], strides = [1, 1, 1]} : vector<2x128x1xf32> to vector<1x128x1xf32>
    %46 = vector.shape_cast %45 : vector<1x128x1xf32> to vector<128x1xf32>
    %47 = vector.broadcast %46 : vector<128x1xf32> to vector<128x32xf32>
    %48 = arith.mulf %44, %47 : vector<128x32xf32>
    %49 = vector.extract_strided_slice %39 {offsets = [1, 0, 0], sizes = [1, 128, 256], strides = [1, 1, 1]} : vector<2x128x256xbf16> to vector<1x128x256xbf16>
    %50 = vector.shape_cast %49 : vector<1x128x256xbf16> to vector<128x256xbf16>
    %51 = vector.extract_strided_slice %40 {offsets = [0, 32], sizes = [256, 32], strides = [1, 1]} : vector<256x64xbf16> to vector<256x32xbf16>
    %cst_20 = arith.constant dense<0.000000e+00> : vector<128x32xf32>
    %52 = tpu.matmul %50, %51, %cst_20 {dimension_numbers = #tpu.dot_dimension_numbers<[1], [0], [0], [1], [0, 0, 1, 1], [], []>} : vector<128x256xbf16>, vector<256x32xbf16>, vector<128x32xf32> -> vector<128x32xf32>
    %53 = vector.extract_strided_slice %38 {offsets = [1, 0, 0], sizes = [1, 128, 1], strides = [1, 1, 1]} : vector<2x128x1xf32> to vector<1x128x1xf32>
    %54 = vector.shape_cast %53 : vector<1x128x1xf32> to vector<128x1xf32>
    %55 = vector.broadcast %54 : vector<128x1xf32> to vector<128x32xf32>
    %56 = arith.mulf %52, %55 : vector<128x32xf32>
    %57 = tpu.concatenate %48, %56 in 1 : vector<128x32xf32>, vector<128x32xf32> -> vector<128x64xf32>
    %58 = vector.broadcast %7 : vector<1x64xf32> to vector<128x64xf32>
    %59 = arith.addf %57, %58 : vector<128x64xf32>
    %cst_21 = arith.constant 0.000000e+00 : f32
    %60 = vector.broadcast %cst_21 : f32 to vector<128x64xf32>
    %61 = arith.cmpf ogt, %59, %60 : vector<128x64xf32>
    %62 = math.exp %59 : vector<128x64xf32>
    %cst_22 = arith.constant 1.000000e+00 : f32
    %63 = vector.broadcast %cst_22 : f32 to vector<128x64xf32>
    %64 = arith.subf %62, %63 : vector<128x64xf32>
    %cst_23 = arith.constant 1.67326319 : f32
    %65 = vector.broadcast %cst_23 : f32 to vector<128x64xf32>
    %66 = arith.mulf %65, %64 : vector<128x64xf32>
    %67 = arith.select %61, %59, %66 : vector<128x64xi1>, vector<128x64xf32>
    %cst_24 = arith.constant 1.05070102 : f32
    %68 = vector.broadcast %cst_24 : f32 to vector<128x64xf32>
    %69 = arith.mulf %68, %67 : vector<128x64xf32>
    %70 = vector.extract_strided_slice %69 {offsets = [0, 0], sizes = [128, 32], strides = [1, 1]} : vector<128x64xf32> to vector<128x32xf32>
    %71 = vector.extract_strided_slice %69 {offsets = [0, 32], sizes = [128, 32], strides = [1, 1]} : vector<128x64xf32> to vector<128x32xf32>
    %72 = arith.addf %70, %71 : vector<128x32xf32>
    %c0_25 = arith.constant 0 : index
    %c32 = arith.constant 32 : index
    %73 = vector.load %arg1[%c0_25, %c32] : memref<256x64xf32, #tpu.memory_space<vmem>>, vector<256x32xf32>
    %74 = arith.truncf %73 : vector<256x32xf32> to vector<256x32xbf16>
    %75 = arith.index_cast %1 : i32 to index
    %c32_26 = arith.constant 32 : index
    %76 = vector.load %arg1[%75, %c32_26] : memref<256x64xf32, #tpu.memory_space<vmem>>, vector<128x32xf32>
    %77 = arith.truncf %76 : vector<128x32xf32> to vector<128x32xbf16>
    %cst_27 = arith.constant dense<0.000000e+00> : vector<256x64xf32>
    %78 = tpu.matmul %74, %4, %cst_27 {dimension_numbers = #tpu.dot_dimension_numbers<[1], [0], [0], [1], [0, 0, 1, 1], [], []>} : vector<256x32xbf16>, vector<32x64xbf16>, vector<256x64xf32> -> vector<256x64xf32>
    %cst_28 = arith.constant dense<0.000000e+00> : vector<2x256xf32>
    %79 = tpu.matmul %5, %74, %cst_28 {dimension_numbers = #tpu.dot_dimension_numbers<[1], [1], [0], [0], [0, 0, 1, 0], [], []>} : vector<2x32xbf16>, vector<256x32xbf16>, vector<2x256xf32> -> vector<2x256xf32>
    %cst_29 = arith.constant dense<0.000000e+00> : vector<2x128xf32>
    %80 = tpu.matmul %6, %77, %cst_29 {dimension_numbers = #tpu.dot_dimension_numbers<[1], [1], [0], [0], [0, 0, 1, 0], [], []>} : vector<2x32xbf16>, vector<128x32xbf16>, vector<2x128xf32> -> vector<2x128xf32>
    %81 = vector.shape_cast %80 : vector<2x128xf32> to vector<2x128x1xf32>
    %82 = vector.shape_cast %79 : vector<2x256xf32> to vector<2x1x256xf32>
    %83 = vector.broadcast %81 : vector<2x128x1xf32> to vector<2x128x256xf32>
    %84 = vector.broadcast %82 : vector<2x1x256xf32> to vector<2x128x256xf32>
    %85 = arith.addf %83, %84 : vector<2x128x256xf32>
    %cst_30 = arith.constant 2.000000e-01 : f32
    %86 = vector.broadcast %cst_30 : f32 to vector<2x128x256xf32>
    %87 = arith.mulf %86, %85 : vector<2x128x256xf32>
    %88 = arith.maximumf %85, %87 : vector<2x128x256xf32>
    %89 = vector.shape_cast %3 : vector<128x256xf32> to vector<1x128x256xf32>
    %90 = vector.broadcast %89 : vector<1x128x256xf32> to vector<2x128x256xf32>
    %91 = arith.addf %88, %90 : vector<2x128x256xf32>
    %cst_31 = arith.constant dense<0xFF800000> : vector<2x128xf32>
    %92 = vector.multi_reduction <maximumf>, %91, %cst_31 [2] : vector<2x128x256xf32> to vector<2x128xf32>
    %93 = vector.shape_cast %92 : vector<2x128xf32> to vector<2x128x1xf32>
    %cst_32 = arith.constant -5.000000e+29 : f32
    %94 = vector.broadcast %cst_32 : f32 to vector<2x128x1xf32>
    %95 = arith.maximumf %93, %94 : vector<2x128x1xf32>
    %96 = vector.broadcast %95 : vector<2x128x1xf32> to vector<2x128x256xf32>
    %97 = arith.subf %91, %96 : vector<2x128x256xf32>
    %98 = math.exp %97 : vector<2x128x256xf32>
    %cst_33 = arith.constant dense<0.000000e+00> : vector<2x128xf32>
    %99 = vector.multi_reduction <add>, %98, %cst_33 [2] : vector<2x128x256xf32> to vector<2x128xf32>
    %100 = vector.shape_cast %99 : vector<2x128xf32> to vector<2x128x1xf32>
    %cst_34 = arith.constant 9.99999968E-21 : f32
    %101 = vector.broadcast %cst_34 : f32 to vector<2x128x1xf32>
    %102 = arith.maximumf %100, %101 : vector<2x128x1xf32>
    %103 = tpu.reciprocal %102 {approx = true} : vector<2x128x1xf32> -> vector<2x128x1xf32>
    %104 = arith.truncf %98 : vector<2x128x256xf32> to vector<2x128x256xbf16>
    %105 = arith.truncf %78 : vector<256x64xf32> to vector<256x64xbf16>
    %106 = vector.extract_strided_slice %104 {offsets = [0, 0, 0], sizes = [1, 128, 256], strides = [1, 1, 1]} : vector<2x128x256xbf16> to vector<1x128x256xbf16>
    %107 = vector.shape_cast %106 : vector<1x128x256xbf16> to vector<128x256xbf16>
    %108 = vector.extract_strided_slice %105 {offsets = [0, 0], sizes = [256, 32], strides = [1, 1]} : vector<256x64xbf16> to vector<256x32xbf16>
    %cst_35 = arith.constant dense<0.000000e+00> : vector<128x32xf32>
    %109 = tpu.matmul %107, %108, %cst_35 {dimension_numbers = #tpu.dot_dimension_numbers<[1], [0], [0], [1], [0, 0, 1, 1], [], []>} : vector<128x256xbf16>, vector<256x32xbf16>, vector<128x32xf32> -> vector<128x32xf32>
    %110 = vector.extract_strided_slice %103 {offsets = [0, 0, 0], sizes = [1, 128, 1], strides = [1, 1, 1]} : vector<2x128x1xf32> to vector<1x128x1xf32>
    %111 = vector.shape_cast %110 : vector<1x128x1xf32> to vector<128x1xf32>
    %112 = vector.broadcast %111 : vector<128x1xf32> to vector<128x32xf32>
    %113 = arith.mulf %109, %112 : vector<128x32xf32>
    %114 = vector.extract_strided_slice %104 {offsets = [1, 0, 0], sizes = [1, 128, 256], strides = [1, 1, 1]} : vector<2x128x256xbf16> to vector<1x128x256xbf16>
    %115 = vector.shape_cast %114 : vector<1x128x256xbf16> to vector<128x256xbf16>
    %116 = vector.extract_strided_slice %105 {offsets = [0, 32], sizes = [256, 32], strides = [1, 1]} : vector<256x64xbf16> to vector<256x32xbf16>
    %cst_36 = arith.constant dense<0.000000e+00> : vector<128x32xf32>
    %117 = tpu.matmul %115, %116, %cst_36 {dimension_numbers = #tpu.dot_dimension_numbers<[1], [0], [0], [1], [0, 0, 1, 1], [], []>} : vector<128x256xbf16>, vector<256x32xbf16>, vector<128x32xf32> -> vector<128x32xf32>
    %118 = vector.extract_strided_slice %103 {offsets = [1, 0, 0], sizes = [1, 128, 1], strides = [1, 1, 1]} : vector<2x128x1xf32> to vector<1x128x1xf32>
    %119 = vector.shape_cast %118 : vector<1x128x1xf32> to vector<128x1xf32>
    %120 = vector.broadcast %119 : vector<128x1xf32> to vector<128x32xf32>
    %121 = arith.mulf %117, %120 : vector<128x32xf32>
    %122 = tpu.concatenate %113, %121 in 1 : vector<128x32xf32>, vector<128x32xf32> -> vector<128x64xf32>
    %123 = vector.broadcast %7 : vector<1x64xf32> to vector<128x64xf32>
    %124 = arith.addf %122, %123 : vector<128x64xf32>
    %cst_37 = arith.constant 0.000000e+00 : f32
    %125 = vector.broadcast %cst_37 : f32 to vector<128x64xf32>
    %126 = arith.cmpf ogt, %124, %125 : vector<128x64xf32>
    %127 = math.exp %124 : vector<128x64xf32>
    %cst_38 = arith.constant 1.000000e+00 : f32
    %128 = vector.broadcast %cst_38 : f32 to vector<128x64xf32>
    %129 = arith.subf %127, %128 : vector<128x64xf32>
    %cst_39 = arith.constant 1.67326319 : f32
    %130 = vector.broadcast %cst_39 : f32 to vector<128x64xf32>
    %131 = arith.mulf %130, %129 : vector<128x64xf32>
    %132 = arith.select %126, %124, %131 : vector<128x64xi1>, vector<128x64xf32>
    %cst_40 = arith.constant 1.05070102 : f32
    %133 = vector.broadcast %cst_40 : f32 to vector<128x64xf32>
    %134 = arith.mulf %133, %132 : vector<128x64xf32>
    %135 = vector.extract_strided_slice %134 {offsets = [0, 0], sizes = [128, 32], strides = [1, 1]} : vector<128x64xf32> to vector<128x32xf32>
    %136 = arith.addf %72, %135 : vector<128x32xf32>
    %137 = vector.extract_strided_slice %134 {offsets = [0, 32], sizes = [128, 32], strides = [1, 1]} : vector<128x64xf32> to vector<128x32xf32>
    %138 = arith.addf %136, %137 : vector<128x32xf32>
    %cst_41 = arith.constant 2.500000e-01 : f32
    %139 = vector.broadcast %cst_41 : f32 to vector<128x32xf32>
    %140 = arith.mulf %138, %139 : vector<128x32xf32>
    %c0_42 = arith.constant 0 : index
    %c0_43 = arith.constant 0 : index
    %141 = vector.load %arg7[%c0_42, %c0_43] : memref<32x128xf32, #tpu.memory_space<vmem>>, vector<32x128xf32>
    %cst_44 = arith.constant dense<0.000000e+00> : vector<128x128xf32>
    %142 = tpu.matmul %140, %141, %cst_44 {dimension_numbers = #tpu.dot_dimension_numbers<[1], [0], [0], [1], [0, 0, 1, 1], [], []>} : vector<128x32xf32>, vector<32x128xf32>, vector<128x128xf32> -> vector<128x128xf32>
    %c0_45 = arith.constant 0 : index
    %c0_46 = arith.constant 0 : index
    %143 = vector.load %arg8[%c0_45, %c0_46] : memref<1x128xf32, #tpu.memory_space<vmem>>, vector<1x128xf32>
    %144 = vector.broadcast %143 : vector<1x128xf32> to vector<128x128xf32>
    %145 = arith.addf %142, %144 : vector<128x128xf32>
    %cst_47 = arith.constant dense<0xFF800000> : vector<128xf32>
    %146 = vector.multi_reduction <maximumf>, %145, %cst_47 [1] : vector<128x128xf32> to vector<128xf32>
    %147 = vector.shape_cast %146 : vector<128xf32> to vector<128x1xf32>
    %148 = vector.broadcast %147 : vector<128x1xf32> to vector<128x128xf32>
    %149 = arith.subf %145, %148 : vector<128x128xf32>
    %150 = math.exp %149 : vector<128x128xf32>
    %cst_48 = arith.constant dense<0.000000e+00> : vector<128xf32>
    %151 = vector.multi_reduction <add>, %150, %cst_48 [1] : vector<128x128xf32> to vector<128xf32>
    %152 = vector.shape_cast %151 : vector<128xf32> to vector<128x1xf32>
    %153 = vector.broadcast %152 : vector<128x1xf32> to vector<128x128xf32>
    %154 = arith.divf %150, %153 : vector<128x128xf32>
    %c0_49 = arith.constant 0 : index
    %c0_50 = arith.constant 0 : index
    %155 = vector.load %arg9[%c0_49, %c0_50] : memref<128x128xf32, #tpu.memory_space<vmem>>, vector<128x128xf32>
    tpu.vector_store %arg9[%c0_49, %c0_50], %154 {strides = array<i32>} : memref<128x128xf32, #tpu.memory_space<vmem>>, vector<128x128xf32>,
    return
  }
  func.func @transform_0(%arg0: i32) -> (i32, i32) {
    %c0_i32 = arith.constant 0 : i32
    %c0_i32_0 = arith.constant 0 : i32
    %c0_i32_1 = arith.constant 0 : i32
    return %c0_i32, %c0_i32_0 : i32, i32
  }
  func.func @transform_1(%arg0: i32) -> (i32, i32) {
    %c0_i32 = arith.constant 0 : i32
    %c0_i32_0 = arith.constant 0 : i32
    return %arg0, %c0_i32 : i32, i32
  }
  func.func @transform_2(%arg0: i32) -> (i32, i32) {
    %c0_i32 = arith.constant 0 : i32
    %c0_i32_0 = arith.constant 0 : i32
    %c0_i32_1 = arith.constant 0 : i32
    return %c0_i32, %c0_i32_0 : i32, i32
  }
  func.func @transform_3(%arg0: i32) -> (i32, i32) {
    %c0_i32 = arith.constant 0 : i32
    %c0_i32_0 = arith.constant 0 : i32
    %c0_i32_1 = arith.constant 0 : i32
    return %c0_i32, %c0_i32_0 : i32, i32
  }
  func.func @transform_4(%arg0: i32) -> (i32, i32) {
    %c0_i32 = arith.constant 0 : i32
    %c0_i32_0 = arith.constant 0 : i32
    %c0_i32_1 = arith.constant 0 : i32
    return %c0_i32, %c0_i32_0 : i32, i32
  }
  func.func @transform_5(%arg0: i32) -> (i32, i32) {
    %c0_i32 = arith.constant 0 : i32
    %c0_i32_0 = arith.constant 0 : i32
    %c0_i32_1 = arith.constant 0 : i32
    return %c0_i32, %c0_i32_0 : i32, i32
  }
  func.func @transform_6(%arg0: i32) -> (i32, i32) {
    %c0_i32 = arith.constant 0 : i32
    %c0_i32_0 = arith.constant 0 : i32
    %c0_i32_1 = arith.constant 0 : i32
    return %c0_i32, %c0_i32_0 : i32, i32
  }
  func.func @transform_7(%arg0: i32) -> (i32, i32) {
    %c0_i32 = arith.constant 0 : i32
    %c0_i32_0 = arith.constant 0 : i32
    %c0_i32_1 = arith.constant 0 : i32
    return %c0_i32, %c0_i32_0 : i32, i32
  }
  func.func @transform_8(%arg0: i32) -> (i32, i32) {
    %c0_i32 = arith.constant 0 : i32
    %c0_i32_0 = arith.constant 0 : i32
    return %arg0, %c0_i32 : i32, i32
  }
}

</mosaic_0001>

<llo_original>
// kernel: gat_forward.2
$region0: #{gat_forward.2}
  #allocation0 [shape = 'u32[]', space=smem, size = 0x4, offset = 0x4, fixed_abs, tag = 'smem constant byte address 0x4 - core index']
  #allocation1 [shape = 'u32[72,128]{1,0:T(1,128)}', space=vmem, size = 0x9000, scoped, tag = 'internal scratch']
  %s0 = inlined_call_operand.vmem [shape: f32[256,32], index: 0, kind: input, shape index: {}]
  %s1 = inlined_call_operand.vmem [shape: bf16[256,256], index: 1, kind: input, shape index: {}]
  %s2 = inlined_call_operand.vmem [shape: bf16[32,64], index: 2, kind: input, shape index: {}]
  %s3 = inlined_call_operand.vmem [shape: bf16[2,32], index: 3, kind: input, shape index: {}]
  %s4 = inlined_call_operand.vmem [shape: bf16[2,32], index: 4, kind: input, shape index: {}]
  %s5 = inlined_call_operand.vmem [shape: f32[1,64], index: 5, kind: input, shape index: {}]
  %s6 = inlined_call_operand.vmem [shape: f32[256,64], index: 6, kind: output, shape index: {}]
  %s7 = sld [smem:[#allocation0]]
  $region57: #{gat_forward.2} parent=0
    _
  %s9 = ssub.s32 1, %s7
  %s10 = scalar_select 0, %s9, %s7
  loop: start=0, step=1, limit=4
  $region2: #{gat_forward.2} parent=0 // loop_pre_header
    _
  $region3: #{gat_forward.2} parent=0 // loop_header
    %s12 = sphi 0, %s16
    %p13 = scmp.ge.s32.totalorder %s12, 4
    %s20 = sphi 0, %s20
    %s22 = sphi 0, %s20
    %s23 = sphi 0, %s22
    %s37 = sphi 0, %s23
    %s43 = sphi 0, %s45
    %s46 = sphi 0, %s43
    %s47 = sphi 0, %s46
    %s63 = sphi 0, %s47
    %s67 = sphi 0, %s67
    %s69 = sphi 0, %s67
    %s70 = sphi 0, %s69
    %s84 = sphi 0, %s70
    %s88 = sphi 0, %s88
    %s90 = sphi 0, %s88
    %s91 = sphi 0, %s90
    %s105 = sphi 0, %s91
    %s109 = sphi 0, %s109
    %s111 = sphi 0, %s109
    %s112 = sphi 0, %s111
    %s126 = sphi 0, %s112
    %s130 = sphi 0, %s130
    %s132 = sphi 0, %s130
    %s133 = sphi 0, %s132
    %s147 = sphi 0, %s133
    %s153 = sphi 0, %s155
    %s156 = sphi 0, %s153
    %s157 = sphi 0, %s156
    %s173 = sphi 0, %s157
  $region4: #{gat_forward.2} parent=0 // loop_header_branch
    %15 = sbr.rel (%p13) target = $region8
  $region5: #{gat_forward.2} parent=0 // loop_body
    %s17 = ssub.s32 %s12, 1
    %s18 = ssub.s32 %s12, 2
    %s19 = sadd.s32 %s12, 1
    %s21 = sadd.s32 %s20, 1
    %p24 = scmp.eq.s32.totalorder %s12, 1
    %p25 = scmp.ne.s32.totalorder %s20, %s22
    %p26 = scmp.eq.s32.totalorder %s12, 0
    %p27 = por %p25, %p26
    %p28 = scmp.ne.s32.totalorder %s20, %s22
    %p29 = scmp.eq.s32.totalorder %s17, 1
    %p30 = por %p28, %p29
    %p31 = scmp.ne.s32.totalorder %s22, %s23
    %p32 = scmp.eq.s32.totalorder %s17, 0
    %p33 = por %p31, %p32
    %p34 = scmp.ne.s32.totalorder %s22, %s23
    %p35 = scmp.eq.s32.totalorder %s18, 1
    %p36 = por %p34, %p35
    %p38 = scmp.ne.s32.totalorder %s23, %s37
    %p39 = scmp.eq.s32.totalorder %s18, 0
    %p40 = por %p38, %p39
    %s41 = ssub.s32 %s12, %s19
    %p42 = scmp.eq.s32.totalorder %s41, 0
    %s44 = sadd.s32 %s43, 1
    %s45 = scalar_select %p42, %s43, %s44
    %p48 = pneg %p42
    %p49 = scmp.eq.s32.totalorder %s12, 1
    %p50 = por %p48, %p49
    %p51 = scmp.ne.s32.totalorder %s43, %s46
    %p52 = scmp.eq.s32.totalorder %s12, 0
    %p53 = por %p51, %p52
    %p54 = scmp.ne.s32.totalorder %s43, %s46
    %p55 = scmp.eq.s32.totalorder %s17, 1
    %p56 = por %p54, %p55
    %p57 = scmp.ne.s32.totalorder %s46, %s47
    %p58 = scmp.eq.s32.totalorder %s17, 0
    %p59 = por %p57, %p58
    %p60 = scmp.ne.s32.totalorder %s46, %s47
    %p61 = scmp.eq.s32.totalorder %s18, 1
    %p62 = por %p60, %p61
    %p64 = scmp.ne.s32.totalorder %s47, %s63
    %p65 = scmp.eq.s32.totalorder %s18, 0
    %p66 = por %p64, %p65
    %s68 = sadd.s32 %s67, 1
    %p71 = scmp.eq.s32.totalorder %s12, 1
    %p72 = scmp.ne.s32.totalorder %s67, %s69
    %p73 = scmp.eq.s32.totalorder %s12, 0
    %p74 = por %p72, %p73
    %p75 = scmp.ne.s32.totalorder %s67, %s69
    %p76 = scmp.eq.s32.totalorder %s17, 1
    %p77 = por %p75, %p76
    %p78 = scmp.ne.s32.totalorder %s69, %s70
    %p79 = scmp.eq.s32.totalorder %s17, 0
    %p80 = por %p78, %p79
    %p81 = scmp.ne.s32.totalorder %s69, %s70
    %p82 = scmp.eq.s32.totalorder %s18, 1
    %p83 = por %p81, %p82
    %p85 = scmp.ne.s32.totalorder %s70, %s84
    %p86 = scmp.eq.s32.totalorder %s18, 0
    %p87 = por %p85, %p86
    %s89 = sadd.s32 %s88, 1
    %p92 = scmp.eq.s32.totalorder %s12, 1
    %p93 = scmp.ne.s32.totalorder %s88, %s90
    %p94 = scmp.eq.s32.totalorder %s12, 0
    %p95 = por %p93, %p94
    %p96 = scmp.ne.s32.totalorder %s88, %s90
    %p97 = scmp.eq.s32.totalorder %s17, 1
    %p98 = por %p96, %p97
    %p99 = scmp.ne.s32.totalorder %s90, %s91
    %p100 = scmp.eq.s32.totalorder %s17, 0
    %p101 = por %p99, %p100
    %p102 = scmp.ne.s32.totalorder %s90, %s91
    %p103 = scmp.eq.s32.totalorder %s18, 1
    %p104 = por %p102, %p103
    %p106 = scmp.ne.s32.totalorder %s91, %s105
    %p107 = scmp.eq.s32.totalorder %s18, 0
    %p108 = por %p106, %p107
    %s110 = sadd.s32 %s109, 1
    %p113 = scmp.eq.s32.totalorder %s12, 1
    %p114 = scmp.ne.s32.totalorder %s109, %s111
    %p115 = scmp.eq.s32.totalorder %s12, 0
    %p116 = por %p114, %p115
    %p117 = scmp.ne.s32.totalorder %s109, %s111
    %p118 = scmp.eq.s32.totalorder %s17, 1
    %p119 = por %p117, %p118
    %p120 = scmp.ne.s32.totalorder %s111, %s112
    %p121 = scmp.eq.s32.totalorder %s17, 0
    %p122 = por %p120, %p121
    %p123 = scmp.ne.s32.totalorder %s111, %s112
    %p124 = scmp.eq.s32.totalorder %s18, 1
    %p125 = por %p123, %p124
    %p127 = scmp.ne.s32.totalorder %s112, %s126
    %p128 = scmp.eq.s32.totalorder %s18, 0
    %p129 = por %p127, %p128
    %s131 = sadd.s32 %s130, 1
    %p134 = scmp.eq.s32.totalorder %s12, 1
    %p135 = scmp.ne.s32.totalorder %s130, %s132
    %p136 = scmp.eq.s32.totalorder %s12, 0
    %p137 = por %p135, %p136
    %p138 = scmp.ne.s32.totalorder %s130, %s132
    %p139 = scmp.eq.s32.totalorder %s17, 1
    %p140 = por %p138, %p139
    %p141 = scmp.ne.s32.totalorder %s132, %s133
    %p142 = scmp.eq.s32.totalorder %s17, 0
    %p143 = por %p141, %p142
    %p144 = scmp.ne.s32.totalorder %s132, %s133
    %p145 = scmp.eq.s32.totalorder %s18, 1
    %p146 = por %p144, %p145
    %p148 = scmp.ne.s32.totalorder %s133, %s147
    %p149 = scmp.eq.s32.totalorder %s18, 0
    %p150 = por %p148, %p149
    %s151 = ssub.s32 %s12, %s19
    %p152 = scmp.eq.s32.totalorder %s151, 0
    %s154 = sadd.s32 %s153, 1
    %s155 = scalar_select %p152, %s153, %s154
    %p158 = pneg %p152
    %p159 = scmp.eq.s32.totalorder %s12, 1
    %p160 = por %p158, %p159
    %p161 = scmp.ne.s32.totalorder %s153, %s156
    %p162 = scmp.eq.s32.totalorder %s12, 0
    %p163 = por %p161, %p162
    %p164 = scmp.ne.s32.totalorder %s153, %s156
    %p165 = scmp.eq.s32.totalorder %s17, 1
    %p166 = por %p164, %p165
    %p167 = scmp.ne.s32.totalorder %s156, %s157
    %p168 = scmp.eq.s32.totalorder %s17, 0
    %p169 = por %p167, %p168
    %p170 = scmp.ne.s32.totalorder %s156, %s157
    %p171 = scmp.eq.s32.totalorder %s18, 1
    %p172 = por %p170, %p171
    %p174 = scmp.ne.s32.totalorder %s157, %s173
    %p175 = scmp.eq.s32.totalorder %s18, 0
    %p176 = por %p174, %p175
    %p177 = scmp.le.s32.totalorder 1, %s12
    %p178 = scmp.lt.s32.totalorder %s12, 3
    %p179 = pnand %p177, %p178
    %p180 = pneg %p179
    // Predicated region
    $region9: #{gat_forward.2} parent=5 // pred_check
      _
    $region10: #{gat_forward.2} parent=5 // pred_check_branch
      %182 = sbr.rel (%p179) target = $region12
    $region11: #{gat_forward.2} parent=5 // pred_region
      %s183 = ssub.s32 %s12, 1
      // Predicated region
      $region13: #{gat_forward.2} parent=11 // pred_check
        %p184 = pneg %p33
      $region14: #{gat_forward.2} parent=11 // pred_check_branch
        %186 = sbr.rel (%p184) target = $region16
      $region15: #{gat_forward.2} parent=11 // pred_region
        _
      $region16: #{gat_forward.2} parent=11 // pred_fallthru
        _
      // Predicated region
      $region17: #{gat_forward.2} parent=11 // pred_check
        %p187 = pneg %p80
      $region18: #{gat_forward.2} parent=11 // pred_check_branch
        %189 = sbr.rel (%p187) target = $region20
      $region19: #{gat_forward.2} parent=11 // pred_region
        _
      $region20: #{gat_forward.2} parent=11 // pred_fallthru
        _
      // Predicated region
      $region21: #{gat_forward.2} parent=11 // pred_check
        %p190 = pneg %p101
      $region22: #{gat_forward.2} parent=11 // pred_check_branch
        %192 = sbr.rel (%p190) target = $region24
      $region23: #{gat_forward.2} parent=11 // pred_region
        _
      $region24: #{gat_forward.2} parent=11 // pred_fallthru
        _
      // Predicated region
      $region25: #{gat_forward.2} parent=11 // pred_check
        %p193 = pneg %p122
      $region26: #{gat_forward.2} parent=11 // pred_check_branch
        %195 = sbr.rel (%p193) target = $region28
      $region27: #{gat_forward.2} parent=11 // pred_region
        _
      $region28: #{gat_forward.2} parent=11 // pred_fallthru
        _
      // Predicated region
      $region29: #{gat_forward.2} parent=11 // pred_check
        %p196 = pneg %p143
      $region30: #{gat_forward.2} parent=11 // pred_check_branch
        %198 = sbr.rel (%p196) target = $region32
      $region31: #{gat_forward.2} parent=11 // pred_region
        _
      $region32: #{gat_forward.2} parent=11 // pred_fallthru
        _
    $region12: #{gat_forward.2} parent=5 // pred_fallthru
      _
    %p199 = scmp.lt.s32.totalorder %s12, 2
    // Predicated region
    $region33: #{gat_forward.2} parent=5 // pred_check
      %p200 = pneg %p199
    $region34: #{gat_forward.2} parent=5 // pred_check_branch
      %202 = sbr.rel (%p200) target = $region36
    $region35: #{gat_forward.2} parent=5 // pred_region
      // Predicated region
      $region37: #{gat_forward.2} parent=35 // pred_check
        %p203 = pneg %p53
      $region38: #{gat_forward.2} parent=35 // pred_check_branch
        %205 = sbr.rel (%p203) target = $region40
      $region39: #{gat_forward.2} parent=35 // pred_region
        %s206 = smul.u32 16, %s12
        %p207 = scmp.lt.s32.totalorder %s206, 31
        %s208 = scalar_select %p207, %s206, 31
        %s209 = smul.addr %s208, 2
        %s210 = smul.addr %s209, 4
        %s211 = scalar_lea.vmem %s1, %s210
        %s212 = smul.u32 16, %s12
      $region40: #{gat_forward.2} parent=35 // pred_fallthru
        _
    $region36: #{gat_forward.2} parent=5 // pred_fallthru
      _
    %p213 = scmp.le.s32.totalorder 1, %s12
    %p214 = scmp.lt.s32.totalorder %s12, 3
    %p215 = pnand %p213, %p214
    %p216 = pneg %p215
    // Predicated region
    $region41: #{gat_forward.2} parent=5 // pred_check
      _
    $region42: #{gat_forward.2} parent=5 // pred_check_branch
      %218 = sbr.rel (%p215) target = $region44
    $region43: #{gat_forward.2} parent=5 // pred_region
      %s219 = ssub.s32 %s12, 1
      %p220 = pneg %p33
      %p221 = pneg %p30
      %s222 = smul.u32 16, %s17
      %p223 = scmp.lt.s32.totalorder %s222, 31
      %s224 = scalar_select %p223, %s222, 31
      %s225 = smul.addr %s224, 2
      %s226 = smul.addr %s225, 4
      %s227 = scalar_lea.vmem %s1, %s226
      %p228 = pneg %p59
      %p229 = pneg %p56
      %p230 = pneg %p80
      %p231 = pneg %p77
      %p232 = pneg %p101
      %p233 = pneg %p98
      %p234 = pneg %p122
      %p235 = pneg %p119
      %p236 = pneg %p143
      %p237 = pneg %p140
      %p238 = pneg %p169
      %p239 = pneg %p166
      %s240 = smul.u32 16, %s17
      %p241 = scmp.lt.s32.totalorder %s240, 31
      %s242 = scalar_select %p241, %s240, 31
      %s243 = smul.addr %s242, 8
      %s244 = scalar_lea.vmem %s6, %s243
      %s245 = smul.u32 16, %s17
      %p246 = scmp.lt.s32.totalorder %s245, 31
      %s247 = scalar_select %p246, %s245, 31
      %s248 = smul.addr %s247, 2
      %s249 = smul.addr %s248, 4
      %s250 = scalar_lea.vmem %s1, %s249
      %s251 = smul.u32 16, %s17
      %s252 = smul.u32 16, %s17
      %p253 = scmp.lt.s32.totalorder %s252, 31
      %s254 = scalar_select %p253, %s252, 31
      %s255 = smul.addr %s254, 8
      %s256 = scalar_lea.vmem %s6, %s255
      %s257 = smul.u32 16, %s17
      %s259 = smul.u32 %s17, 128
      %v260 = vld [vmem:[%s250] sm:$0xff]
      %v261 = vld [vmem:[%s250 + $0x8] sm:$0xff]
      %v262 = vld [vmem:[%s250 + $0x10] sm:$0xff]
      %v263 = vld [vmem:[%s250 + $0x18] sm:$0xff]
      %v264 = vld [vmem:[%s250 + $0x20] sm:$0xff]
      %v265 = vld [vmem:[%s250 + $0x28] sm:$0xff]
      %v266 = vld [vmem:[%s250 + $0x30] sm:$0xff]
      %v267 = vld [vmem:[%s250 + $0x38] sm:$0xff]
      %v268 = vld [vmem:[%s250 + $0x40] sm:$0xff]
      %v269 = vld [vmem:[%s250 + $0x48] sm:$0xff]
      %v270 = vld [vmem:[%s250 + $0x50] sm:$0xff]
      %v271 = vld [vmem:[%s250 + $0x58] sm:$0xff]
      %v272 = vld [vmem:[%s250 + $0x60] sm:$0xff]
      %v273 = vld [vmem:[%s250 + $0x68] sm:$0xff]
      %v274 = vld [vmem:[%s250 + $0x70] sm:$0xff]
      %v275 = vld [vmem:[%s250 + $0x78] sm:$0xff]
      %v276 = vunpack.c.l.bf16 %v260
      %v277 = vunpack.c.h.bf16 %v260
      %v278 = vunpack.c.l.bf16 %v261
      %v279 = vunpack.c.h.bf16 %v261
      %v280 = vunpack.c.l.bf16 %v262
      %v281 = vunpack.c.h.bf16 %v262
      %v282 = vunpack.c.l.bf16 %v263
      %v283 = vunpack.c.h.bf16 %v263
      %v284 = vunpack.c.l.bf16 %v264
      %v285 = vunpack.c.h.bf16 %v264
      %v286 = vunpack.c.l.bf16 %v265
      %v287 = vunpack.c.h.bf16 %v265
      %v288 = vunpack.c.l.bf16 %v266
      %v289 = vunpack.c.h.bf16 %v266
      %v290 = vunpack.c.l.bf16 %v267
      %v291 = vunpack.c.h.bf16 %v267
      %v292 = vunpack.c.l.bf16 %v268
      %v293 = vunpack.c.h.bf16 %v268
      %v294 = vunpack.c.l.bf16 %v269
      %v295 = vunpack.c.h.bf16 %v269
      %v296 = vunpack.c.l.bf16 %v270
      %v297 = vunpack.c.h.bf16 %v270
      %v298 = vunpack.c.l.bf16 %v271
      %v299 = vunpack.c.h.bf16 %v271
      %v300 = vunpack.c.l.bf16 %v272
      %v301 = vunpack.c.h.bf16 %v272
      %v302 = vunpack.c.l.bf16 %v273
      %v303 = vunpack.c.h.bf16 %v273
      %v304 = vunpack.c.l.bf16 %v274
      %v305 = vunpack.c.h.bf16 %v274
      %v306 = vunpack.c.l.bf16 %v275
      %v307 = vunpack.c.h.bf16 %v275
      %v308 = vld [vmem:[%s2] sm:$0xf]
      %v309 = vld [vmem:[%s2 + $0x4] sm:$0xf]
      %v310 = vld [vmem:[%s2 + $0x8] sm:$0xf]
      %v311 = vld [vmem:[%s2 + $0xc] sm:$0xf]
      %v312 = vld [vmem:[%s3] sm:$0x1]
      %v313 = vld [vmem:[%s4] sm:$0x1]
      %v314 = vld [vmem:[%s5] sm:$0x1]
      %v315 = vld [vmem:[%s0] sm:$0xff]
      %v316 = vld [vmem:[%s0 + $0x8] sm:$0xff]
      %v317 = vld [vmem:[%s0 + $0x10] sm:$0xff]
      %v318 = vld [vmem:[%s0 + $0x18] sm:$0xff]
      %v319 = vld [vmem:[%s0 + $0x20] sm:$0xff]
      %v320 = vld [vmem:[%s0 + $0x28] sm:$0xff]
      %v321 = vld [vmem:[%s0 + $0x30] sm:$0xff]
      %v322 = vld [vmem:[%s0 + $0x38] sm:$0xff]
      %v323 = vld [vmem:[%s0 + $0x40] sm:$0xff]
      %v324 = vld [vmem:[%s0 + $0x48] sm:$0xff]
      %v325 = vld [vmem:[%s0 + $0x50] sm:$0xff]
      %v326 = vld [vmem:[%s0 + $0x58] sm:$0xff]
      %v327 = vld [vmem:[%s0 + $0x60] sm:$0xff]
      %v328 = vld [vmem:[%s0 + $0x68] sm:$0xff]
      %v329 = vld [vmem:[%s0 + $0x70] sm:$0xff]
      %v330 = vld [vmem:[%s0 + $0x78] sm:$0xff]
      %v331 = vld [vmem:[%s0 + $0x80] sm:$0xff]
      %v332 = vld [vmem:[%s0 + $0x88] sm:$0xff]
      %v333 = vld [vmem:[%s0 + $0x90] sm:$0xff]
      %v334 = vld [vmem:[%s0 + $0x98] sm:$0xff]
      %v335 = vld [vmem:[%s0 + $0xa0] sm:$0xff]
      %v336 = vld [vmem:[%s0 + $0xa8] sm:$0xff]
      %v337 = vld [vmem:[%s0 + $0xb0] sm:$0xff]
      %v338 = vld [vmem:[%s0 + $0xb8] sm:$0xff]
      %v339 = vld [vmem:[%s0 + $0xc0] sm:$0xff]
      %v340 = vld [vmem:[%s0 + $0xc8] sm:$0xff]
      %v341 = vld [vmem:[%s0 + $0xd0] sm:$0xff]
      %v342 = vld [vmem:[%s0 + $0xd8] sm:$0xff]
      %v343 = vld [vmem:[%s0 + $0xe0] sm:$0xff]
      %v344 = vld [vmem:[%s0 + $0xe8] sm:$0xff]
      %v345 = vld [vmem:[%s0 + $0xf0] sm:$0xff]
      %v346 = vld [vmem:[%s0 + $0xf8] sm:$0xff]
      %v347 = vpack.c.bf16 %v316, %v315
      %v348 = vpack.c.bf16 %v318, %v317
      %v349 = vpack.c.bf16 %v320, %v319
      %v350 = vpack.c.bf16 %v322, %v321
      %v351 = vpack.c.bf16 %v324, %v323
      %v352 = vpack.c.bf16 %v326, %v325
      %v353 = vpack.c.bf16 %v328, %v327
      %v354 = vpack.c.bf16 %v330, %v329
      %v355 = vpack.c.bf16 %v332, %v331
      %v356 = vpack.c.bf16 %v334, %v333
      %v357 = vpack.c.bf16 %v336, %v335
      %v358 = vpack.c.bf16 %v338, %v337
      %v359 = vpack.c.bf16 %v340, %v339
      %v360 = vpack.c.bf16 %v342, %v341
      %v361 = vpack.c.bf16 %v344, %v343
      %v362 = vpack.c.bf16 %v346, %v345
      %s363 = scalar_lea.vmem %s0, %s259
      %v364 = vld [vmem:[%s363] sm:$0xff]
      %v365 = vld [vmem:[%s363 + $0x8] sm:$0xff]
      %v366 = vld [vmem:[%s363 + $0x10] sm:$0xff]
      %v367 = vld [vmem:[%s363 + $0x18] sm:$0xff]
      %v368 = vld [vmem:[%s363 + $0x20] sm:$0xff]
      %v369 = vld [vmem:[%s363 + $0x28] sm:$0xff]
      %v370 = vld [vmem:[%s363 + $0x30] sm:$0xff]
      %v371 = vld [vmem:[%s363 + $0x38] sm:$0xff]
      %v372 = vld [vmem:[%s363 + $0x40] sm:$0xff]
      %v373 = vld [vmem:[%s363 + $0x48] sm:$0xff]
      %v374 = vld [vmem:[%s363 + $0x50] sm:$0xff]
      %v375 = vld [vmem:[%s363 + $0x58] sm:$0xff]
      %v376 = vld [vmem:[%s363 + $0x60] sm:$0xff]
      %v377 = vld [vmem:[%s363 + $0x68] sm:$0xff]
      %v378 = vld [vmem:[%s363 + $0x70] sm:$0xff]
      %v379 = vld [vmem:[%s363 + $0x78] sm:$0xff]
      %v380 = vpack.c.bf16 %v365, %v364
      %v381 = vpack.c.bf16 %v367, %v366
      %v382 = vpack.c.bf16 %v369, %v368
      %v383 = vpack.c.bf16 %v371, %v370
      %v384 = vpack.c.bf16 %v373, %v372
      %v385 = vpack.c.bf16 %v375, %v374
      %v386 = vpack.c.bf16 %v377, %v376
      %v387 = vpack.c.bf16 %v379, %v378
      %v392 = vunpack.c.l.b16 %v308
      %v393 = vunpack.c.l.b16 %v309
      %v394 = vunpack.c.l.b16 %v310
      %v395 = vunpack.c.l.b16 %v311
      %v396 = vpack.c.b16 %v393, %v392
      %v397 = vpack.c.b16 %v395, %v394
      %vm400 = vcmask 261120
      %v402 = vsel %vm400, %v347, 0
      %v405 = vsel %vm400, %v348, 0
      %v408 = vsel %vm400, %v349, 0
      %v411 = vsel %vm400, %v350, 0
      %v414 = vsel %vm400, %v351, 0
      %v417 = vsel %vm400, %v352, 0
      %v420 = vsel %vm400, %v353, 0
      %v423 = vsel %vm400, %v354, 0
      %v426 = vsel %vm400, %v355, 0
      %v429 = vsel %vm400, %v356, 0
      %v432 = vsel %vm400, %v357, 0
      %v435 = vsel %vm400, %v358, 0
      %v438 = vsel %vm400, %v359, 0
      %v441 = vsel %vm400, %v360, 0
      %v444 = vsel %vm400, %v361, 0
      %v447 = vsel %vm400, %v362, 0
      %449 = vmatpush.bf16.msra.mxu0 0
      %450 = vmatpush.bf16.msra.mxu0 0
      %451 = vmatpush.bf16.msra.mxu0 0
      %452 = vmatpush.bf16.msra.mxu0 0
      %453 = vmatpush.bf16.msra.mxu0 0
      %454 = vmatpush.bf16.msra.mxu0 0
      %455 = vmatpush.bf16.msra.mxu0 %v397
      %456 = vmatpush.bf16.msra.mxu0 %v396
      %457 = vmatmul.bf16.gmra.mxu0 %v402
      %v458 = vpop.f32.mrf.mxu0
      %v459 = vadd.f32 0.0, %v458
      %v460 = vpop.f32.mrf.mxu0
      %v461 = vadd.f32 0.0, %v460
      %462 = vmatmul.bf16.gmra.mxu0 %v405
      %v463 = vpop.f32.mrf.mxu0
      %v464 = vadd.f32 0.0, %v463
      %v465 = vpop.f32.mrf.mxu0
      %v466 = vadd.f32 0.0, %v465
      %467 = vmatmul.bf16.gmra.mxu0 %v408
      %v468 = vpop.f32.mrf.mxu0
      %v469 = vadd.f32 0.0, %v468
      %v470 = vpop.f32.mrf.mxu0
      %v471 = vadd.f32 0.0, %v470
      %472 = vmatmul.bf16.gmra.mxu0 %v411
      %v473 = vpop.f32.mrf.mxu0
      %v474 = vadd.f32 0.0, %v473
      %v475 = vpop.f32.mrf.mxu0
      %v476 = vadd.f32 0.0, %v475
      %477 = vmatmul.bf16.gmra.mxu0 %v414
      %v478 = vpop.f32.mrf.mxu0
      %v479 = vadd.f32 0.0, %v478
      %v480 = vpop.f32.mrf.mxu0
      %v481 = vadd.f32 0.0, %v480
      %482 = vmatmul.bf16.gmra.mxu0 %v417
      %v483 = vpop.f32.mrf.mxu0
      %v484 = vadd.f32 0.0, %v483
      %v485 = vpop.f32.mrf.mxu0
      %v486 = vadd.f32 0.0, %v485
      %487 = vmatmul.bf16.gmra.mxu0 %v420
      %v488 = vpop.f32.mrf.mxu0
      %v489 = vadd.f32 0.0, %v488
      %v490 = vpop.f32.mrf.mxu0
      %v491 = vadd.f32 0.0, %v490
      %492 = vmatmul.bf16.gmra.mxu0 %v423
      %v493 = vpop.f32.mrf.mxu0
      %v494 = vadd.f32 0.0, %v493
      %v495 = vpop.f32.mrf.mxu0
      %v496 = vadd.f32 0.0, %v495
      %497 = vmatmul.bf16.gmra.mxu0 %v426
      %v498 = vpop.f32.mrf.mxu0
      %v499 = vadd.f32 0.0, %v498
      %v500 = vpop.f32.mrf.mxu0
      %v501 = vadd.f32 0.0, %v500
      %502 = vmatmul.bf16.gmra.mxu0 %v429
      %v503 = vpop.f32.mrf.mxu0
      %v504 = vadd.f32 0.0, %v503
      %v505 = vpop.f32.mrf.mxu0
      %v506 = vadd.f32 0.0, %v505
      %507 = vmatmul.bf16.gmra.mxu0 %v432
      %v508 = vpop.f32.mrf.mxu0
      %v509 = vadd.f32 0.0, %v508
      %v510 = vpop.f32.mrf.mxu0
      %v511 = vadd.f32 0.0, %v510
      %512 = vmatmul.bf16.gmra.mxu0 %v435
      %v513 = vpop.f32.mrf.mxu0
      %v514 = vadd.f32 0.0, %v513
      %v515 = vpop.f32.mrf.mxu0
      %v516 = vadd.f32 0.0, %v515
      %517 = vmatmul.bf16.gmra.mxu0 %v438
      %v518 = vpop.f32.mrf.mxu0
      %v519 = vadd.f32 0.0, %v518
      %v520 = vpop.f32.mrf.mxu0
      %v521 = vadd.f32 0.0, %v520
      %522 = vmatmul.bf16.gmra.mxu0 %v441
      %v523 = vpop.f32.mrf.mxu0
      %v524 = vadd.f32 0.0, %v523
      %v525 = vpop.f32.mrf.mxu0
      %v526 = vadd.f32 0.0, %v525
      %527 = vmatmul.bf16.gmra.mxu0 %v444
      %v528 = vpop.f32.mrf.mxu0
      %v529 = vadd.f32 0.0, %v528
      %v530 = vpop.f32.mrf.mxu0
      %v531 = vadd.f32 0.0, %v530
      %532 = vmatmul.bf16.gmra.mxu0 %v447
      %v533 = vpop.f32.mrf.mxu0
      %v534 = vadd.f32 0.0, %v533
      %v535 = vpop.f32.mrf.mxu0
      %v536 = vadd.f32 0.0, %v535
      %537 = vdwg.mxu0
      %v539 = vsel %vm400, %v312, 0
      %541 = vmatpush.bf16.xpose.msra.mxu0 %v423
      %542 = vmatpush.bf16.xpose.msra.mxu0 %v420
      %543 = vmatpush.bf16.xpose.msra.mxu0 %v417
      %544 = vmatpush.bf16.xpose.msra.mxu0 %v414
      %545 = vmatpush.bf16.xpose.msra.mxu0 %v411
      %546 = vmatpush.bf16.xpose.msra.mxu0 %v408
      %547 = vmatpush.bf16.xpose.msra.mxu0 %v405
      %548 = vmatpush.bf16.xpose.msra.mxu0 %v402
      %549 = vmatmul.bf16.gmra.mxu0 %v539
      %v550 = vpop.f32.mrf.mxu0
      %v551 = vadd.f32 0.0, %v550
      %v552 = vpop.f32.mrf.mxu0
      %553 = vdwg.mxu0
      %554 = vmatpush.bf16.xpose.msra.mxu0 %v447
      %555 = vmatpush.bf16.xpose.msra.mxu0 %v444
      %556 = vmatpush.bf16.xpose.msra.mxu0 %v441
      %557 = vmatpush.bf16.xpose.msra.mxu0 %v438
      %558 = vmatpush.bf16.xpose.msra.mxu0 %v435
      %559 = vmatpush.bf16.xpose.msra.mxu0 %v432
      %560 = vmatpush.bf16.xpose.msra.mxu0 %v429
      %561 = vmatpush.bf16.xpose.msra.mxu0 %v426
      %562 = vmatmul.bf16.gmra.mxu0 %v539
      %v563 = vpop.f32.mrf.mxu0
      %v564 = vadd.f32 0.0, %v563
      %v565 = vpop.f32.mrf.mxu0
      %566 = vdwg.mxu0
      %v568 = vsel %vm400, %v313, 0
      %v571 = vsel %vm400, %v380, 0
      %v574 = vsel %vm400, %v381, 0
      %v577 = vsel %vm400, %v382, 0
      %v580 = vsel %vm400, %v383, 0
      %v583 = vsel %vm400, %v384, 0
      %v586 = vsel %vm400, %v385, 0
      %v589 = vsel %vm400, %v386, 0
      %v592 = vsel %vm400, %v387, 0
      %594 = vmatpush.bf16.xpose.msra.mxu0 %v592
      %595 = vmatpush.bf16.xpose.msra.mxu0 %v589
      %596 = vmatpush.bf16.xpose.msra.mxu0 %v586
      %597 = vmatpush.bf16.xpose.msra.mxu0 %v583
      %598 = vmatpush.bf16.xpose.msra.mxu0 %v580
      %599 = vmatpush.bf16.xpose.msra.mxu0 %v577
      %600 = vmatpush.bf16.xpose.msra.mxu0 %v574
      %601 = vmatpush.bf16.xpose.msra.mxu0 %v571
      %602 = vmatmul.bf16.gmra.mxu0 %v568
      %v603 = vpop.f32.mrf.mxu0
      %v604 = vadd.f32 0.0, %v603
      %v605 = vpop.f32.mrf.mxu0
      %606 = vdwg.mxu0
      %v607 = vperm.slane %v604, 0
      %v608 = vlaneseq
      %v609 = vshrl.u32 %v608, 7
      %611 = vset.pattern.permute.xlu0 %v609
      %612 = vperm.xlu0 %611, %v607
      %v613 = vpop.permute.xlu0 %612
      %v614 = vlaneseq
      %v615 = vshrl.u32 %v614, 7
      %v616 = vadd.s32 %v615, 8
      %617 = vset.pattern.permute.xlu0 %v616
      %618 = vperm.xlu0 %617, %v607
      %v619 = vpop.permute.xlu0 %618
      %v620 = vlaneseq
      %v621 = vshrl.u32 %v620, 7
      %v622 = vadd.s32 %v621, 16
      %623 = vset.pattern.permute.xlu0 %v622
      %624 = vperm.xlu0 %623, %v607
      %v625 = vpop.permute.xlu0 %624
      %v626 = vlaneseq
      %v627 = vshrl.u32 %v626, 7
      %v628 = vadd.s32 %v627, 24
      %629 = vset.pattern.permute.xlu0 %v628
      %630 = vperm.xlu0 %629, %v607
      %v631 = vpop.permute.xlu0 %630
      %v632 = vlaneseq
      %v633 = vshrl.u32 %v632, 7
      %v634 = vadd.s32 %v633, 32
      %635 = vset.pattern.permute.xlu0 %v634
      %636 = vperm.xlu0 %635, %v607
      %v637 = vpop.permute.xlu0 %636
      %v638 = vlaneseq
      %v639 = vshrl.u32 %v638, 7
      %v640 = vadd.s32 %v639, 40
      %641 = vset.pattern.permute.xlu0 %v640
      %642 = vperm.xlu0 %641, %v607
      %v643 = vpop.permute.xlu0 %642
      %v644 = vlaneseq
      %v645 = vshrl.u32 %v644, 7
      %v646 = vadd.s32 %v645, 48
      %647 = vset.pattern.permute.xlu0 %v646
      %648 = vperm.xlu0 %647, %v607
      %v649 = vpop.permute.xlu0 %648
      %v650 = vlaneseq
      %v651 = vshrl.u32 %v650, 7
      %v652 = vadd.s32 %v651, 56
      %653 = vset.pattern.permute.xlu0 %v652
      %654 = vperm.xlu0 %653, %v607
      %v655 = vpop.permute.xlu0 %654
      %v656 = vlaneseq
      %v657 = vshrl.u32 %v656, 7
      %v658 = vadd.s32 %v657, 64
      %659 = vset.pattern.permute.xlu0 %v658
      %660 = vperm.xlu0 %659, %v607
      %v661 = vpop.permute.xlu0 %660
      %v662 = vlaneseq
      %v663 = vshrl.u32 %v662, 7
      %v664 = vadd.s32 %v663, 72
      %665 = vset.pattern.permute.xlu0 %v664
      %666 = vperm.xlu0 %665, %v607
      %v667 = vpop.permute.xlu0 %666
      %v668 = vlaneseq
      %v669 = vshrl.u32 %v668, 7
      %v670 = vadd.s32 %v669, 80
      %671 = vset.pattern.permute.xlu0 %v670
      %672 = vperm.xlu0 %671, %v607
      %v673 = vpop.permute.xlu0 %672
      %v674 = vlaneseq
      %v675 = vshrl.u32 %v674, 7
      %v676 = vadd.s32 %v675, 88
      %677 = vset.pattern.permute.xlu0 %v676
      %678 = vperm.xlu0 %677, %v607
      %v679 = vpop.permute.xlu0 %678
      %v680 = vlaneseq
      %v681 = vshrl.u32 %v680, 7
      %v682 = vadd.s32 %v681, 96
      %683 = vset.pattern.permute.xlu0 %v682
      %684 = vperm.xlu0 %683, %v607
      %v685 = vpop.permute.xlu0 %684
      %v686 = vlaneseq
      %v687 = vshrl.u32 %v686, 7
      %v688 = vadd.s32 %v687, 104
      %689 = vset.pattern.permute.xlu0 %v688
      %690 = vperm.xlu0 %689, %v607
      %v691 = vpop.permute.xlu0 %690
      %v692 = vlaneseq
      %v693 = vshrl.u32 %v692, 7
      %v694 = vadd.s32 %v693, 112
      %695 = vset.pattern.permute.xlu0 %v694
      %696 = vperm.xlu0 %695, %v607
      %v697 = vpop.permute.xlu0 %696
      %v698 = vlaneseq
      %v699 = vshrl.u32 %v698, 7
      %v700 = vadd.s32 %v699, 120
      %701 = vset.pattern.permute.xlu0 %v700
      %702 = vperm.xlu0 %701, %v607
      %v703 = vpop.permute.xlu0 %702
      %v704 = vperm.slane %v604, 1
      %v705 = vlaneseq
      %v706 = vshrl.u32 %v705, 7
      %708 = vset.pattern.permute.xlu0 %v706
      %709 = vperm.xlu0 %708, %v704
      %v710 = vpop.permute.xlu0 %709
      %v711 = vlaneseq
      %v712 = vshrl.u32 %v711, 7
      %v713 = vadd.s32 %v712, 8
      %714 = vset.pattern.permute.xlu0 %v713
      %715 = vperm.xlu0 %714, %v704
      %v716 = vpop.permute.xlu0 %715
      %v717 = vlaneseq
      %v718 = vshrl.u32 %v717, 7
      %v719 = vadd.s32 %v718, 16
      %720 = vset.pattern.permute.xlu0 %v719
      %721 = vperm.xlu0 %720, %v704
      %v722 = vpop.permute.xlu0 %721
      %v723 = vlaneseq
      %v724 = vshrl.u32 %v723, 7
      %v725 = vadd.s32 %v724, 24
      %726 = vset.pattern.permute.xlu0 %v725
      %727 = vperm.xlu0 %726, %v704
      %v728 = vpop.permute.xlu0 %727
      %v729 = vlaneseq
      %v730 = vshrl.u32 %v729, 7
      %v731 = vadd.s32 %v730, 32
      %732 = vset.pattern.permute.xlu0 %v731
      %733 = vperm.xlu0 %732, %v704
      %v734 = vpop.permute.xlu0 %733
      %v735 = vlaneseq
      %v736 = vshrl.u32 %v735, 7
      %v737 = vadd.s32 %v736, 40
      %738 = vset.pattern.permute.xlu0 %v737
      %739 = vperm.xlu0 %738, %v704
      %v740 = vpop.permute.xlu0 %739
      %v741 = vlaneseq
      %v742 = vshrl.u32 %v741, 7
      %v743 = vadd.s32 %v742, 48
      %744 = vset.pattern.permute.xlu0 %v743
      %745 = vperm.xlu0 %744, %v704
      %v746 = vpop.permute.xlu0 %745
      %v747 = vlaneseq
      %v748 = vshrl.u32 %v747, 7
      %v749 = vadd.s32 %v748, 56
      %750 = vset.pattern.permute.xlu0 %v749
      %751 = vperm.xlu0 %750, %v704
      %v752 = vpop.permute.xlu0 %751
      %v753 = vlaneseq
      %v754 = vshrl.u32 %v753, 7
      %v755 = vadd.s32 %v754, 64
      %756 = vset.pattern.permute.xlu0 %v755
      %757 = vperm.xlu0 %756, %v704
      %v758 = vpop.permute.xlu0 %757
      %v759 = vlaneseq
      %v760 = vshrl.u32 %v759, 7
      %v761 = vadd.s32 %v760, 72
      %762 = vset.pattern.permute.xlu0 %v761
      %763 = vperm.xlu0 %762, %v704
      %v764 = vpop.permute.xlu0 %763
      %v765 = vlaneseq
      %v766 = vshrl.u32 %v765, 7
      %v767 = vadd.s32 %v766, 80
      %768 = vset.pattern.permute.xlu0 %v767
      %769 = vperm.xlu0 %768, %v704
      %v770 = vpop.permute.xlu0 %769
      %v771 = vlaneseq
      %v772 = vshrl.u32 %v771, 7
      %v773 = vadd.s32 %v772, 88
      %774 = vset.pattern.permute.xlu0 %v773
      %775 = vperm.xlu0 %774, %v704
      %v776 = vpop.permute.xlu0 %775
      %v777 = vlaneseq
      %v778 = vshrl.u32 %v777, 7
      %v779 = vadd.s32 %v778, 96
      %780 = vset.pattern.permute.xlu0 %v779
      %781 = vperm.xlu0 %780, %v704
      %v782 = vpop.permute.xlu0 %781
      %v783 = vlaneseq
      %v784 = vshrl.u32 %v783, 7
      %v785 = vadd.s32 %v784, 104
      %786 = vset.pattern.permute.xlu0 %v785
      %787 = vperm.xlu0 %786, %v704
      %v788 = vpop.permute.xlu0 %787
      %v789 = vlaneseq
      %v790 = vshrl.u32 %v789, 7
      %v791 = vadd.s32 %v790, 112
      %792 = vset.pattern.permute.xlu0 %v791
      %793 = vperm.xlu0 %792, %v704
      %v794 = vpop.permute.xlu0 %793
      %v795 = vlaneseq
      %v796 = vshrl.u32 %v795, 7
      %v797 = vadd.s32 %v796, 120
      %798 = vset.pattern.permute.xlu0 %v797
      %799 = vperm.xlu0 %798, %v704
      %v800 = vpop.permute.xlu0 %799
      %v803 = vrot.slane %v564, 7
      %vm804 = vcmask 1040384
      %v805 = vsel %vm804, %v551, %v803
      %vm806 = vcmask 1041409
      %v807 = vsel %vm806, %v551, %v803
      %v808 = vrot.slane %v807, 1
      %v809 = vperm.slane %v805, 0
      %v810 = vperm.slane %v805, 1
      %v811 = vperm.slane %v808, 0
      %v812 = vperm.slane %v808, 1
      %v817 = vadd.f32 %v613, %v809
      %v818 = vadd.f32 %v613, %v810
      %v819 = vadd.f32 %v619, %v809
      %v820 = vadd.f32 %v619, %v810
      %v821 = vadd.f32 %v625, %v809
      %v822 = vadd.f32 %v625, %v810
      %v823 = vadd.f32 %v631, %v809
      %v824 = vadd.f32 %v631, %v810
      %v825 = vadd.f32 %v637, %v809
      %v826 = vadd.f32 %v637, %v810
      %v827 = vadd.f32 %v643, %v809
      %v828 = vadd.f32 %v643, %v810
      %v829 = vadd.f32 %v649, %v809
      %v830 = vadd.f32 %v649, %v810
      %v831 = vadd.f32 %v655, %v809
      %v832 = vadd.f32 %v655, %v810
      %v833 = vadd.f32 %v661, %v809
      %v834 = vadd.f32 %v661, %v810
      %v835 = vadd.f32 %v667, %v809
      %v836 = vadd.f32 %v667, %v810
      %v837 = vadd.f32 %v673, %v809
      %v838 = vadd.f32 %v673, %v810
      %v839 = vadd.f32 %v679, %v809
      %v840 = vadd.f32 %v679, %v810
      %v841 = vadd.f32 %v685, %v809
      %v842 = vadd.f32 %v685, %v810
      %v843 = vadd.f32 %v691, %v809
      %v844 = vadd.f32 %v691, %v810
      %v845 = vadd.f32 %v697, %v809
      %v846 = vadd.f32 %v697, %v810
      %v847 = vadd.f32 %v703, %v809
      %v848 = vadd.f32 %v703, %v810
      %v849 = vadd.f32 %v710, %v811
      %v850 = vadd.f32 %v710, %v812
      %v851 = vadd.f32 %v716, %v811
      %v852 = vadd.f32 %v716, %v812
      %v853 = vadd.f32 %v722, %v811
      %v854 = vadd.f32 %v722, %v812
      %v855 = vadd.f32 %v728, %v811
      %v856 = vadd.f32 %v728, %v812
      %v857 = vadd.f32 %v734, %v811
      %v858 = vadd.f32 %v734, %v812
      %v859 = vadd.f32 %v740, %v811
      %v860 = vadd.f32 %v740, %v812
      %v861 = vadd.f32 %v746, %v811
      %v862 = vadd.f32 %v746, %v812
      %v863 = vadd.f32 %v752, %v811
      %v864 = vadd.f32 %v752, %v812
      %v865 = vadd.f32 %v758, %v811
      %v866 = vadd.f32 %v758, %v812
      %v867 = vadd.f32 %v764, %v811
      %v868 = vadd.f32 %v764, %v812
      %v869 = vadd.f32 %v770, %v811
      %v870 = vadd.f32 %v770, %v812
      %v871 = vadd.f32 %v776, %v811
      %v872 = vadd.f32 %v776, %v812
      %v873 = vadd.f32 %v782, %v811
      %v874 = vadd.f32 %v782, %v812
      %v875 = vadd.f32 %v788, %v811
      %v876 = vadd.f32 %v788, %v812
      %v877 = vadd.f32 %v794, %v811
      %v878 = vadd.f32 %v794, %v812
      %v879 = vadd.f32 %v800, %v811
      %v880 = vadd.f32 %v800, %v812
      %v881 = vmul.f32 %v817, 0.2
      %v882 = vmul.f32 %v818, 0.2
      %v883 = vmul.f32 %v819, 0.2
      %v884 = vmul.f32 %v820, 0.2
      %v885 = vmul.f32 %v821, 0.2
      %v886 = vmul.f32 %v822, 0.2
      %v887 = vmul.f32 %v823, 0.2
      %v888 = vmul.f32 %v824, 0.2
      %v889 = vmul.f32 %v825, 0.2
      %v890 = vmul.f32 %v826, 0.2
      %v891 = vmul.f32 %v827, 0.2
      %v892 = vmul.f32 %v828, 0.2
      %v893 = vmul.f32 %v829, 0.2
      %v894 = vmul.f32 %v830, 0.2
      %v895 = vmul.f32 %v831, 0.2
      %v896 = vmul.f32 %v832, 0.2
      %v897 = vmul.f32 %v833, 0.2
      %v898 = vmul.f32 %v834, 0.2
      %v899 = vmul.f32 %v835, 0.2
      %v900 = vmul.f32 %v836, 0.2
      %v901 = vmul.f32 %v837, 0.2
      %v902 = vmul.f32 %v838, 0.2
      %v903 = vmul.f32 %v839, 0.2
      %v904 = vmul.f32 %v840, 0.2
      %v905 = vmul.f32 %v841, 0.2
      %v906 = vmul.f32 %v842, 0.2
      %v907 = vmul.f32 %v843, 0.2
      %v908 = vmul.f32 %v844, 0.2
      %v909 = vmul.f32 %v845, 0.2
      %v910 = vmul.f32 %v846, 0.2
      %v911 = vmul.f32 %v847, 0.2
      %v912 = vmul.f32 %v848, 0.2
      %v913 = vmul.f32 %v849, 0.2
      %v914 = vmul.f32 %v850, 0.2
      %v915 = vmul.f32 %v851, 0.2
      %v916 = vmul.f32 %v852, 0.2
      %v917 = vmul.f32 %v853, 0.2
      %v918 = vmul.f32 %v854, 0.2
      %v919 = vmul.f32 %v855, 0.2
      %v920 = vmul.f32 %v856, 0.2
      %v921 = vmul.f32 %v857, 0.2
      %v922 = vmul.f32 %v858, 0.2
      %v923 = vmul.f32 %v859, 0.2
      %v924 = vmul.f32 %v860, 0.2
      %v925 = vmul.f32 %v861, 0.2
      %v926 = vmul.f32 %v862, 0.2
      %v927 = vmul.f32 %v863, 0.2
      %v928 = vmul.f32 %v864, 0.2
      %v929 = vmul.f32 %v865, 0.2
      %v930 = vmul.f32 %v866, 0.2
      %v931 = vmul.f32 %v867, 0.2
      %v932 = vmul.f32 %v868, 0.2
      %v933 = vmul.f32 %v869, 0.2
      %v934 = vmul.f32 %v870, 0.2
      %v935 = vmul.f32 %v871, 0.2
      %v936 = vmul.f32 %v872, 0.2
      %v937 = vmul.f32 %v873, 0.2
      %v938 = vmul.f32 %v874, 0.2
      %v939 = vmul.f32 %v875, 0.2
      %v940 = vmul.f32 %v876, 0.2
      %v941 = vmul.f32 %v877, 0.2
      %v942 = vmul.f32 %v878, 0.2
      %v943 = vmul.f32 %v879, 0.2
      %v944 = vmul.f32 %v880, 0.2
      %v945 = vmax.f32 %v817, %v881
      %v946 = vmax.f32 %v818, %v882
      %v947 = vmax.f32 %v819, %v883
      %v948 = vmax.f32 %v820, %v884
      %v949 = vmax.f32 %v821, %v885
      %v950 = vmax.f32 %v822, %v886
      %v951 = vmax.f32 %v823, %v887
      %v952 = vmax.f32 %v824, %v888
      %v953 = vmax.f32 %v825, %v889
      %v954 = vmax.f32 %v826, %v890
      %v955 = vmax.f32 %v827, %v891
      %v956 = vmax.f32 %v828, %v892
      %v957 = vmax.f32 %v829, %v893
      %v958 = vmax.f32 %v830, %v894
      %v959 = vmax.f32 %v831, %v895
      %v960 = vmax.f32 %v832, %v896
      %v961 = vmax.f32 %v833, %v897
      %v962 = vmax.f32 %v834, %v898
      %v963 = vmax.f32 %v835, %v899
      %v964 = vmax.f32 %v836, %v900
      %v965 = vmax.f32 %v837, %v901
      %v966 = vmax.f32 %v838, %v902
      %v967 = vmax.f32 %v839, %v903
      %v968 = vmax.f32 %v840, %v904
      %v969 = vmax.f32 %v841, %v905
      %v970 = vmax.f32 %v842, %v906
      %v971 = vmax.f32 %v843, %v907
      %v972 = vmax.f32 %v844, %v908
      %v973 = vmax.f32 %v845, %v909
      %v974 = vmax.f32 %v846, %v910
      %v975 = vmax.f32 %v847, %v911
      %v976 = vmax.f32 %v848, %v912
      %v977 = vmax.f32 %v849, %v913
      %v978 = vmax.f32 %v850, %v914
      %v979 = vmax.f32 %v851, %v915
      %v980 = vmax.f32 %v852, %v916
      %v981 = vmax.f32 %v853, %v917
      %v982 = vmax.f32 %v854, %v918
      %v983 = vmax.f32 %v855, %v919
      %v984 = vmax.f32 %v856, %v920
      %v985 = vmax.f32 %v857, %v921
      %v986 = vmax.f32 %v858, %v922
      %v987 = vmax.f32 %v859, %v923
      %v988 = vmax.f32 %v860, %v924
      %v989 = vmax.f32 %v861, %v925
      %v990 = vmax.f32 %v862, %v926
      %v991 = vmax.f32 %v863, %v927
      %v992 = vmax.f32 %v864, %v928
      %v993 = vmax.f32 %v865, %v929
      %v994 = vmax.f32 %v866, %v930
      %v995 = vmax.f32 %v867, %v931
      %v996 = vmax.f32 %v868, %v932
      %v997 = vmax.f32 %v869, %v933
      %v998 = vmax.f32 %v870, %v934
      %v999 = vmax.f32 %v871, %v935
      %v1000 = vmax.f32 %v872, %v936
      %v1001 = vmax.f32 %v873, %v937
      %v1002 = vmax.f32 %v874, %v938
      %v1003 = vmax.f32 %v875, %v939
      %v1004 = vmax.f32 %v876, %v940
      %v1005 = vmax.f32 %v877, %v941
      %v1006 = vmax.f32 %v878, %v942
      %v1007 = vmax.f32 %v879, %v943
      %v1008 = vmax.f32 %v880, %v944
      %v1009 = vadd.f32 %v945, %v276
      %v1010 = vadd.f32 %v946, %v277
      %v1011 = vadd.f32 %v947, %v278
      %v1012 = vadd.f32 %v948, %v279
      %v1013 = vadd.f32 %v949, %v280
      %v1014 = vadd.f32 %v950, %v281
      %v1015 = vadd.f32 %v951, %v282
      %v1016 = vadd.f32 %v952, %v283
      %v1017 = vadd.f32 %v953, %v284
      %v1018 = vadd.f32 %v954, %v285
      %v1019 = vadd.f32 %v955, %v286
      %v1020 = vadd.f32 %v956, %v287
      %v1021 = vadd.f32 %v957, %v288
      %v1022 = vadd.f32 %v958, %v289
      %v1023 = vadd.f32 %v959, %v290
      %v1024 = vadd.f32 %v960, %v291
      %v1025 = vadd.f32 %v961, %v292
      %v1026 = vadd.f32 %v962, %v293
      %v1027 = vadd.f32 %v963, %v294
      %v1028 = vadd.f32 %v964, %v295
      %v1029 = vadd.f32 %v965, %v296
      %v1030 = vadd.f32 %v966, %v297
      %v1031 = vadd.f32 %v967, %v298
      %v1032 = vadd.f32 %v968, %v299
      %v1033 = vadd.f32 %v969, %v300
      %v1034 = vadd.f32 %v970, %v301
      %v1035 = vadd.f32 %v971, %v302
      %v1036 = vadd.f32 %v972, %v303
      %v1037 = vadd.f32 %v973, %v304
      %v1038 = vadd.f32 %v974, %v305
      %v1039 = vadd.f32 %v975, %v306
      %v1040 = vadd.f32 %v976, %v307
      %v1041 = vadd.f32 %v977, %v276
      %v1042 = vadd.f32 %v978, %v277
      %v1043 = vadd.f32 %v979, %v278
      %v1044 = vadd.f32 %v980, %v279
      %v1045 = vadd.f32 %v981, %v280
      %v1046 = vadd.f32 %v982, %v281
      %v1047 = vadd.f32 %v983, %v282
      %v1048 = vadd.f32 %v984, %v283
      %v1049 = vadd.f32 %v985, %v284
      %v1050 = vadd.f32 %v986, %v285
      %v1051 = vadd.f32 %v987, %v286
      %v1052 = vadd.f32 %v988, %v287
      %v1053 = vadd.f32 %v989, %v288
      %v1054 = vadd.f32 %v990, %v289
      %v1055 = vadd.f32 %v991, %v290
      %v1056 = vadd.f32 %v992, %v291
      %v1057 = vadd.f32 %v993, %v292
      %v1058 = vadd.f32 %v994, %v293
      %v1059 = vadd.f32 %v995, %v294
      %v1060 = vadd.f32 %v996, %v295
      %v1061 = vadd.f32 %v997, %v296
      %v1062 = vadd.f32 %v998, %v297
      %v1063 = vadd.f32 %v999, %v298
      %v1064 = vadd.f32 %v1000, %v299
      %v1065 = vadd.f32 %v1001, %v300
      %v1066 = vadd.f32 %v1002, %v301
      %v1067 = vadd.f32 %v1003, %v302
      %v1068 = vadd.f32 %v1004, %v303
      %v1069 = vadd.f32 %v1005, %v304
      %v1070 = vadd.f32 %v1006, %v305
      %v1071 = vadd.f32 %v1007, %v306
      %v1072 = vadd.f32 %v1008, %v307
      %v1073 = vmax.f32 %v1009, %v1010
      %1074 = vmax.xlane.f32.xlu0 %v1073
      %v1075 = vpop.xlane.xlu0 %1074
      %v1076 = vmax.f32 %v1011, %v1012
      %1077 = vmax.xlane.f32.xlu0 %v1076
      %v1078 = vpop.xlane.xlu0 %1077
      %v1079 = vmax.f32 %v1013, %v1014
      %1080 = vmax.xlane.f32.xlu0 %v1079
      %v1081 = vpop.xlane.xlu0 %1080
      %v1082 = vmax.f32 %v1015, %v1016
      %1083 = vmax.xlane.f32.xlu0 %v1082
      %v1084 = vpop.xlane.xlu0 %1083
      %v1085 = vmax.f32 %v1017, %v1018
      %1086 = vmax.xlane.f32.xlu0 %v1085
      %v1087 = vpop.xlane.xlu0 %1086
      %v1088 = vmax.f32 %v1019, %v1020
      %1089 = vmax.xlane.f32.xlu0 %v1088
      %v1090 = vpop.xlane.xlu0 %1089
      %v1091 = vmax.f32 %v1021, %v1022
      %1092 = vmax.xlane.f32.xlu0 %v1091
      %v1093 = vpop.xlane.xlu0 %1092
      %v1094 = vmax.f32 %v1023, %v1024
      %1095 = vmax.xlane.f32.xlu0 %v1094
      %v1096 = vpop.xlane.xlu0 %1095
      %v1097 = vmax.f32 %v1025, %v1026
      %1098 = vmax.xlane.f32.xlu0 %v1097
      %v1099 = vpop.xlane.xlu0 %1098
      %v1100 = vmax.f32 %v1027, %v1028
      %1101 = vmax.xlane.f32.xlu0 %v1100
      %v1102 = vpop.xlane.xlu0 %1101
      %v1103 = vmax.f32 %v1029, %v1030
      %1104 = vmax.xlane.f32.xlu0 %v1103
      %v1105 = vpop.xlane.xlu0 %1104
      %v1106 = vmax.f32 %v1031, %v1032
      %1107 = vmax.xlane.f32.xlu0 %v1106
      %v1108 = vpop.xlane.xlu0 %1107
      %v1109 = vmax.f32 %v1033, %v1034
      %1110 = vmax.xlane.f32.xlu0 %v1109
      %v1111 = vpop.xlane.xlu0 %1110
      %v1112 = vmax.f32 %v1035, %v1036
      %1113 = vmax.xlane.f32.xlu0 %v1112
      %v1114 = vpop.xlane.xlu0 %1113
      %v1115 = vmax.f32 %v1037, %v1038
      %1116 = vmax.xlane.f32.xlu0 %v1115
      %v1117 = vpop.xlane.xlu0 %1116
      %v1118 = vmax.f32 %v1039, %v1040
      %1119 = vmax.xlane.f32.xlu0 %v1118
      %v1120 = vpop.xlane.xlu0 %1119
      %v1121 = vmax.f32 %v1041, %v1042
      %1122 = vmax.xlane.f32.xlu0 %v1121
      %v1123 = vpop.xlane.xlu0 %1122
      %v1124 = vmax.f32 %v1043, %v1044
      %1125 = vmax.xlane.f32.xlu0 %v1124
      %v1126 = vpop.xlane.xlu0 %1125
      %v1127 = vmax.f32 %v1045, %v1046
      %1128 = vmax.xlane.f32.xlu0 %v1127
      %v1129 = vpop.xlane.xlu0 %1128
      %v1130 = vmax.f32 %v1047, %v1048
      %1131 = vmax.xlane.f32.xlu0 %v1130
      %v1132 = vpop.xlane.xlu0 %1131
      %v1133 = vmax.f32 %v1049, %v1050
      %1134 = vmax.xlane.f32.xlu0 %v1133
      %v1135 = vpop.xlane.xlu0 %1134
      %v1136 = vmax.f32 %v1051, %v1052
      %1137 = vmax.xlane.f32.xlu0 %v1136
      %v1138 = vpop.xlane.xlu0 %1137
      %v1139 = vmax.f32 %v1053, %v1054
      %1140 = vmax.xlane.f32.xlu0 %v1139
      %v1141 = vpop.xlane.xlu0 %1140
      %v1142 = vmax.f32 %v1055, %v1056
      %1143 = vmax.xlane.f32.xlu0 %v1142
      %v1144 = vpop.xlane.xlu0 %1143
      %v1145 = vmax.f32 %v1057, %v1058
      %1146 = vmax.xlane.f32.xlu0 %v1145
      %v1147 = vpop.xlane.xlu0 %1146
      %v1148 = vmax.f32 %v1059, %v1060
      %1149 = vmax.xlane.f32.xlu0 %v1148
      %v1150 = vpop.xlane.xlu0 %1149
      %v1151 = vmax.f32 %v1061, %v1062
      %1152 = vmax.xlane.f32.xlu0 %v1151
      %v1153 = vpop.xlane.xlu0 %1152
      %v1154 = vmax.f32 %v1063, %v1064
      %1155 = vmax.xlane.f32.xlu0 %v1154
      %v1156 = vpop.xlane.xlu0 %1155
      %v1157 = vmax.f32 %v1065, %v1066
      %1158 = vmax.xlane.f32.xlu0 %v1157
      %v1159 = vpop.xlane.xlu0 %1158
      %v1160 = vmax.f32 %v1067, %v1068
      %1161 = vmax.xlane.f32.xlu0 %v1160
      %v1162 = vpop.xlane.xlu0 %1161
      %v1163 = vmax.f32 %v1069, %v1070
      %1164 = vmax.xlane.f32.xlu0 %v1163
      %v1165 = vpop.xlane.xlu0 %1164
      %v1166 = vmax.f32 %v1071, %v1072
      %1167 = vmax.xlane.f32.xlu0 %v1166
      %v1168 = vpop.xlane.xlu0 %1167
      %v1169 = vmax.f32 %v1075, -5e+29
      %v1170 = vmax.f32 %v1078, -5e+29
      %v1171 = vmax.f32 %v1081, -5e+29
      %v1172 = vmax.f32 %v1084, -5e+29
      %v1173 = vmax.f32 %v1087, -5e+29
      %v1174 = vmax.f32 %v1090, -5e+29
      %v1175 = vmax.f32 %v1093, -5e+29
      %v1176 = vmax.f32 %v1096, -5e+29
      %v1177 = vmax.f32 %v1099, -5e+29
      %v1178 = vmax.f32 %v1102, -5e+29
      %v1179 = vmax.f32 %v1105, -5e+29
      %v1180 = vmax.f32 %v1108, -5e+29
      %v1181 = vmax.f32 %v1111, -5e+29
      %v1182 = vmax.f32 %v1114, -5e+29
      %v1183 = vmax.f32 %v1117, -5e+29
      %v1184 = vmax.f32 %v1120, -5e+29
      %v1185 = vmax.f32 %v1123, -5e+29
      %v1186 = vmax.f32 %v1126, -5e+29
      %v1187 = vmax.f32 %v1129, -5e+29
      %v1188 = vmax.f32 %v1132, -5e+29
      %v1189 = vmax.f32 %v1135, -5e+29
      %v1190 = vmax.f32 %v1138, -5e+29
      %v1191 = vmax.f32 %v1141, -5e+29
      %v1192 = vmax.f32 %v1144, -5e+29
      %v1193 = vmax.f32 %v1147, -5e+29
      %v1194 = vmax.f32 %v1150, -5e+29
      %v1195 = vmax.f32 %v1153, -5e+29
      %v1196 = vmax.f32 %v1156, -5e+29
      %v1197 = vmax.f32 %v1159, -5e+29
      %v1198 = vmax.f32 %v1162, -5e+29
      %v1199 = vmax.f32 %v1165, -5e+29
      %v1200 = vmax.f32 %v1168, -5e+29
      %v1201 = vsub.f32 %v1009, %v1169
      %v1202 = vsub.f32 %v1010, %v1169
      %v1203 = vsub.f32 %v1011, %v1170
      %v1204 = vsub.f32 %v1012, %v1170
      %v1205 = vsub.f32 %v1013, %v1171
      %v1206 = vsub.f32 %v1014, %v1171
      %v1207 = vsub.f32 %v1015, %v1172
      %v1208 = vsub.f32 %v1016, %v1172
      %v1209 = vsub.f32 %v1017, %v1173
      %v1210 = vsub.f32 %v1018, %v1173
      %v1211 = vsub.f32 %v1019, %v1174
      %v1212 = vsub.f32 %v1020, %v1174
      %v1213 = vsub.f32 %v1021, %v1175
      %v1214 = vsub.f32 %v1022, %v1175
      %v1215 = vsub.f32 %v1023, %v1176
      %v1216 = vsub.f32 %v1024, %v1176
      %v1217 = vsub.f32 %v1025, %v1177
      %v1218 = vsub.f32 %v1026, %v1177
      %v1219 = vsub.f32 %v1027, %v1178
      %v1220 = vsub.f32 %v1028, %v1178
      %v1221 = vsub.f32 %v1029, %v1179
      %v1222 = vsub.f32 %v1030, %v1179
      %v1223 = vsub.f32 %v1031, %v1180
      %v1224 = vsub.f32 %v1032, %v1180
      %v1225 = vsub.f32 %v1033, %v1181
      %v1226 = vsub.f32 %v1034, %v1181
      %v1227 = vsub.f32 %v1035, %v1182
      %v1228 = vsub.f32 %v1036, %v1182
      %v1229 = vsub.f32 %v1037, %v1183
      %v1230 = vsub.f32 %v1038, %v1183
      %v1231 = vsub.f32 %v1039, %v1184
      %v1232 = vsub.f32 %v1040, %v1184
      %v1233 = vsub.f32 %v1041, %v1185
      %v1234 = vsub.f32 %v1042, %v1185
      %v1235 = vsub.f32 %v1043, %v1186
      %v1236 = vsub.f32 %v1044, %v1186
      %v1237 = vsub.f32 %v1045, %v1187
      %v1238 = vsub.f32 %v1046, %v1187
      %v1239 = vsub.f32 %v1047, %v1188
      %v1240 = vsub.f32 %v1048, %v1188
      %v1241 = vsub.f32 %v1049, %v1189
      %v1242 = vsub.f32 %v1050, %v1189
      %v1243 = vsub.f32 %v1051, %v1190
      %v1244 = vsub.f32 %v1052, %v1190
      %v1245 = vsub.f32 %v1053, %v1191
      %v1246 = vsub.f32 %v1054, %v1191
      %v1247 = vsub.f32 %v1055, %v1192
      %v1248 = vsub.f32 %v1056, %v1192
      %v1249 = vsub.f32 %v1057, %v1193
      %v1250 = vsub.f32 %v1058, %v1193
      %v1251 = vsub.f32 %v1059, %v1194
      %v1252 = vsub.f32 %v1060, %v1194
      %v1253 = vsub.f32 %v1061, %v1195
      %v1254 = vsub.f32 %v1062, %v1195
      %v1255 = vsub.f32 %v1063, %v1196
      %v1256 = vsub.f32 %v1064, %v1196
      %v1257 = vsub.f32 %v1065, %v1197
      %v1258 = vsub.f32 %v1066, %v1197
      %v1259 = vsub.f32 %v1067, %v1198
      %v1260 = vsub.f32 %v1068, %v1198
      %v1261 = vsub.f32 %v1069, %v1199
      %v1262 = vsub.f32 %v1070, %v1199
      %v1263 = vsub.f32 %v1071, %v1200
      %v1264 = vsub.f32 %v1072, %v1200
      %v1265 = vmul.f32 %v1201, 1.442695
      %v1266 = vpow.pop %v1265
      %v1267 = vmul.f32 %v1202, 1.442695
      %v1268 = vpow.pop %v1267
      %v1269 = vmul.f32 %v1203, 1.442695
      %v1270 = vpow.pop %v1269
      %v1271 = vmul.f32 %v1204, 1.442695
      %v1272 = vpow.pop %v1271
      %v1273 = vmul.f32 %v1205, 1.442695
      %v1274 = vpow.pop %v1273
      %v1275 = vmul.f32 %v1206, 1.442695
      %v1276 = vpow.pop %v1275
      %v1277 = vmul.f32 %v1207, 1.442695
      %v1278 = vpow.pop %v1277
      %v1279 = vmul.f32 %v1208, 1.442695
      %v1280 = vpow.pop %v1279
      %v1281 = vmul.f32 %v1209, 1.442695
      %v1282 = vpow.pop %v1281
      %v1283 = vmul.f32 %v1210, 1.442695
      %v1284 = vpow.pop %v1283
      %v1285 = vmul.f32 %v1211, 1.442695
      %v1286 = vpow.pop %v1285
      %v1287 = vmul.f32 %v1212, 1.442695
      %v1288 = vpow.pop %v1287
      %v1289 = vmul.f32 %v1213, 1.442695
      %v1290 = vpow.pop %v1289
      %v1291 = vmul.f32 %v1214, 1.442695
      %v1292 = vpow.pop %v1291
      %v1293 = vmul.f32 %v1215, 1.442695
      %v1294 = vpow.pop %v1293
      %v1295 = vmul.f32 %v1216, 1.442695
      %v1296 = vpow.pop %v1295
      %v1297 = vmul.f32 %v1217, 1.442695
      %v1298 = vpow.pop %v1297
      %v1299 = vmul.f32 %v1218, 1.442695
      %v1300 = vpow.pop %v1299
      %v1301 = vmul.f32 %v1219, 1.442695
      %v1302 = vpow.pop %v1301
      %v1303 = vmul.f32 %v1220, 1.442695
      %v1304 = vpow.pop %v1303
      %v1305 = vmul.f32 %v1221, 1.442695
      %v1306 = vpow.pop %v1305
      %v1307 = vmul.f32 %v1222, 1.442695
      %v1308 = vpow.pop %v1307
      %v1309 = vmul.f32 %v1223, 1.442695
      %v1310 = vpow.pop %v1309
      %v1311 = vmul.f32 %v1224, 1.442695
      %v1312 = vpow.pop %v1311
      %v1313 = vmul.f32 %v1225, 1.442695
      %v1314 = vpow.pop %v1313
      %v1315 = vmul.f32 %v1226, 1.442695
      %v1316 = vpow.pop %v1315
      %v1317 = vmul.f32 %v1227, 1.442695
      %v1318 = vpow.pop %v1317
      %v1319 = vmul.f32 %v1228, 1.442695
      %v1320 = vpow.pop %v1319
      %v1321 = vmul.f32 %v1229, 1.442695
      %v1322 = vpow.pop %v1321
      %v1323 = vmul.f32 %v1230, 1.442695
      %v1324 = vpow.pop %v1323
      %v1325 = vmul.f32 %v1231, 1.442695
      %v1326 = vpow.pop %v1325
      %v1327 = vmul.f32 %v1232, 1.442695
      %v1328 = vpow.pop %v1327
      %v1329 = vmul.f32 %v1233, 1.442695
      %v1330 = vpow.pop %v1329
      %v1331 = vmul.f32 %v1234, 1.442695
      %v1332 = vpow.pop %v1331
      %v1333 = vmul.f32 %v1235, 1.442695
      %v1334 = vpow.pop %v1333
      %v1335 = vmul.f32 %v1236, 1.442695
      %v1336 = vpow.pop %v1335
      %v1337 = vmul.f32 %v1237, 1.442695
      %v1338 = vpow.pop %v1337
      %v1339 = vmul.f32 %v1238, 1.442695
      %v1340 = vpow.pop %v1339
      %v1341 = vmul.f32 %v1239, 1.442695
      %v1342 = vpow.pop %v1341
      %v1343 = vmul.f32 %v1240, 1.442695
      %v1344 = vpow.pop %v1343
      %v1345 = vmul.f32 %v1241, 1.442695
      %v1346 = vpow.pop %v1345
      %v1347 = vmul.f32 %v1242, 1.442695
      %v1348 = vpow.pop %v1347
      %v1349 = vmul.f32 %v1243, 1.442695
      %v1350 = vpow.pop %v1349
      %v1351 = vmul.f32 %v1244, 1.442695
      %v1352 = vpow.pop %v1351
      %v1353 = vmul.f32 %v1245, 1.442695
      %v1354 = vpow.pop %v1353
      %v1355 = vmul.f32 %v1246, 1.442695
      %v1356 = vpow.pop %v1355
      %v1357 = vmul.f32 %v1247, 1.442695
      %v1358 = vpow.pop %v1357
      %v1359 = vmul.f32 %v1248, 1.442695
      %v1360 = vpow.pop %v1359
      %v1361 = vmul.f32 %v1249, 1.442695
      %v1362 = vpow.pop %v1361
      %v1363 = vmul.f32 %v1250, 1.442695
      %v1364 = vpow.pop %v1363
      %v1365 = vmul.f32 %v1251, 1.442695
      %v1366 = vpow.pop %v1365
      %v1367 = vmul.f32 %v1252, 1.442695
      %v1368 = vpow.pop %v1367
      %v1369 = vmul.f32 %v1253, 1.442695
      %v1370 = vpow.pop %v1369
      %v1371 = vmul.f32 %v1254, 1.442695
      %v1372 = vpow.pop %v1371
      %v1373 = vmul.f32 %v1255, 1.442695
      %v1374 = vpow.pop %v1373
      %v1375 = vmul.f32 %v1256, 1.442695
      %v1376 = vpow.pop %v1375
      %v1377 = vmul.f32 %v1257, 1.442695
      %v1378 = vpow.pop %v1377
      %v1379 = vmul.f32 %v1258, 1.442695
      %v1380 = vpow.pop %v1379
      %v1381 = vmul.f32 %v1259, 1.442695
      %v1382 = vpow.pop %v1381
      %v1383 = vmul.f32 %v1260, 1.442695
      %v1384 = vpow.pop %v1383
      %v1385 = vmul.f32 %v1261, 1.442695
      %v1386 = vpow.pop %v1385
      %v1387 = vmul.f32 %v1262, 1.442695
      %v1388 = vpow.pop %v1387
      %v1389 = vmul.f32 %v1263, 1.442695
      %v1390 = vpow.pop %v1389
      %v1391 = vmul.f32 %v1264, 1.442695
      %v1392 = vpow.pop %v1391
      %v1393 = vadd.f32 %v1266, %v1268
      %1394 = vadd.xlane.f32.xlu0 %v1393
      %v1395 = vpop.xlane.xlu0 %1394
      %v1396 = vadd.f32 %v1270, %v1272
      %1397 = vadd.xlane.f32.xlu0 %v1396
      %v1398 = vpop.xlane.xlu0 %1397
      %v1399 = vadd.f32 %v1274, %v1276
      %1400 = vadd.xlane.f32.xlu0 %v1399
      %v1401 = vpop.xlane.xlu0 %1400
      %v1402 = vadd.f32 %v1278, %v1280
      %1403 = vadd.xlane.f32.xlu0 %v1402
      %v1404 = vpop.xlane.xlu0 %1403
      %v1405 = vadd.f32 %v1282, %v1284
      %1406 = vadd.xlane.f32.xlu0 %v1405
      %v1407 = vpop.xlane.xlu0 %1406
      %v1408 = vadd.f32 %v1286, %v1288
      %1409 = vadd.xlane.f32.xlu0 %v1408
      %v1410 = vpop.xlane.xlu0 %1409
      %v1411 = vadd.f32 %v1290, %v1292
      %1412 = vadd.xlane.f32.xlu0 %v1411
      %v1413 = vpop.xlane.xlu0 %1412
      %v1414 = vadd.f32 %v1294, %v1296
      %1415 = vadd.xlane.f32.xlu0 %v1414
      %v1416 = vpop.xlane.xlu0 %1415
      %v1417 = vadd.f32 %v1298, %v1300
      %1418 = vadd.xlane.f32.xlu0 %v1417
      %v1419 = vpop.xlane.xlu0 %1418
      %v1420 = vadd.f32 %v1302, %v1304
      %1421 = vadd.xlane.f32.xlu0 %v1420
      %v1422 = vpop.xlane.xlu0 %1421
      %v1423 = vadd.f32 %v1306, %v1308
      %1424 = vadd.xlane.f32.xlu0 %v1423
      %v1425 = vpop.xlane.xlu0 %1424
      %v1426 = vadd.f32 %v1310, %v1312
      %1427 = vadd.xlane.f32.xlu0 %v1426
      %v1428 = vpop.xlane.xlu0 %1427
      %v1429 = vadd.f32 %v1314, %v1316
      %1430 = vadd.xlane.f32.xlu0 %v1429
      %v1431 = vpop.xlane.xlu0 %1430
      %v1432 = vadd.f32 %v1318, %v1320
      %1433 = vadd.xlane.f32.xlu0 %v1432
      %v1434 = vpop.xlane.xlu0 %1433
      %v1435 = vadd.f32 %v1322, %v1324
      %1436 = vadd.xlane.f32.xlu0 %v1435
      %v1437 = vpop.xlane.xlu0 %1436
      %v1438 = vadd.f32 %v1326, %v1328
      %1439 = vadd.xlane.f32.xlu0 %v1438
      %v1440 = vpop.xlane.xlu0 %1439
      %v1441 = vadd.f32 %v1330, %v1332
      %1442 = vadd.xlane.f32.xlu0 %v1441
      %v1443 = vpop.xlane.xlu0 %1442
      %v1444 = vadd.f32 %v1334, %v1336
      %1445 = vadd.xlane.f32.xlu0 %v1444
      %v1446 = vpop.xlane.xlu0 %1445
      %v1447 = vadd.f32 %v1338, %v1340
      %1448 = vadd.xlane.f32.xlu0 %v1447
      %v1449 = vpop.xlane.xlu0 %1448
      %v1450 = vadd.f32 %v1342, %v1344
      %1451 = vadd.xlane.f32.xlu0 %v1450
      %v1452 = vpop.xlane.xlu0 %1451
      %v1453 = vadd.f32 %v1346, %v1348
      %1454 = vadd.xlane.f32.xlu0 %v1453
      %v1455 = vpop.xlane.xlu0 %1454
      %v1456 = vadd.f32 %v1350, %v1352
      %1457 = vadd.xlane.f32.xlu0 %v1456
      %v1458 = vpop.xlane.xlu0 %1457
      %v1459 = vadd.f32 %v1354, %v1356
      %1460 = vadd.xlane.f32.xlu0 %v1459
      %v1461 = vpop.xlane.xlu0 %1460
      %v1462 = vadd.f32 %v1358, %v1360
      %1463 = vadd.xlane.f32.xlu0 %v1462
      %v1464 = vpop.xlane.xlu0 %1463
      %v1465 = vadd.f32 %v1362, %v1364
      %1466 = vadd.xlane.f32.xlu0 %v1465
      %v1467 = vpop.xlane.xlu0 %1466
      %v1468 = vadd.f32 %v1366, %v1368
      %1469 = vadd.xlane.f32.xlu0 %v1468
      %v1470 = vpop.xlane.xlu0 %1469
      %v1471 = vadd.f32 %v1370, %v1372
      %1472 = vadd.xlane.f32.xlu0 %v1471
      %v1473 = vpop.xlane.xlu0 %1472
      %v1474 = vadd.f32 %v1374, %v1376
      %1475 = vadd.xlane.f32.xlu0 %v1474
      %v1476 = vpop.xlane.xlu0 %1475
      %v1477 = vadd.f32 %v1378, %v1380
      %1478 = vadd.xlane.f32.xlu0 %v1477
      %v1479 = vpop.xlane.xlu0 %1478
      %v1480 = vadd.f32 %v1382, %v1384
      %1481 = vadd.xlane.f32.xlu0 %v1480
      %v1482 = vpop.xlane.xlu0 %1481
      %v1483 = vadd.f32 %v1386, %v1388
      %1484 = vadd.xlane.f32.xlu0 %v1483
      %v1485 = vpop.xlane.xlu0 %1484
      %v1486 = vadd.f32 %v1390, %v1392
      %1487 = vadd.xlane.f32.xlu0 %v1486
      %v1488 = vpop.xlane.xlu0 %1487
      %v1489 = vmax.f32 %v1395, 1e-20
      %v1490 = vmax.f32 %v1398, 1e-20
      %v1491 = vmax.f32 %v1401, 1e-20
      %v1492 = vmax.f32 %v1404, 1e-20
      %v1493 = vmax.f32 %v1407, 1e-20
      %v1494 = vmax.f32 %v1410, 1e-20
      %v1495 = vmax.f32 %v1413, 1e-20
      %v1496 = vmax.f32 %v1416, 1e-20
      %v1497 = vmax.f32 %v1419, 1e-20
      %v1498 = vmax.f32 %v1422, 1e-20
      %v1499 = vmax.f32 %v1425, 1e-20
      %v1500 = vmax.f32 %v1428, 1e-20
      %v1501 = vmax.f32 %v1431, 1e-20
      %v1502 = vmax.f32 %v1434, 1e-20
      %v1503 = vmax.f32 %v1437, 1e-20
      %v1504 = vmax.f32 %v1440, 1e-20
      %v1505 = vmax.f32 %v1443, 1e-20
      %v1506 = vmax.f32 %v1446, 1e-20
      %v1507 = vmax.f32 %v1449, 1e-20
      %v1508 = vmax.f32 %v1452, 1e-20
      %v1509 = vmax.f32 %v1455, 1e-20
      %v1510 = vmax.f32 %v1458, 1e-20
      %v1511 = vmax.f32 %v1461, 1e-20
      %v1512 = vmax.f32 %v1464, 1e-20
      %v1513 = vmax.f32 %v1467, 1e-20
      %v1514 = vmax.f32 %v1470, 1e-20
      %v1515 = vmax.f32 %v1473, 1e-20
      %v1516 = vmax.f32 %v1476, 1e-20
      %v1517 = vmax.f32 %v1479, 1e-20
      %v1518 = vmax.f32 %v1482, 1e-20
      %v1519 = vmax.f32 %v1485, 1e-20
      %v1520 = vmax.f32 %v1488, 1e-20
      %v1521 = vrcp.pop %v1489
      %v1522 = vrcp.pop %v1490
      %v1523 = vrcp.pop %v1491
      %v1524 = vrcp.pop %v1492
      %v1525 = vrcp.pop %v1493
      %v1526 = vrcp.pop %v1494
      %v1527 = vrcp.pop %v1495
      %v1528 = vrcp.pop %v1496
      %v1529 = vrcp.pop %v1497
      %v1530 = vrcp.pop %v1498
      %v1531 = vrcp.pop %v1499
      %v1532 = vrcp.pop %v1500
      %v1533 = vrcp.pop %v1501
      %v1534 = vrcp.pop %v1502
      %v1535 = vrcp.pop %v1503
      %v1536 = vrcp.pop %v1504
      %v1537 = vrcp.pop %v1505
      %v1538 = vrcp.pop %v1506
      %v1539 = vrcp.pop %v1507
      %v1540 = vrcp.pop %v1508
      %v1541 = vrcp.pop %v1509
      %v1542 = vrcp.pop %v1510
      %v1543 = vrcp.pop %v1511
      %v1544 = vrcp.pop %v1512
      %v1545 = vrcp.pop %v1513
      %v1546 = vrcp.pop %v1514
      %v1547 = vrcp.pop %v1515
      %v1548 = vrcp.pop %v1516
      %v1549 = vrcp.pop %v1517
      %v1550 = vrcp.pop %v1518
      %v1551 = vrcp.pop %v1519
      %v1552 = vrcp.pop %v1520
      %v1553 = vpack.c.bf16 %v1268, %v1266
      %v1554 = vpack.c.bf16 %v1272, %v1270
      %v1555 = vpack.c.bf16 %v1276, %v1274
      %v1556 = vpack.c.bf16 %v1280, %v1278
      %v1557 = vpack.c.bf16 %v1284, %v1282
      %v1558 = vpack.c.bf16 %v1288, %v1286
      %v1559 = vpack.c.bf16 %v1292, %v1290
      %v1560 = vpack.c.bf16 %v1296, %v1294
      %v1561 = vpack.c.bf16 %v1300, %v1298
      %v1562 = vpack.c.bf16 %v1304, %v1302
      %v1563 = vpack.c.bf16 %v1308, %v1306
      %v1564 = vpack.c.bf16 %v1312, %v1310
      %v1565 = vpack.c.bf16 %v1316, %v1314
      %v1566 = vpack.c.bf16 %v1320, %v1318
      %v1567 = vpack.c.bf16 %v1324, %v1322
      %v1568 = vpack.c.bf16 %v1328, %v1326
      %v1569 = vpack.c.bf16 %v1332, %v1330
      %v1570 = vpack.c.bf16 %v1336, %v1334
      %v1571 = vpack.c.bf16 %v1340, %v1338
      %v1572 = vpack.c.bf16 %v1344, %v1342
      %v1573 = vpack.c.bf16 %v1348, %v1346
      %v1574 = vpack.c.bf16 %v1352, %v1350
      %v1575 = vpack.c.bf16 %v1356, %v1354
      %v1576 = vpack.c.bf16 %v1360, %v1358
      %v1577 = vpack.c.bf16 %v1364, %v1362
      %v1578 = vpack.c.bf16 %v1368, %v1366
      %v1579 = vpack.c.bf16 %v1372, %v1370
      %v1580 = vpack.c.bf16 %v1376, %v1374
      %v1581 = vpack.c.bf16 %v1380, %v1378
      %v1582 = vpack.c.bf16 %v1384, %v1382
      %v1583 = vpack.c.bf16 %v1388, %v1386
      %v1584 = vpack.c.bf16 %v1392, %v1390
      %v1585 = vpack.c.bf16 %v459, %v459
      %v1586 = vpack.c.bf16 %v461, %v461
      %v1587 = vpack.c.bf16 %v464, %v464
      %v1588 = vpack.c.bf16 %v466, %v466
      %v1589 = vpack.c.bf16 %v469, %v469
      %v1590 = vpack.c.bf16 %v471, %v471
      %v1591 = vpack.c.bf16 %v474, %v474
      %v1592 = vpack.c.bf16 %v476, %v476
      %v1593 = vpack.c.bf16 %v479, %v479
      %v1594 = vpack.c.bf16 %v481, %v481
      %v1595 = vpack.c.bf16 %v484, %v484
      %v1596 = vpack.c.bf16 %v486, %v486
      %v1597 = vpack.c.bf16 %v489, %v489
      %v1598 = vpack.c.bf16 %v491, %v491
      %v1599 = vpack.c.bf16 %v494, %v494
      %v1600 = vpack.c.bf16 %v496, %v496
      %v1601 = vpack.c.bf16 %v499, %v499
      %v1602 = vpack.c.bf16 %v501, %v501
      %v1603 = vpack.c.bf16 %v504, %v504
      %v1604 = vpack.c.bf16 %v506, %v506
      %v1605 = vpack.c.bf16 %v509, %v509
      %v1606 = vpack.c.bf16 %v511, %v511
      %v1607 = vpack.c.bf16 %v514, %v514
      %v1608 = vpack.c.bf16 %v516, %v516
      %v1609 = vpack.c.bf16 %v519, %v519
      %v1610 = vpack.c.bf16 %v521, %v521
      %v1611 = vpack.c.bf16 %v524, %v524
      %v1612 = vpack.c.bf16 %v526, %v526
      %v1613 = vpack.c.bf16 %v529, %v529
      %v1614 = vpack.c.bf16 %v531, %v531
      %v1615 = vpack.c.bf16 %v534, %v534
      %v1616 = vpack.c.bf16 %v536, %v536
      %v1633 = vunpack.c.l.b16 %v1553
      %v1634 = vunpack.c.h.b16 %v1553
      %v1635 = vunpack.c.l.b16 %v1554
      %v1636 = vunpack.c.h.b16 %v1554
      %v1637 = vunpack.c.l.b16 %v1555
      %v1638 = vunpack.c.h.b16 %v1555
      %v1639 = vunpack.c.l.b16 %v1556
      %v1640 = vunpack.c.h.b16 %v1556
      %v1641 = vunpack.c.l.b16 %v1557
      %v1642 = vunpack.c.h.b16 %v1557
      %v1643 = vunpack.c.l.b16 %v1558
      %v1644 = vunpack.c.h.b16 %v1558
      %v1645 = vunpack.c.l.b16 %v1559
      %v1646 = vunpack.c.h.b16 %v1559
      %v1647 = vunpack.c.l.b16 %v1560
      %v1648 = vunpack.c.h.b16 %v1560
      %v1649 = vunpack.c.l.b16 %v1561
      %v1650 = vunpack.c.h.b16 %v1561
      %v1651 = vunpack.c.l.b16 %v1562
      %v1652 = vunpack.c.h.b16 %v1562
      %v1653 = vunpack.c.l.b16 %v1563
      %v1654 = vunpack.c.h.b16 %v1563
      %v1655 = vunpack.c.l.b16 %v1564
      %v1656 = vunpack.c.h.b16 %v1564
      %v1657 = vunpack.c.l.b16 %v1565
      %v1658 = vunpack.c.h.b16 %v1565
      %v1659 = vunpack.c.l.b16 %v1566
      %v1660 = vunpack.c.h.b16 %v1566
      %v1661 = vunpack.c.l.b16 %v1567
      %v1662 = vunpack.c.h.b16 %v1567
      %v1663 = vunpack.c.l.b16 %v1568
      %v1664 = vunpack.c.h.b16 %v1568
      %v1665 = vpack.c.b16 %v1635, %v1633
      %v1666 = vpack.c.b16 %v1636, %v1634
      %v1667 = vpack.c.b16 %v1639, %v1637
      %v1668 = vpack.c.b16 %v1640, %v1638
      %v1669 = vpack.c.b16 %v1643, %v1641
      %v1670 = vpack.c.b16 %v1644, %v1642
      %v1671 = vpack.c.b16 %v1647, %v1645
      %v1672 = vpack.c.b16 %v1648, %v1646
      %v1673 = vpack.c.b16 %v1651, %v1649
      %v1674 = vpack.c.b16 %v1652, %v1650
      %v1675 = vpack.c.b16 %v1655, %v1653
      %v1676 = vpack.c.b16 %v1656, %v1654
      %v1677 = vpack.c.b16 %v1659, %v1657
      %v1678 = vpack.c.b16 %v1660, %v1658
      %v1679 = vpack.c.b16 %v1663, %v1661
      %v1680 = vpack.c.b16 %v1664, %v1662
      %v1729 = vunpack.c.l.b16 %v1585
      %v1730 = vunpack.c.l.b16 %v1586
      %v1731 = vunpack.c.l.b16 %v1587
      %v1732 = vunpack.c.l.b16 %v1588
      %v1733 = vunpack.c.l.b16 %v1589
      %v1734 = vunpack.c.l.b16 %v1590
      %v1735 = vunpack.c.l.b16 %v1591
      %v1736 = vunpack.c.l.b16 %v1592
      %v1737 = vunpack.c.l.b16 %v1593
      %v1738 = vunpack.c.l.b16 %v1594
      %v1739 = vunpack.c.l.b16 %v1595
      %v1740 = vunpack.c.l.b16 %v1596
      %v1741 = vunpack.c.l.b16 %v1597
      %v1742 = vunpack.c.l.b16 %v1598
      %v1743 = vunpack.c.l.b16 %v1599
      %v1744 = vunpack.c.l.b16 %v1600
      %v1745 = vunpack.c.l.b16 %v1601
      %v1746 = vunpack.c.l.b16 %v1602
      %v1747 = vunpack.c.l.b16 %v1603
      %v1748 = vunpack.c.l.b16 %v1604
      %v1749 = vunpack.c.l.b16 %v1605
      %v1750 = vunpack.c.l.b16 %v1606
      %v1751 = vunpack.c.l.b16 %v1607
      %v1752 = vunpack.c.l.b16 %v1608
      %v1753 = vunpack.c.l.b16 %v1609
      %v1754 = vunpack.c.l.b16 %v1610
      %v1755 = vunpack.c.l.b16 %v1611
      %v1756 = vunpack.c.l.b16 %v1612
      %v1757 = vunpack.c.l.b16 %v1613
      %v1758 = vunpack.c.l.b16 %v1614
      %v1759 = vunpack.c.l.b16 %v1615
      %v1760 = vunpack.c.l.b16 %v1616
      %v1761 = vpack.c.b16 %v1730, %v1729
      %v1762 = vpack.c.b16 %v1732, %v1731
      %v1763 = vpack.c.b16 %v1734, %v1733
      %v1764 = vpack.c.b16 %v1736, %v1735
      %v1765 = vpack.c.b16 %v1738, %v1737
      %v1766 = vpack.c.b16 %v1740, %v1739
      %v1767 = vpack.c.b16 %v1742, %v1741
      %v1768 = vpack.c.b16 %v1744, %v1743
      %v1769 = vpack.c.b16 %v1746, %v1745
      %v1770 = vpack.c.b16 %v1748, %v1747
      %v1771 = vpack.c.b16 %v1750, %v1749
      %v1772 = vpack.c.b16 %v1752, %v1751
      %v1773 = vpack.c.b16 %v1754, %v1753
      %v1774 = vpack.c.b16 %v1756, %v1755
      %v1775 = vpack.c.b16 %v1758, %v1757
      %v1776 = vpack.c.b16 %v1760, %v1759
      %1793 = vmatpush.bf16.msra.mxu0 %v1768
      %1794 = vmatpush.bf16.msra.mxu0 %v1767
      %1795 = vmatpush.bf16.msra.mxu0 %v1766
      %1796 = vmatpush.bf16.msra.mxu0 %v1765
      %1797 = vmatpush.bf16.msra.mxu0 %v1764
      %1798 = vmatpush.bf16.msra.mxu0 %v1763
      %1799 = vmatpush.bf16.msra.mxu0 %v1762
      %1800 = vmatpush.bf16.msra.mxu0 %v1761
      %1801 = vmatmul.bf16.gmra.mxu0 %v1665
      %v1802 = vpop.f32.mrf.mxu0
      %v1803 = vadd.f32 0.0, %v1802
      %v1804 = vpop.f32.mrf.mxu0
      %v1805 = vadd.f32 0.0, %v1804
      %1806 = vmatmul.bf16.gmra.mxu0 %v1667
      %v1807 = vpop.f32.mrf.mxu0
      %v1808 = vadd.f32 0.0, %v1807
      %v1809 = vpop.f32.mrf.mxu0
      %v1810 = vadd.f32 0.0, %v1809
      %1811 = vmatmul.bf16.gmra.mxu0 %v1669
      %v1812 = vpop.f32.mrf.mxu0
      %v1813 = vadd.f32 0.0, %v1812
      %v1814 = vpop.f32.mrf.mxu0
      %v1815 = vadd.f32 0.0, %v1814
      %1816 = vmatmul.bf16.gmra.mxu0 %v1671
      %v1817 = vpop.f32.mrf.mxu0
      %v1818 = vadd.f32 0.0, %v1817
      %v1819 = vpop.f32.mrf.mxu0
      %v1820 = vadd.f32 0.0, %v1819
      %1821 = vmatmul.bf16.gmra.mxu0 %v1673
      %v1822 = vpop.f32.mrf.mxu0
      %v1823 = vadd.f32 0.0, %v1822
      %v1824 = vpop.f32.mrf.mxu0
      %v1825 = vadd.f32 0.0, %v1824
      %1826 = vmatmul.bf16.gmra.mxu0 %v1675
      %v1827 = vpop.f32.mrf.mxu0
      %v1828 = vadd.f32 0.0, %v1827
      %v1829 = vpop.f32.mrf.mxu0
      %v1830 = vadd.f32 0.0, %v1829
      %1831 = vmatmul.bf16.gmra.mxu0 %v1677
      %v1832 = vpop.f32.mrf.mxu0
      %v1833 = vadd.f32 0.0, %v1832
      %v1834 = vpop.f32.mrf.mxu0
      %v1835 = vadd.f32 0.0, %v1834
      %1836 = vmatmul.bf16.gmra.mxu0 %v1679
      %v1837 = vpop.f32.mrf.mxu0
      %v1838 = vadd.f32 0.0, %v1837
      %v1839 = vpop.f32.mrf.mxu0
      %v1840 = vadd.f32 0.0, %v1839
      %1841 = vdwg.mxu0
      %1842 = vmatpush.bf16.msra.mxu0 %v1776
      %1843 = vmatpush.bf16.msra.mxu0 %v1775
      %1844 = vmatpush.bf16.msra.mxu0 %v1774
      %1845 = vmatpush.bf16.msra.mxu0 %v1773
      %1846 = vmatpush.bf16.msra.mxu0 %v1772
      %1847 = vmatpush.bf16.msra.mxu0 %v1771
      %1848 = vmatpush.bf16.msra.mxu0 %v1770
      %1849 = vmatpush.bf16.msra.mxu0 %v1769
      %1850 = vmatmul.bf16.gmra.mxu0 %v1666
      %v1851 = vpop.f32.mrf.mxu0
      %v1852 = vadd.f32 %v1803, %v1851
      %v1853 = vpop.f32.mrf.mxu0
      %v1854 = vadd.f32 %v1805, %v1853
      %1855 = vmatmul.bf16.gmra.mxu0 %v1668
      %v1856 = vpop.f32.mrf.mxu0
      %v1857 = vadd.f32 %v1808, %v1856
      %v1858 = vpop.f32.mrf.mxu0
      %v1859 = vadd.f32 %v1810, %v1858
      %1860 = vmatmul.bf16.gmra.mxu0 %v1670
      %v1861 = vpop.f32.mrf.mxu0
      %v1862 = vadd.f32 %v1813, %v1861
      %v1863 = vpop.f32.mrf.mxu0
      %v1864 = vadd.f32 %v1815, %v1863
      %1865 = vmatmul.bf16.gmra.mxu0 %v1672
      %v1866 = vpop.f32.mrf.mxu0
      %v1867 = vadd.f32 %v1818, %v1866
      %v1868 = vpop.f32.mrf.mxu0
      %v1869 = vadd.f32 %v1820, %v1868
      %1870 = vmatmul.bf16.gmra.mxu0 %v1674
      %v1871 = vpop.f32.mrf.mxu0
      %v1872 = vadd.f32 %v1823, %v1871
      %v1873 = vpop.f32.mrf.mxu0
      %v1874 = vadd.f32 %v1825, %v1873
      %1875 = vmatmul.bf16.gmra.mxu0 %v1676
      %v1876 = vpop.f32.mrf.mxu0
      %v1877 = vadd.f32 %v1828, %v1876
      %v1878 = vpop.f32.mrf.mxu0
      %v1879 = vadd.f32 %v1830, %v1878
      %1880 = vmatmul.bf16.gmra.mxu0 %v1678
      %v1881 = vpop.f32.mrf.mxu0
      %v1882 = vadd.f32 %v1833, %v1881
      %v1883 = vpop.f32.mrf.mxu0
      %v1884 = vadd.f32 %v1835, %v1883
      %1885 = vmatmul.bf16.gmra.mxu0 %v1680
      %v1886 = vpop.f32.mrf.mxu0
      %v1887 = vadd.f32 %v1838, %v1886
      %v1888 = vpop.f32.mrf.mxu0
      %v1889 = vadd.f32 %v1840, %v1888
      %1890 = vdwg.mxu0
      %v1891 = vmul.f32 %v1852, %v1521
      %v1892 = vmul.f32 %v1854, %v1522
      %v1893 = vmul.f32 %v1857, %v1523
      %v1894 = vmul.f32 %v1859, %v1524
      %v1895 = vmul.f32 %v1862, %v1525
      %v1896 = vmul.f32 %v1864, %v1526
      %v1897 = vmul.f32 %v1867, %v1527
      %v1898 = vmul.f32 %v1869, %v1528
      %v1899 = vmul.f32 %v1872, %v1529
      %v1900 = vmul.f32 %v1874, %v1530
      %v1901 = vmul.f32 %v1877, %v1531
      %v1902 = vmul.f32 %v1879, %v1532
      %v1903 = vmul.f32 %v1882, %v1533
      %v1904 = vmul.f32 %v1884, %v1534
      %v1905 = vmul.f32 %v1887, %v1535
      %v1906 = vmul.f32 %v1889, %v1536
      %v1923 = vunpack.c.l.b16 %v1569
      %v1924 = vunpack.c.h.b16 %v1569
      %v1925 = vunpack.c.l.b16 %v1570
      %v1926 = vunpack.c.h.b16 %v1570
      %v1927 = vunpack.c.l.b16 %v1571
      %v1928 = vunpack.c.h.b16 %v1571
      %v1929 = vunpack.c.l.b16 %v1572
      %v1930 = vunpack.c.h.b16 %v1572
      %v1931 = vunpack.c.l.b16 %v1573
      %v1932 = vunpack.c.h.b16 %v1573
      %v1933 = vunpack.c.l.b16 %v1574
      %v1934 = vunpack.c.h.b16 %v1574
      %v1935 = vunpack.c.l.b16 %v1575
      %v1936 = vunpack.c.h.b16 %v1575
      %v1937 = vunpack.c.l.b16 %v1576
      %v1938 = vunpack.c.h.b16 %v1576
      %v1939 = vunpack.c.l.b16 %v1577
      %v1940 = vunpack.c.h.b16 %v1577
      %v1941 = vunpack.c.l.b16 %v1578
      %v1942 = vunpack.c.h.b16 %v1578
      %v1943 = vunpack.c.l.b16 %v1579
      %v1944 = vunpack.c.h.b16 %v1579
      %v1945 = vunpack.c.l.b16 %v1580
      %v1946 = vunpack.c.h.b16 %v1580
      %v1947 = vunpack.c.l.b16 %v1581
      %v1948 = vunpack.c.h.b16 %v1581
      %v1949 = vunpack.c.l.b16 %v1582
      %v1950 = vunpack.c.h.b16 %v1582
      %v1951 = vunpack.c.l.b16 %v1583
      %v1952 = vunpack.c.h.b16 %v1583
      %v1953 = vunpack.c.l.b16 %v1584
      %v1954 = vunpack.c.h.b16 %v1584
      %v1955 = vpack.c.b16 %v1925, %v1923
      %v1956 = vpack.c.b16 %v1926, %v1924
      %v1957 = vpack.c.b16 %v1929, %v1927
      %v1958 = vpack.c.b16 %v1930, %v1928
      %v1959 = vpack.c.b16 %v1933, %v1931
      %v1960 = vpack.c.b16 %v1934, %v1932
      %v1961 = vpack.c.b16 %v1937, %v1935
      %v1962 = vpack.c.b16 %v1938, %v1936
      %v1963 = vpack.c.b16 %v1941, %v1939
      %v1964 = vpack.c.b16 %v1942, %v1940
      %v1965 = vpack.c.b16 %v1945, %v1943
      %v1966 = vpack.c.b16 %v1946, %v1944
      %v1967 = vpack.c.b16 %v1949, %v1947
      %v1968 = vpack.c.b16 %v1950, %v1948
      %v1969 = vpack.c.b16 %v1953, %v1951
      %v1970 = vpack.c.b16 %v1954, %v1952
      %1987 = vrot.lane.b32.xlu0 %v1761, 96
      %v1988 = vpop.permute.xlu0 %1987
      %1989 = vrot.lane.b32.xlu0 %v1762, 96
      %v1990 = vpop.permute.xlu0 %1989
      %1991 = vrot.lane.b32.xlu0 %v1763, 96
      %v1992 = vpop.permute.xlu0 %1991
      %1993 = vrot.lane.b32.xlu0 %v1764, 96
      %v1994 = vpop.permute.xlu0 %1993
      %1995 = vrot.lane.b32.xlu0 %v1765, 96
      %v1996 = vpop.permute.xlu0 %1995
      %1997 = vrot.lane.b32.xlu0 %v1766, 96
      %v1998 = vpop.permute.xlu0 %1997
      %1999 = vrot.lane.b32.xlu0 %v1767, 96
      %v2000 = vpop.permute.xlu0 %1999
      %2001 = vrot.lane.b32.xlu0 %v1768, 96
      %v2002 = vpop.permute.xlu0 %2001
      %2003 = vrot.lane.b32.xlu0 %v1769, 96
      %v2004 = vpop.permute.xlu0 %2003
      %2005 = vrot.lane.b32.xlu0 %v1770, 96
      %v2006 = vpop.permute.xlu0 %2005
      %2007 = vrot.lane.b32.xlu0 %v1771, 96
      %v2008 = vpop.permute.xlu0 %2007
      %2009 = vrot.lane.b32.xlu0 %v1772, 96
      %v2010 = vpop.permute.xlu0 %2009
      %2011 = vrot.lane.b32.xlu0 %v1773, 96
      %v2012 = vpop.permute.xlu0 %2011
      %2013 = vrot.lane.b32.xlu0 %v1774, 96
      %v2014 = vpop.permute.xlu0 %2013
      %2015 = vrot.lane.b32.xlu0 %v1775, 96
      %v2016 = vpop.permute.xlu0 %2015
      %2017 = vrot.lane.b32.xlu0 %v1776, 96
      %v2018 = vpop.permute.xlu0 %2017
      %2035 = vmatpush.bf16.msra.mxu0 %v2002
      %2036 = vmatpush.bf16.msra.mxu0 %v2000
      %2037 = vmatpush.bf16.msra.mxu0 %v1998
      %2038 = vmatpush.bf16.msra.mxu0 %v1996
      %2039 = vmatpush.bf16.msra.mxu0 %v1994
      %2040 = vmatpush.bf16.msra.mxu0 %v1992
      %2041 = vmatpush.bf16.msra.mxu0 %v1990
      %2042 = vmatpush.bf16.msra.mxu0 %v1988
      %2043 = vmatmul.bf16.gmra.mxu0 %v1955
      %v2044 = vpop.f32.mrf.mxu0
      %v2045 = vadd.f32 0.0, %v2044
      %v2046 = vpop.f32.mrf.mxu0
      %v2047 = vadd.f32 0.0, %v2046
      %2048 = vmatmul.bf16.gmra.mxu0 %v1957
      %v2049 = vpop.f32.mrf.mxu0
      %v2050 = vadd.f32 0.0, %v2049
      %v2051 = vpop.f32.mrf.mxu0
      %v2052 = vadd.f32 0.0, %v2051
      %2053 = vmatmul.bf16.gmra.mxu0 %v1959
      %v2054 = vpop.f32.mrf.mxu0
      %v2055 = vadd.f32 0.0, %v2054
      %v2056 = vpop.f32.mrf.mxu0
      %v2057 = vadd.f32 0.0, %v2056
      %2058 = vmatmul.bf16.gmra.mxu0 %v1961
      %v2059 = vpop.f32.mrf.mxu0
      %v2060 = vadd.f32 0.0, %v2059
      %v2061 = vpop.f32.mrf.mxu0
      %v2062 = vadd.f32 0.0, %v2061
      %2063 = vmatmul.bf16.gmra.mxu0 %v1963
      %v2064 = vpop.f32.mrf.mxu0
      %v2065 = vadd.f32 0.0, %v2064
      %v2066 = vpop.f32.mrf.mxu0
      %v2067 = vadd.f32 0.0, %v2066
      %2068 = vmatmul.bf16.gmra.mxu0 %v1965
      %v2069 = vpop.f32.mrf.mxu0
      %v2070 = vadd.f32 0.0, %v2069
      %v2071 = vpop.f32.mrf.mxu0
      %v2072 = vadd.f32 0.0, %v2071
      %2073 = vmatmul.bf16.gmra.mxu0 %v1967
      %v2074 = vpop.f32.mrf.mxu0
      %v2075 = vadd.f32 0.0, %v2074
      %v2076 = vpop.f32.mrf.mxu0
      %v2077 = vadd.f32 0.0, %v2076
      %2078 = vmatmul.bf16.gmra.mxu0 %v1969
      %v2079 = vpop.f32.mrf.mxu0
      %v2080 = vadd.f32 0.0, %v2079
      %v2081 = vpop.f32.mrf.mxu0
      %v2082 = vadd.f32 0.0, %v2081
      %2083 = vdwg.mxu0
      %2084 = vmatpush.bf16.msra.mxu0 %v2018
      %2085 = vmatpush.bf16.msra.mxu0 %v2016
      %2086 = vmatpush.bf16.msra.mxu0 %v2014
      %2087 = vmatpush.bf16.msra.mxu0 %v2012
      %2088 = vmatpush.bf16.msra.mxu0 %v2010
      %2089 = vmatpush.bf16.msra.mxu0 %v2008
      %2090 = vmatpush.bf16.msra.mxu0 %v2006
      %2091 = vmatpush.bf16.msra.mxu0 %v2004
      %2092 = vmatmul.bf16.gmra.mxu0 %v1956
      %v2093 = vpop.f32.mrf.mxu0
      %v2094 = vadd.f32 %v2045, %v2093
      %v2095 = vpop.f32.mrf.mxu0
      %v2096 = vadd.f32 %v2047, %v2095
      %2097 = vmatmul.bf16.gmra.mxu0 %v1958
      %v2098 = vpop.f32.mrf.mxu0
      %v2099 = vadd.f32 %v2050, %v2098
      %v2100 = vpop.f32.mrf.mxu0
      %v2101 = vadd.f32 %v2052, %v2100
      %2102 = vmatmul.bf16.gmra.mxu0 %v1960
      %v2103 = vpop.f32.mrf.mxu0
      %v2104 = vadd.f32 %v2055, %v2103
      %v2105 = vpop.f32.mrf.mxu0
      %v2106 = vadd.f32 %v2057, %v2105
      %2107 = vmatmul.bf16.gmra.mxu0 %v1962
      %v2108 = vpop.f32.mrf.mxu0
      %v2109 = vadd.f32 %v2060, %v2108
      %v2110 = vpop.f32.mrf.mxu0
      %v2111 = vadd.f32 %v2062, %v2110
      %2112 = vmatmul.bf16.gmra.mxu0 %v1964
      %v2113 = vpop.f32.mrf.mxu0
      %v2114 = vadd.f32 %v2065, %v2113
      %v2115 = vpop.f32.mrf.mxu0
      %v2116 = vadd.f32 %v2067, %v2115
      %2117 = vmatmul.bf16.gmra.mxu0 %v1966
      %v2118 = vpop.f32.mrf.mxu0
      %v2119 = vadd.f32 %v2070, %v2118
      %v2120 = vpop.f32.mrf.mxu0
      %v2121 = vadd.f32 %v2072, %v2120
      %2122 = vmatmul.bf16.gmra.mxu0 %v1968
      %v2123 = vpop.f32.mrf.mxu0
      %v2124 = vadd.f32 %v2075, %v2123
      %v2125 = vpop.f32.mrf.mxu0
      %v2126 = vadd.f32 %v2077, %v2125
      %2127 = vmatmul.bf16.gmra.mxu0 %v1970
      %v2128 = vpop.f32.mrf.mxu0
      %v2129 = vadd.f32 %v2080, %v2128
      %v2130 = vpop.f32.mrf.mxu0
      %v2131 = vadd.f32 %v2082, %v2130
      %2132 = vdwg.mxu0
      %v2133 = vmul.f32 %v2094, %v1537
      %v2134 = vmul.f32 %v2096, %v1538
      %v2135 = vmul.f32 %v2099, %v1539
      %v2136 = vmul.f32 %v2101, %v1540
      %v2137 = vmul.f32 %v2104, %v1541
      %v2138 = vmul.f32 %v2106, %v1542
      %v2139 = vmul.f32 %v2109, %v1543
      %v2140 = vmul.f32 %v2111, %v1544
      %v2141 = vmul.f32 %v2114, %v1545
      %v2142 = vmul.f32 %v2116, %v1546
      %v2143 = vmul.f32 %v2119, %v1547
      %v2144 = vmul.f32 %v2121, %v1548
      %v2145 = vmul.f32 %v2124, %v1549
      %v2146 = vmul.f32 %v2126, %v1550
      %v2147 = vmul.f32 %v2129, %v1551
      %v2148 = vmul.f32 %v2131, %v1552
      %2165 = vrot.lane.b32.xlu0 %v2133, 32
      %v2166 = vpop.permute.xlu0 %2165
      %2167 = vrot.lane.b32.xlu0 %v2134, 32
      %v2168 = vpop.permute.xlu0 %2167
      %2169 = vrot.lane.b32.xlu0 %v2135, 32
      %v2170 = vpop.permute.xlu0 %2169
      %2171 = vrot.lane.b32.xlu0 %v2136, 32
      %v2172 = vpop.permute.xlu0 %2171
      %2173 = vrot.lane.b32.xlu0 %v2137, 32
      %v2174 = vpop.permute.xlu0 %2173
      %2175 = vrot.lane.b32.xlu0 %v2138, 32
      %v2176 = vpop.permute.xlu0 %2175
      %2177 = vrot.lane.b32.xlu0 %v2139, 32
      %v2178 = vpop.permute.xlu0 %2177
      %2179 = vrot.lane.b32.xlu0 %v2140, 32
      %v2180 = vpop.permute.xlu0 %2179
      %2181 = vrot.lane.b32.xlu0 %v2141, 32
      %v2182 = vpop.permute.xlu0 %2181
      %2183 = vrot.lane.b32.xlu0 %v2142, 32
      %v2184 = vpop.permute.xlu0 %2183
      %2185 = vrot.lane.b32.xlu0 %v2143, 32
      %v2186 = vpop.permute.xlu0 %2185
      %2187 = vrot.lane.b32.xlu0 %v2144, 32
      %v2188 = vpop.permute.xlu0 %2187
      %2189 = vrot.lane.b32.xlu0 %v2145, 32
      %v2190 = vpop.permute.xlu0 %2189
      %2191 = vrot.lane.b32.xlu0 %v2146, 32
      %v2192 = vpop.permute.xlu0 %2191
      %2193 = vrot.lane.b32.xlu0 %v2147, 32
      %v2194 = vpop.permute.xlu0 %2193
      %2195 = vrot.lane.b32.xlu0 %v2148, 32
      %v2196 = vpop.permute.xlu0 %2195
      %v2213 = vsel %vm400, %v1891, %v2166
      %v2214 = vsel %vm400, %v1892, %v2168
      %v2215 = vsel %vm400, %v1893, %v2170
      %v2216 = vsel %vm400, %v1894, %v2172
      %v2217 = vsel %vm400, %v1895, %v2174
      %v2218 = vsel %vm400, %v1896, %v2176
      %v2219 = vsel %vm400, %v1897, %v2178
      %v2220 = vsel %vm400, %v1898, %v2180
      %v2221 = vsel %vm400, %v1899, %v2182
      %v2222 = vsel %vm400, %v1900, %v2184
      %v2223 = vsel %vm400, %v1901, %v2186
      %v2224 = vsel %vm400, %v1902, %v2188
      %v2225 = vsel %vm400, %v1903, %v2190
      %v2226 = vsel %vm400, %v1904, %v2192
      %v2227 = vsel %vm400, %v1905, %v2194
      %v2228 = vsel %vm400, %v1906, %v2196
      %v2230 = vperm.slane %v314, 0
      %v2232 = vadd.f32 %v2213, %v2230
      %v2233 = vadd.f32 %v2214, %v2230
      %v2234 = vadd.f32 %v2215, %v2230
      %v2235 = vadd.f32 %v2216, %v2230
      %v2236 = vadd.f32 %v2217, %v2230
      %v2237 = vadd.f32 %v2218, %v2230
      %v2238 = vadd.f32 %v2219, %v2230
      %v2239 = vadd.f32 %v2220, %v2230
      %v2240 = vadd.f32 %v2221, %v2230
      %v2241 = vadd.f32 %v2222, %v2230
      %v2242 = vadd.f32 %v2223, %v2230
      %v2243 = vadd.f32 %v2224, %v2230
      %v2244 = vadd.f32 %v2225, %v2230
      %v2245 = vadd.f32 %v2226, %v2230
      %v2246 = vadd.f32 %v2227, %v2230
      %v2247 = vadd.f32 %v2228, %v2230
      %vm2248 = vcmp.gt.f32.partialorder %v2232, 0.0
      %vm2249 = vcmp.gt.f32.partialorder %v2233, 0.0
      %vm2250 = vcmp.gt.f32.partialorder %v2234, 0.0
      %vm2251 = vcmp.gt.f32.partialorder %v2235, 0.0
      %vm2252 = vcmp.gt.f32.partialorder %v2236, 0.0
      %vm2253 = vcmp.gt.f32.partialorder %v2237, 0.0
      %vm2254 = vcmp.gt.f32.partialorder %v2238, 0.0
      %vm2255 = vcmp.gt.f32.partialorder %v2239, 0.0
      %vm2256 = vcmp.gt.f32.partialorder %v2240, 0.0
      %vm2257 = vcmp.gt.f32.partialorder %v2241, 0.0
      %vm2258 = vcmp.gt.f32.partialorder %v2242, 0.0
      %vm2259 = vcmp.gt.f32.partialorder %v2243, 0.0
      %vm2260 = vcmp.gt.f32.partialorder %v2244, 0.0
      %vm2261 = vcmp.gt.f32.partialorder %v2245, 0.0
      %vm2262 = vcmp.gt.f32.partialorder %v2246, 0.0
      %vm2263 = vcmp.gt.f32.partialorder %v2247, 0.0
      %v2264 = vmul.f32 %v2232, 1.442695
      %v2265 = vpow.pop %v2264
      %v2266 = vmul.f32 %v2233, 1.442695
      %v2267 = vpow.pop %v2266
      %v2268 = vmul.f32 %v2234, 1.442695
      %v2269 = vpow.pop %v2268
      %v2270 = vmul.f32 %v2235, 1.442695
      %v2271 = vpow.pop %v2270
      %v2272 = vmul.f32 %v2236, 1.442695
      %v2273 = vpow.pop %v2272
      %v2274 = vmul.f32 %v2237, 1.442695
      %v2275 = vpow.pop %v2274
      %v2276 = vmul.f32 %v2238, 1.442695
      %v2277 = vpow.pop %v2276
      %v2278 = vmul.f32 %v2239, 1.442695
      %v2279 = vpow.pop %v2278
      %v2280 = vmul.f32 %v2240, 1.442695
      %v2281 = vpow.pop %v2280
      %v2282 = vmul.f32 %v2241, 1.442695
      %v2283 = vpow.pop %v2282
      %v2284 = vmul.f32 %v2242, 1.442695
      %v2285 = vpow.pop %v2284
      %v2286 = vmul.f32 %v2243, 1.442695
      %v2287 = vpow.pop %v2286
      %v2288 = vmul.f32 %v2244, 1.442695
      %v2289 = vpow.pop %v2288
      %v2290 = vmul.f32 %v2245, 1.442695
      %v2291 = vpow.pop %v2290
      %v2292 = vmul.f32 %v2246, 1.442695
      %v2293 = vpow.pop %v2292
      %v2294 = vmul.f32 %v2247, 1.442695
      %v2295 = vpow.pop %v2294
      %v2296 = vsub.f32 %v2265, 1.0
      %v2297 = vsub.f32 %v2267, 1.0
      %v2298 = vsub.f32 %v2269, 1.0
      %v2299 = vsub.f32 %v2271, 1.0
      %v2300 = vsub.f32 %v2273, 1.0
      %v2301 = vsub.f32 %v2275, 1.0
      %v2302 = vsub.f32 %v2277, 1.0
      %v2303 = vsub.f32 %v2279, 1.0
      %v2304 = vsub.f32 %v2281, 1.0
      %v2305 = vsub.f32 %v2283, 1.0
      %v2306 = vsub.f32 %v2285, 1.0
      %v2307 = vsub.f32 %v2287, 1.0
      %v2308 = vsub.f32 %v2289, 1.0
      %v2309 = vsub.f32 %v2291, 1.0
      %v2310 = vsub.f32 %v2293, 1.0
      %v2311 = vsub.f32 %v2295, 1.0
      %v2312 = vmul.f32 %v2296, 1.6732632
      %v2313 = vmul.f32 %v2297, 1.6732632
      %v2314 = vmul.f32 %v2298, 1.6732632
      %v2315 = vmul.f32 %v2299, 1.6732632
      %v2316 = vmul.f32 %v2300, 1.6732632
      %v2317 = vmul.f32 %v2301, 1.6732632
      %v2318 = vmul.f32 %v2302, 1.6732632
      %v2319 = vmul.f32 %v2303, 1.6732632
      %v2320 = vmul.f32 %v2304, 1.6732632
      %v2321 = vmul.f32 %v2305, 1.6732632
      %v2322 = vmul.f32 %v2306, 1.6732632
      %v2323 = vmul.f32 %v2307, 1.6732632
      %v2324 = vmul.f32 %v2308, 1.6732632
      %v2325 = vmul.f32 %v2309, 1.6732632
      %v2326 = vmul.f32 %v2310, 1.6732632
      %v2327 = vmul.f32 %v2311, 1.6732632
      %v2328 = vsel %vm2248, %v2232, %v2312
      %v2329 = vsel %vm2249, %v2233, %v2313
      %v2330 = vsel %vm2250, %v2234, %v2314
      %v2331 = vsel %vm2251, %v2235, %v2315
      %v2332 = vsel %vm2252, %v2236, %v2316
      %v2333 = vsel %vm2253, %v2237, %v2317
      %v2334 = vsel %vm2254, %v2238, %v2318
      %v2335 = vsel %vm2255, %v2239, %v2319
      %v2336 = vsel %vm2256, %v2240, %v2320
      %v2337 = vsel %vm2257, %v2241, %v2321
      %v2338 = vsel %vm2258, %v2242, %v2322
      %v2339 = vsel %vm2259, %v2243, %v2323
      %v2340 = vsel %vm2260, %v2244, %v2324
      %v2341 = vsel %vm2261, %v2245, %v2325
      %v2342 = vsel %vm2262, %v2246, %v2326
      %v2343 = vsel %vm2263, %v2247, %v2327
      %v2344 = vmul.f32 %v2328, 1.050701
      %v2345 = vmul.f32 %v2329, 1.050701
      %v2346 = vmul.f32 %v2330, 1.050701
      %v2347 = vmul.f32 %v2331, 1.050701
      %v2348 = vmul.f32 %v2332, 1.050701
      %v2349 = vmul.f32 %v2333, 1.050701
      %v2350 = vmul.f32 %v2334, 1.050701
      %v2351 = vmul.f32 %v2335, 1.050701
      %v2352 = vmul.f32 %v2336, 1.050701
      %v2353 = vmul.f32 %v2337, 1.050701
      %v2354 = vmul.f32 %v2338, 1.050701
      %v2355 = vmul.f32 %v2339, 1.050701
      %v2356 = vmul.f32 %v2340, 1.050701
      %v2357 = vmul.f32 %v2341, 1.050701
      %v2358 = vmul.f32 %v2342, 1.050701
      %v2359 = vmul.f32 %v2343, 1.050701
      %vm2360 = vcmask 523264
      %2361 = vst.msk [vmem:[%s256] sm:$0xff] %vm2360, %v2344
      %2362 = vst.msk [vmem:[%s256 + $0x8] sm:$0xff] %vm2360, %v2345
      %2363 = vst.msk [vmem:[%s256 + $0x10] sm:$0xff] %vm2360, %v2346
      %2364 = vst.msk [vmem:[%s256 + $0x18] sm:$0xff] %vm2360, %v2347
      %2365 = vst.msk [vmem:[%s256 + $0x20] sm:$0xff] %vm2360, %v2348
      %2366 = vst.msk [vmem:[%s256 + $0x28] sm:$0xff] %vm2360, %v2349
      %2367 = vst.msk [vmem:[%s256 + $0x30] sm:$0xff] %vm2360, %v2350
      %2368 = vst.msk [vmem:[%s256 + $0x38] sm:$0xff] %vm2360, %v2351
      %2369 = vst.msk [vmem:[%s256 + $0x40] sm:$0xff] %vm2360, %v2352
      %2370 = vst.msk [vmem:[%s256 + $0x48] sm:$0xff] %vm2360, %v2353
      %2371 = vst.msk [vmem:[%s256 + $0x50] sm:$0xff] %vm2360, %v2354
      %2372 = vst.msk [vmem:[%s256 + $0x58] sm:$0xff] %vm2360, %v2355
      %2373 = vst.msk [vmem:[%s256 + $0x60] sm:$0xff] %vm2360, %v2356
      %2374 = vst.msk [vmem:[%s256 + $0x68] sm:$0xff] %vm2360, %v2357
      %2375 = vst.msk [vmem:[%s256 + $0x70] sm:$0xff] %vm2360, %v2358
      %2376 = vst.msk [vmem:[%s256 + $0x78] sm:$0xff] %vm2360, %v2359
      %s2377 = smul.u32 16, %s17
      %p2378 = scmp.lt.s32.totalorder %s2377, 31
      %s2379 = scalar_select %p2378, %s2377, 31
      %s2380 = smul.addr %s2379, 8
      %s2381 = scalar_lea.vmem %s6, %s2380
      // Predicated region
      $region45: #{gat_forward.2} parent=43 // pred_check
        %p2382 = pneg %p166
      $region46: #{gat_forward.2} parent=43 // pred_check_branch
        %2384 = sbr.rel (%p2382) target = $region48
      $region47: #{gat_forward.2} parent=43 // pred_region
        %s2385 = smul.u32 16, %s17
      $region48: #{gat_forward.2} parent=43 // pred_fallthru
        _
    $region44: #{gat_forward.2} parent=5 // pred_fallthru
      _
    %p2386 = scmp.le.s32.totalorder 2, %s12
    // Predicated region
    $region49: #{gat_forward.2} parent=5 // pred_check
      %p2387 = pneg %p2386
    $region50: #{gat_forward.2} parent=5 // pred_check_branch
      %2389 = sbr.rel (%p2387) target = $region52
    $region51: #{gat_forward.2} parent=5 // pred_region
      %s2390 = ssub.s32 %s12, 2
      // Predicated region
      $region53: #{gat_forward.2} parent=51 // pred_check
        %p2391 = pneg %p172
      $region54: #{gat_forward.2} parent=51 // pred_check_branch
        %2393 = sbr.rel (%p2391) target = $region56
      $region55: #{gat_forward.2} parent=51 // pred_region
        %s2394 = smul.u32 16, %s18
        %p2395 = scmp.lt.s32.totalorder %s2394, 31
        %s2396 = scalar_select %p2395, %s2394, 31
        %s2397 = smul.addr %s2396, 8
        %s2398 = scalar_lea.vmem %s6, %s2397
      $region56: #{gat_forward.2} parent=51 // pred_fallthru
        _
    $region52: #{gat_forward.2} parent=5 // pred_fallthru
      _
  $region6: #{gat_forward.2} parent=0 // loop_footer
    %s16 = sadd.s32 1, %s12
  $region7: #{gat_forward.2} parent=0 // loop_footer_branch
    %11 = sbr.rel target = $region3
  $region8: #{gat_forward.2} parent=0 // loop_exit
    _

// kernel: gat_forward.3
$region0: #{gat_forward.3}
  #allocation0 [shape = 'u32[]', space=smem, size = 0x4, offset = 0x4, fixed_abs, tag = 'smem constant byte address 0x4 - core index']
  #allocation1 [shape = 'u32[72,128]{1,0:T(1,128)}', space=vmem, size = 0x9000, scoped, tag = 'internal scratch']
  %s0 = inlined_call_operand.vmem [shape: f32[256,64], index: 0, kind: input, shape index: {}]
  %s1 = inlined_call_operand.vmem [shape: bf16[256,256], index: 1, kind: input, shape index: {}]
  %s2 = inlined_call_operand.vmem [shape: bf16[32,64], index: 2, kind: input, shape index: {}]
  %s3 = inlined_call_operand.vmem [shape: bf16[2,32], index: 3, kind: input, shape index: {}]
  %s4 = inlined_call_operand.vmem [shape: bf16[2,32], index: 4, kind: input, shape index: {}]
  %s5 = inlined_call_operand.vmem [shape: f32[1,64], index: 5, kind: input, shape index: {}]
  %s6 = inlined_call_operand.vmem [shape: f32[32,128], index: 6, kind: input, shape index: {}]
  %s7 = inlined_call_operand.vmem [shape: f32[1,128], index: 7, kind: input, shape index: {}]
  %s8 = inlined_call_operand.vmem [shape: f32[256,128], index: 8, kind: output, shape index: {}]
  %s9 = sld [smem:[#allocation0]]
  $region65: #{gat_forward.3} parent=0
    _
  %s11 = ssub.s32 1, %s9
  %s12 = scalar_select 0, %s11, %s9
  loop: start=0, step=1, limit=4
  $region2: #{gat_forward.3} parent=0 // loop_pre_header
    _
  $region3: #{gat_forward.3} parent=0 // loop_header
    %s14 = sphi 0, %s18
    %p15 = scmp.ge.s32.totalorder %s14, 4
    %s22 = sphi 0, %s22
    %s24 = sphi 0, %s22
    %s25 = sphi 0, %s24
    %s39 = sphi 0, %s25
    %s45 = sphi 0, %s47
    %s48 = sphi 0, %s45
    %s49 = sphi 0, %s48
    %s65 = sphi 0, %s49
    %s69 = sphi 0, %s69
    %s71 = sphi 0, %s69
    %s72 = sphi 0, %s71
    %s86 = sphi 0, %s72
    %s90 = sphi 0, %s90
    %s92 = sphi 0, %s90
    %s93 = sphi 0, %s92
    %s107 = sphi 0, %s93
    %s111 = sphi 0, %s111
    %s113 = sphi 0, %s111
    %s114 = sphi 0, %s113
    %s128 = sphi 0, %s114
    %s132 = sphi 0, %s132
    %s134 = sphi 0, %s132
    %s135 = sphi 0, %s134
    %s149 = sphi 0, %s135
    %s153 = sphi 0, %s153
    %s155 = sphi 0, %s153
    %s156 = sphi 0, %s155
    %s170 = sphi 0, %s156
    %s174 = sphi 0, %s174
    %s176 = sphi 0, %s174
    %s177 = sphi 0, %s176
    %s191 = sphi 0, %s177
    %s197 = sphi 0, %s199
    %s200 = sphi 0, %s197
    %s201 = sphi 0, %s200
    %s217 = sphi 0, %s201
  $region4: #{gat_forward.3} parent=0 // loop_header_branch
    %17 = sbr.rel (%p15) target = $region8
  $region5: #{gat_forward.3} parent=0 // loop_body
    %s19 = ssub.s32 %s14, 1
    %s20 = ssub.s32 %s14, 2
    %s21 = sadd.s32 %s14, 1
    %s23 = sadd.s32 %s22, 1
    %p26 = scmp.eq.s32.totalorder %s14, 1
    %p27 = scmp.ne.s32.totalorder %s22, %s24
    %p28 = scmp.eq.s32.totalorder %s14, 0
    %p29 = por %p27, %p28
    %p30 = scmp.ne.s32.totalorder %s22, %s24
    %p31 = scmp.eq.s32.totalorder %s19, 1
    %p32 = por %p30, %p31
    %p33 = scmp.ne.s32.totalorder %s24, %s25
    %p34 = scmp.eq.s32.totalorder %s19, 0
    %p35 = por %p33, %p34
    %p36 = scmp.ne.s32.totalorder %s24, %s25
    %p37 = scmp.eq.s32.totalorder %s20, 1
    %p38 = por %p36, %p37
    %p40 = scmp.ne.s32.totalorder %s25, %s39
    %p41 = scmp.eq.s32.totalorder %s20, 0
    %p42 = por %p40, %p41
    %s43 = ssub.s32 %s14, %s21
    %p44 = scmp.eq.s32.totalorder %s43, 0
    %s46 = sadd.s32 %s45, 1
    %s47 = scalar_select %p44, %s45, %s46
    %p50 = pneg %p44
    %p51 = scmp.eq.s32.totalorder %s14, 1
    %p52 = por %p50, %p51
    %p53 = scmp.ne.s32.totalorder %s45, %s48
    %p54 = scmp.eq.s32.totalorder %s14, 0
    %p55 = por %p53, %p54
    %p56 = scmp.ne.s32.totalorder %s45, %s48
    %p57 = scmp.eq.s32.totalorder %s19, 1
    %p58 = por %p56, %p57
    %p59 = scmp.ne.s32.totalorder %s48, %s49
    %p60 = scmp.eq.s32.totalorder %s19, 0
    %p61 = por %p59, %p60
    %p62 = scmp.ne.s32.totalorder %s48, %s49
    %p63 = scmp.eq.s32.totalorder %s20, 1
    %p64 = por %p62, %p63
    %p66 = scmp.ne.s32.totalorder %s49, %s65
    %p67 = scmp.eq.s32.totalorder %s20, 0
    %p68 = por %p66, %p67
    %s70 = sadd.s32 %s69, 1
    %p73 = scmp.eq.s32.totalorder %s14, 1
    %p74 = scmp.ne.s32.totalorder %s69, %s71
    %p75 = scmp.eq.s32.totalorder %s14, 0
    %p76 = por %p74, %p75
    %p77 = scmp.ne.s32.totalorder %s69, %s71
    %p78 = scmp.eq.s32.totalorder %s19, 1
    %p79 = por %p77, %p78
    %p80 = scmp.ne.s32.totalorder %s71, %s72
    %p81 = scmp.eq.s32.totalorder %s19, 0
    %p82 = por %p80, %p81
    %p83 = scmp.ne.s32.totalorder %s71, %s72
    %p84 = scmp.eq.s32.totalorder %s20, 1
    %p85 = por %p83, %p84
    %p87 = scmp.ne.s32.totalorder %s72, %s86
    %p88 = scmp.eq.s32.totalorder %s20, 0
    %p89 = por %p87, %p88
    %s91 = sadd.s32 %s90, 1
    %p94 = scmp.eq.s32.totalorder %s14, 1
    %p95 = scmp.ne.s32.totalorder %s90, %s92
    %p96 = scmp.eq.s32.totalorder %s14, 0
    %p97 = por %p95, %p96
    %p98 = scmp.ne.s32.totalorder %s90, %s92
    %p99 = scmp.eq.s32.totalorder %s19, 1
    %p100 = por %p98, %p99
    %p101 = scmp.ne.s32.totalorder %s92, %s93
    %p102 = scmp.eq.s32.totalorder %s19, 0
    %p103 = por %p101, %p102
    %p104 = scmp.ne.s32.totalorder %s92, %s93
    %p105 = scmp.eq.s32.totalorder %s20, 1
    %p106 = por %p104, %p105
    %p108 = scmp.ne.s32.totalorder %s93, %s107
    %p109 = scmp.eq.s32.totalorder %s20, 0
    %p110 = por %p108, %p109
    %s112 = sadd.s32 %s111, 1
    %p115 = scmp.eq.s32.totalorder %s14, 1
    %p116 = scmp.ne.s32.totalorder %s111, %s113
    %p117 = scmp.eq.s32.totalorder %s14, 0
    %p118 = por %p116, %p117
    %p119 = scmp.ne.s32.totalorder %s111, %s113
    %p120 = scmp.eq.s32.totalorder %s19, 1
    %p121 = por %p119, %p120
    %p122 = scmp.ne.s32.totalorder %s113, %s114
    %p123 = scmp.eq.s32.totalorder %s19, 0
    %p124 = por %p122, %p123
    %p125 = scmp.ne.s32.totalorder %s113, %s114
    %p126 = scmp.eq.s32.totalorder %s20, 1
    %p127 = por %p125, %p126
    %p129 = scmp.ne.s32.totalorder %s114, %s128
    %p130 = scmp.eq.s32.totalorder %s20, 0
    %p131 = por %p129, %p130
    %s133 = sadd.s32 %s132, 1
    %p136 = scmp.eq.s32.totalorder %s14, 1
    %p137 = scmp.ne.s32.totalorder %s132, %s134
    %p138 = scmp.eq.s32.totalorder %s14, 0
    %p139 = por %p137, %p138
    %p140 = scmp.ne.s32.totalorder %s132, %s134
    %p141 = scmp.eq.s32.totalorder %s19, 1
    %p142 = por %p140, %p141
    %p143 = scmp.ne.s32.totalorder %s134, %s135
    %p144 = scmp.eq.s32.totalorder %s19, 0
    %p145 = por %p143, %p144
    %p146 = scmp.ne.s32.totalorder %s134, %s135
    %p147 = scmp.eq.s32.totalorder %s20, 1
    %p148 = por %p146, %p147
    %p150 = scmp.ne.s32.totalorder %s135, %s149
    %p151 = scmp.eq.s32.totalorder %s20, 0
    %p152 = por %p150, %p151
    %s154 = sadd.s32 %s153, 1
    %p157 = scmp.eq.s32.totalorder %s14, 1
    %p158 = scmp.ne.s32.totalorder %s153, %s155
    %p159 = scmp.eq.s32.totalorder %s14, 0
    %p160 = por %p158, %p159
    %p161 = scmp.ne.s32.totalorder %s153, %s155
    %p162 = scmp.eq.s32.totalorder %s19, 1
    %p163 = por %p161, %p162
    %p164 = scmp.ne.s32.totalorder %s155, %s156
    %p165 = scmp.eq.s32.totalorder %s19, 0
    %p166 = por %p164, %p165
    %p167 = scmp.ne.s32.totalorder %s155, %s156
    %p168 = scmp.eq.s32.totalorder %s20, 1
    %p169 = por %p167, %p168
    %p171 = scmp.ne.s32.totalorder %s156, %s170
    %p172 = scmp.eq.s32.totalorder %s20, 0
    %p173 = por %p171, %p172
    %s175 = sadd.s32 %s174, 1
    %p178 = scmp.eq.s32.totalorder %s14, 1
    %p179 = scmp.ne.s32.totalorder %s174, %s176
    %p180 = scmp.eq.s32.totalorder %s14, 0
    %p181 = por %p179, %p180
    %p182 = scmp.ne.s32.totalorder %s174, %s176
    %p183 = scmp.eq.s32.totalorder %s19, 1
    %p184 = por %p182, %p183
    %p185 = scmp.ne.s32.totalorder %s176, %s177
    %p186 = scmp.eq.s32.totalorder %s19, 0
    %p187 = por %p185, %p186
    %p188 = scmp.ne.s32.totalorder %s176, %s177
    %p189 = scmp.eq.s32.totalorder %s20, 1
    %p190 = por %p188, %p189
    %p192 = scmp.ne.s32.totalorder %s177, %s191
    %p193 = scmp.eq.s32.totalorder %s20, 0
    %p194 = por %p192, %p193
    %s195 = ssub.s32 %s14, %s21
    %p196 = scmp.eq.s32.totalorder %s195, 0
    %s198 = sadd.s32 %s197, 1
    %s199 = scalar_select %p196, %s197, %s198
    %p202 = pneg %p196
    %p203 = scmp.eq.s32.totalorder %s14, 1
    %p204 = por %p202, %p203
    %p205 = scmp.ne.s32.totalorder %s197, %s200
    %p206 = scmp.eq.s32.totalorder %s14, 0
    %p207 = por %p205, %p206
    %p208 = scmp.ne.s32.totalorder %s197, %s200
    %p209 = scmp.eq.s32.totalorder %s19, 1
    %p210 = por %p208, %p209
    %p211 = scmp.ne.s32.totalorder %s200, %s201
    %p212 = scmp.eq.s32.totalorder %s19, 0
    %p213 = por %p211, %p212
    %p214 = scmp.ne.s32.totalorder %s200, %s201
    %p215 = scmp.eq.s32.totalorder %s20, 1
    %p216 = por %p214, %p215
    %p218 = scmp.ne.s32.totalorder %s201, %s217
    %p219 = scmp.eq.s32.totalorder %s20, 0
    %p220 = por %p218, %p219
    %p221 = scmp.le.s32.totalorder 1, %s14
    %p222 = scmp.lt.s32.totalorder %s14, 3
    %p223 = pnand %p221, %p222
    %p224 = pneg %p223
    // Predicated region
    $region9: #{gat_forward.3} parent=5 // pred_check
      _
    $region10: #{gat_forward.3} parent=5 // pred_check_branch
      %226 = sbr.rel (%p223) target = $region12
    $region11: #{gat_forward.3} parent=5 // pred_region
      %s227 = ssub.s32 %s14, 1
      // Predicated region
      $region13: #{gat_forward.3} parent=11 // pred_check
        %p228 = pneg %p35
      $region14: #{gat_forward.3} parent=11 // pred_check_branch
        %230 = sbr.rel (%p228) target = $region16
      $region15: #{gat_forward.3} parent=11 // pred_region
        _
      $region16: #{gat_forward.3} parent=11 // pred_fallthru
        _
      // Predicated region
      $region17: #{gat_forward.3} parent=11 // pred_check
        %p231 = pneg %p82
      $region18: #{gat_forward.3} parent=11 // pred_check_branch
        %233 = sbr.rel (%p231) target = $region20
      $region19: #{gat_forward.3} parent=11 // pred_region
        _
      $region20: #{gat_forward.3} parent=11 // pred_fallthru
        _
      // Predicated region
      $region21: #{gat_forward.3} parent=11 // pred_check
        %p234 = pneg %p103
      $region22: #{gat_forward.3} parent=11 // pred_check_branch
        %236 = sbr.rel (%p234) target = $region24
      $region23: #{gat_forward.3} parent=11 // pred_region
        _
      $region24: #{gat_forward.3} parent=11 // pred_fallthru
        _
      // Predicated region
      $region25: #{gat_forward.3} parent=11 // pred_check
        %p237 = pneg %p124
      $region26: #{gat_forward.3} parent=11 // pred_check_branch
        %239 = sbr.rel (%p237) target = $region28
      $region27: #{gat_forward.3} parent=11 // pred_region
        _
      $region28: #{gat_forward.3} parent=11 // pred_fallthru
        _
      // Predicated region
      $region29: #{gat_forward.3} parent=11 // pred_check
        %p240 = pneg %p145
      $region30: #{gat_forward.3} parent=11 // pred_check_branch
        %242 = sbr.rel (%p240) target = $region32
      $region31: #{gat_forward.3} parent=11 // pred_region
        _
      $region32: #{gat_forward.3} parent=11 // pred_fallthru
        _
      // Predicated region
      $region33: #{gat_forward.3} parent=11 // pred_check
        %p243 = pneg %p166
      $region34: #{gat_forward.3} parent=11 // pred_check_branch
        %245 = sbr.rel (%p243) target = $region36
      $region35: #{gat_forward.3} parent=11 // pred_region
        _
      $region36: #{gat_forward.3} parent=11 // pred_fallthru
        _
      // Predicated region
      $region37: #{gat_forward.3} parent=11 // pred_check
        %p246 = pneg %p187
      $region38: #{gat_forward.3} parent=11 // pred_check_branch
        %248 = sbr.rel (%p246) target = $region40
      $region39: #{gat_forward.3} parent=11 // pred_region
        _
      $region40: #{gat_forward.3} parent=11 // pred_fallthru
        _
    $region12: #{gat_forward.3} parent=5 // pred_fallthru
      _
    %p249 = scmp.lt.s32.totalorder %s14, 2
    // Predicated region
    $region41: #{gat_forward.3} parent=5 // pred_check
      %p250 = pneg %p249
    $region42: #{gat_forward.3} parent=5 // pred_check_branch
      %252 = sbr.rel (%p250) target = $region44
    $region43: #{gat_forward.3} parent=5 // pred_region
      // Predicated region
      $region45: #{gat_forward.3} parent=43 // pred_check
        %p253 = pneg %p55
      $region46: #{gat_forward.3} parent=43 // pred_check_branch
        %255 = sbr.rel (%p253) target = $region48
      $region47: #{gat_forward.3} parent=43 // pred_region
        %s256 = smul.u32 16, %s14
        %p257 = scmp.lt.s32.totalorder %s256, 31
        %s258 = scalar_select %p257, %s256, 31
        %s259 = smul.addr %s258, 2
        %s260 = smul.addr %s259, 4
        %s261 = scalar_lea.vmem %s1, %s260
        %s262 = smul.u32 16, %s14
      $region48: #{gat_forward.3} parent=43 // pred_fallthru
        _
    $region44: #{gat_forward.3} parent=5 // pred_fallthru
      _
    %p263 = scmp.le.s32.totalorder 1, %s14
    %p264 = scmp.lt.s32.totalorder %s14, 3
    %p265 = pnand %p263, %p264
    %p266 = pneg %p265
    // Predicated region
    $region49: #{gat_forward.3} parent=5 // pred_check
      _
    $region50: #{gat_forward.3} parent=5 // pred_check_branch
      %268 = sbr.rel (%p265) target = $region52
    $region51: #{gat_forward.3} parent=5 // pred_region
      %s269 = ssub.s32 %s14, 1
      %p270 = pneg %p35
      %p271 = pneg %p32
      %s272 = smul.u32 16, %s19
      %p273 = scmp.lt.s32.totalorder %s272, 31
      %s274 = scalar_select %p273, %s272, 31
      %s275 = smul.addr %s274, 2
      %s276 = smul.addr %s275, 4
      %s277 = scalar_lea.vmem %s1, %s276
      %p278 = pneg %p61
      %p279 = pneg %p58
      %p280 = pneg %p82
      %p281 = pneg %p79
      %p282 = pneg %p103
      %p283 = pneg %p100
      %p284 = pneg %p124
      %p285 = pneg %p121
      %p286 = pneg %p145
      %p287 = pneg %p142
      %p288 = pneg %p166
      %p289 = pneg %p163
      %p290 = pneg %p187
      %p291 = pneg %p184
      %p292 = pneg %p213
      %p293 = pneg %p210
      %s294 = smul.u32 16, %s19
      %p295 = scmp.lt.s32.totalorder %s294, 31
      %s296 = scalar_select %p295, %s294, 31
      %s297 = smul.addr %s296, 8
      %s298 = scalar_lea.vmem %s8, %s297
      %s299 = smul.u32 16, %s19
      %p300 = scmp.lt.s32.totalorder %s299, 31
      %s301 = scalar_select %p300, %s299, 31
      %s302 = smul.addr %s301, 2
      %s303 = smul.addr %s302, 4
      %s304 = scalar_lea.vmem %s1, %s303
      %s305 = smul.u32 16, %s19
      %s306 = smul.u32 16, %s19
      %p307 = scmp.lt.s32.totalorder %s306, 31
      %s308 = scalar_select %p307, %s306, 31
      %s309 = smul.addr %s308, 8
      %s310 = scalar_lea.vmem %s8, %s309
      %s311 = smul.u32 16, %s19
      %s313 = smul.u32 %s19, 128
      %v314 = vld [vmem:[%s304] sm:$0xff]
      %v315 = vld [vmem:[%s304 + $0x8] sm:$0xff]
      %v316 = vld [vmem:[%s304 + $0x10] sm:$0xff]
      %v317 = vld [vmem:[%s304 + $0x18] sm:$0xff]
      %v318 = vld [vmem:[%s304 + $0x20] sm:$0xff]
      %v319 = vld [vmem:[%s304 + $0x28] sm:$0xff]
      %v320 = vld [vmem:[%s304 + $0x30] sm:$0xff]
      %v321 = vld [vmem:[%s304 + $0x38] sm:$0xff]
      %v322 = vld [vmem:[%s304 + $0x40] sm:$0xff]
      %v323 = vld [vmem:[%s304 + $0x48] sm:$0xff]
      %v324 = vld [vmem:[%s304 + $0x50] sm:$0xff]
      %v325 = vld [vmem:[%s304 + $0x58] sm:$0xff]
      %v326 = vld [vmem:[%s304 + $0x60] sm:$0xff]
      %v327 = vld [vmem:[%s304 + $0x68] sm:$0xff]
      %v328 = vld [vmem:[%s304 + $0x70] sm:$0xff]
      %v329 = vld [vmem:[%s304 + $0x78] sm:$0xff]
      %v330 = vunpack.c.l.bf16 %v314
      %v331 = vunpack.c.h.bf16 %v314
      %v332 = vunpack.c.l.bf16 %v315
      %v333 = vunpack.c.h.bf16 %v315
      %v334 = vunpack.c.l.bf16 %v316
      %v335 = vunpack.c.h.bf16 %v316
      %v336 = vunpack.c.l.bf16 %v317
      %v337 = vunpack.c.h.bf16 %v317
      %v338 = vunpack.c.l.bf16 %v318
      %v339 = vunpack.c.h.bf16 %v318
      %v340 = vunpack.c.l.bf16 %v319
      %v341 = vunpack.c.h.bf16 %v319
      %v342 = vunpack.c.l.bf16 %v320
      %v343 = vunpack.c.h.bf16 %v320
      %v344 = vunpack.c.l.bf16 %v321
      %v345 = vunpack.c.h.bf16 %v321
      %v346 = vunpack.c.l.bf16 %v322
      %v347 = vunpack.c.h.bf16 %v322
      %v348 = vunpack.c.l.bf16 %v323
      %v349 = vunpack.c.h.bf16 %v323
      %v350 = vunpack.c.l.bf16 %v324
      %v351 = vunpack.c.h.bf16 %v324
      %v352 = vunpack.c.l.bf16 %v325
      %v353 = vunpack.c.h.bf16 %v325
      %v354 = vunpack.c.l.bf16 %v326
      %v355 = vunpack.c.h.bf16 %v326
      %v356 = vunpack.c.l.bf16 %v327
      %v357 = vunpack.c.h.bf16 %v327
      %v358 = vunpack.c.l.bf16 %v328
      %v359 = vunpack.c.h.bf16 %v328
      %v360 = vunpack.c.l.bf16 %v329
      %v361 = vunpack.c.h.bf16 %v329
      %v362 = vld [vmem:[%s2] sm:$0xf]
      %v363 = vld [vmem:[%s2 + $0x4] sm:$0xf]
      %v364 = vld [vmem:[%s2 + $0x8] sm:$0xf]
      %v365 = vld [vmem:[%s2 + $0xc] sm:$0xf]
      %v366 = vld [vmem:[%s3] sm:$0x1]
      %v367 = vld [vmem:[%s4] sm:$0x1]
      %v368 = vld [vmem:[%s5] sm:$0x1]
      %v369 = vld [vmem:[%s0] sm:$0xff]
      %v370 = vld [vmem:[%s0 + $0x8] sm:$0xff]
      %v371 = vld [vmem:[%s0 + $0x10] sm:$0xff]
      %v372 = vld [vmem:[%s0 + $0x18] sm:$0xff]
      %v373 = vld [vmem:[%s0 + $0x20] sm:$0xff]
      %v374 = vld [vmem:[%s0 + $0x28] sm:$0xff]
      %v375 = vld [vmem:[%s0 + $0x30] sm:$0xff]
      %v376 = vld [vmem:[%s0 + $0x38] sm:$0xff]
      %v377 = vld [vmem:[%s0 + $0x40] sm:$0xff]
      %v378 = vld [vmem:[%s0 + $0x48] sm:$0xff]
      %v379 = vld [vmem:[%s0 + $0x50] sm:$0xff]
      %v380 = vld [vmem:[%s0 + $0x58] sm:$0xff]
      %v381 = vld [vmem:[%s0 + $0x60] sm:$0xff]
      %v382 = vld [vmem:[%s0 + $0x68] sm:$0xff]
      %v383 = vld [vmem:[%s0 + $0x70] sm:$0xff]
      %v384 = vld [vmem:[%s0 + $0x78] sm:$0xff]
      %v385 = vld [vmem:[%s0 + $0x80] sm:$0xff]
      %v386 = vld [vmem:[%s0 + $0x88] sm:$0xff]
      %v387 = vld [vmem:[%s0 + $0x90] sm:$0xff]
      %v388 = vld [vmem:[%s0 + $0x98] sm:$0xff]
      %v389 = vld [vmem:[%s0 + $0xa0] sm:$0xff]
      %v390 = vld [vmem:[%s0 + $0xa8] sm:$0xff]
      %v391 = vld [vmem:[%s0 + $0xb0] sm:$0xff]
      %v392 = vld [vmem:[%s0 + $0xb8] sm:$0xff]
      %v393 = vld [vmem:[%s0 + $0xc0] sm:$0xff]
      %v394 = vld [vmem:[%s0 + $0xc8] sm:$0xff]
      %v395 = vld [vmem:[%s0 + $0xd0] sm:$0xff]
      %v396 = vld [vmem:[%s0 + $0xd8] sm:$0xff]
      %v397 = vld [vmem:[%s0 + $0xe0] sm:$0xff]
      %v398 = vld [vmem:[%s0 + $0xe8] sm:$0xff]
      %v399 = vld [vmem:[%s0 + $0xf0] sm:$0xff]
      %v400 = vld [vmem:[%s0 + $0xf8] sm:$0xff]
      %v401 = vpack.c.bf16 %v370, %v369
      %v402 = vpack.c.bf16 %v372, %v371
      %v403 = vpack.c.bf16 %v374, %v373
      %v404 = vpack.c.bf16 %v376, %v375
      %v405 = vpack.c.bf16 %v378, %v377
      %v406 = vpack.c.bf16 %v380, %v379
      %v407 = vpack.c.bf16 %v382, %v381
      %v408 = vpack.c.bf16 %v384, %v383
      %v409 = vpack.c.bf16 %v386, %v385
      %v410 = vpack.c.bf16 %v388, %v387
      %v411 = vpack.c.bf16 %v390, %v389
      %v412 = vpack.c.bf16 %v392, %v391
      %v413 = vpack.c.bf16 %v394, %v393
      %v414 = vpack.c.bf16 %v396, %v395
      %v415 = vpack.c.bf16 %v398, %v397
      %v416 = vpack.c.bf16 %v400, %v399
      %s417 = scalar_lea.vmem %s0, %s313
      %v418 = vld [vmem:[%s417] sm:$0xff]
      %v419 = vld [vmem:[%s417 + $0x8] sm:$0xff]
      %v420 = vld [vmem:[%s417 + $0x10] sm:$0xff]
      %v421 = vld [vmem:[%s417 + $0x18] sm:$0xff]
      %v422 = vld [vmem:[%s417 + $0x20] sm:$0xff]
      %v423 = vld [vmem:[%s417 + $0x28] sm:$0xff]
      %v424 = vld [vmem:[%s417 + $0x30] sm:$0xff]
      %v425 = vld [vmem:[%s417 + $0x38] sm:$0xff]
      %v426 = vld [vmem:[%s417 + $0x40] sm:$0xff]
      %v427 = vld [vmem:[%s417 + $0x48] sm:$0xff]
      %v428 = vld [vmem:[%s417 + $0x50] sm:$0xff]
      %v429 = vld [vmem:[%s417 + $0x58] sm:$0xff]
      %v430 = vld [vmem:[%s417 + $0x60] sm:$0xff]
      %v431 = vld [vmem:[%s417 + $0x68] sm:$0xff]
      %v432 = vld [vmem:[%s417 + $0x70] sm:$0xff]
      %v433 = vld [vmem:[%s417 + $0x78] sm:$0xff]
      %v434 = vpack.c.bf16 %v419, %v418
      %v435 = vpack.c.bf16 %v421, %v420
      %v436 = vpack.c.bf16 %v423, %v422
      %v437 = vpack.c.bf16 %v425, %v424
      %v438 = vpack.c.bf16 %v427, %v426
      %v439 = vpack.c.bf16 %v429, %v428
      %v440 = vpack.c.bf16 %v431, %v430
      %v441 = vpack.c.bf16 %v433, %v432
      %v446 = vunpack.c.l.b16 %v362
      %v447 = vunpack.c.l.b16 %v363
      %v448 = vunpack.c.l.b16 %v364
      %v449 = vunpack.c.l.b16 %v365
      %v450 = vpack.c.b16 %v447, %v446
      %v451 = vpack.c.b16 %v449, %v448
      %vm454 = vcmask 261120
      %v456 = vsel %vm454, %v401, 0
      %v459 = vsel %vm454, %v402, 0
      %v462 = vsel %vm454, %v403, 0
      %v465 = vsel %vm454, %v404, 0
      %v468 = vsel %vm454, %v405, 0
      %v471 = vsel %vm454, %v406, 0
      %v474 = vsel %vm454, %v407, 0
      %v477 = vsel %vm454, %v408, 0
      %v480 = vsel %vm454, %v409, 0
      %v483 = vsel %vm454, %v410, 0
      %v486 = vsel %vm454, %v411, 0
      %v489 = vsel %vm454, %v412, 0
      %v492 = vsel %vm454, %v413, 0
      %v495 = vsel %vm454, %v414, 0
      %v498 = vsel %vm454, %v415, 0
      %v501 = vsel %vm454, %v416, 0
      %503 = vmatpush.bf16.msra.mxu0 0
      %504 = vmatpush.bf16.msra.mxu0 0
      %505 = vmatpush.bf16.msra.mxu0 0
      %506 = vmatpush.bf16.msra.mxu0 0
      %507 = vmatpush.bf16.msra.mxu0 0
      %508 = vmatpush.bf16.msra.mxu0 0
      %509 = vmatpush.bf16.msra.mxu0 %v451
      %510 = vmatpush.bf16.msra.mxu0 %v450
      %511 = vmatmul.bf16.gmra.mxu0 %v456
      %v512 = vpop.f32.mrf.mxu0
      %v513 = vadd.f32 0.0, %v512
      %v514 = vpop.f32.mrf.mxu0
      %v515 = vadd.f32 0.0, %v514
      %516 = vmatmul.bf16.gmra.mxu0 %v459
      %v517 = vpop.f32.mrf.mxu0
      %v518 = vadd.f32 0.0, %v517
      %v519 = vpop.f32.mrf.mxu0
      %v520 = vadd.f32 0.0, %v519
      %521 = vmatmul.bf16.gmra.mxu0 %v462
      %v522 = vpop.f32.mrf.mxu0
      %v523 = vadd.f32 0.0, %v522
      %v524 = vpop.f32.mrf.mxu0
      %v525 = vadd.f32 0.0, %v524
      %526 = vmatmul.bf16.gmra.mxu0 %v465
      %v527 = vpop.f32.mrf.mxu0
      %v528 = vadd.f32 0.0, %v527
      %v529 = vpop.f32.mrf.mxu0
      %v530 = vadd.f32 0.0, %v529
      %531 = vmatmul.bf16.gmra.mxu0 %v468
      %v532 = vpop.f32.mrf.mxu0
      %v533 = vadd.f32 0.0, %v532
      %v534 = vpop.f32.mrf.mxu0
      %v535 = vadd.f32 0.0, %v534
      %536 = vmatmul.bf16.gmra.mxu0 %v471
      %v537 = vpop.f32.mrf.mxu0
      %v538 = vadd.f32 0.0, %v537
      %v539 = vpop.f32.mrf.mxu0
      %v540 = vadd.f32 0.0, %v539
      %541 = vmatmul.bf16.gmra.mxu0 %v474
      %v542 = vpop.f32.mrf.mxu0
      %v543 = vadd.f32 0.0, %v542
      %v544 = vpop.f32.mrf.mxu0
      %v545 = vadd.f32 0.0, %v544
      %546 = vmatmul.bf16.gmra.mxu0 %v477
      %v547 = vpop.f32.mrf.mxu0
      %v548 = vadd.f32 0.0, %v547
      %v549 = vpop.f32.mrf.mxu0
      %v550 = vadd.f32 0.0, %v549
      %551 = vmatmul.bf16.gmra.mxu0 %v480
      %v552 = vpop.f32.mrf.mxu0
      %v553 = vadd.f32 0.0, %v552
      %v554 = vpop.f32.mrf.mxu0
      %v555 = vadd.f32 0.0, %v554
      %556 = vmatmul.bf16.gmra.mxu0 %v483
      %v557 = vpop.f32.mrf.mxu0
      %v558 = vadd.f32 0.0, %v557
      %v559 = vpop.f32.mrf.mxu0
      %v560 = vadd.f32 0.0, %v559
      %561 = vmatmul.bf16.gmra.mxu0 %v486
      %v562 = vpop.f32.mrf.mxu0
      %v563 = vadd.f32 0.0, %v562
      %v564 = vpop.f32.mrf.mxu0
      %v565 = vadd.f32 0.0, %v564
      %566 = vmatmul.bf16.gmra.mxu0 %v489
      %v567 = vpop.f32.mrf.mxu0
      %v568 = vadd.f32 0.0, %v567
      %v569 = vpop.f32.mrf.mxu0
      %v570 = vadd.f32 0.0, %v569
      %571 = vmatmul.bf16.gmra.mxu0 %v492
      %v572 = vpop.f32.mrf.mxu0
      %v573 = vadd.f32 0.0, %v572
      %v574 = vpop.f32.mrf.mxu0
      %v575 = vadd.f32 0.0, %v574
      %576 = vmatmul.bf16.gmra.mxu0 %v495
      %v577 = vpop.f32.mrf.mxu0
      %v578 = vadd.f32 0.0, %v577
      %v579 = vpop.f32.mrf.mxu0
      %v580 = vadd.f32 0.0, %v579
      %581 = vmatmul.bf16.gmra.mxu0 %v498
      %v582 = vpop.f32.mrf.mxu0
      %v583 = vadd.f32 0.0, %v582
      %v584 = vpop.f32.mrf.mxu0
      %v585 = vadd.f32 0.0, %v584
      %586 = vmatmul.bf16.gmra.mxu0 %v501
      %v587 = vpop.f32.mrf.mxu0
      %v588 = vadd.f32 0.0, %v587
      %v589 = vpop.f32.mrf.mxu0
      %v590 = vadd.f32 0.0, %v589
      %591 = vdwg.mxu0
      %v593 = vsel %vm454, %v366, 0
      %595 = vmatpush.bf16.xpose.msra.mxu0 %v477
      %596 = vmatpush.bf16.xpose.msra.mxu0 %v474
      %597 = vmatpush.bf16.xpose.msra.mxu0 %v471
      %598 = vmatpush.bf16.xpose.msra.mxu0 %v468
      %599 = vmatpush.bf16.xpose.msra.mxu0 %v465
      %600 = vmatpush.bf16.xpose.msra.mxu0 %v462
      %601 = vmatpush.bf16.xpose.msra.mxu0 %v459
      %602 = vmatpush.bf16.xpose.msra.mxu0 %v456
      %603 = vmatmul.bf16.gmra.mxu0 %v593
      %v604 = vpop.f32.mrf.mxu0
      %v605 = vadd.f32 0.0, %v604
      %v606 = vpop.f32.mrf.mxu0
      %607 = vdwg.mxu0
      %608 = vmatpush.bf16.xpose.msra.mxu0 %v501
      %609 = vmatpush.bf16.xpose.msra.mxu0 %v498
      %610 = vmatpush.bf16.xpose.msra.mxu0 %v495
      %611 = vmatpush.bf16.xpose.msra.mxu0 %v492
      %612 = vmatpush.bf16.xpose.msra.mxu0 %v489
      %613 = vmatpush.bf16.xpose.msra.mxu0 %v486
      %614 = vmatpush.bf16.xpose.msra.mxu0 %v483
      %615 = vmatpush.bf16.xpose.msra.mxu0 %v480
      %616 = vmatmul.bf16.gmra.mxu0 %v593
      %v617 = vpop.f32.mrf.mxu0
      %v618 = vadd.f32 0.0, %v617
      %v619 = vpop.f32.mrf.mxu0
      %620 = vdwg.mxu0
      %v622 = vsel %vm454, %v367, 0
      %v625 = vsel %vm454, %v434, 0
      %v628 = vsel %vm454, %v435, 0
      %v631 = vsel %vm454, %v436, 0
      %v634 = vsel %vm454, %v437, 0
      %v637 = vsel %vm454, %v438, 0
      %v640 = vsel %vm454, %v439, 0
      %v643 = vsel %vm454, %v440, 0
      %v646 = vsel %vm454, %v441, 0
      %648 = vmatpush.bf16.xpose.msra.mxu0 %v646
      %649 = vmatpush.bf16.xpose.msra.mxu0 %v643
      %650 = vmatpush.bf16.xpose.msra.mxu0 %v640
      %651 = vmatpush.bf16.xpose.msra.mxu0 %v637
      %652 = vmatpush.bf16.xpose.msra.mxu0 %v634
      %653 = vmatpush.bf16.xpose.msra.mxu0 %v631
      %654 = vmatpush.bf16.xpose.msra.mxu0 %v628
      %655 = vmatpush.bf16.xpose.msra.mxu0 %v625
      %656 = vmatmul.bf16.gmra.mxu0 %v622
      %v657 = vpop.f32.mrf.mxu0
      %v658 = vadd.f32 0.0, %v657
      %v659 = vpop.f32.mrf.mxu0
      %660 = vdwg.mxu0
      %v661 = vperm.slane %v658, 0
      %v662 = vlaneseq
      %v663 = vshrl.u32 %v662, 7
      %665 = vset.pattern.permute.xlu0 %v663
      %666 = vperm.xlu0 %665, %v661
      %v667 = vpop.permute.xlu0 %666
      %v668 = vlaneseq
      %v669 = vshrl.u32 %v668, 7
      %v670 = vadd.s32 %v669, 8
      %671 = vset.pattern.permute.xlu0 %v670
      %672 = vperm.xlu0 %671, %v661
      %v673 = vpop.permute.xlu0 %672
      %v674 = vlaneseq
      %v675 = vshrl.u32 %v674, 7
      %v676 = vadd.s32 %v675, 16
      %677 = vset.pattern.permute.xlu0 %v676
      %678 = vperm.xlu0 %677, %v661
      %v679 = vpop.permute.xlu0 %678
      %v680 = vlaneseq
      %v681 = vshrl.u32 %v680, 7
      %v682 = vadd.s32 %v681, 24
      %683 = vset.pattern.permute.xlu0 %v682
      %684 = vperm.xlu0 %683, %v661
      %v685 = vpop.permute.xlu0 %684
      %v686 = vlaneseq
      %v687 = vshrl.u32 %v686, 7
      %v688 = vadd.s32 %v687, 32
      %689 = vset.pattern.permute.xlu0 %v688
      %690 = vperm.xlu0 %689, %v661
      %v691 = vpop.permute.xlu0 %690
      %v692 = vlaneseq
      %v693 = vshrl.u32 %v692, 7
      %v694 = vadd.s32 %v693, 40
      %695 = vset.pattern.permute.xlu0 %v694
      %696 = vperm.xlu0 %695, %v661
      %v697 = vpop.permute.xlu0 %696
      %v698 = vlaneseq
      %v699 = vshrl.u32 %v698, 7
      %v700 = vadd.s32 %v699, 48
      %701 = vset.pattern.permute.xlu0 %v700
      %702 = vperm.xlu0 %701, %v661
      %v703 = vpop.permute.xlu0 %702
      %v704 = vlaneseq
      %v705 = vshrl.u32 %v704, 7
      %v706 = vadd.s32 %v705, 56
      %707 = vset.pattern.permute.xlu0 %v706
      %708 = vperm.xlu0 %707, %v661
      %v709 = vpop.permute.xlu0 %708
      %v710 = vlaneseq
      %v711 = vshrl.u32 %v710, 7
      %v712 = vadd.s32 %v711, 64
      %713 = vset.pattern.permute.xlu0 %v712
      %714 = vperm.xlu0 %713, %v661
      %v715 = vpop.permute.xlu0 %714
      %v716 = vlaneseq
      %v717 = vshrl.u32 %v716, 7
      %v718 = vadd.s32 %v717, 72
      %719 = vset.pattern.permute.xlu0 %v718
      %720 = vperm.xlu0 %719, %v661
      %v721 = vpop.permute.xlu0 %720
      %v722 = vlaneseq
      %v723 = vshrl.u32 %v722, 7
      %v724 = vadd.s32 %v723, 80
      %725 = vset.pattern.permute.xlu0 %v724
      %726 = vperm.xlu0 %725, %v661
      %v727 = vpop.permute.xlu0 %726
      %v728 = vlaneseq
      %v729 = vshrl.u32 %v728, 7
      %v730 = vadd.s32 %v729, 88
      %731 = vset.pattern.permute.xlu0 %v730
      %732 = vperm.xlu0 %731, %v661
      %v733 = vpop.permute.xlu0 %732
      %v734 = vlaneseq
      %v735 = vshrl.u32 %v734, 7
      %v736 = vadd.s32 %v735, 96
      %737 = vset.pattern.permute.xlu0 %v736
      %738 = vperm.xlu0 %737, %v661
      %v739 = vpop.permute.xlu0 %738
      %v740 = vlaneseq
      %v741 = vshrl.u32 %v740, 7
      %v742 = vadd.s32 %v741, 104
      %743 = vset.pattern.permute.xlu0 %v742
      %744 = vperm.xlu0 %743, %v661
      %v745 = vpop.permute.xlu0 %744
      %v746 = vlaneseq
      %v747 = vshrl.u32 %v746, 7
      %v748 = vadd.s32 %v747, 112
      %749 = vset.pattern.permute.xlu0 %v748
      %750 = vperm.xlu0 %749, %v661
      %v751 = vpop.permute.xlu0 %750
      %v752 = vlaneseq
      %v753 = vshrl.u32 %v752, 7
      %v754 = vadd.s32 %v753, 120
      %755 = vset.pattern.permute.xlu0 %v754
      %756 = vperm.xlu0 %755, %v661
      %v757 = vpop.permute.xlu0 %756
      %v758 = vperm.slane %v658, 1
      %v759 = vlaneseq
      %v760 = vshrl.u32 %v759, 7
      %762 = vset.pattern.permute.xlu0 %v760
      %763 = vperm.xlu0 %762, %v758
      %v764 = vpop.permute.xlu0 %763
      %v765 = vlaneseq
      %v766 = vshrl.u32 %v765, 7
      %v767 = vadd.s32 %v766, 8
      %768 = vset.pattern.permute.xlu0 %v767
      %769 = vperm.xlu0 %768, %v758
      %v770 = vpop.permute.xlu0 %769
      %v771 = vlaneseq
      %v772 = vshrl.u32 %v771, 7
      %v773 = vadd.s32 %v772, 16
      %774 = vset.pattern.permute.xlu0 %v773
      %775 = vperm.xlu0 %774, %v758
      %v776 = vpop.permute.xlu0 %775
      %v777 = vlaneseq
      %v778 = vshrl.u32 %v777, 7
      %v779 = vadd.s32 %v778, 24
      %780 = vset.pattern.permute.xlu0 %v779
      %781 = vperm.xlu0 %780, %v758
      %v782 = vpop.permute.xlu0 %781
      %v783 = vlaneseq
      %v784 = vshrl.u32 %v783, 7
      %v785 = vadd.s32 %v784, 32
      %786 = vset.pattern.permute.xlu0 %v785
      %787 = vperm.xlu0 %786, %v758
      %v788 = vpop.permute.xlu0 %787
      %v789 = vlaneseq
      %v790 = vshrl.u32 %v789, 7
      %v791 = vadd.s32 %v790, 40
      %792 = vset.pattern.permute.xlu0 %v791
      %793 = vperm.xlu0 %792, %v758
      %v794 = vpop.permute.xlu0 %793
      %v795 = vlaneseq
      %v796 = vshrl.u32 %v795, 7
      %v797 = vadd.s32 %v796, 48
      %798 = vset.pattern.permute.xlu0 %v797
      %799 = vperm.xlu0 %798, %v758
      %v800 = vpop.permute.xlu0 %799
      %v801 = vlaneseq
      %v802 = vshrl.u32 %v801, 7
      %v803 = vadd.s32 %v802, 56
      %804 = vset.pattern.permute.xlu0 %v803
      %805 = vperm.xlu0 %804, %v758
      %v806 = vpop.permute.xlu0 %805
      %v807 = vlaneseq
      %v808 = vshrl.u32 %v807, 7
      %v809 = vadd.s32 %v808, 64
      %810 = vset.pattern.permute.xlu0 %v809
      %811 = vperm.xlu0 %810, %v758
      %v812 = vpop.permute.xlu0 %811
      %v813 = vlaneseq
      %v814 = vshrl.u32 %v813, 7
      %v815 = vadd.s32 %v814, 72
      %816 = vset.pattern.permute.xlu0 %v815
      %817 = vperm.xlu0 %816, %v758
      %v818 = vpop.permute.xlu0 %817
      %v819 = vlaneseq
      %v820 = vshrl.u32 %v819, 7
      %v821 = vadd.s32 %v820, 80
      %822 = vset.pattern.permute.xlu0 %v821
      %823 = vperm.xlu0 %822, %v758
      %v824 = vpop.permute.xlu0 %823
      %v825 = vlaneseq
      %v826 = vshrl.u32 %v825, 7
      %v827 = vadd.s32 %v826, 88
      %828 = vset.pattern.permute.xlu0 %v827
      %829 = vperm.xlu0 %828, %v758
      %v830 = vpop.permute.xlu0 %829
      %v831 = vlaneseq
      %v832 = vshrl.u32 %v831, 7
      %v833 = vadd.s32 %v832, 96
      %834 = vset.pattern.permute.xlu0 %v833
      %835 = vperm.xlu0 %834, %v758
      %v836 = vpop.permute.xlu0 %835
      %v837 = vlaneseq
      %v838 = vshrl.u32 %v837, 7
      %v839 = vadd.s32 %v838, 104
      %840 = vset.pattern.permute.xlu0 %v839
      %841 = vperm.xlu0 %840, %v758
      %v842 = vpop.permute.xlu0 %841
      %v843 = vlaneseq
      %v844 = vshrl.u32 %v843, 7
      %v845 = vadd.s32 %v844, 112
      %846 = vset.pattern.permute.xlu0 %v845
      %847 = vperm.xlu0 %846, %v758
      %v848 = vpop.permute.xlu0 %847
      %v849 = vlaneseq
      %v850 = vshrl.u32 %v849, 7
      %v851 = vadd.s32 %v850, 120
      %852 = vset.pattern.permute.xlu0 %v851
      %853 = vperm.xlu0 %852, %v758
      %v854 = vpop.permute.xlu0 %853
      %v857 = vrot.slane %v618, 7
      %vm858 = vcmask 1040384
      %v859 = vsel %vm858, %v605, %v857
      %vm860 = vcmask 1041409
      %v861 = vsel %vm860, %v605, %v857
      %v862 = vrot.slane %v861, 1
      %v863 = vperm.slane %v859, 0
      %v864 = vperm.slane %v859, 1
      %v865 = vperm.slane %v862, 0
      %v866 = vperm.slane %v862, 1
      %v871 = vadd.f32 %v667, %v863
      %v872 = vadd.f32 %v667, %v864
      %v873 = vadd.f32 %v673, %v863
      %v874 = vadd.f32 %v673, %v864
      %v875 = vadd.f32 %v679, %v863
      %v876 = vadd.f32 %v679, %v864
      %v877 = vadd.f32 %v685, %v863
      %v878 = vadd.f32 %v685, %v864
      %v879 = vadd.f32 %v691, %v863
      %v880 = vadd.f32 %v691, %v864
      %v881 = vadd.f32 %v697, %v863
      %v882 = vadd.f32 %v697, %v864
      %v883 = vadd.f32 %v703, %v863
      %v884 = vadd.f32 %v703, %v864
      %v885 = vadd.f32 %v709, %v863
      %v886 = vadd.f32 %v709, %v864
      %v887 = vadd.f32 %v715, %v863
      %v888 = vadd.f32 %v715, %v864
      %v889 = vadd.f32 %v721, %v863
      %v890 = vadd.f32 %v721, %v864
      %v891 = vadd.f32 %v727, %v863
      %v892 = vadd.f32 %v727, %v864
      %v893 = vadd.f32 %v733, %v863
      %v894 = vadd.f32 %v733, %v864
      %v895 = vadd.f32 %v739, %v863
      %v896 = vadd.f32 %v739, %v864
      %v897 = vadd.f32 %v745, %v863
      %v898 = vadd.f32 %v745, %v864
      %v899 = vadd.f32 %v751, %v863
      %v900 = vadd.f32 %v751, %v864
      %v901 = vadd.f32 %v757, %v863
      %v902 = vadd.f32 %v757, %v864
      %v903 = vadd.f32 %v764, %v865
      %v904 = vadd.f32 %v764, %v866
      %v905 = vadd.f32 %v770, %v865
      %v906 = vadd.f32 %v770, %v866
      %v907 = vadd.f32 %v776, %v865
      %v908 = vadd.f32 %v776, %v866
      %v909 = vadd.f32 %v782, %v865
      %v910 = vadd.f32 %v782, %v866
      %v911 = vadd.f32 %v788, %v865
      %v912 = vadd.f32 %v788, %v866
      %v913 = vadd.f32 %v794, %v865
      %v914 = vadd.f32 %v794, %v866
      %v915 = vadd.f32 %v800, %v865
      %v916 = vadd.f32 %v800, %v866
      %v917 = vadd.f32 %v806, %v865
      %v918 = vadd.f32 %v806, %v866
      %v919 = vadd.f32 %v812, %v865
      %v920 = vadd.f32 %v812, %v866
      %v921 = vadd.f32 %v818, %v865
      %v922 = vadd.f32 %v818, %v866
      %v923 = vadd.f32 %v824, %v865
      %v924 = vadd.f32 %v824, %v866
      %v925 = vadd.f32 %v830, %v865
      %v926 = vadd.f32 %v830, %v866
      %v927 = vadd.f32 %v836, %v865
      %v928 = vadd.f32 %v836, %v866
      %v929 = vadd.f32 %v842, %v865
      %v930 = vadd.f32 %v842, %v866
      %v931 = vadd.f32 %v848, %v865
      %v932 = vadd.f32 %v848, %v866
      %v933 = vadd.f32 %v854, %v865
      %v934 = vadd.f32 %v854, %v866
      %v935 = vmul.f32 %v871, 0.2
      %v936 = vmul.f32 %v872, 0.2
      %v937 = vmul.f32 %v873, 0.2
      %v938 = vmul.f32 %v874, 0.2
      %v939 = vmul.f32 %v875, 0.2
      %v940 = vmul.f32 %v876, 0.2
      %v941 = vmul.f32 %v877, 0.2
      %v942 = vmul.f32 %v878, 0.2
      %v943 = vmul.f32 %v879, 0.2
      %v944 = vmul.f32 %v880, 0.2
      %v945 = vmul.f32 %v881, 0.2
      %v946 = vmul.f32 %v882, 0.2
      %v947 = vmul.f32 %v883, 0.2
      %v948 = vmul.f32 %v884, 0.2
      %v949 = vmul.f32 %v885, 0.2
      %v950 = vmul.f32 %v886, 0.2
      %v951 = vmul.f32 %v887, 0.2
      %v952 = vmul.f32 %v888, 0.2
      %v953 = vmul.f32 %v889, 0.2
      %v954 = vmul.f32 %v890, 0.2
      %v955 = vmul.f32 %v891, 0.2
      %v956 = vmul.f32 %v892, 0.2
      %v957 = vmul.f32 %v893, 0.2
      %v958 = vmul.f32 %v894, 0.2
      %v959 = vmul.f32 %v895, 0.2
      %v960 = vmul.f32 %v896, 0.2
      %v961 = vmul.f32 %v897, 0.2
      %v962 = vmul.f32 %v898, 0.2
      %v963 = vmul.f32 %v899, 0.2
      %v964 = vmul.f32 %v900, 0.2
      %v965 = vmul.f32 %v901, 0.2
      %v966 = vmul.f32 %v902, 0.2
      %v967 = vmul.f32 %v903, 0.2
      %v968 = vmul.f32 %v904, 0.2
      %v969 = vmul.f32 %v905, 0.2
      %v970 = vmul.f32 %v906, 0.2
      %v971 = vmul.f32 %v907, 0.2
      %v972 = vmul.f32 %v908, 0.2
      %v973 = vmul.f32 %v909, 0.2
      %v974 = vmul.f32 %v910, 0.2
      %v975 = vmul.f32 %v911, 0.2
      %v976 = vmul.f32 %v912, 0.2
      %v977 = vmul.f32 %v913, 0.2
      %v978 = vmul.f32 %v914, 0.2
      %v979 = vmul.f32 %v915, 0.2
      %v980 = vmul.f32 %v916, 0.2
      %v981 = vmul.f32 %v917, 0.2
      %v982 = vmul.f32 %v918, 0.2
      %v983 = vmul.f32 %v919, 0.2
      %v984 = vmul.f32 %v920, 0.2
      %v985 = vmul.f32 %v921, 0.2
      %v986 = vmul.f32 %v922, 0.2
      %v987 = vmul.f32 %v923, 0.2
      %v988 = vmul.f32 %v924, 0.2
      %v989 = vmul.f32 %v925, 0.2
      %v990 = vmul.f32 %v926, 0.2
      %v991 = vmul.f32 %v927, 0.2
      %v992 = vmul.f32 %v928, 0.2
      %v993 = vmul.f32 %v929, 0.2
      %v994 = vmul.f32 %v930, 0.2
      %v995 = vmul.f32 %v931, 0.2
      %v996 = vmul.f32 %v932, 0.2
      %v997 = vmul.f32 %v933, 0.2
      %v998 = vmul.f32 %v934, 0.2
      %v999 = vmax.f32 %v871, %v935
      %v1000 = vmax.f32 %v872, %v936
      %v1001 = vmax.f32 %v873, %v937
      %v1002 = vmax.f32 %v874, %v938
      %v1003 = vmax.f32 %v875, %v939
      %v1004 = vmax.f32 %v876, %v940
      %v1005 = vmax.f32 %v877, %v941
      %v1006 = vmax.f32 %v878, %v942
      %v1007 = vmax.f32 %v879, %v943
      %v1008 = vmax.f32 %v880, %v944
      %v1009 = vmax.f32 %v881, %v945
      %v1010 = vmax.f32 %v882, %v946
      %v1011 = vmax.f32 %v883, %v947
      %v1012 = vmax.f32 %v884, %v948
      %v1013 = vmax.f32 %v885, %v949
      %v1014 = vmax.f32 %v886, %v950
      %v1015 = vmax.f32 %v887, %v951
      %v1016 = vmax.f32 %v888, %v952
      %v1017 = vmax.f32 %v889, %v953
      %v1018 = vmax.f32 %v890, %v954
      %v1019 = vmax.f32 %v891, %v955
      %v1020 = vmax.f32 %v892, %v956
      %v1021 = vmax.f32 %v893, %v957
      %v1022 = vmax.f32 %v894, %v958
      %v1023 = vmax.f32 %v895, %v959
      %v1024 = vmax.f32 %v896, %v960
      %v1025 = vmax.f32 %v897, %v961
      %v1026 = vmax.f32 %v898, %v962
      %v1027 = vmax.f32 %v899, %v963
      %v1028 = vmax.f32 %v900, %v964
      %v1029 = vmax.f32 %v901, %v965
      %v1030 = vmax.f32 %v902, %v966
      %v1031 = vmax.f32 %v903, %v967
      %v1032 = vmax.f32 %v904, %v968
      %v1033 = vmax.f32 %v905, %v969
      %v1034 = vmax.f32 %v906, %v970
      %v1035 = vmax.f32 %v907, %v971
      %v1036 = vmax.f32 %v908, %v972
      %v1037 = vmax.f32 %v909, %v973
      %v1038 = vmax.f32 %v910, %v974
      %v1039 = vmax.f32 %v911, %v975
      %v1040 = vmax.f32 %v912, %v976
      %v1041 = vmax.f32 %v913, %v977
      %v1042 = vmax.f32 %v914, %v978
      %v1043 = vmax.f32 %v915, %v979
      %v1044 = vmax.f32 %v916, %v980
      %v1045 = vmax.f32 %v917, %v981
      %v1046 = vmax.f32 %v918, %v982
      %v1047 = vmax.f32 %v919, %v983
      %v1048 = vmax.f32 %v920, %v984
      %v1049 = vmax.f32 %v921, %v985
      %v1050 = vmax.f32 %v922, %v986
      %v1051 = vmax.f32 %v923, %v987
      %v1052 = vmax.f32 %v924, %v988
      %v1053 = vmax.f32 %v925, %v989
      %v1054 = vmax.f32 %v926, %v990
      %v1055 = vmax.f32 %v927, %v991
      %v1056 = vmax.f32 %v928, %v992
      %v1057 = vmax.f32 %v929, %v993
      %v1058 = vmax.f32 %v930, %v994
      %v1059 = vmax.f32 %v931, %v995
      %v1060 = vmax.f32 %v932, %v996
      %v1061 = vmax.f32 %v933, %v997
      %v1062 = vmax.f32 %v934, %v998
      %v1063 = vadd.f32 %v999, %v330
      %v1064 = vadd.f32 %v1000, %v331
      %v1065 = vadd.f32 %v1001, %v332
      %v1066 = vadd.f32 %v1002, %v333
      %v1067 = vadd.f32 %v1003, %v334
      %v1068 = vadd.f32 %v1004, %v335
      %v1069 = vadd.f32 %v1005, %v336
      %v1070 = vadd.f32 %v1006, %v337
      %v1071 = vadd.f32 %v1007, %v338
      %v1072 = vadd.f32 %v1008, %v339
      %v1073 = vadd.f32 %v1009, %v340
      %v1074 = vadd.f32 %v1010, %v341
      %v1075 = vadd.f32 %v1011, %v342
      %v1076 = vadd.f32 %v1012, %v343
      %v1077 = vadd.f32 %v1013, %v344
      %v1078 = vadd.f32 %v1014, %v345
      %v1079 = vadd.f32 %v1015, %v346
      %v1080 = vadd.f32 %v1016, %v347
      %v1081 = vadd.f32 %v1017, %v348
      %v1082 = vadd.f32 %v1018, %v349
      %v1083 = vadd.f32 %v1019, %v350
      %v1084 = vadd.f32 %v1020, %v351
      %v1085 = vadd.f32 %v1021, %v352
      %v1086 = vadd.f32 %v1022, %v353
      %v1087 = vadd.f32 %v1023, %v354
      %v1088 = vadd.f32 %v1024, %v355
      %v1089 = vadd.f32 %v1025, %v356
      %v1090 = vadd.f32 %v1026, %v357
      %v1091 = vadd.f32 %v1027, %v358
      %v1092 = vadd.f32 %v1028, %v359
      %v1093 = vadd.f32 %v1029, %v360
      %v1094 = vadd.f32 %v1030, %v361
      %v1095 = vadd.f32 %v1031, %v330
      %v1096 = vadd.f32 %v1032, %v331
      %v1097 = vadd.f32 %v1033, %v332
      %v1098 = vadd.f32 %v1034, %v333
      %v1099 = vadd.f32 %v1035, %v334
      %v1100 = vadd.f32 %v1036, %v335
      %v1101 = vadd.f32 %v1037, %v336
      %v1102 = vadd.f32 %v1038, %v337
      %v1103 = vadd.f32 %v1039, %v338
      %v1104 = vadd.f32 %v1040, %v339
      %v1105 = vadd.f32 %v1041, %v340
      %v1106 = vadd.f32 %v1042, %v341
      %v1107 = vadd.f32 %v1043, %v342
      %v1108 = vadd.f32 %v1044, %v343
      %v1109 = vadd.f32 %v1045, %v344
      %v1110 = vadd.f32 %v1046, %v345
      %v1111 = vadd.f32 %v1047, %v346
      %v1112 = vadd.f32 %v1048, %v347
      %v1113 = vadd.f32 %v1049, %v348
      %v1114 = vadd.f32 %v1050, %v349
      %v1115 = vadd.f32 %v1051, %v350
      %v1116 = vadd.f32 %v1052, %v351
      %v1117 = vadd.f32 %v1053, %v352
      %v1118 = vadd.f32 %v1054, %v353
      %v1119 = vadd.f32 %v1055, %v354
      %v1120 = vadd.f32 %v1056, %v355
      %v1121 = vadd.f32 %v1057, %v356
      %v1122 = vadd.f32 %v1058, %v357
      %v1123 = vadd.f32 %v1059, %v358
      %v1124 = vadd.f32 %v1060, %v359
      %v1125 = vadd.f32 %v1061, %v360
      %v1126 = vadd.f32 %v1062, %v361
      %v1127 = vmax.f32 %v1063, %v1064
      %1128 = vmax.xlane.f32.xlu0 %v1127
      %v1129 = vpop.xlane.xlu0 %1128
      %v1130 = vmax.f32 %v1065, %v1066
      %1131 = vmax.xlane.f32.xlu0 %v1130
      %v1132 = vpop.xlane.xlu0 %1131
      %v1133 = vmax.f32 %v1067, %v1068
      %1134 = vmax.xlane.f32.xlu0 %v1133
      %v1135 = vpop.xlane.xlu0 %1134
      %v1136 = vmax.f32 %v1069, %v1070
      %1137 = vmax.xlane.f32.xlu0 %v1136
      %v1138 = vpop.xlane.xlu0 %1137
      %v1139 = vmax.f32 %v1071, %v1072
      %1140 = vmax.xlane.f32.xlu0 %v1139
      %v1141 = vpop.xlane.xlu0 %1140
      %v1142 = vmax.f32 %v1073, %v1074
      %1143 = vmax.xlane.f32.xlu0 %v1142
      %v1144 = vpop.xlane.xlu0 %1143
      %v1145 = vmax.f32 %v1075, %v1076
      %1146 = vmax.xlane.f32.xlu0 %v1145
      %v1147 = vpop.xlane.xlu0 %1146
      %v1148 = vmax.f32 %v1077, %v1078
      %1149 = vmax.xlane.f32.xlu0 %v1148
      %v1150 = vpop.xlane.xlu0 %1149
      %v1151 = vmax.f32 %v1079, %v1080
      %1152 = vmax.xlane.f32.xlu0 %v1151
      %v1153 = vpop.xlane.xlu0 %1152
      %v1154 = vmax.f32 %v1081, %v1082
      %1155 = vmax.xlane.f32.xlu0 %v1154
      %v1156 = vpop.xlane.xlu0 %1155
      %v1157 = vmax.f32 %v1083, %v1084
      %1158 = vmax.xlane.f32.xlu0 %v1157
      %v1159 = vpop.xlane.xlu0 %1158
      %v1160 = vmax.f32 %v1085, %v1086
      %1161 = vmax.xlane.f32.xlu0 %v1160
      %v1162 = vpop.xlane.xlu0 %1161
      %v1163 = vmax.f32 %v1087, %v1088
      %1164 = vmax.xlane.f32.xlu0 %v1163
      %v1165 = vpop.xlane.xlu0 %1164
      %v1166 = vmax.f32 %v1089, %v1090
      %1167 = vmax.xlane.f32.xlu0 %v1166
      %v1168 = vpop.xlane.xlu0 %1167
      %v1169 = vmax.f32 %v1091, %v1092
      %1170 = vmax.xlane.f32.xlu0 %v1169
      %v1171 = vpop.xlane.xlu0 %1170
      %v1172 = vmax.f32 %v1093, %v1094
      %1173 = vmax.xlane.f32.xlu0 %v1172
      %v1174 = vpop.xlane.xlu0 %1173
      %v1175 = vmax.f32 %v1095, %v1096
      %1176 = vmax.xlane.f32.xlu0 %v1175
      %v1177 = vpop.xlane.xlu0 %1176
      %v1178 = vmax.f32 %v1097, %v1098
      %1179 = vmax.xlane.f32.xlu0 %v1178
      %v1180 = vpop.xlane.xlu0 %1179
      %v1181 = vmax.f32 %v1099, %v1100
      %1182 = vmax.xlane.f32.xlu0 %v1181
      %v1183 = vpop.xlane.xlu0 %1182
      %v1184 = vmax.f32 %v1101, %v1102
      %1185 = vmax.xlane.f32.xlu0 %v1184
      %v1186 = vpop.xlane.xlu0 %1185
      %v1187 = vmax.f32 %v1103, %v1104
      %1188 = vmax.xlane.f32.xlu0 %v1187
      %v1189 = vpop.xlane.xlu0 %1188
      %v1190 = vmax.f32 %v1105, %v1106
      %1191 = vmax.xlane.f32.xlu0 %v1190
      %v1192 = vpop.xlane.xlu0 %1191
      %v1193 = vmax.f32 %v1107, %v1108
      %1194 = vmax.xlane.f32.xlu0 %v1193
      %v1195 = vpop.xlane.xlu0 %1194
      %v1196 = vmax.f32 %v1109, %v1110
      %1197 = vmax.xlane.f32.xlu0 %v1196
      %v1198 = vpop.xlane.xlu0 %1197
      %v1199 = vmax.f32 %v1111, %v1112
      %1200 = vmax.xlane.f32.xlu0 %v1199
      %v1201 = vpop.xlane.xlu0 %1200
      %v1202 = vmax.f32 %v1113, %v1114
      %1203 = vmax.xlane.f32.xlu0 %v1202
      %v1204 = vpop.xlane.xlu0 %1203
      %v1205 = vmax.f32 %v1115, %v1116
      %1206 = vmax.xlane.f32.xlu0 %v1205
      %v1207 = vpop.xlane.xlu0 %1206
      %v1208 = vmax.f32 %v1117, %v1118
      %1209 = vmax.xlane.f32.xlu0 %v1208
      %v1210 = vpop.xlane.xlu0 %1209
      %v1211 = vmax.f32 %v1119, %v1120
      %1212 = vmax.xlane.f32.xlu0 %v1211
      %v1213 = vpop.xlane.xlu0 %1212
      %v1214 = vmax.f32 %v1121, %v1122
      %1215 = vmax.xlane.f32.xlu0 %v1214
      %v1216 = vpop.xlane.xlu0 %1215
      %v1217 = vmax.f32 %v1123, %v1124
      %1218 = vmax.xlane.f32.xlu0 %v1217
      %v1219 = vpop.xlane.xlu0 %1218
      %v1220 = vmax.f32 %v1125, %v1126
      %1221 = vmax.xlane.f32.xlu0 %v1220
      %v1222 = vpop.xlane.xlu0 %1221
      %v1223 = vmax.f32 %v1129, -5e+29
      %v1224 = vmax.f32 %v1132, -5e+29
      %v1225 = vmax.f32 %v1135, -5e+29
      %v1226 = vmax.f32 %v1138, -5e+29
      %v1227 = vmax.f32 %v1141, -5e+29
      %v1228 = vmax.f32 %v1144, -5e+29
      %v1229 = vmax.f32 %v1147, -5e+29
      %v1230 = vmax.f32 %v1150, -5e+29
      %v1231 = vmax.f32 %v1153, -5e+29
      %v1232 = vmax.f32 %v1156, -5e+29
      %v1233 = vmax.f32 %v1159, -5e+29
      %v1234 = vmax.f32 %v1162, -5e+29
      %v1235 = vmax.f32 %v1165, -5e+29
      %v1236 = vmax.f32 %v1168, -5e+29
      %v1237 = vmax.f32 %v1171, -5e+29
      %v1238 = vmax.f32 %v1174, -5e+29
      %v1239 = vmax.f32 %v1177, -5e+29
      %v1240 = vmax.f32 %v1180, -5e+29
      %v1241 = vmax.f32 %v1183, -5e+29
      %v1242 = vmax.f32 %v1186, -5e+29
      %v1243 = vmax.f32 %v1189, -5e+29
      %v1244 = vmax.f32 %v1192, -5e+29
      %v1245 = vmax.f32 %v1195, -5e+29
      %v1246 = vmax.f32 %v1198, -5e+29
      %v1247 = vmax.f32 %v1201, -5e+29
      %v1248 = vmax.f32 %v1204, -5e+29
      %v1249 = vmax.f32 %v1207, -5e+29
      %v1250 = vmax.f32 %v1210, -5e+29
      %v1251 = vmax.f32 %v1213, -5e+29
      %v1252 = vmax.f32 %v1216, -5e+29
      %v1253 = vmax.f32 %v1219, -5e+29
      %v1254 = vmax.f32 %v1222, -5e+29
      %v1255 = vsub.f32 %v1063, %v1223
      %v1256 = vsub.f32 %v1064, %v1223
      %v1257 = vsub.f32 %v1065, %v1224
      %v1258 = vsub.f32 %v1066, %v1224
      %v1259 = vsub.f32 %v1067, %v1225
      %v1260 = vsub.f32 %v1068, %v1225
      %v1261 = vsub.f32 %v1069, %v1226
      %v1262 = vsub.f32 %v1070, %v1226
      %v1263 = vsub.f32 %v1071, %v1227
      %v1264 = vsub.f32 %v1072, %v1227
      %v1265 = vsub.f32 %v1073, %v1228
      %v1266 = vsub.f32 %v1074, %v1228
      %v1267 = vsub.f32 %v1075, %v1229
      %v1268 = vsub.f32 %v1076, %v1229
      %v1269 = vsub.f32 %v1077, %v1230
      %v1270 = vsub.f32 %v1078, %v1230
      %v1271 = vsub.f32 %v1079, %v1231
      %v1272 = vsub.f32 %v1080, %v1231
      %v1273 = vsub.f32 %v1081, %v1232
      %v1274 = vsub.f32 %v1082, %v1232
      %v1275 = vsub.f32 %v1083, %v1233
      %v1276 = vsub.f32 %v1084, %v1233
      %v1277 = vsub.f32 %v1085, %v1234
      %v1278 = vsub.f32 %v1086, %v1234
      %v1279 = vsub.f32 %v1087, %v1235
      %v1280 = vsub.f32 %v1088, %v1235
      %v1281 = vsub.f32 %v1089, %v1236
      %v1282 = vsub.f32 %v1090, %v1236
      %v1283 = vsub.f32 %v1091, %v1237
      %v1284 = vsub.f32 %v1092, %v1237
      %v1285 = vsub.f32 %v1093, %v1238
      %v1286 = vsub.f32 %v1094, %v1238
      %v1287 = vsub.f32 %v1095, %v1239
      %v1288 = vsub.f32 %v1096, %v1239
      %v1289 = vsub.f32 %v1097, %v1240
      %v1290 = vsub.f32 %v1098, %v1240
      %v1291 = vsub.f32 %v1099, %v1241
      %v1292 = vsub.f32 %v1100, %v1241
      %v1293 = vsub.f32 %v1101, %v1242
      %v1294 = vsub.f32 %v1102, %v1242
      %v1295 = vsub.f32 %v1103, %v1243
      %v1296 = vsub.f32 %v1104, %v1243
      %v1297 = vsub.f32 %v1105, %v1244
      %v1298 = vsub.f32 %v1106, %v1244
      %v1299 = vsub.f32 %v1107, %v1245
      %v1300 = vsub.f32 %v1108, %v1245
      %v1301 = vsub.f32 %v1109, %v1246
      %v1302 = vsub.f32 %v1110, %v1246
      %v1303 = vsub.f32 %v1111, %v1247
      %v1304 = vsub.f32 %v1112, %v1247
      %v1305 = vsub.f32 %v1113, %v1248
      %v1306 = vsub.f32 %v1114, %v1248
      %v1307 = vsub.f32 %v1115, %v1249
      %v1308 = vsub.f32 %v1116, %v1249
      %v1309 = vsub.f32 %v1117, %v1250
      %v1310 = vsub.f32 %v1118, %v1250
      %v1311 = vsub.f32 %v1119, %v1251
      %v1312 = vsub.f32 %v1120, %v1251
      %v1313 = vsub.f32 %v1121, %v1252
      %v1314 = vsub.f32 %v1122, %v1252
      %v1315 = vsub.f32 %v1123, %v1253
      %v1316 = vsub.f32 %v1124, %v1253
      %v1317 = vsub.f32 %v1125, %v1254
      %v1318 = vsub.f32 %v1126, %v1254
      %v1319 = vmul.f32 %v1255, 1.442695
      %v1320 = vpow.pop %v1319
      %v1321 = vmul.f32 %v1256, 1.442695
      %v1322 = vpow.pop %v1321
      %v1323 = vmul.f32 %v1257, 1.442695
      %v1324 = vpow.pop %v1323
      %v1325 = vmul.f32 %v1258, 1.442695
      %v1326 = vpow.pop %v1325
      %v1327 = vmul.f32 %v1259, 1.442695
      %v1328 = vpow.pop %v1327
      %v1329 = vmul.f32 %v1260, 1.442695
      %v1330 = vpow.pop %v1329
      %v1331 = vmul.f32 %v1261, 1.442695
      %v1332 = vpow.pop %v1331
      %v1333 = vmul.f32 %v1262, 1.442695
      %v1334 = vpow.pop %v1333
      %v1335 = vmul.f32 %v1263, 1.442695
      %v1336 = vpow.pop %v1335
      %v1337 = vmul.f32 %v1264, 1.442695
      %v1338 = vpow.pop %v1337
      %v1339 = vmul.f32 %v1265, 1.442695
      %v1340 = vpow.pop %v1339
      %v1341 = vmul.f32 %v1266, 1.442695
      %v1342 = vpow.pop %v1341
      %v1343 = vmul.f32 %v1267, 1.442695
      %v1344 = vpow.pop %v1343
      %v1345 = vmul.f32 %v1268, 1.442695
      %v1346 = vpow.pop %v1345
      %v1347 = vmul.f32 %v1269, 1.442695
      %v1348 = vpow.pop %v1347
      %v1349 = vmul.f32 %v1270, 1.442695
      %v1350 = vpow.pop %v1349
      %v1351 = vmul.f32 %v1271, 1.442695
      %v1352 = vpow.pop %v1351
      %v1353 = vmul.f32 %v1272, 1.442695
      %v1354 = vpow.pop %v1353
      %v1355 = vmul.f32 %v1273, 1.442695
      %v1356 = vpow.pop %v1355
      %v1357 = vmul.f32 %v1274, 1.442695
      %v1358 = vpow.pop %v1357
      %v1359 = vmul.f32 %v1275, 1.442695
      %v1360 = vpow.pop %v1359
      %v1361 = vmul.f32 %v1276, 1.442695
      %v1362 = vpow.pop %v1361
      %v1363 = vmul.f32 %v1277, 1.442695
      %v1364 = vpow.pop %v1363
      %v1365 = vmul.f32 %v1278, 1.442695
      %v1366 = vpow.pop %v1365
      %v1367 = vmul.f32 %v1279, 1.442695
      %v1368 = vpow.pop %v1367
      %v1369 = vmul.f32 %v1280, 1.442695
      %v1370 = vpow.pop %v1369
      %v1371 = vmul.f32 %v1281, 1.442695
      %v1372 = vpow.pop %v1371
      %v1373 = vmul.f32 %v1282, 1.442695
      %v1374 = vpow.pop %v1373
      %v1375 = vmul.f32 %v1283, 1.442695
      %v1376 = vpow.pop %v1375
      %v1377 = vmul.f32 %v1284, 1.442695
      %v1378 = vpow.pop %v1377
      %v1379 = vmul.f32 %v1285, 1.442695
      %v1380 = vpow.pop %v1379
      %v1381 = vmul.f32 %v1286, 1.442695
      %v1382 = vpow.pop %v1381
      %v1383 = vmul.f32 %v1287, 1.442695
      %v1384 = vpow.pop %v1383
      %v1385 = vmul.f32 %v1288, 1.442695
      %v1386 = vpow.pop %v1385
      %v1387 = vmul.f32 %v1289, 1.442695
      %v1388 = vpow.pop %v1387
      %v1389 = vmul.f32 %v1290, 1.442695
      %v1390 = vpow.pop %v1389
      %v1391 = vmul.f32 %v1291, 1.442695
      %v1392 = vpow.pop %v1391
      %v1393 = vmul.f32 %v1292, 1.442695
      %v1394 = vpow.pop %v1393
      %v1395 = vmul.f32 %v1293, 1.442695
      %v1396 = vpow.pop %v1395
      %v1397 = vmul.f32 %v1294, 1.442695
      %v1398 = vpow.pop %v1397
      %v1399 = vmul.f32 %v1295, 1.442695
      %v1400 = vpow.pop %v1399
      %v1401 = vmul.f32 %v1296, 1.442695
      %v1402 = vpow.pop %v1401
      %v1403 = vmul.f32 %v1297, 1.442695
      %v1404 = vpow.pop %v1403
      %v1405 = vmul.f32 %v1298, 1.442695
      %v1406 = vpow.pop %v1405
      %v1407 = vmul.f32 %v1299, 1.442695
      %v1408 = vpow.pop %v1407
      %v1409 = vmul.f32 %v1300, 1.442695
      %v1410 = vpow.pop %v1409
      %v1411 = vmul.f32 %v1301, 1.442695
      %v1412 = vpow.pop %v1411
      %v1413 = vmul.f32 %v1302, 1.442695
      %v1414 = vpow.pop %v1413
      %v1415 = vmul.f32 %v1303, 1.442695
      %v1416 = vpow.pop %v1415
      %v1417 = vmul.f32 %v1304, 1.442695
      %v1418 = vpow.pop %v1417
      %v1419 = vmul.f32 %v1305, 1.442695
      %v1420 = vpow.pop %v1419
      %v1421 = vmul.f32 %v1306, 1.442695
      %v1422 = vpow.pop %v1421
      %v1423 = vmul.f32 %v1307, 1.442695
      %v1424 = vpow.pop %v1423
      %v1425 = vmul.f32 %v1308, 1.442695
      %v1426 = vpow.pop %v1425
      %v1427 = vmul.f32 %v1309, 1.442695
      %v1428 = vpow.pop %v1427
      %v1429 = vmul.f32 %v1310, 1.442695
      %v1430 = vpow.pop %v1429
      %v1431 = vmul.f32 %v1311, 1.442695
      %v1432 = vpow.pop %v1431
      %v1433 = vmul.f32 %v1312, 1.442695
      %v1434 = vpow.pop %v1433
      %v1435 = vmul.f32 %v1313, 1.442695
      %v1436 = vpow.pop %v1435
      %v1437 = vmul.f32 %v1314, 1.442695
      %v1438 = vpow.pop %v1437
      %v1439 = vmul.f32 %v1315, 1.442695
      %v1440 = vpow.pop %v1439
      %v1441 = vmul.f32 %v1316, 1.442695
      %v1442 = vpow.pop %v1441
      %v1443 = vmul.f32 %v1317, 1.442695
      %v1444 = vpow.pop %v1443
      %v1445 = vmul.f32 %v1318, 1.442695
      %v1446 = vpow.pop %v1445
      %v1447 = vadd.f32 %v1320, %v1322
      %1448 = vadd.xlane.f32.xlu0 %v1447
      %v1449 = vpop.xlane.xlu0 %1448
      %v1450 = vadd.f32 %v1324, %v1326
      %1451 = vadd.xlane.f32.xlu0 %v1450
      %v1452 = vpop.xlane.xlu0 %1451
      %v1453 = vadd.f32 %v1328, %v1330
      %1454 = vadd.xlane.f32.xlu0 %v1453
      %v1455 = vpop.xlane.xlu0 %1454
      %v1456 = vadd.f32 %v1332, %v1334
      %1457 = vadd.xlane.f32.xlu0 %v1456
      %v1458 = vpop.xlane.xlu0 %1457
      %v1459 = vadd.f32 %v1336, %v1338
      %1460 = vadd.xlane.f32.xlu0 %v1459
      %v1461 = vpop.xlane.xlu0 %1460
      %v1462 = vadd.f32 %v1340, %v1342
      %1463 = vadd.xlane.f32.xlu0 %v1462
      %v1464 = vpop.xlane.xlu0 %1463
      %v1465 = vadd.f32 %v1344, %v1346
      %1466 = vadd.xlane.f32.xlu0 %v1465
      %v1467 = vpop.xlane.xlu0 %1466
      %v1468 = vadd.f32 %v1348, %v1350
      %1469 = vadd.xlane.f32.xlu0 %v1468
      %v1470 = vpop.xlane.xlu0 %1469
      %v1471 = vadd.f32 %v1352, %v1354
      %1472 = vadd.xlane.f32.xlu0 %v1471
      %v1473 = vpop.xlane.xlu0 %1472
      %v1474 = vadd.f32 %v1356, %v1358
      %1475 = vadd.xlane.f32.xlu0 %v1474
      %v1476 = vpop.xlane.xlu0 %1475
      %v1477 = vadd.f32 %v1360, %v1362
      %1478 = vadd.xlane.f32.xlu0 %v1477
      %v1479 = vpop.xlane.xlu0 %1478
      %v1480 = vadd.f32 %v1364, %v1366
      %1481 = vadd.xlane.f32.xlu0 %v1480
      %v1482 = vpop.xlane.xlu0 %1481
      %v1483 = vadd.f32 %v1368, %v1370
      %1484 = vadd.xlane.f32.xlu0 %v1483
      %v1485 = vpop.xlane.xlu0 %1484
      %v1486 = vadd.f32 %v1372, %v1374
      %1487 = vadd.xlane.f32.xlu0 %v1486
      %v1488 = vpop.xlane.xlu0 %1487
      %v1489 = vadd.f32 %v1376, %v1378
      %1490 = vadd.xlane.f32.xlu0 %v1489
      %v1491 = vpop.xlane.xlu0 %1490
      %v1492 = vadd.f32 %v1380, %v1382
      %1493 = vadd.xlane.f32.xlu0 %v1492
      %v1494 = vpop.xlane.xlu0 %1493
      %v1495 = vadd.f32 %v1384, %v1386
      %1496 = vadd.xlane.f32.xlu0 %v1495
      %v1497 = vpop.xlane.xlu0 %1496
      %v1498 = vadd.f32 %v1388, %v1390
      %1499 = vadd.xlane.f32.xlu0 %v1498
      %v1500 = vpop.xlane.xlu0 %1499
      %v1501 = vadd.f32 %v1392, %v1394
      %1502 = vadd.xlane.f32.xlu0 %v1501
      %v1503 = vpop.xlane.xlu0 %1502
      %v1504 = vadd.f32 %v1396, %v1398
      %1505 = vadd.xlane.f32.xlu0 %v1504
      %v1506 = vpop.xlane.xlu0 %1505
      %v1507 = vadd.f32 %v1400, %v1402
      %1508 = vadd.xlane.f32.xlu0 %v1507
      %v1509 = vpop.xlane.xlu0 %1508
      %v1510 = vadd.f32 %v1404, %v1406
      %1511 = vadd.xlane.f32.xlu0 %v1510
      %v1512 = vpop.xlane.xlu0 %1511
      %v1513 = vadd.f32 %v1408, %v1410
      %1514 = vadd.xlane.f32.xlu0 %v1513
      %v1515 = vpop.xlane.xlu0 %1514
      %v1516 = vadd.f32 %v1412, %v1414
      %1517 = vadd.xlane.f32.xlu0 %v1516
      %v1518 = vpop.xlane.xlu0 %1517
      %v1519 = vadd.f32 %v1416, %v1418
      %1520 = vadd.xlane.f32.xlu0 %v1519
      %v1521 = vpop.xlane.xlu0 %1520
      %v1522 = vadd.f32 %v1420, %v1422
      %1523 = vadd.xlane.f32.xlu0 %v1522
      %v1524 = vpop.xlane.xlu0 %1523
      %v1525 = vadd.f32 %v1424, %v1426
      %1526 = vadd.xlane.f32.xlu0 %v1525
      %v1527 = vpop.xlane.xlu0 %1526
      %v1528 = vadd.f32 %v1428, %v1430
      %1529 = vadd.xlane.f32.xlu0 %v1528
      %v1530 = vpop.xlane.xlu0 %1529
      %v1531 = vadd.f32 %v1432, %v1434
      %1532 = vadd.xlane.f32.xlu0 %v1531
      %v1533 = vpop.xlane.xlu0 %1532
      %v1534 = vadd.f32 %v1436, %v1438
      %1535 = vadd.xlane.f32.xlu0 %v1534
      %v1536 = vpop.xlane.xlu0 %1535
      %v1537 = vadd.f32 %v1440, %v1442
      %1538 = vadd.xlane.f32.xlu0 %v1537
      %v1539 = vpop.xlane.xlu0 %1538
      %v1540 = vadd.f32 %v1444, %v1446
      %1541 = vadd.xlane.f32.xlu0 %v1540
      %v1542 = vpop.xlane.xlu0 %1541
      %v1543 = vmax.f32 %v1449, 1e-20
      %v1544 = vmax.f32 %v1452, 1e-20
      %v1545 = vmax.f32 %v1455, 1e-20
      %v1546 = vmax.f32 %v1458, 1e-20
      %v1547 = vmax.f32 %v1461, 1e-20
      %v1548 = vmax.f32 %v1464, 1e-20
      %v1549 = vmax.f32 %v1467, 1e-20
      %v1550 = vmax.f32 %v1470, 1e-20
      %v1551 = vmax.f32 %v1473, 1e-20
      %v1552 = vmax.f32 %v1476, 1e-20
      %v1553 = vmax.f32 %v1479, 1e-20
      %v1554 = vmax.f32 %v1482, 1e-20
      %v1555 = vmax.f32 %v1485, 1e-20
      %v1556 = vmax.f32 %v1488, 1e-20
      %v1557 = vmax.f32 %v1491, 1e-20
      %v1558 = vmax.f32 %v1494, 1e-20
      %v1559 = vmax.f32 %v1497, 1e-20
      %v1560 = vmax.f32 %v1500, 1e-20
      %v1561 = vmax.f32 %v1503, 1e-20
      %v1562 = vmax.f32 %v1506, 1e-20
      %v1563 = vmax.f32 %v1509, 1e-20
      %v1564 = vmax.f32 %v1512, 1e-20
      %v1565 = vmax.f32 %v1515, 1e-20
      %v1566 = vmax.f32 %v1518, 1e-20
      %v1567 = vmax.f32 %v1521, 1e-20
      %v1568 = vmax.f32 %v1524, 1e-20
      %v1569 = vmax.f32 %v1527, 1e-20
      %v1570 = vmax.f32 %v1530, 1e-20
      %v1571 = vmax.f32 %v1533, 1e-20
      %v1572 = vmax.f32 %v1536, 1e-20
      %v1573 = vmax.f32 %v1539, 1e-20
      %v1574 = vmax.f32 %v1542, 1e-20
      %v1575 = vrcp.pop %v1543
      %v1576 = vrcp.pop %v1544
      %v1577 = vrcp.pop %v1545
      %v1578 = vrcp.pop %v1546
      %v1579 = vrcp.pop %v1547
      %v1580 = vrcp.pop %v1548
      %v1581 = vrcp.pop %v1549
      %v1582 = vrcp.pop %v1550
      %v1583 = vrcp.pop %v1551
      %v1584 = vrcp.pop %v1552
      %v1585 = vrcp.pop %v1553
      %v1586 = vrcp.pop %v1554
      %v1587 = vrcp.pop %v1555
      %v1588 = vrcp.pop %v1556
      %v1589 = vrcp.pop %v1557
      %v1590 = vrcp.pop %v1558
      %v1591 = vrcp.pop %v1559
      %v1592 = vrcp.pop %v1560
      %v1593 = vrcp.pop %v1561
      %v1594 = vrcp.pop %v1562
      %v1595 = vrcp.pop %v1563
      %v1596 = vrcp.pop %v1564
      %v1597 = vrcp.pop %v1565
      %v1598 = vrcp.pop %v1566
      %v1599 = vrcp.pop %v1567
      %v1600 = vrcp.pop %v1568
      %v1601 = vrcp.pop %v1569
      %v1602 = vrcp.pop %v1570
      %v1603 = vrcp.pop %v1571
      %v1604 = vrcp.pop %v1572
      %v1605 = vrcp.pop %v1573
      %v1606 = vrcp.pop %v1574
      %v1607 = vpack.c.bf16 %v1322, %v1320
      %v1608 = vpack.c.bf16 %v1326, %v1324
      %v1609 = vpack.c.bf16 %v1330, %v1328
      %v1610 = vpack.c.bf16 %v1334, %v1332
      %v1611 = vpack.c.bf16 %v1338, %v1336
      %v1612 = vpack.c.bf16 %v1342, %v1340
      %v1613 = vpack.c.bf16 %v1346, %v1344
      %v1614 = vpack.c.bf16 %v1350, %v1348
      %v1615 = vpack.c.bf16 %v1354, %v1352
      %v1616 = vpack.c.bf16 %v1358, %v1356
      %v1617 = vpack.c.bf16 %v1362, %v1360
      %v1618 = vpack.c.bf16 %v1366, %v1364
      %v1619 = vpack.c.bf16 %v1370, %v1368
      %v1620 = vpack.c.bf16 %v1374, %v1372
      %v1621 = vpack.c.bf16 %v1378, %v1376
      %v1622 = vpack.c.bf16 %v1382, %v1380
      %v1623 = vpack.c.bf16 %v1386, %v1384
      %v1624 = vpack.c.bf16 %v1390, %v1388
      %v1625 = vpack.c.bf16 %v1394, %v1392
      %v1626 = vpack.c.bf16 %v1398, %v1396
      %v1627 = vpack.c.bf16 %v1402, %v1400
      %v1628 = vpack.c.bf16 %v1406, %v1404
      %v1629 = vpack.c.bf16 %v1410, %v1408
      %v1630 = vpack.c.bf16 %v1414, %v1412
      %v1631 = vpack.c.bf16 %v1418, %v1416
      %v1632 = vpack.c.bf16 %v1422, %v1420
      %v1633 = vpack.c.bf16 %v1426, %v1424
      %v1634 = vpack.c.bf16 %v1430, %v1428
      %v1635 = vpack.c.bf16 %v1434, %v1432
      %v1636 = vpack.c.bf16 %v1438, %v1436
      %v1637 = vpack.c.bf16 %v1442, %v1440
      %v1638 = vpack.c.bf16 %v1446, %v1444
      %v1639 = vpack.c.bf16 %v513, %v513
      %v1640 = vpack.c.bf16 %v515, %v515
      %v1641 = vpack.c.bf16 %v518, %v518
      %v1642 = vpack.c.bf16 %v520, %v520
      %v1643 = vpack.c.bf16 %v523, %v523
      %v1644 = vpack.c.bf16 %v525, %v525
      %v1645 = vpack.c.bf16 %v528, %v528
      %v1646 = vpack.c.bf16 %v530, %v530
      %v1647 = vpack.c.bf16 %v533, %v533
      %v1648 = vpack.c.bf16 %v535, %v535
      %v1649 = vpack.c.bf16 %v538, %v538
      %v1650 = vpack.c.bf16 %v540, %v540
      %v1651 = vpack.c.bf16 %v543, %v543
      %v1652 = vpack.c.bf16 %v545, %v545
      %v1653 = vpack.c.bf16 %v548, %v548
      %v1654 = vpack.c.bf16 %v550, %v550
      %v1655 = vpack.c.bf16 %v553, %v553
      %v1656 = vpack.c.bf16 %v555, %v555
      %v1657 = vpack.c.bf16 %v558, %v558
      %v1658 = vpack.c.bf16 %v560, %v560
      %v1659 = vpack.c.bf16 %v563, %v563
      %v1660 = vpack.c.bf16 %v565, %v565
      %v1661 = vpack.c.bf16 %v568, %v568
      %v1662 = vpack.c.bf16 %v570, %v570
      %v1663 = vpack.c.bf16 %v573, %v573
      %v1664 = vpack.c.bf16 %v575, %v575
      %v1665 = vpack.c.bf16 %v578, %v578
      %v1666 = vpack.c.bf16 %v580, %v580
      %v1667 = vpack.c.bf16 %v583, %v583
      %v1668 = vpack.c.bf16 %v585, %v585
      %v1669 = vpack.c.bf16 %v588, %v588
      %v1670 = vpack.c.bf16 %v590, %v590
      %v1687 = vunpack.c.l.b16 %v1607
      %v1688 = vunpack.c.h.b16 %v1607
      %v1689 = vunpack.c.l.b16 %v1608
      %v1690 = vunpack.c.h.b16 %v1608
      %v1691 = vunpack.c.l.b16 %v1609
      %v1692 = vunpack.c.h.b16 %v1609
      %v1693 = vunpack.c.l.b16 %v1610
      %v1694 = vunpack.c.h.b16 %v1610
      %v1695 = vunpack.c.l.b16 %v1611
      %v1696 = vunpack.c.h.b16 %v1611
      %v1697 = vunpack.c.l.b16 %v1612
      %v1698 = vunpack.c.h.b16 %v1612
      %v1699 = vunpack.c.l.b16 %v1613
      %v1700 = vunpack.c.h.b16 %v1613
      %v1701 = vunpack.c.l.b16 %v1614
      %v1702 = vunpack.c.h.b16 %v1614
      %v1703 = vunpack.c.l.b16 %v1615
      %v1704 = vunpack.c.h.b16 %v1615
      %v1705 = vunpack.c.l.b16 %v1616
      %v1706 = vunpack.c.h.b16 %v1616
      %v1707 = vunpack.c.l.b16 %v1617
      %v1708 = vunpack.c.h.b16 %v1617
      %v1709 = vunpack.c.l.b16 %v1618
      %v1710 = vunpack.c.h.b16 %v1618
      %v1711 = vunpack.c.l.b16 %v1619
      %v1712 = vunpack.c.h.b16 %v1619
      %v1713 = vunpack.c.l.b16 %v1620
      %v1714 = vunpack.c.h.b16 %v1620
      %v1715 = vunpack.c.l.b16 %v1621
      %v1716 = vunpack.c.h.b16 %v1621
      %v1717 = vunpack.c.l.b16 %v1622
      %v1718 = vunpack.c.h.b16 %v1622
      %v1719 = vpack.c.b16 %v1689, %v1687
      %v1720 = vpack.c.b16 %v1690, %v1688
      %v1721 = vpack.c.b16 %v1693, %v1691
      %v1722 = vpack.c.b16 %v1694, %v1692
      %v1723 = vpack.c.b16 %v1697, %v1695
      %v1724 = vpack.c.b16 %v1698, %v1696
      %v1725 = vpack.c.b16 %v1701, %v1699
      %v1726 = vpack.c.b16 %v1702, %v1700
      %v1727 = vpack.c.b16 %v1705, %v1703
      %v1728 = vpack.c.b16 %v1706, %v1704
      %v1729 = vpack.c.b16 %v1709, %v1707
      %v1730 = vpack.c.b16 %v1710, %v1708
      %v1731 = vpack.c.b16 %v1713, %v1711
      %v1732 = vpack.c.b16 %v1714, %v1712
      %v1733 = vpack.c.b16 %v1717, %v1715
      %v1734 = vpack.c.b16 %v1718, %v1716
      %v1783 = vunpack.c.l.b16 %v1639
      %v1784 = vunpack.c.l.b16 %v1640
      %v1785 = vunpack.c.l.b16 %v1641
      %v1786 = vunpack.c.l.b16 %v1642
      %v1787 = vunpack.c.l.b16 %v1643
      %v1788 = vunpack.c.l.b16 %v1644
      %v1789 = vunpack.c.l.b16 %v1645
      %v1790 = vunpack.c.l.b16 %v1646
      %v1791 = vunpack.c.l.b16 %v1647
      %v1792 = vunpack.c.l.b16 %v1648
      %v1793 = vunpack.c.l.b16 %v1649
      %v1794 = vunpack.c.l.b16 %v1650
      %v1795 = vunpack.c.l.b16 %v1651
      %v1796 = vunpack.c.l.b16 %v1652
      %v1797 = vunpack.c.l.b16 %v1653
      %v1798 = vunpack.c.l.b16 %v1654
      %v1799 = vunpack.c.l.b16 %v1655
      %v1800 = vunpack.c.l.b16 %v1656
      %v1801 = vunpack.c.l.b16 %v1657
      %v1802 = vunpack.c.l.b16 %v1658
      %v1803 = vunpack.c.l.b16 %v1659
      %v1804 = vunpack.c.l.b16 %v1660
      %v1805 = vunpack.c.l.b16 %v1661
      %v1806 = vunpack.c.l.b16 %v1662
      %v1807 = vunpack.c.l.b16 %v1663
      %v1808 = vunpack.c.l.b16 %v1664
      %v1809 = vunpack.c.l.b16 %v1665
      %v1810 = vunpack.c.l.b16 %v1666
      %v1811 = vunpack.c.l.b16 %v1667
      %v1812 = vunpack.c.l.b16 %v1668
      %v1813 = vunpack.c.l.b16 %v1669
      %v1814 = vunpack.c.l.b16 %v1670
      %v1815 = vpack.c.b16 %v1784, %v1783
      %v1816 = vpack.c.b16 %v1786, %v1785
      %v1817 = vpack.c.b16 %v1788, %v1787
      %v1818 = vpack.c.b16 %v1790, %v1789
      %v1819 = vpack.c.b16 %v1792, %v1791
      %v1820 = vpack.c.b16 %v1794, %v1793
      %v1821 = vpack.c.b16 %v1796, %v1795
      %v1822 = vpack.c.b16 %v1798, %v1797
      %v1823 = vpack.c.b16 %v1800, %v1799
      %v1824 = vpack.c.b16 %v1802, %v1801
      %v1825 = vpack.c.b16 %v1804, %v1803
      %v1826 = vpack.c.b16 %v1806, %v1805
      %v1827 = vpack.c.b16 %v1808, %v1807
      %v1828 = vpack.c.b16 %v1810, %v1809
      %v1829 = vpack.c.b16 %v1812, %v1811
      %v1830 = vpack.c.b16 %v1814, %v1813
      %1847 = vmatpush.bf16.msra.mxu0 %v1822
      %1848 = vmatpush.bf16.msra.mxu0 %v1821
      %1849 = vmatpush.bf16.msra.mxu0 %v1820
      %1850 = vmatpush.bf16.msra.mxu0 %v1819
      %1851 = vmatpush.bf16.msra.mxu0 %v1818
      %1852 = vmatpush.bf16.msra.mxu0 %v1817
      %1853 = vmatpush.bf16.msra.mxu0 %v1816
      %1854 = vmatpush.bf16.msra.mxu0 %v1815
      %1855 = vmatmul.bf16.gmra.mxu0 %v1719
      %v1856 = vpop.f32.mrf.mxu0
      %v1857 = vadd.f32 0.0, %v1856
      %v1858 = vpop.f32.mrf.mxu0
      %v1859 = vadd.f32 0.0, %v1858
      %1860 = vmatmul.bf16.gmra.mxu0 %v1721
      %v1861 = vpop.f32.mrf.mxu0
      %v1862 = vadd.f32 0.0, %v1861
      %v1863 = vpop.f32.mrf.mxu0
      %v1864 = vadd.f32 0.0, %v1863
      %1865 = vmatmul.bf16.gmra.mxu0 %v1723
      %v1866 = vpop.f32.mrf.mxu0
      %v1867 = vadd.f32 0.0, %v1866
      %v1868 = vpop.f32.mrf.mxu0
      %v1869 = vadd.f32 0.0, %v1868
      %1870 = vmatmul.bf16.gmra.mxu0 %v1725
      %v1871 = vpop.f32.mrf.mxu0
      %v1872 = vadd.f32 0.0, %v1871
      %v1873 = vpop.f32.mrf.mxu0
      %v1874 = vadd.f32 0.0, %v1873
      %1875 = vmatmul.bf16.gmra.mxu0 %v1727
      %v1876 = vpop.f32.mrf.mxu0
      %v1877 = vadd.f32 0.0, %v1876
      %v1878 = vpop.f32.mrf.mxu0
      %v1879 = vadd.f32 0.0, %v1878
      %1880 = vmatmul.bf16.gmra.mxu0 %v1729
      %v1881 = vpop.f32.mrf.mxu0
      %v1882 = vadd.f32 0.0, %v1881
      %v1883 = vpop.f32.mrf.mxu0
      %v1884 = vadd.f32 0.0, %v1883
      %1885 = vmatmul.bf16.gmra.mxu0 %v1731
      %v1886 = vpop.f32.mrf.mxu0
      %v1887 = vadd.f32 0.0, %v1886
      %v1888 = vpop.f32.mrf.mxu0
      %v1889 = vadd.f32 0.0, %v1888
      %1890 = vmatmul.bf16.gmra.mxu0 %v1733
      %v1891 = vpop.f32.mrf.mxu0
      %v1892 = vadd.f32 0.0, %v1891
      %v1893 = vpop.f32.mrf.mxu0
      %v1894 = vadd.f32 0.0, %v1893
      %1895 = vdwg.mxu0
      %1896 = vmatpush.bf16.msra.mxu0 %v1830
      %1897 = vmatpush.bf16.msra.mxu0 %v1829
      %1898 = vmatpush.bf16.msra.mxu0 %v1828
      %1899 = vmatpush.bf16.msra.mxu0 %v1827
      %1900 = vmatpush.bf16.msra.mxu0 %v1826
      %1901 = vmatpush.bf16.msra.mxu0 %v1825
      %1902 = vmatpush.bf16.msra.mxu0 %v1824
      %1903 = vmatpush.bf16.msra.mxu0 %v1823
      %1904 = vmatmul.bf16.gmra.mxu0 %v1720
      %v1905 = vpop.f32.mrf.mxu0
      %v1906 = vadd.f32 %v1857, %v1905
      %v1907 = vpop.f32.mrf.mxu0
      %v1908 = vadd.f32 %v1859, %v1907
      %1909 = vmatmul.bf16.gmra.mxu0 %v1722
      %v1910 = vpop.f32.mrf.mxu0
      %v1911 = vadd.f32 %v1862, %v1910
      %v1912 = vpop.f32.mrf.mxu0
      %v1913 = vadd.f32 %v1864, %v1912
      %1914 = vmatmul.bf16.gmra.mxu0 %v1724
      %v1915 = vpop.f32.mrf.mxu0
      %v1916 = vadd.f32 %v1867, %v1915
      %v1917 = vpop.f32.mrf.mxu0
      %v1918 = vadd.f32 %v1869, %v1917
      %1919 = vmatmul.bf16.gmra.mxu0 %v1726
      %v1920 = vpop.f32.mrf.mxu0
      %v1921 = vadd.f32 %v1872, %v1920
      %v1922 = vpop.f32.mrf.mxu0
      %v1923 = vadd.f32 %v1874, %v1922
      %1924 = vmatmul.bf16.gmra.mxu0 %v1728
      %v1925 = vpop.f32.mrf.mxu0
      %v1926 = vadd.f32 %v1877, %v1925
      %v1927 = vpop.f32.mrf.mxu0
      %v1928 = vadd.f32 %v1879, %v1927
      %1929 = vmatmul.bf16.gmra.mxu0 %v1730
      %v1930 = vpop.f32.mrf.mxu0
      %v1931 = vadd.f32 %v1882, %v1930
      %v1932 = vpop.f32.mrf.mxu0
      %v1933 = vadd.f32 %v1884, %v1932
      %1934 = vmatmul.bf16.gmra.mxu0 %v1732
      %v1935 = vpop.f32.mrf.mxu0
      %v1936 = vadd.f32 %v1887, %v1935
      %v1937 = vpop.f32.mrf.mxu0
      %v1938 = vadd.f32 %v1889, %v1937
      %1939 = vmatmul.bf16.gmra.mxu0 %v1734
      %v1940 = vpop.f32.mrf.mxu0
      %v1941 = vadd.f32 %v1892, %v1940
      %v1942 = vpop.f32.mrf.mxu0
      %v1943 = vadd.f32 %v1894, %v1942
      %1944 = vdwg.mxu0
      %v1945 = vmul.f32 %v1906, %v1575
      %v1946 = vmul.f32 %v1908, %v1576
      %v1947 = vmul.f32 %v1911, %v1577
      %v1948 = vmul.f32 %v1913, %v1578
      %v1949 = vmul.f32 %v1916, %v1579
      %v1950 = vmul.f32 %v1918, %v1580
      %v1951 = vmul.f32 %v1921, %v1581
      %v1952 = vmul.f32 %v1923, %v1582
      %v1953 = vmul.f32 %v1926, %v1583
      %v1954 = vmul.f32 %v1928, %v1584
      %v1955 = vmul.f32 %v1931, %v1585
      %v1956 = vmul.f32 %v1933, %v1586
      %v1957 = vmul.f32 %v1936, %v1587
      %v1958 = vmul.f32 %v1938, %v1588
      %v1959 = vmul.f32 %v1941, %v1589
      %v1960 = vmul.f32 %v1943, %v1590
      %v1977 = vunpack.c.l.b16 %v1623
      %v1978 = vunpack.c.h.b16 %v1623
      %v1979 = vunpack.c.l.b16 %v1624
      %v1980 = vunpack.c.h.b16 %v1624
      %v1981 = vunpack.c.l.b16 %v1625
      %v1982 = vunpack.c.h.b16 %v1625
      %v1983 = vunpack.c.l.b16 %v1626
      %v1984 = vunpack.c.h.b16 %v1626
      %v1985 = vunpack.c.l.b16 %v1627
      %v1986 = vunpack.c.h.b16 %v1627
      %v1987 = vunpack.c.l.b16 %v1628
      %v1988 = vunpack.c.h.b16 %v1628
      %v1989 = vunpack.c.l.b16 %v1629
      %v1990 = vunpack.c.h.b16 %v1629
      %v1991 = vunpack.c.l.b16 %v1630
      %v1992 = vunpack.c.h.b16 %v1630
      %v1993 = vunpack.c.l.b16 %v1631
      %v1994 = vunpack.c.h.b16 %v1631
      %v1995 = vunpack.c.l.b16 %v1632
      %v1996 = vunpack.c.h.b16 %v1632
      %v1997 = vunpack.c.l.b16 %v1633
      %v1998 = vunpack.c.h.b16 %v1633
      %v1999 = vunpack.c.l.b16 %v1634
      %v2000 = vunpack.c.h.b16 %v1634
      %v2001 = vunpack.c.l.b16 %v1635
      %v2002 = vunpack.c.h.b16 %v1635
      %v2003 = vunpack.c.l.b16 %v1636
      %v2004 = vunpack.c.h.b16 %v1636
      %v2005 = vunpack.c.l.b16 %v1637
      %v2006 = vunpack.c.h.b16 %v1637
      %v2007 = vunpack.c.l.b16 %v1638
      %v2008 = vunpack.c.h.b16 %v1638
      %v2009 = vpack.c.b16 %v1979, %v1977
      %v2010 = vpack.c.b16 %v1980, %v1978
      %v2011 = vpack.c.b16 %v1983, %v1981
      %v2012 = vpack.c.b16 %v1984, %v1982
      %v2013 = vpack.c.b16 %v1987, %v1985
      %v2014 = vpack.c.b16 %v1988, %v1986
      %v2015 = vpack.c.b16 %v1991, %v1989
      %v2016 = vpack.c.b16 %v1992, %v1990
      %v2017 = vpack.c.b16 %v1995, %v1993
      %v2018 = vpack.c.b16 %v1996, %v1994
      %v2019 = vpack.c.b16 %v1999, %v1997
      %v2020 = vpack.c.b16 %v2000, %v1998
      %v2021 = vpack.c.b16 %v2003, %v2001
      %v2022 = vpack.c.b16 %v2004, %v2002
      %v2023 = vpack.c.b16 %v2007, %v2005
      %v2024 = vpack.c.b16 %v2008, %v2006
      %2041 = vrot.lane.b32.xlu0 %v1815, 96
      %v2042 = vpop.permute.xlu0 %2041
      %2043 = vrot.lane.b32.xlu0 %v1816, 96
      %v2044 = vpop.permute.xlu0 %2043
      %2045 = vrot.lane.b32.xlu0 %v1817, 96
      %v2046 = vpop.permute.xlu0 %2045
      %2047 = vrot.lane.b32.xlu0 %v1818, 96
      %v2048 = vpop.permute.xlu0 %2047
      %2049 = vrot.lane.b32.xlu0 %v1819, 96
      %v2050 = vpop.permute.xlu0 %2049
      %2051 = vrot.lane.b32.xlu0 %v1820, 96
      %v2052 = vpop.permute.xlu0 %2051
      %2053 = vrot.lane.b32.xlu0 %v1821, 96
      %v2054 = vpop.permute.xlu0 %2053
      %2055 = vrot.lane.b32.xlu0 %v1822, 96
      %v2056 = vpop.permute.xlu0 %2055
      %2057 = vrot.lane.b32.xlu0 %v1823, 96
      %v2058 = vpop.permute.xlu0 %2057
      %2059 = vrot.lane.b32.xlu0 %v1824, 96
      %v2060 = vpop.permute.xlu0 %2059
      %2061 = vrot.lane.b32.xlu0 %v1825, 96
      %v2062 = vpop.permute.xlu0 %2061
      %2063 = vrot.lane.b32.xlu0 %v1826, 96
      %v2064 = vpop.permute.xlu0 %2063
      %2065 = vrot.lane.b32.xlu0 %v1827, 96
      %v2066 = vpop.permute.xlu0 %2065
      %2067 = vrot.lane.b32.xlu0 %v1828, 96
      %v2068 = vpop.permute.xlu0 %2067
      %2069 = vrot.lane.b32.xlu0 %v1829, 96
      %v2070 = vpop.permute.xlu0 %2069
      %2071 = vrot.lane.b32.xlu0 %v1830, 96
      %v2072 = vpop.permute.xlu0 %2071
      %2089 = vmatpush.bf16.msra.mxu0 %v2056
      %2090 = vmatpush.bf16.msra.mxu0 %v2054
      %2091 = vmatpush.bf16.msra.mxu0 %v2052
      %2092 = vmatpush.bf16.msra.mxu0 %v2050
      %2093 = vmatpush.bf16.msra.mxu0 %v2048
      %2094 = vmatpush.bf16.msra.mxu0 %v2046
      %2095 = vmatpush.bf16.msra.mxu0 %v2044
      %2096 = vmatpush.bf16.msra.mxu0 %v2042
      %2097 = vmatmul.bf16.gmra.mxu0 %v2009
      %v2098 = vpop.f32.mrf.mxu0
      %v2099 = vadd.f32 0.0, %v2098
      %v2100 = vpop.f32.mrf.mxu0
      %v2101 = vadd.f32 0.0, %v2100
      %2102 = vmatmul.bf16.gmra.mxu0 %v2011
      %v2103 = vpop.f32.mrf.mxu0
      %v2104 = vadd.f32 0.0, %v2103
      %v2105 = vpop.f32.mrf.mxu0
      %v2106 = vadd.f32 0.0, %v2105
      %2107 = vmatmul.bf16.gmra.mxu0 %v2013
      %v2108 = vpop.f32.mrf.mxu0
      %v2109 = vadd.f32 0.0, %v2108
      %v2110 = vpop.f32.mrf.mxu0
      %v2111 = vadd.f32 0.0, %v2110
      %2112 = vmatmul.bf16.gmra.mxu0 %v2015
      %v2113 = vpop.f32.mrf.mxu0
      %v2114 = vadd.f32 0.0, %v2113
      %v2115 = vpop.f32.mrf.mxu0
      %v2116 = vadd.f32 0.0, %v2115
      %2117 = vmatmul.bf16.gmra.mxu0 %v2017
      %v2118 = vpop.f32.mrf.mxu0
      %v2119 = vadd.f32 0.0, %v2118
      %v2120 = vpop.f32.mrf.mxu0
      %v2121 = vadd.f32 0.0, %v2120
      %2122 = vmatmul.bf16.gmra.mxu0 %v2019
      %v2123 = vpop.f32.mrf.mxu0
      %v2124 = vadd.f32 0.0, %v2123
      %v2125 = vpop.f32.mrf.mxu0
      %v2126 = vadd.f32 0.0, %v2125
      %2127 = vmatmul.bf16.gmra.mxu0 %v2021
      %v2128 = vpop.f32.mrf.mxu0
      %v2129 = vadd.f32 0.0, %v2128
      %v2130 = vpop.f32.mrf.mxu0
      %v2131 = vadd.f32 0.0, %v2130
      %2132 = vmatmul.bf16.gmra.mxu0 %v2023
      %v2133 = vpop.f32.mrf.mxu0
      %v2134 = vadd.f32 0.0, %v2133
      %v2135 = vpop.f32.mrf.mxu0
      %v2136 = vadd.f32 0.0, %v2135
      %2137 = vdwg.mxu0
      %2138 = vmatpush.bf16.msra.mxu0 %v2072
      %2139 = vmatpush.bf16.msra.mxu0 %v2070
      %2140 = vmatpush.bf16.msra.mxu0 %v2068
      %2141 = vmatpush.bf16.msra.mxu0 %v2066
      %2142 = vmatpush.bf16.msra.mxu0 %v2064
      %2143 = vmatpush.bf16.msra.mxu0 %v2062
      %2144 = vmatpush.bf16.msra.mxu0 %v2060
      %2145 = vmatpush.bf16.msra.mxu0 %v2058
      %2146 = vmatmul.bf16.gmra.mxu0 %v2010
      %v2147 = vpop.f32.mrf.mxu0
      %v2148 = vadd.f32 %v2099, %v2147
      %v2149 = vpop.f32.mrf.mxu0
      %v2150 = vadd.f32 %v2101, %v2149
      %2151 = vmatmul.bf16.gmra.mxu0 %v2012
      %v2152 = vpop.f32.mrf.mxu0
      %v2153 = vadd.f32 %v2104, %v2152
      %v2154 = vpop.f32.mrf.mxu0
      %v2155 = vadd.f32 %v2106, %v2154
      %2156 = vmatmul.bf16.gmra.mxu0 %v2014
      %v2157 = vpop.f32.mrf.mxu0
      %v2158 = vadd.f32 %v2109, %v2157
      %v2159 = vpop.f32.mrf.mxu0
      %v2160 = vadd.f32 %v2111, %v2159
      %2161 = vmatmul.bf16.gmra.mxu0 %v2016
      %v2162 = vpop.f32.mrf.mxu0
      %v2163 = vadd.f32 %v2114, %v2162
      %v2164 = vpop.f32.mrf.mxu0
      %v2165 = vadd.f32 %v2116, %v2164
      %2166 = vmatmul.bf16.gmra.mxu0 %v2018
      %v2167 = vpop.f32.mrf.mxu0
      %v2168 = vadd.f32 %v2119, %v2167
      %v2169 = vpop.f32.mrf.mxu0
      %v2170 = vadd.f32 %v2121, %v2169
      %2171 = vmatmul.bf16.gmra.mxu0 %v2020
      %v2172 = vpop.f32.mrf.mxu0
      %v2173 = vadd.f32 %v2124, %v2172
      %v2174 = vpop.f32.mrf.mxu0
      %v2175 = vadd.f32 %v2126, %v2174
      %2176 = vmatmul.bf16.gmra.mxu0 %v2022
      %v2177 = vpop.f32.mrf.mxu0
      %v2178 = vadd.f32 %v2129, %v2177
      %v2179 = vpop.f32.mrf.mxu0
      %v2180 = vadd.f32 %v2131, %v2179
      %2181 = vmatmul.bf16.gmra.mxu0 %v2024
      %v2182 = vpop.f32.mrf.mxu0
      %v2183 = vadd.f32 %v2134, %v2182
      %v2184 = vpop.f32.mrf.mxu0
      %v2185 = vadd.f32 %v2136, %v2184
      %2186 = vdwg.mxu0
      %v2187 = vmul.f32 %v2148, %v1591
      %v2188 = vmul.f32 %v2150, %v1592
      %v2189 = vmul.f32 %v2153, %v1593
      %v2190 = vmul.f32 %v2155, %v1594
      %v2191 = vmul.f32 %v2158, %v1595
      %v2192 = vmul.f32 %v2160, %v1596
      %v2193 = vmul.f32 %v2163, %v1597
      %v2194 = vmul.f32 %v2165, %v1598
      %v2195 = vmul.f32 %v2168, %v1599
      %v2196 = vmul.f32 %v2170, %v1600
      %v2197 = vmul.f32 %v2173, %v1601
      %v2198 = vmul.f32 %v2175, %v1602
      %v2199 = vmul.f32 %v2178, %v1603
      %v2200 = vmul.f32 %v2180, %v1604
      %v2201 = vmul.f32 %v2183, %v1605
      %v2202 = vmul.f32 %v2185, %v1606
      %2219 = vrot.lane.b32.xlu0 %v2187, 32
      %v2220 = vpop.permute.xlu0 %2219
      %2221 = vrot.lane.b32.xlu0 %v2188, 32
      %v2222 = vpop.permute.xlu0 %2221
      %2223 = vrot.lane.b32.xlu0 %v2189, 32
      %v2224 = vpop.permute.xlu0 %2223
      %2225 = vrot.lane.b32.xlu0 %v2190, 32
      %v2226 = vpop.permute.xlu0 %2225
      %2227 = vrot.lane.b32.xlu0 %v2191, 32
      %v2228 = vpop.permute.xlu0 %2227
      %2229 = vrot.lane.b32.xlu0 %v2192, 32
      %v2230 = vpop.permute.xlu0 %2229
      %2231 = vrot.lane.b32.xlu0 %v2193, 32
      %v2232 = vpop.permute.xlu0 %2231
      %2233 = vrot.lane.b32.xlu0 %v2194, 32
      %v2234 = vpop.permute.xlu0 %2233
      %2235 = vrot.lane.b32.xlu0 %v2195, 32
      %v2236 = vpop.permute.xlu0 %2235
      %2237 = vrot.lane.b32.xlu0 %v2196, 32
      %v2238 = vpop.permute.xlu0 %2237
      %2239 = vrot.lane.b32.xlu0 %v2197, 32
      %v2240 = vpop.permute.xlu0 %2239
      %2241 = vrot.lane.b32.xlu0 %v2198, 32
      %v2242 = vpop.permute.xlu0 %2241
      %2243 = vrot.lane.b32.xlu0 %v2199, 32
      %v2244 = vpop.permute.xlu0 %2243
      %2245 = vrot.lane.b32.xlu0 %v2200, 32
      %v2246 = vpop.permute.xlu0 %2245
      %2247 = vrot.lane.b32.xlu0 %v2201, 32
      %v2248 = vpop.permute.xlu0 %2247
      %2249 = vrot.lane.b32.xlu0 %v2202, 32
      %v2250 = vpop.permute.xlu0 %2249
      %v2267 = vsel %vm454, %v1945, %v2220
      %v2268 = vsel %vm454, %v1946, %v2222
      %v2269 = vsel %vm454, %v1947, %v2224
      %v2270 = vsel %vm454, %v1948, %v2226
      %v2271 = vsel %vm454, %v1949, %v2228
      %v2272 = vsel %vm454, %v1950, %v2230
      %v2273 = vsel %vm454, %v1951, %v2232
      %v2274 = vsel %vm454, %v1952, %v2234
      %v2275 = vsel %vm454, %v1953, %v2236
      %v2276 = vsel %vm454, %v1954, %v2238
      %v2277 = vsel %vm454, %v1955, %v2240
      %v2278 = vsel %vm454, %v1956, %v2242
      %v2279 = vsel %vm454, %v1957, %v2244
      %v2280 = vsel %vm454, %v1958, %v2246
      %v2281 = vsel %vm454, %v1959, %v2248
      %v2282 = vsel %vm454, %v1960, %v2250
      %v2284 = vperm.slane %v368, 0
      %v2286 = vadd.f32 %v2267, %v2284
      %v2287 = vadd.f32 %v2268, %v2284
      %v2288 = vadd.f32 %v2269, %v2284
      %v2289 = vadd.f32 %v2270, %v2284
      %v2290 = vadd.f32 %v2271, %v2284
      %v2291 = vadd.f32 %v2272, %v2284
      %v2292 = vadd.f32 %v2273, %v2284
      %v2293 = vadd.f32 %v2274, %v2284
      %v2294 = vadd.f32 %v2275, %v2284
      %v2295 = vadd.f32 %v2276, %v2284
      %v2296 = vadd.f32 %v2277, %v2284
      %v2297 = vadd.f32 %v2278, %v2284
      %v2298 = vadd.f32 %v2279, %v2284
      %v2299 = vadd.f32 %v2280, %v2284
      %v2300 = vadd.f32 %v2281, %v2284
      %v2301 = vadd.f32 %v2282, %v2284
      %vm2302 = vcmp.gt.f32.partialorder %v2286, 0.0
      %vm2303 = vcmp.gt.f32.partialorder %v2287, 0.0
      %vm2304 = vcmp.gt.f32.partialorder %v2288, 0.0
      %vm2305 = vcmp.gt.f32.partialorder %v2289, 0.0
      %vm2306 = vcmp.gt.f32.partialorder %v2290, 0.0
      %vm2307 = vcmp.gt.f32.partialorder %v2291, 0.0
      %vm2308 = vcmp.gt.f32.partialorder %v2292, 0.0
      %vm2309 = vcmp.gt.f32.partialorder %v2293, 0.0
      %vm2310 = vcmp.gt.f32.partialorder %v2294, 0.0
      %vm2311 = vcmp.gt.f32.partialorder %v2295, 0.0
      %vm2312 = vcmp.gt.f32.partialorder %v2296, 0.0
      %vm2313 = vcmp.gt.f32.partialorder %v2297, 0.0
      %vm2314 = vcmp.gt.f32.partialorder %v2298, 0.0
      %vm2315 = vcmp.gt.f32.partialorder %v2299, 0.0
      %vm2316 = vcmp.gt.f32.partialorder %v2300, 0.0
      %vm2317 = vcmp.gt.f32.partialorder %v2301, 0.0
      %v2318 = vmul.f32 %v2286, 1.442695
      %v2319 = vpow.pop %v2318
      %v2320 = vmul.f32 %v2287, 1.442695
      %v2321 = vpow.pop %v2320
      %v2322 = vmul.f32 %v2288, 1.442695
      %v2323 = vpow.pop %v2322
      %v2324 = vmul.f32 %v2289, 1.442695
      %v2325 = vpow.pop %v2324
      %v2326 = vmul.f32 %v2290, 1.442695
      %v2327 = vpow.pop %v2326
      %v2328 = vmul.f32 %v2291, 1.442695
      %v2329 = vpow.pop %v2328
      %v2330 = vmul.f32 %v2292, 1.442695
      %v2331 = vpow.pop %v2330
      %v2332 = vmul.f32 %v2293, 1.442695
      %v2333 = vpow.pop %v2332
      %v2334 = vmul.f32 %v2294, 1.442695
      %v2335 = vpow.pop %v2334
      %v2336 = vmul.f32 %v2295, 1.442695
      %v2337 = vpow.pop %v2336
      %v2338 = vmul.f32 %v2296, 1.442695
      %v2339 = vpow.pop %v2338
      %v2340 = vmul.f32 %v2297, 1.442695
      %v2341 = vpow.pop %v2340
      %v2342 = vmul.f32 %v2298, 1.442695
      %v2343 = vpow.pop %v2342
      %v2344 = vmul.f32 %v2299, 1.442695
      %v2345 = vpow.pop %v2344
      %v2346 = vmul.f32 %v2300, 1.442695
      %v2347 = vpow.pop %v2346
      %v2348 = vmul.f32 %v2301, 1.442695
      %v2349 = vpow.pop %v2348
      %v2350 = vsub.f32 %v2319, 1.0
      %v2351 = vsub.f32 %v2321, 1.0
      %v2352 = vsub.f32 %v2323, 1.0
      %v2353 = vsub.f32 %v2325, 1.0
      %v2354 = vsub.f32 %v2327, 1.0
      %v2355 = vsub.f32 %v2329, 1.0
      %v2356 = vsub.f32 %v2331, 1.0
      %v2357 = vsub.f32 %v2333, 1.0
      %v2358 = vsub.f32 %v2335, 1.0
      %v2359 = vsub.f32 %v2337, 1.0
      %v2360 = vsub.f32 %v2339, 1.0
      %v2361 = vsub.f32 %v2341, 1.0
      %v2362 = vsub.f32 %v2343, 1.0
      %v2363 = vsub.f32 %v2345, 1.0
      %v2364 = vsub.f32 %v2347, 1.0
      %v2365 = vsub.f32 %v2349, 1.0
      %v2366 = vmul.f32 %v2350, 1.6732632
      %v2367 = vmul.f32 %v2351, 1.6732632
      %v2368 = vmul.f32 %v2352, 1.6732632
      %v2369 = vmul.f32 %v2353, 1.6732632
      %v2370 = vmul.f32 %v2354, 1.6732632
      %v2371 = vmul.f32 %v2355, 1.6732632
      %v2372 = vmul.f32 %v2356, 1.6732632
      %v2373 = vmul.f32 %v2357, 1.6732632
      %v2374 = vmul.f32 %v2358, 1.6732632
      %v2375 = vmul.f32 %v2359, 1.6732632
      %v2376 = vmul.f32 %v2360, 1.6732632
      %v2377 = vmul.f32 %v2361, 1.6732632
      %v2378 = vmul.f32 %v2362, 1.6732632
      %v2379 = vmul.f32 %v2363, 1.6732632
      %v2380 = vmul.f32 %v2364, 1.6732632
      %v2381 = vmul.f32 %v2365, 1.6732632
      %v2382 = vsel %vm2302, %v2286, %v2366
      %v2383 = vsel %vm2303, %v2287, %v2367
      %v2384 = vsel %vm2304, %v2288, %v2368
      %v2385 = vsel %vm2305, %v2289, %v2369
      %v2386 = vsel %vm2306, %v2290, %v2370
      %v2387 = vsel %vm2307, %v2291, %v2371
      %v2388 = vsel %vm2308, %v2292, %v2372
      %v2389 = vsel %vm2309, %v2293, %v2373
      %v2390 = vsel %vm2310, %v2294, %v2374
      %v2391 = vsel %vm2311, %v2295, %v2375
      %v2392 = vsel %vm2312, %v2296, %v2376
      %v2393 = vsel %vm2313, %v2297, %v2377
      %v2394 = vsel %vm2314, %v2298, %v2378
      %v2395 = vsel %vm2315, %v2299, %v2379
      %v2396 = vsel %vm2316, %v2300, %v2380
      %v2397 = vsel %vm2317, %v2301, %v2381
      %v2398 = vmul.f32 %v2382, 1.050701
      %v2399 = vmul.f32 %v2383, 1.050701
      %v2400 = vmul.f32 %v2384, 1.050701
      %v2401 = vmul.f32 %v2385, 1.050701
      %v2402 = vmul.f32 %v2386, 1.050701
      %v2403 = vmul.f32 %v2387, 1.050701
      %v2404 = vmul.f32 %v2388, 1.050701
      %v2405 = vmul.f32 %v2389, 1.050701
      %v2406 = vmul.f32 %v2390, 1.050701
      %v2407 = vmul.f32 %v2391, 1.050701
      %v2408 = vmul.f32 %v2392, 1.050701
      %v2409 = vmul.f32 %v2393, 1.050701
      %v2410 = vmul.f32 %v2394, 1.050701
      %v2411 = vmul.f32 %v2395, 1.050701
      %v2412 = vmul.f32 %v2396, 1.050701
      %v2413 = vmul.f32 %v2397, 1.050701
      %2430 = vrot.lane.b32.xlu0 %v2398, 96
      %v2431 = vpop.permute.xlu0 %2430
      %2432 = vrot.lane.b32.xlu0 %v2399, 96
      %v2433 = vpop.permute.xlu0 %2432
      %2434 = vrot.lane.b32.xlu0 %v2400, 96
      %v2435 = vpop.permute.xlu0 %2434
      %2436 = vrot.lane.b32.xlu0 %v2401, 96
      %v2437 = vpop.permute.xlu0 %2436
      %2438 = vrot.lane.b32.xlu0 %v2402, 96
      %v2439 = vpop.permute.xlu0 %2438
      %2440 = vrot.lane.b32.xlu0 %v2403, 96
      %v2441 = vpop.permute.xlu0 %2440
      %2442 = vrot.lane.b32.xlu0 %v2404, 96
      %v2443 = vpop.permute.xlu0 %2442
      %2444 = vrot.lane.b32.xlu0 %v2405, 96
      %v2445 = vpop.permute.xlu0 %2444
      %2446 = vrot.lane.b32.xlu0 %v2406, 96
      %v2447 = vpop.permute.xlu0 %2446
      %2448 = vrot.lane.b32.xlu0 %v2407, 96
      %v2449 = vpop.permute.xlu0 %2448
      %2450 = vrot.lane.b32.xlu0 %v2408, 96
      %v2451 = vpop.permute.xlu0 %2450
      %2452 = vrot.lane.b32.xlu0 %v2409, 96
      %v2453 = vpop.permute.xlu0 %2452
      %2454 = vrot.lane.b32.xlu0 %v2410, 96
      %v2455 = vpop.permute.xlu0 %2454
      %2456 = vrot.lane.b32.xlu0 %v2411, 96
      %v2457 = vpop.permute.xlu0 %2456
      %2458 = vrot.lane.b32.xlu0 %v2412, 96
      %v2459 = vpop.permute.xlu0 %2458
      %2460 = vrot.lane.b32.xlu0 %v2413, 96
      %v2461 = vpop.permute.xlu0 %2460
      %v2478 = vadd.f32 %v2398, %v2431
      %v2479 = vadd.f32 %v2399, %v2433
      %v2480 = vadd.f32 %v2400, %v2435
      %v2481 = vadd.f32 %v2401, %v2437
      %v2482 = vadd.f32 %v2402, %v2439
      %v2483 = vadd.f32 %v2403, %v2441
      %v2484 = vadd.f32 %v2404, %v2443
      %v2485 = vadd.f32 %v2405, %v2445
      %v2486 = vadd.f32 %v2406, %v2447
      %v2487 = vadd.f32 %v2407, %v2449
      %v2488 = vadd.f32 %v2408, %v2451
      %v2489 = vadd.f32 %v2409, %v2453
      %v2490 = vadd.f32 %v2410, %v2455
      %v2491 = vadd.f32 %v2411, %v2457
      %v2492 = vadd.f32 %v2412, %v2459
      %v2493 = vadd.f32 %v2413, %v2461
      %2510 = vrot.lane.b32.xlu0 %v401, 96
      %v2511 = vpop.permute.xlu0 %2510
      %2512 = vrot.lane.b32.xlu0 %v402, 96
      %v2513 = vpop.permute.xlu0 %2512
      %2514 = vrot.lane.b32.xlu0 %v403, 96
      %v2515 = vpop.permute.xlu0 %2514
      %2516 = vrot.lane.b32.xlu0 %v404, 96
      %v2517 = vpop.permute.xlu0 %2516
      %2518 = vrot.lane.b32.xlu0 %v405, 96
      %v2519 = vpop.permute.xlu0 %2518
      %2520 = vrot.lane.b32.xlu0 %v406, 96
      %v2521 = vpop.permute.xlu0 %2520
      %2522 = vrot.lane.b32.xlu0 %v407, 96
      %v2523 = vpop.permute.xlu0 %2522
      %2524 = vrot.lane.b32.xlu0 %v408, 96
      %v2525 = vpop.permute.xlu0 %2524
      %2526 = vrot.lane.b32.xlu0 %v409, 96
      %v2527 = vpop.permute.xlu0 %2526
      %2528 = vrot.lane.b32.xlu0 %v410, 96
      %v2529 = vpop.permute.xlu0 %2528
      %2530 = vrot.lane.b32.xlu0 %v411, 96
      %v2531 = vpop.permute.xlu0 %2530
      %2532 = vrot.lane.b32.xlu0 %v412, 96
      %v2533 = vpop.permute.xlu0 %2532
      %2534 = vrot.lane.b32.xlu0 %v413, 96
      %v2535 = vpop.permute.xlu0 %2534
      %2536 = vrot.lane.b32.xlu0 %v414, 96
      %v2537 = vpop.permute.xlu0 %2536
      %2538 = vrot.lane.b32.xlu0 %v415, 96
      %v2539 = vpop.permute.xlu0 %2538
      %2540 = vrot.lane.b32.xlu0 %v416, 96
      %v2541 = vpop.permute.xlu0 %2540
      %v2543 = vsel %vm454, %v2511, 0
      %v2546 = vsel %vm454, %v2513, 0
      %v2549 = vsel %vm454, %v2515, 0
      %v2552 = vsel %vm454, %v2517, 0
      %v2555 = vsel %vm454, %v2519, 0
      %v2558 = vsel %vm454, %v2521, 0
      %v2561 = vsel %vm454, %v2523, 0
      %v2564 = vsel %vm454, %v2525, 0
      %v2567 = vsel %vm454, %v2527, 0
      %v2570 = vsel %vm454, %v2529, 0
      %v2573 = vsel %vm454, %v2531, 0
      %v2576 = vsel %vm454, %v2533, 0
      %v2579 = vsel %vm454, %v2535, 0
      %v2582 = vsel %vm454, %v2537, 0
      %v2585 = vsel %vm454, %v2539, 0
      %v2588 = vsel %vm454, %v2541, 0
      %2590 = vmatpush.bf16.msra.mxu0 0
      %2591 = vmatpush.bf16.msra.mxu0 0
      %2592 = vmatpush.bf16.msra.mxu0 0
      %2593 = vmatpush.bf16.msra.mxu0 0
      %2594 = vmatpush.bf16.msra.mxu0 0
      %2595 = vmatpush.bf16.msra.mxu0 0
      %2596 = vmatpush.bf16.msra.mxu0 %v451
      %2597 = vmatpush.bf16.msra.mxu0 %v450
      %2598 = vmatmul.bf16.gmra.mxu0 %v2543
      %v2599 = vpop.f32.mrf.mxu0
      %v2600 = vadd.f32 0.0, %v2599
      %v2601 = vpop.f32.mrf.mxu0
      %v2602 = vadd.f32 0.0, %v2601
      %2603 = vmatmul.bf16.gmra.mxu0 %v2546
      %v2604 = vpop.f32.mrf.mxu0
      %v2605 = vadd.f32 0.0, %v2604
      %v2606 = vpop.f32.mrf.mxu0
      %v2607 = vadd.f32 0.0, %v2606
      %2608 = vmatmul.bf16.gmra.mxu0 %v2549
      %v2609 = vpop.f32.mrf.mxu0
      %v2610 = vadd.f32 0.0, %v2609
      %v2611 = vpop.f32.mrf.mxu0
      %v2612 = vadd.f32 0.0, %v2611
      %2613 = vmatmul.bf16.gmra.mxu0 %v2552
      %v2614 = vpop.f32.mrf.mxu0
      %v2615 = vadd.f32 0.0, %v2614
      %v2616 = vpop.f32.mrf.mxu0
      %v2617 = vadd.f32 0.0, %v2616
      %2618 = vmatmul.bf16.gmra.mxu0 %v2555
      %v2619 = vpop.f32.mrf.mxu0
      %v2620 = vadd.f32 0.0, %v2619
      %v2621 = vpop.f32.mrf.mxu0
      %v2622 = vadd.f32 0.0, %v2621
      %2623 = vmatmul.bf16.gmra.mxu0 %v2558
      %v2624 = vpop.f32.mrf.mxu0
      %v2625 = vadd.f32 0.0, %v2624
      %v2626 = vpop.f32.mrf.mxu0
      %v2627 = vadd.f32 0.0, %v2626
      %2628 = vmatmul.bf16.gmra.mxu0 %v2561
      %v2629 = vpop.f32.mrf.mxu0
      %v2630 = vadd.f32 0.0, %v2629
      %v2631 = vpop.f32.mrf.mxu0
      %v2632 = vadd.f32 0.0, %v2631
      %2633 = vmatmul.bf16.gmra.mxu0 %v2564
      %v2634 = vpop.f32.mrf.mxu0
      %v2635 = vadd.f32 0.0, %v2634
      %v2636 = vpop.f32.mrf.mxu0
      %v2637 = vadd.f32 0.0, %v2636
      %2638 = vmatmul.bf16.gmra.mxu0 %v2567
      %v2639 = vpop.f32.mrf.mxu0
      %v2640 = vadd.f32 0.0, %v2639
      %v2641 = vpop.f32.mrf.mxu0
      %v2642 = vadd.f32 0.0, %v2641
      %2643 = vmatmul.bf16.gmra.mxu0 %v2570
      %v2644 = vpop.f32.mrf.mxu0
      %v2645 = vadd.f32 0.0, %v2644
      %v2646 = vpop.f32.mrf.mxu0
      %v2647 = vadd.f32 0.0, %v2646
      %2648 = vmatmul.bf16.gmra.mxu0 %v2573
      %v2649 = vpop.f32.mrf.mxu0
      %v2650 = vadd.f32 0.0, %v2649
      %v2651 = vpop.f32.mrf.mxu0
      %v2652 = vadd.f32 0.0, %v2651
      %2653 = vmatmul.bf16.gmra.mxu0 %v2576
      %v2654 = vpop.f32.mrf.mxu0
      %v2655 = vadd.f32 0.0, %v2654
      %v2656 = vpop.f32.mrf.mxu0
      %v2657 = vadd.f32 0.0, %v2656
      %2658 = vmatmul.bf16.gmra.mxu0 %v2579
      %v2659 = vpop.f32.mrf.mxu0
      %v2660 = vadd.f32 0.0, %v2659
      %v2661 = vpop.f32.mrf.mxu0
      %v2662 = vadd.f32 0.0, %v2661
      %2663 = vmatmul.bf16.gmra.mxu0 %v2582
      %v2664 = vpop.f32.mrf.mxu0
      %v2665 = vadd.f32 0.0, %v2664
      %v2666 = vpop.f32.mrf.mxu0
      %v2667 = vadd.f32 0.0, %v2666
      %2668 = vmatmul.bf16.gmra.mxu0 %v2585
      %v2669 = vpop.f32.mrf.mxu0
      %v2670 = vadd.f32 0.0, %v2669
      %v2671 = vpop.f32.mrf.mxu0
      %v2672 = vadd.f32 0.0, %v2671
      %2673 = vmatmul.bf16.gmra.mxu0 %v2588
      %v2674 = vpop.f32.mrf.mxu0
      %v2675 = vadd.f32 0.0, %v2674
      %v2676 = vpop.f32.mrf.mxu0
      %v2677 = vadd.f32 0.0, %v2676
      %2678 = vdwg.mxu0
      %2679 = vmatpush.bf16.xpose.msra.mxu0 %v2564
      %2680 = vmatpush.bf16.xpose.msra.mxu0 %v2561
      %2681 = vmatpush.bf16.xpose.msra.mxu0 %v2558
      %2682 = vmatpush.bf16.xpose.msra.mxu0 %v2555
      %2683 = vmatpush.bf16.xpose.msra.mxu0 %v2552
      %2684 = vmatpush.bf16.xpose.msra.mxu0 %v2549
      %2685 = vmatpush.bf16.xpose.msra.mxu0 %v2546
      %2686 = vmatpush.bf16.xpose.msra.mxu0 %v2543
      %2687 = vmatmul.bf16.gmra.mxu0 %v593
      %v2688 = vpop.f32.mrf.mxu0
      %v2689 = vadd.f32 0.0, %v2688
      %v2690 = vpop.f32.mrf.mxu0
      %2691 = vdwg.mxu0
      %2692 = vmatpush.bf16.xpose.msra.mxu0 %v2588
      %2693 = vmatpush.bf16.xpose.msra.mxu0 %v2585
      %2694 = vmatpush.bf16.xpose.msra.mxu0 %v2582
      %2695 = vmatpush.bf16.xpose.msra.mxu0 %v2579
      %2696 = vmatpush.bf16.xpose.msra.mxu0 %v2576
      %2697 = vmatpush.bf16.xpose.msra.mxu0 %v2573
      %2698 = vmatpush.bf16.xpose.msra.mxu0 %v2570
      %2699 = vmatpush.bf16.xpose.msra.mxu0 %v2567
      %2700 = vmatmul.bf16.gmra.mxu0 %v593
      %v2701 = vpop.f32.mrf.mxu0
      %v2702 = vadd.f32 0.0, %v2701
      %v2703 = vpop.f32.mrf.mxu0
      %2704 = vdwg.mxu0
      %2713 = vrot.lane.b32.xlu0 %v434, 96
      %v2714 = vpop.permute.xlu0 %2713
      %2715 = vrot.lane.b32.xlu0 %v435, 96
      %v2716 = vpop.permute.xlu0 %2715
      %2717 = vrot.lane.b32.xlu0 %v436, 96
      %v2718 = vpop.permute.xlu0 %2717
      %2719 = vrot.lane.b32.xlu0 %v437, 96
      %v2720 = vpop.permute.xlu0 %2719
      %2721 = vrot.lane.b32.xlu0 %v438, 96
      %v2722 = vpop.permute.xlu0 %2721
      %2723 = vrot.lane.b32.xlu0 %v439, 96
      %v2724 = vpop.permute.xlu0 %2723
      %2725 = vrot.lane.b32.xlu0 %v440, 96
      %v2726 = vpop.permute.xlu0 %2725
      %2727 = vrot.lane.b32.xlu0 %v441, 96
      %v2728 = vpop.permute.xlu0 %2727
      %v2730 = vsel %vm454, %v2714, 0
      %v2733 = vsel %vm454, %v2716, 0
      %v2736 = vsel %vm454, %v2718, 0
      %v2739 = vsel %vm454, %v2720, 0
      %v2742 = vsel %vm454, %v2722, 0
      %v2745 = vsel %vm454, %v2724, 0
      %v2748 = vsel %vm454, %v2726, 0
      %v2751 = vsel %vm454, %v2728, 0
      %2753 = vmatpush.bf16.xpose.msra.mxu0 %v2751
      %2754 = vmatpush.bf16.xpose.msra.mxu0 %v2748
      %2755 = vmatpush.bf16.xpose.msra.mxu0 %v2745
      %2756 = vmatpush.bf16.xpose.msra.mxu0 %v2742
      %2757 = vmatpush.bf16.xpose.msra.mxu0 %v2739
      %2758 = vmatpush.bf16.xpose.msra.mxu0 %v2736
      %2759 = vmatpush.bf16.xpose.msra.mxu0 %v2733
      %2760 = vmatpush.bf16.xpose.msra.mxu0 %v2730
      %2761 = vmatmul.bf16.gmra.mxu0 %v622
      %v2762 = vpop.f32.mrf.mxu0
      %v2763 = vadd.f32 0.0, %v2762
      %v2764 = vpop.f32.mrf.mxu0
      %2765 = vdwg.mxu0
      %v2766 = vperm.slane %v2763, 0
      %v2767 = vlaneseq
      %v2768 = vshrl.u32 %v2767, 7
      %2770 = vset.pattern.permute.xlu0 %v2768
      %2771 = vperm.xlu0 %2770, %v2766
      %v2772 = vpop.permute.xlu0 %2771
      %v2773 = vlaneseq
      %v2774 = vshrl.u32 %v2773, 7
      %v2775 = vadd.s32 %v2774, 8
      %2776 = vset.pattern.permute.xlu0 %v2775
      %2777 = vperm.xlu0 %2776, %v2766
      %v2778 = vpop.permute.xlu0 %2777
      %v2779 = vlaneseq
      %v2780 = vshrl.u32 %v2779, 7
      %v2781 = vadd.s32 %v2780, 16
      %2782 = vset.pattern.permute.xlu0 %v2781
      %2783 = vperm.xlu0 %2782, %v2766
      %v2784 = vpop.permute.xlu0 %2783
      %v2785 = vlaneseq
      %v2786 = vshrl.u32 %v2785, 7
      %v2787 = vadd.s32 %v2786, 24
      %2788 = vset.pattern.permute.xlu0 %v2787
      %2789 = vperm.xlu0 %2788, %v2766
      %v2790 = vpop.permute.xlu0 %2789
      %v2791 = vlaneseq
      %v2792 = vshrl.u32 %v2791, 7
      %v2793 = vadd.s32 %v2792, 32
      %2794 = vset.pattern.permute.xlu0 %v2793
      %2795 = vperm.xlu0 %2794, %v2766
      %v2796 = vpop.permute.xlu0 %2795
      %v2797 = vlaneseq
      %v2798 = vshrl.u32 %v2797, 7
      %v2799 = vadd.s32 %v2798, 40
      %2800 = vset.pattern.permute.xlu0 %v2799
      %2801 = vperm.xlu0 %2800, %v2766
      %v2802 = vpop.permute.xlu0 %2801
      %v2803 = vlaneseq
      %v2804 = vshrl.u32 %v2803, 7
      %v2805 = vadd.s32 %v2804, 48
      %2806 = vset.pattern.permute.xlu0 %v2805
      %2807 = vperm.xlu0 %2806, %v2766
      %v2808 = vpop.permute.xlu0 %2807
      %v2809 = vlaneseq
      %v2810 = vshrl.u32 %v2809, 7
      %v2811 = vadd.s32 %v2810, 56
      %2812 = vset.pattern.permute.xlu0 %v2811
      %2813 = vperm.xlu0 %2812, %v2766
      %v2814 = vpop.permute.xlu0 %2813
      %v2815 = vlaneseq
      %v2816 = vshrl.u32 %v2815, 7
      %v2817 = vadd.s32 %v2816, 64
      %2818 = vset.pattern.permute.xlu0 %v2817
      %2819 = vperm.xlu0 %2818, %v2766
      %v2820 = vpop.permute.xlu0 %2819
      %v2821 = vlaneseq
      %v2822 = vshrl.u32 %v2821, 7
      %v2823 = vadd.s32 %v2822, 72
      %2824 = vset.pattern.permute.xlu0 %v2823
      %2825 = vperm.xlu0 %2824, %v2766
      %v2826 = vpop.permute.xlu0 %2825
      %v2827 = vlaneseq
      %v2828 = vshrl.u32 %v2827, 7
      %v2829 = vadd.s32 %v2828, 80
      %2830 = vset.pattern.permute.xlu0 %v2829
      %2831 = vperm.xlu0 %2830, %v2766
      %v2832 = vpop.permute.xlu0 %2831
      %v2833 = vlaneseq
      %v2834 = vshrl.u32 %v2833, 7
      %v2835 = vadd.s32 %v2834, 88
      %2836 = vset.pattern.permute.xlu0 %v2835
      %2837 = vperm.xlu0 %2836, %v2766
      %v2838 = vpop.permute.xlu0 %2837
      %v2839 = vlaneseq
      %v2840 = vshrl.u32 %v2839, 7
      %v2841 = vadd.s32 %v2840, 96
      %2842 = vset.pattern.permute.xlu0 %v2841
      %2843 = vperm.xlu0 %2842, %v2766
      %v2844 = vpop.permute.xlu0 %2843
      %v2845 = vlaneseq
      %v2846 = vshrl.u32 %v2845, 7
      %v2847 = vadd.s32 %v2846, 104
      %2848 = vset.pattern.permute.xlu0 %v2847
      %2849 = vperm.xlu0 %2848, %v2766
      %v2850 = vpop.permute.xlu0 %2849
      %v2851 = vlaneseq
      %v2852 = vshrl.u32 %v2851, 7
      %v2853 = vadd.s32 %v2852, 112
      %2854 = vset.pattern.permute.xlu0 %v2853
      %2855 = vperm.xlu0 %2854, %v2766
      %v2856 = vpop.permute.xlu0 %2855
      %v2857 = vlaneseq
      %v2858 = vshrl.u32 %v2857, 7
      %v2859 = vadd.s32 %v2858, 120
      %2860 = vset.pattern.permute.xlu0 %v2859
      %2861 = vperm.xlu0 %2860, %v2766
      %v2862 = vpop.permute.xlu0 %2861
      %v2863 = vperm.slane %v2763, 1
      %v2864 = vlaneseq
      %v2865 = vshrl.u32 %v2864, 7
      %2867 = vset.pattern.permute.xlu0 %v2865
      %2868 = vperm.xlu0 %2867, %v2863
      %v2869 = vpop.permute.xlu0 %2868
      %v2870 = vlaneseq
      %v2871 = vshrl.u32 %v2870, 7
      %v2872 = vadd.s32 %v2871, 8
      %2873 = vset.pattern.permute.xlu0 %v2872
      %2874 = vperm.xlu0 %2873, %v2863
      %v2875 = vpop.permute.xlu0 %2874
      %v2876 = vlaneseq
      %v2877 = vshrl.u32 %v2876, 7
      %v2878 = vadd.s32 %v2877, 16
      %2879 = vset.pattern.permute.xlu0 %v2878
      %2880 = vperm.xlu0 %2879, %v2863
      %v2881 = vpop.permute.xlu0 %2880
      %v2882 = vlaneseq
      %v2883 = vshrl.u32 %v2882, 7
      %v2884 = vadd.s32 %v2883, 24
      %2885 = vset.pattern.permute.xlu0 %v2884
      %2886 = vperm.xlu0 %2885, %v2863
      %v2887 = vpop.permute.xlu0 %2886
      %v2888 = vlaneseq
      %v2889 = vshrl.u32 %v2888, 7
      %v2890 = vadd.s32 %v2889, 32
      %2891 = vset.pattern.permute.xlu0 %v2890
      %2892 = vperm.xlu0 %2891, %v2863
      %v2893 = vpop.permute.xlu0 %2892
      %v2894 = vlaneseq
      %v2895 = vshrl.u32 %v2894, 7
      %v2896 = vadd.s32 %v2895, 40
      %2897 = vset.pattern.permute.xlu0 %v2896
      %2898 = vperm.xlu0 %2897, %v2863
      %v2899 = vpop.permute.xlu0 %2898
      %v2900 = vlaneseq
      %v2901 = vshrl.u32 %v2900, 7
      %v2902 = vadd.s32 %v2901, 48
      %2903 = vset.pattern.permute.xlu0 %v2902
      %2904 = vperm.xlu0 %2903, %v2863
      %v2905 = vpop.permute.xlu0 %2904
      %v2906 = vlaneseq
      %v2907 = vshrl.u32 %v2906, 7
      %v2908 = vadd.s32 %v2907, 56
      %2909 = vset.pattern.permute.xlu0 %v2908
      %2910 = vperm.xlu0 %2909, %v2863
      %v2911 = vpop.permute.xlu0 %2910
      %v2912 = vlaneseq
      %v2913 = vshrl.u32 %v2912, 7
      %v2914 = vadd.s32 %v2913, 64
      %2915 = vset.pattern.permute.xlu0 %v2914
      %2916 = vperm.xlu0 %2915, %v2863
      %v2917 = vpop.permute.xlu0 %2916
      %v2918 = vlaneseq
      %v2919 = vshrl.u32 %v2918, 7
      %v2920 = vadd.s32 %v2919, 72
      %2921 = vset.pattern.permute.xlu0 %v2920
      %2922 = vperm.xlu0 %2921, %v2863
      %v2923 = vpop.permute.xlu0 %2922
      %v2924 = vlaneseq
      %v2925 = vshrl.u32 %v2924, 7
      %v2926 = vadd.s32 %v2925, 80
      %2927 = vset.pattern.permute.xlu0 %v2926
      %2928 = vperm.xlu0 %2927, %v2863
      %v2929 = vpop.permute.xlu0 %2928
      %v2930 = vlaneseq
      %v2931 = vshrl.u32 %v2930, 7
      %v2932 = vadd.s32 %v2931, 88
      %2933 = vset.pattern.permute.xlu0 %v2932
      %2934 = vperm.xlu0 %2933, %v2863
      %v2935 = vpop.permute.xlu0 %2934
      %v2936 = vlaneseq
      %v2937 = vshrl.u32 %v2936, 7
      %v2938 = vadd.s32 %v2937, 96
      %2939 = vset.pattern.permute.xlu0 %v2938
      %2940 = vperm.xlu0 %2939, %v2863
      %v2941 = vpop.permute.xlu0 %2940
      %v2942 = vlaneseq
      %v2943 = vshrl.u32 %v2942, 7
      %v2944 = vadd.s32 %v2943, 104
      %2945 = vset.pattern.permute.xlu0 %v2944
      %2946 = vperm.xlu0 %2945, %v2863
      %v2947 = vpop.permute.xlu0 %2946
      %v2948 = vlaneseq
      %v2949 = vshrl.u32 %v2948, 7
      %v2950 = vadd.s32 %v2949, 112
      %2951 = vset.pattern.permute.xlu0 %v2950
      %2952 = vperm.xlu0 %2951, %v2863
      %v2953 = vpop.permute.xlu0 %2952
      %v2954 = vlaneseq
      %v2955 = vshrl.u32 %v2954, 7
      %v2956 = vadd.s32 %v2955, 120
      %2957 = vset.pattern.permute.xlu0 %v2956
      %2958 = vperm.xlu0 %2957, %v2863
      %v2959 = vpop.permute.xlu0 %2958
      %v2962 = vrot.slane %v2702, 7
      %v2963 = vsel %vm858, %v2689, %v2962
      %v2964 = vsel %vm860, %v2689, %v2962
      %v2965 = vrot.slane %v2964, 1
      %v2966 = vperm.slane %v2963, 0
      %v2967 = vperm.slane %v2963, 1
      %v2968 = vperm.slane %v2965, 0
      %v2969 = vperm.slane %v2965, 1
      %v2974 = vadd.f32 %v2772, %v2966
      %v2975 = vadd.f32 %v2772, %v2967
      %v2976 = vadd.f32 %v2778, %v2966
      %v2977 = vadd.f32 %v2778, %v2967
      %v2978 = vadd.f32 %v2784, %v2966
      %v2979 = vadd.f32 %v2784, %v2967
      %v2980 = vadd.f32 %v2790, %v2966
      %v2981 = vadd.f32 %v2790, %v2967
      %v2982 = vadd.f32 %v2796, %v2966
      %v2983 = vadd.f32 %v2796, %v2967
      %v2984 = vadd.f32 %v2802, %v2966
      %v2985 = vadd.f32 %v2802, %v2967
      %v2986 = vadd.f32 %v2808, %v2966
      %v2987 = vadd.f32 %v2808, %v2967
      %v2988 = vadd.f32 %v2814, %v2966
      %v2989 = vadd.f32 %v2814, %v2967
      %v2990 = vadd.f32 %v2820, %v2966
      %v2991 = vadd.f32 %v2820, %v2967
      %v2992 = vadd.f32 %v2826, %v2966
      %v2993 = vadd.f32 %v2826, %v2967
      %v2994 = vadd.f32 %v2832, %v2966
      %v2995 = vadd.f32 %v2832, %v2967
      %v2996 = vadd.f32 %v2838, %v2966
      %v2997 = vadd.f32 %v2838, %v2967
      %v2998 = vadd.f32 %v2844, %v2966
      %v2999 = vadd.f32 %v2844, %v2967
      %v3000 = vadd.f32 %v2850, %v2966
      %v3001 = vadd.f32 %v2850, %v2967
      %v3002 = vadd.f32 %v2856, %v2966
      %v3003 = vadd.f32 %v2856, %v2967
      %v3004 = vadd.f32 %v2862, %v2966
      %v3005 = vadd.f32 %v2862, %v2967
      %v3006 = vadd.f32 %v2869, %v2968
      %v3007 = vadd.f32 %v2869, %v2969
      %v3008 = vadd.f32 %v2875, %v2968
      %v3009 = vadd.f32 %v2875, %v2969
      %v3010 = vadd.f32 %v2881, %v2968
      %v3011 = vadd.f32 %v2881, %v2969
      %v3012 = vadd.f32 %v2887, %v2968
      %v3013 = vadd.f32 %v2887, %v2969
      %v3014 = vadd.f32 %v2893, %v2968
      %v3015 = vadd.f32 %v2893, %v2969
      %v3016 = vadd.f32 %v2899, %v2968
      %v3017 = vadd.f32 %v2899, %v2969
      %v3018 = vadd.f32 %v2905, %v2968
      %v3019 = vadd.f32 %v2905, %v2969
      %v3020 = vadd.f32 %v2911, %v2968
      %v3021 = vadd.f32 %v2911, %v2969
      %v3022 = vadd.f32 %v2917, %v2968
      %v3023 = vadd.f32 %v2917, %v2969
      %v3024 = vadd.f32 %v2923, %v2968
      %v3025 = vadd.f32 %v2923, %v2969
      %v3026 = vadd.f32 %v2929, %v2968
      %v3027 = vadd.f32 %v2929, %v2969
      %v3028 = vadd.f32 %v2935, %v2968
      %v3029 = vadd.f32 %v2935, %v2969
      %v3030 = vadd.f32 %v2941, %v2968
      %v3031 = vadd.f32 %v2941, %v2969
      %v3032 = vadd.f32 %v2947, %v2968
      %v3033 = vadd.f32 %v2947, %v2969
      %v3034 = vadd.f32 %v2953, %v2968
      %v3035 = vadd.f32 %v2953, %v2969
      %v3036 = vadd.f32 %v2959, %v2968
      %v3037 = vadd.f32 %v2959, %v2969
      %v3038 = vmul.f32 %v2974, 0.2
      %v3039 = vmul.f32 %v2975, 0.2
      %v3040 = vmul.f32 %v2976, 0.2
      %v3041 = vmul.f32 %v2977, 0.2
      %v3042 = vmul.f32 %v2978, 0.2
      %v3043 = vmul.f32 %v2979, 0.2
      %v3044 = vmul.f32 %v2980, 0.2
      %v3045 = vmul.f32 %v2981, 0.2
      %v3046 = vmul.f32 %v2982, 0.2
      %v3047 = vmul.f32 %v2983, 0.2
      %v3048 = vmul.f32 %v2984, 0.2
      %v3049 = vmul.f32 %v2985, 0.2
      %v3050 = vmul.f32 %v2986, 0.2
      %v3051 = vmul.f32 %v2987, 0.2
      %v3052 = vmul.f32 %v2988, 0.2
      %v3053 = vmul.f32 %v2989, 0.2
      %v3054 = vmul.f32 %v2990, 0.2
      %v3055 = vmul.f32 %v2991, 0.2
      %v3056 = vmul.f32 %v2992, 0.2
      %v3057 = vmul.f32 %v2993, 0.2
      %v3058 = vmul.f32 %v2994, 0.2
      %v3059 = vmul.f32 %v2995, 0.2
      %v3060 = vmul.f32 %v2996, 0.2
      %v3061 = vmul.f32 %v2997, 0.2
      %v3062 = vmul.f32 %v2998, 0.2
      %v3063 = vmul.f32 %v2999, 0.2
      %v3064 = vmul.f32 %v3000, 0.2
      %v3065 = vmul.f32 %v3001, 0.2
      %v3066 = vmul.f32 %v3002, 0.2
      %v3067 = vmul.f32 %v3003, 0.2
      %v3068 = vmul.f32 %v3004, 0.2
      %v3069 = vmul.f32 %v3005, 0.2
      %v3070 = vmul.f32 %v3006, 0.2
      %v3071 = vmul.f32 %v3007, 0.2
      %v3072 = vmul.f32 %v3008, 0.2
      %v3073 = vmul.f32 %v3009, 0.2
      %v3074 = vmul.f32 %v3010, 0.2
      %v3075 = vmul.f32 %v3011, 0.2
      %v3076 = vmul.f32 %v3012, 0.2
      %v3077 = vmul.f32 %v3013, 0.2
      %v3078 = vmul.f32 %v3014, 0.2
      %v3079 = vmul.f32 %v3015, 0.2
      %v3080 = vmul.f32 %v3016, 0.2
      %v3081 = vmul.f32 %v3017, 0.2
      %v3082 = vmul.f32 %v3018, 0.2
      %v3083 = vmul.f32 %v3019, 0.2
      %v3084 = vmul.f32 %v3020, 0.2
      %v3085 = vmul.f32 %v3021, 0.2
      %v3086 = vmul.f32 %v3022, 0.2
      %v3087 = vmul.f32 %v3023, 0.2
      %v3088 = vmul.f32 %v3024, 0.2
      %v3089 = vmul.f32 %v3025, 0.2
      %v3090 = vmul.f32 %v3026, 0.2
      %v3091 = vmul.f32 %v3027, 0.2
      %v3092 = vmul.f32 %v3028, 0.2
      %v3093 = vmul.f32 %v3029, 0.2
      %v3094 = vmul.f32 %v3030, 0.2
      %v3095 = vmul.f32 %v3031, 0.2
      %v3096 = vmul.f32 %v3032, 0.2
      %v3097 = vmul.f32 %v3033, 0.2
      %v3098 = vmul.f32 %v3034, 0.2
      %v3099 = vmul.f32 %v3035, 0.2
      %v3100 = vmul.f32 %v3036, 0.2
      %v3101 = vmul.f32 %v3037, 0.2
      %v3102 = vmax.f32 %v2974, %v3038
      %v3103 = vmax.f32 %v2975, %v3039
      %v3104 = vmax.f32 %v2976, %v3040
      %v3105 = vmax.f32 %v2977, %v3041
      %v3106 = vmax.f32 %v2978, %v3042
      %v3107 = vmax.f32 %v2979, %v3043
      %v3108 = vmax.f32 %v2980, %v3044
      %v3109 = vmax.f32 %v2981, %v3045
      %v3110 = vmax.f32 %v2982, %v3046
      %v3111 = vmax.f32 %v2983, %v3047
      %v3112 = vmax.f32 %v2984, %v3048
      %v3113 = vmax.f32 %v2985, %v3049
      %v3114 = vmax.f32 %v2986, %v3050
      %v3115 = vmax.f32 %v2987, %v3051
      %v3116 = vmax.f32 %v2988, %v3052
      %v3117 = vmax.f32 %v2989, %v3053
      %v3118 = vmax.f32 %v2990, %v3054
      %v3119 = vmax.f32 %v2991, %v3055
      %v3120 = vmax.f32 %v2992, %v3056
      %v3121 = vmax.f32 %v2993, %v3057
      %v3122 = vmax.f32 %v2994, %v3058
      %v3123 = vmax.f32 %v2995, %v3059
      %v3124 = vmax.f32 %v2996, %v3060
      %v3125 = vmax.f32 %v2997, %v3061
      %v3126 = vmax.f32 %v2998, %v3062
      %v3127 = vmax.f32 %v2999, %v3063
      %v3128 = vmax.f32 %v3000, %v3064
      %v3129 = vmax.f32 %v3001, %v3065
      %v3130 = vmax.f32 %v3002, %v3066
      %v3131 = vmax.f32 %v3003, %v3067
      %v3132 = vmax.f32 %v3004, %v3068
      %v3133 = vmax.f32 %v3005, %v3069
      %v3134 = vmax.f32 %v3006, %v3070
      %v3135 = vmax.f32 %v3007, %v3071
      %v3136 = vmax.f32 %v3008, %v3072
      %v3137 = vmax.f32 %v3009, %v3073
      %v3138 = vmax.f32 %v3010, %v3074
      %v3139 = vmax.f32 %v3011, %v3075
      %v3140 = vmax.f32 %v3012, %v3076
      %v3141 = vmax.f32 %v3013, %v3077
      %v3142 = vmax.f32 %v3014, %v3078
      %v3143 = vmax.f32 %v3015, %v3079
      %v3144 = vmax.f32 %v3016, %v3080
      %v3145 = vmax.f32 %v3017, %v3081
      %v3146 = vmax.f32 %v3018, %v3082
      %v3147 = vmax.f32 %v3019, %v3083
      %v3148 = vmax.f32 %v3020, %v3084
      %v3149 = vmax.f32 %v3021, %v3085
      %v3150 = vmax.f32 %v3022, %v3086
      %v3151 = vmax.f32 %v3023, %v3087
      %v3152 = vmax.f32 %v3024, %v3088
      %v3153 = vmax.f32 %v3025, %v3089
      %v3154 = vmax.f32 %v3026, %v3090
      %v3155 = vmax.f32 %v3027, %v3091
      %v3156 = vmax.f32 %v3028, %v3092
      %v3157 = vmax.f32 %v3029, %v3093
      %v3158 = vmax.f32 %v3030, %v3094
      %v3159 = vmax.f32 %v3031, %v3095
      %v3160 = vmax.f32 %v3032, %v3096
      %v3161 = vmax.f32 %v3033, %v3097
      %v3162 = vmax.f32 %v3034, %v3098
      %v3163 = vmax.f32 %v3035, %v3099
      %v3164 = vmax.f32 %v3036, %v3100
      %v3165 = vmax.f32 %v3037, %v3101
      %v3166 = vadd.f32 %v3102, %v330
      %v3167 = vadd.f32 %v3103, %v331
      %v3168 = vadd.f32 %v3104, %v332
      %v3169 = vadd.f32 %v3105, %v333
      %v3170 = vadd.f32 %v3106, %v334
      %v3171 = vadd.f32 %v3107, %v335
      %v3172 = vadd.f32 %v3108, %v336
      %v3173 = vadd.f32 %v3109, %v337
      %v3174 = vadd.f32 %v3110, %v338
      %v3175 = vadd.f32 %v3111, %v339
      %v3176 = vadd.f32 %v3112, %v340
      %v3177 = vadd.f32 %v3113, %v341
      %v3178 = vadd.f32 %v3114, %v342
      %v3179 = vadd.f32 %v3115, %v343
      %v3180 = vadd.f32 %v3116, %v344
      %v3181 = vadd.f32 %v3117, %v345
      %v3182 = vadd.f32 %v3118, %v346
      %v3183 = vadd.f32 %v3119, %v347
      %v3184 = vadd.f32 %v3120, %v348
      %v3185 = vadd.f32 %v3121, %v349
      %v3186 = vadd.f32 %v3122, %v350
      %v3187 = vadd.f32 %v3123, %v351
      %v3188 = vadd.f32 %v3124, %v352
      %v3189 = vadd.f32 %v3125, %v353
      %v3190 = vadd.f32 %v3126, %v354
      %v3191 = vadd.f32 %v3127, %v355
      %v3192 = vadd.f32 %v3128, %v356
      %v3193 = vadd.f32 %v3129, %v357
      %v3194 = vadd.f32 %v3130, %v358
      %v3195 = vadd.f32 %v3131, %v359
      %v3196 = vadd.f32 %v3132, %v360
      %v3197 = vadd.f32 %v3133, %v361
      %v3198 = vadd.f32 %v3134, %v330
      %v3199 = vadd.f32 %v3135, %v331
      %v3200 = vadd.f32 %v3136, %v332
      %v3201 = vadd.f32 %v3137, %v333
      %v3202 = vadd.f32 %v3138, %v334
      %v3203 = vadd.f32 %v3139, %v335
      %v3204 = vadd.f32 %v3140, %v336
      %v3205 = vadd.f32 %v3141, %v337
      %v3206 = vadd.f32 %v3142, %v338
      %v3207 = vadd.f32 %v3143, %v339
      %v3208 = vadd.f32 %v3144, %v340
      %v3209 = vadd.f32 %v3145, %v341
      %v3210 = vadd.f32 %v3146, %v342
      %v3211 = vadd.f32 %v3147, %v343
      %v3212 = vadd.f32 %v3148, %v344
      %v3213 = vadd.f32 %v3149, %v345
      %v3214 = vadd.f32 %v3150, %v346
      %v3215 = vadd.f32 %v3151, %v347
      %v3216 = vadd.f32 %v3152, %v348
      %v3217 = vadd.f32 %v3153, %v349
      %v3218 = vadd.f32 %v3154, %v350
      %v3219 = vadd.f32 %v3155, %v351
      %v3220 = vadd.f32 %v3156, %v352
      %v3221 = vadd.f32 %v3157, %v353
      %v3222 = vadd.f32 %v3158, %v354
      %v3223 = vadd.f32 %v3159, %v355
      %v3224 = vadd.f32 %v3160, %v356
      %v3225 = vadd.f32 %v3161, %v357
      %v3226 = vadd.f32 %v3162, %v358
      %v3227 = vadd.f32 %v3163, %v359
      %v3228 = vadd.f32 %v3164, %v360
      %v3229 = vadd.f32 %v3165, %v361
      %v3230 = vmax.f32 %v3166, %v3167
      %3231 = vmax.xlane.f32.xlu0 %v3230
      %v3232 = vpop.xlane.xlu0 %3231
      %v3233 = vmax.f32 %v3168, %v3169
      %3234 = vmax.xlane.f32.xlu0 %v3233
      %v3235 = vpop.xlane.xlu0 %3234
      %v3236 = vmax.f32 %v3170, %v3171
      %3237 = vmax.xlane.f32.xlu0 %v3236
      %v3238 = vpop.xlane.xlu0 %3237
      %v3239 = vmax.f32 %v3172, %v3173
      %3240 = vmax.xlane.f32.xlu0 %v3239
      %v3241 = vpop.xlane.xlu0 %3240
      %v3242 = vmax.f32 %v3174, %v3175
      %3243 = vmax.xlane.f32.xlu0 %v3242
      %v3244 = vpop.xlane.xlu0 %3243
      %v3245 = vmax.f32 %v3176, %v3177
      %3246 = vmax.xlane.f32.xlu0 %v3245
      %v3247 = vpop.xlane.xlu0 %3246
      %v3248 = vmax.f32 %v3178, %v3179
      %3249 = vmax.xlane.f32.xlu0 %v3248
      %v3250 = vpop.xlane.xlu0 %3249
      %v3251 = vmax.f32 %v3180, %v3181
      %3252 = vmax.xlane.f32.xlu0 %v3251
      %v3253 = vpop.xlane.xlu0 %3252
      %v3254 = vmax.f32 %v3182, %v3183
      %3255 = vmax.xlane.f32.xlu0 %v3254
      %v3256 = vpop.xlane.xlu0 %3255
      %v3257 = vmax.f32 %v3184, %v3185
      %3258 = vmax.xlane.f32.xlu0 %v3257
      %v3259 = vpop.xlane.xlu0 %3258
      %v3260 = vmax.f32 %v3186, %v3187
      %3261 = vmax.xlane.f32.xlu0 %v3260
      %v3262 = vpop.xlane.xlu0 %3261
      %v3263 = vmax.f32 %v3188, %v3189
      %3264 = vmax.xlane.f32.xlu0 %v3263
      %v3265 = vpop.xlane.xlu0 %3264
      %v3266 = vmax.f32 %v3190, %v3191
      %3267 = vmax.xlane.f32.xlu0 %v3266
      %v3268 = vpop.xlane.xlu0 %3267
      %v3269 = vmax.f32 %v3192, %v3193
      %3270 = vmax.xlane.f32.xlu0 %v3269
      %v3271 = vpop.xlane.xlu0 %3270
      %v3272 = vmax.f32 %v3194, %v3195
      %3273 = vmax.xlane.f32.xlu0 %v3272
      %v3274 = vpop.xlane.xlu0 %3273
      %v3275 = vmax.f32 %v3196, %v3197
      %3276 = vmax.xlane.f32.xlu0 %v3275
      %v3277 = vpop.xlane.xlu0 %3276
      %v3278 = vmax.f32 %v3198, %v3199
      %3279 = vmax.xlane.f32.xlu0 %v3278
      %v3280 = vpop.xlane.xlu0 %3279
      %v3281 = vmax.f32 %v3200, %v3201
      %3282 = vmax.xlane.f32.xlu0 %v3281
      %v3283 = vpop.xlane.xlu0 %3282
      %v3284 = vmax.f32 %v3202, %v3203
      %3285 = vmax.xlane.f32.xlu0 %v3284
      %v3286 = vpop.xlane.xlu0 %3285
      %v3287 = vmax.f32 %v3204, %v3205
      %3288 = vmax.xlane.f32.xlu0 %v3287
      %v3289 = vpop.xlane.xlu0 %3288
      %v3290 = vmax.f32 %v3206, %v3207
      %3291 = vmax.xlane.f32.xlu0 %v3290
      %v3292 = vpop.xlane.xlu0 %3291
      %v3293 = vmax.f32 %v3208, %v3209
      %3294 = vmax.xlane.f32.xlu0 %v3293
      %v3295 = vpop.xlane.xlu0 %3294
      %v3296 = vmax.f32 %v3210, %v3211
      %3297 = vmax.xlane.f32.xlu0 %v3296
      %v3298 = vpop.xlane.xlu0 %3297
      %v3299 = vmax.f32 %v3212, %v3213
      %3300 = vmax.xlane.f32.xlu0 %v3299
      %v3301 = vpop.xlane.xlu0 %3300
      %v3302 = vmax.f32 %v3214, %v3215
      %3303 = vmax.xlane.f32.xlu0 %v3302
      %v3304 = vpop.xlane.xlu0 %3303
      %v3305 = vmax.f32 %v3216, %v3217
      %3306 = vmax.xlane.f32.xlu0 %v3305
      %v3307 = vpop.xlane.xlu0 %3306
      %v3308 = vmax.f32 %v3218, %v3219
      %3309 = vmax.xlane.f32.xlu0 %v3308
      %v3310 = vpop.xlane.xlu0 %3309
      %v3311 = vmax.f32 %v3220, %v3221
      %3312 = vmax.xlane.f32.xlu0 %v3311
      %v3313 = vpop.xlane.xlu0 %3312
      %v3314 = vmax.f32 %v3222, %v3223
      %3315 = vmax.xlane.f32.xlu0 %v3314
      %v3316 = vpop.xlane.xlu0 %3315
      %v3317 = vmax.f32 %v3224, %v3225
      %3318 = vmax.xlane.f32.xlu0 %v3317
      %v3319 = vpop.xlane.xlu0 %3318
      %v3320 = vmax.f32 %v3226, %v3227
      %3321 = vmax.xlane.f32.xlu0 %v3320
      %v3322 = vpop.xlane.xlu0 %3321
      %v3323 = vmax.f32 %v3228, %v3229
      %3324 = vmax.xlane.f32.xlu0 %v3323
      %v3325 = vpop.xlane.xlu0 %3324
      %v3326 = vmax.f32 %v3232, -5e+29
      %v3327 = vmax.f32 %v3235, -5e+29
      %v3328 = vmax.f32 %v3238, -5e+29
      %v3329 = vmax.f32 %v3241, -5e+29
      %v3330 = vmax.f32 %v3244, -5e+29
      %v3331 = vmax.f32 %v3247, -5e+29
      %v3332 = vmax.f32 %v3250, -5e+29
      %v3333 = vmax.f32 %v3253, -5e+29
      %v3334 = vmax.f32 %v3256, -5e+29
      %v3335 = vmax.f32 %v3259, -5e+29
      %v3336 = vmax.f32 %v3262, -5e+29
      %v3337 = vmax.f32 %v3265, -5e+29
      %v3338 = vmax.f32 %v3268, -5e+29
      %v3339 = vmax.f32 %v3271, -5e+29
      %v3340 = vmax.f32 %v3274, -5e+29
      %v3341 = vmax.f32 %v3277, -5e+29
      %v3342 = vmax.f32 %v3280, -5e+29
      %v3343 = vmax.f32 %v3283, -5e+29
      %v3344 = vmax.f32 %v3286, -5e+29
      %v3345 = vmax.f32 %v3289, -5e+29
      %v3346 = vmax.f32 %v3292, -5e+29
      %v3347 = vmax.f32 %v3295, -5e+29
      %v3348 = vmax.f32 %v3298, -5e+29
      %v3349 = vmax.f32 %v3301, -5e+29
      %v3350 = vmax.f32 %v3304, -5e+29
      %v3351 = vmax.f32 %v3307, -5e+29
      %v3352 = vmax.f32 %v3310, -5e+29
      %v3353 = vmax.f32 %v3313, -5e+29
      %v3354 = vmax.f32 %v3316, -5e+29
      %v3355 = vmax.f32 %v3319, -5e+29
      %v3356 = vmax.f32 %v3322, -5e+29
      %v3357 = vmax.f32 %v3325, -5e+29
      %v3358 = vsub.f32 %v3166, %v3326
      %v3359 = vsub.f32 %v3167, %v3326
      %v3360 = vsub.f32 %v3168, %v3327
      %v3361 = vsub.f32 %v3169, %v3327
      %v3362 = vsub.f32 %v3170, %v3328
      %v3363 = vsub.f32 %v3171, %v3328
      %v3364 = vsub.f32 %v3172, %v3329
      %v3365 = vsub.f32 %v3173, %v3329
      %v3366 = vsub.f32 %v3174, %v3330
      %v3367 = vsub.f32 %v3175, %v3330
      %v3368 = vsub.f32 %v3176, %v3331
      %v3369 = vsub.f32 %v3177, %v3331
      %v3370 = vsub.f32 %v3178, %v3332
      %v3371 = vsub.f32 %v3179, %v3332
      %v3372 = vsub.f32 %v3180, %v3333
      %v3373 = vsub.f32 %v3181, %v3333
      %v3374 = vsub.f32 %v3182, %v3334
      %v3375 = vsub.f32 %v3183, %v3334
      %v3376 = vsub.f32 %v3184, %v3335
      %v3377 = vsub.f32 %v3185, %v3335
      %v3378 = vsub.f32 %v3186, %v3336
      %v3379 = vsub.f32 %v3187, %v3336
      %v3380 = vsub.f32 %v3188, %v3337
      %v3381 = vsub.f32 %v3189, %v3337
      %v3382 = vsub.f32 %v3190, %v3338
      %v3383 = vsub.f32 %v3191, %v3338
      %v3384 = vsub.f32 %v3192, %v3339
      %v3385 = vsub.f32 %v3193, %v3339
      %v3386 = vsub.f32 %v3194, %v3340
      %v3387 = vsub.f32 %v3195, %v3340
      %v3388 = vsub.f32 %v3196, %v3341
      %v3389 = vsub.f32 %v3197, %v3341
      %v3390 = vsub.f32 %v3198, %v3342
      %v3391 = vsub.f32 %v3199, %v3342
      %v3392 = vsub.f32 %v3200, %v3343
      %v3393 = vsub.f32 %v3201, %v3343
      %v3394 = vsub.f32 %v3202, %v3344
      %v3395 = vsub.f32 %v3203, %v3344
      %v3396 = vsub.f32 %v3204, %v3345
      %v3397 = vsub.f32 %v3205, %v3345
      %v3398 = vsub.f32 %v3206, %v3346
      %v3399 = vsub.f32 %v3207, %v3346
      %v3400 = vsub.f32 %v3208, %v3347
      %v3401 = vsub.f32 %v3209, %v3347
      %v3402 = vsub.f32 %v3210, %v3348
      %v3403 = vsub.f32 %v3211, %v3348
      %v3404 = vsub.f32 %v3212, %v3349
      %v3405 = vsub.f32 %v3213, %v3349
      %v3406 = vsub.f32 %v3214, %v3350
      %v3407 = vsub.f32 %v3215, %v3350
      %v3408 = vsub.f32 %v3216, %v3351
      %v3409 = vsub.f32 %v3217, %v3351
      %v3410 = vsub.f32 %v3218, %v3352
      %v3411 = vsub.f32 %v3219, %v3352
      %v3412 = vsub.f32 %v3220, %v3353
      %v3413 = vsub.f32 %v3221, %v3353
      %v3414 = vsub.f32 %v3222, %v3354
      %v3415 = vsub.f32 %v3223, %v3354
      %v3416 = vsub.f32 %v3224, %v3355
      %v3417 = vsub.f32 %v3225, %v3355
      %v3418 = vsub.f32 %v3226, %v3356
      %v3419 = vsub.f32 %v3227, %v3356
      %v3420 = vsub.f32 %v3228, %v3357
      %v3421 = vsub.f32 %v3229, %v3357
      %v3422 = vmul.f32 %v3358, 1.442695
      %v3423 = vpow.pop %v3422
      %v3424 = vmul.f32 %v3359, 1.442695
      %v3425 = vpow.pop %v3424
      %v3426 = vmul.f32 %v3360, 1.442695
      %v3427 = vpow.pop %v3426
      %v3428 = vmul.f32 %v3361, 1.442695
      %v3429 = vpow.pop %v3428
      %v3430 = vmul.f32 %v3362, 1.442695
      %v3431 = vpow.pop %v3430
      %v3432 = vmul.f32 %v3363, 1.442695
      %v3433 = vpow.pop %v3432
      %v3434 = vmul.f32 %v3364, 1.442695
      %v3435 = vpow.pop %v3434
      %v3436 = vmul.f32 %v3365, 1.442695
      %v3437 = vpow.pop %v3436
      %v3438 = vmul.f32 %v3366, 1.442695
      %v3439 = vpow.pop %v3438
      %v3440 = vmul.f32 %v3367, 1.442695
      %v3441 = vpow.pop %v3440
      %v3442 = vmul.f32 %v3368, 1.442695
      %v3443 = vpow.pop %v3442
      %v3444 = vmul.f32 %v3369, 1.442695
      %v3445 = vpow.pop %v3444
      %v3446 = vmul.f32 %v3370, 1.442695
      %v3447 = vpow.pop %v3446
      %v3448 = vmul.f32 %v3371, 1.442695
      %v3449 = vpow.pop %v3448
      %v3450 = vmul.f32 %v3372, 1.442695
      %v3451 = vpow.pop %v3450
      %v3452 = vmul.f32 %v3373, 1.442695
      %v3453 = vpow.pop %v3452
      %v3454 = vmul.f32 %v3374, 1.442695
      %v3455 = vpow.pop %v3454
      %v3456 = vmul.f32 %v3375, 1.442695
      %v3457 = vpow.pop %v3456
      %v3458 = vmul.f32 %v3376, 1.442695
      %v3459 = vpow.pop %v3458
      %v3460 = vmul.f32 %v3377, 1.442695
      %v3461 = vpow.pop %v3460
      %v3462 = vmul.f32 %v3378, 1.442695
      %v3463 = vpow.pop %v3462
      %v3464 = vmul.f32 %v3379, 1.442695
      %v3465 = vpow.pop %v3464
      %v3466 = vmul.f32 %v3380, 1.442695
      %v3467 = vpow.pop %v3466
      %v3468 = vmul.f32 %v3381, 1.442695
      %v3469 = vpow.pop %v3468
      %v3470 = vmul.f32 %v3382, 1.442695
      %v3471 = vpow.pop %v3470
      %v3472 = vmul.f32 %v3383, 1.442695
      %v3473 = vpow.pop %v3472
      %v3474 = vmul.f32 %v3384, 1.442695
      %v3475 = vpow.pop %v3474
      %v3476 = vmul.f32 %v3385, 1.442695
      %v3477 = vpow.pop %v3476
      %v3478 = vmul.f32 %v3386, 1.442695
      %v3479 = vpow.pop %v3478
      %v3480 = vmul.f32 %v3387, 1.442695
      %v3481 = vpow.pop %v3480
      %v3482 = vmul.f32 %v3388, 1.442695
      %v3483 = vpow.pop %v3482
      %v3484 = vmul.f32 %v3389, 1.442695
      %v3485 = vpow.pop %v3484
      %v3486 = vmul.f32 %v3390, 1.442695
      %v3487 = vpow.pop %v3486
      %v3488 = vmul.f32 %v3391, 1.442695
      %v3489 = vpow.pop %v3488
      %v3490 = vmul.f32 %v3392, 1.442695
      %v3491 = vpow.pop %v3490
      %v3492 = vmul.f32 %v3393, 1.442695
      %v3493 = vpow.pop %v3492
      %v3494 = vmul.f32 %v3394, 1.442695
      %v3495 = vpow.pop %v3494
      %v3496 = vmul.f32 %v3395, 1.442695
      %v3497 = vpow.pop %v3496
      %v3498 = vmul.f32 %v3396, 1.442695
      %v3499 = vpow.pop %v3498
      %v3500 = vmul.f32 %v3397, 1.442695
      %v3501 = vpow.pop %v3500
      %v3502 = vmul.f32 %v3398, 1.442695
      %v3503 = vpow.pop %v3502
      %v3504 = vmul.f32 %v3399, 1.442695
      %v3505 = vpow.pop %v3504
      %v3506 = vmul.f32 %v3400, 1.442695
      %v3507 = vpow.pop %v3506
      %v3508 = vmul.f32 %v3401, 1.442695
      %v3509 = vpow.pop %v3508
      %v3510 = vmul.f32 %v3402, 1.442695
      %v3511 = vpow.pop %v3510
      %v3512 = vmul.f32 %v3403, 1.442695
      %v3513 = vpow.pop %v3512
      %v3514 = vmul.f32 %v3404, 1.442695
      %v3515 = vpow.pop %v3514
      %v3516 = vmul.f32 %v3405, 1.442695
      %v3517 = vpow.pop %v3516
      %v3518 = vmul.f32 %v3406, 1.442695
      %v3519 = vpow.pop %v3518
      %v3520 = vmul.f32 %v3407, 1.442695
      %v3521 = vpow.pop %v3520
      %v3522 = vmul.f32 %v3408, 1.442695
      %v3523 = vpow.pop %v3522
      %v3524 = vmul.f32 %v3409, 1.442695
      %v3525 = vpow.pop %v3524
      %v3526 = vmul.f32 %v3410, 1.442695
      %v3527 = vpow.pop %v3526
      %v3528 = vmul.f32 %v3411, 1.442695
      %v3529 = vpow.pop %v3528
      %v3530 = vmul.f32 %v3412, 1.442695
      %v3531 = vpow.pop %v3530
      %v3532 = vmul.f32 %v3413, 1.442695
      %v3533 = vpow.pop %v3532
      %v3534 = vmul.f32 %v3414, 1.442695
      %v3535 = vpow.pop %v3534
      %v3536 = vmul.f32 %v3415, 1.442695
      %v3537 = vpow.pop %v3536
      %v3538 = vmul.f32 %v3416, 1.442695
      %v3539 = vpow.pop %v3538
      %v3540 = vmul.f32 %v3417, 1.442695
      %v3541 = vpow.pop %v3540
      %v3542 = vmul.f32 %v3418, 1.442695
      %v3543 = vpow.pop %v3542
      %v3544 = vmul.f32 %v3419, 1.442695
      %v3545 = vpow.pop %v3544
      %v3546 = vmul.f32 %v3420, 1.442695
      %v3547 = vpow.pop %v3546
      %v3548 = vmul.f32 %v3421, 1.442695
      %v3549 = vpow.pop %v3548
      %v3550 = vadd.f32 %v3423, %v3425
      %3551 = vadd.xlane.f32.xlu0 %v3550
      %v3552 = vpop.xlane.xlu0 %3551
      %v3553 = vadd.f32 %v3427, %v3429
      %3554 = vadd.xlane.f32.xlu0 %v3553
      %v3555 = vpop.xlane.xlu0 %3554
      %v3556 = vadd.f32 %v3431, %v3433
      %3557 = vadd.xlane.f32.xlu0 %v3556
      %v3558 = vpop.xlane.xlu0 %3557
      %v3559 = vadd.f32 %v3435, %v3437
      %3560 = vadd.xlane.f32.xlu0 %v3559
      %v3561 = vpop.xlane.xlu0 %3560
      %v3562 = vadd.f32 %v3439, %v3441
      %3563 = vadd.xlane.f32.xlu0 %v3562
      %v3564 = vpop.xlane.xlu0 %3563
      %v3565 = vadd.f32 %v3443, %v3445
      %3566 = vadd.xlane.f32.xlu0 %v3565
      %v3567 = vpop.xlane.xlu0 %3566
      %v3568 = vadd.f32 %v3447, %v3449
      %3569 = vadd.xlane.f32.xlu0 %v3568
      %v3570 = vpop.xlane.xlu0 %3569
      %v3571 = vadd.f32 %v3451, %v3453
      %3572 = vadd.xlane.f32.xlu0 %v3571
      %v3573 = vpop.xlane.xlu0 %3572
      %v3574 = vadd.f32 %v3455, %v3457
      %3575 = vadd.xlane.f32.xlu0 %v3574
      %v3576 = vpop.xlane.xlu0 %3575
      %v3577 = vadd.f32 %v3459, %v3461
      %3578 = vadd.xlane.f32.xlu0 %v3577
      %v3579 = vpop.xlane.xlu0 %3578
      %v3580 = vadd.f32 %v3463, %v3465
      %3581 = vadd.xlane.f32.xlu0 %v3580
      %v3582 = vpop.xlane.xlu0 %3581
      %v3583 = vadd.f32 %v3467, %v3469
      %3584 = vadd.xlane.f32.xlu0 %v3583
      %v3585 = vpop.xlane.xlu0 %3584
      %v3586 = vadd.f32 %v3471, %v3473
      %3587 = vadd.xlane.f32.xlu0 %v3586
      %v3588 = vpop.xlane.xlu0 %3587
      %v3589 = vadd.f32 %v3475, %v3477
      %3590 = vadd.xlane.f32.xlu0 %v3589
      %v3591 = vpop.xlane.xlu0 %3590
      %v3592 = vadd.f32 %v3479, %v3481
      %3593 = vadd.xlane.f32.xlu0 %v3592
      %v3594 = vpop.xlane.xlu0 %3593
      %v3595 = vadd.f32 %v3483, %v3485
      %3596 = vadd.xlane.f32.xlu0 %v3595
      %v3597 = vpop.xlane.xlu0 %3596
      %v3598 = vadd.f32 %v3487, %v3489
      %3599 = vadd.xlane.f32.xlu0 %v3598
      %v3600 = vpop.xlane.xlu0 %3599
      %v3601 = vadd.f32 %v3491, %v3493
      %3602 = vadd.xlane.f32.xlu0 %v3601
      %v3603 = vpop.xlane.xlu0 %3602
      %v3604 = vadd.f32 %v3495, %v3497
      %3605 = vadd.xlane.f32.xlu0 %v3604
      %v3606 = vpop.xlane.xlu0 %3605
      %v3607 = vadd.f32 %v3499, %v3501
      %3608 = vadd.xlane.f32.xlu0 %v3607
      %v3609 = vpop.xlane.xlu0 %3608
      %v3610 = vadd.f32 %v3503, %v3505
      %3611 = vadd.xlane.f32.xlu0 %v3610
      %v3612 = vpop.xlane.xlu0 %3611
      %v3613 = vadd.f32 %v3507, %v3509
      %3614 = vadd.xlane.f32.xlu0 %v3613
      %v3615 = vpop.xlane.xlu0 %3614
      %v3616 = vadd.f32 %v3511, %v3513
      %3617 = vadd.xlane.f32.xlu0 %v3616
      %v3618 = vpop.xlane.xlu0 %3617
      %v3619 = vadd.f32 %v3515, %v3517
      %3620 = vadd.xlane.f32.xlu0 %v3619
      %v3621 = vpop.xlane.xlu0 %3620
      %v3622 = vadd.f32 %v3519, %v3521
      %3623 = vadd.xlane.f32.xlu0 %v3622
      %v3624 = vpop.xlane.xlu0 %3623
      %v3625 = vadd.f32 %v3523, %v3525
      %3626 = vadd.xlane.f32.xlu0 %v3625
      %v3627 = vpop.xlane.xlu0 %3626
      %v3628 = vadd.f32 %v3527, %v3529
      %3629 = vadd.xlane.f32.xlu0 %v3628
      %v3630 = vpop.xlane.xlu0 %3629
      %v3631 = vadd.f32 %v3531, %v3533
      %3632 = vadd.xlane.f32.xlu0 %v3631
      %v3633 = vpop.xlane.xlu0 %3632
      %v3634 = vadd.f32 %v3535, %v3537
      %3635 = vadd.xlane.f32.xlu0 %v3634
      %v3636 = vpop.xlane.xlu0 %3635
      %v3637 = vadd.f32 %v3539, %v3541
      %3638 = vadd.xlane.f32.xlu0 %v3637
      %v3639 = vpop.xlane.xlu0 %3638
      %v3640 = vadd.f32 %v3543, %v3545
      %3641 = vadd.xlane.f32.xlu0 %v3640
      %v3642 = vpop.xlane.xlu0 %3641
      %v3643 = vadd.f32 %v3547, %v3549
      %3644 = vadd.xlane.f32.xlu0 %v3643
      %v3645 = vpop.xlane.xlu0 %3644
      %v3646 = vmax.f32 %v3552, 1e-20
      %v3647 = vmax.f32 %v3555, 1e-20
      %v3648 = vmax.f32 %v3558, 1e-20
      %v3649 = vmax.f32 %v3561, 1e-20
      %v3650 = vmax.f32 %v3564, 1e-20
      %v3651 = vmax.f32 %v3567, 1e-20
      %v3652 = vmax.f32 %v3570, 1e-20
      %v3653 = vmax.f32 %v3573, 1e-20
      %v3654 = vmax.f32 %v3576, 1e-20
      %v3655 = vmax.f32 %v3579, 1e-20
      %v3656 = vmax.f32 %v3582, 1e-20
      %v3657 = vmax.f32 %v3585, 1e-20
      %v3658 = vmax.f32 %v3588, 1e-20
      %v3659 = vmax.f32 %v3591, 1e-20
      %v3660 = vmax.f32 %v3594, 1e-20
      %v3661 = vmax.f32 %v3597, 1e-20
      %v3662 = vmax.f32 %v3600, 1e-20
      %v3663 = vmax.f32 %v3603, 1e-20
      %v3664 = vmax.f32 %v3606, 1e-20
      %v3665 = vmax.f32 %v3609, 1e-20
      %v3666 = vmax.f32 %v3612, 1e-20
      %v3667 = vmax.f32 %v3615, 1e-20
      %v3668 = vmax.f32 %v3618, 1e-20
      %v3669 = vmax.f32 %v3621, 1e-20
      %v3670 = vmax.f32 %v3624, 1e-20
      %v3671 = vmax.f32 %v3627, 1e-20
      %v3672 = vmax.f32 %v3630, 1e-20
      %v3673 = vmax.f32 %v3633, 1e-20
      %v3674 = vmax.f32 %v3636, 1e-20
      %v3675 = vmax.f32 %v3639, 1e-20
      %v3676 = vmax.f32 %v3642, 1e-20
      %v3677 = vmax.f32 %v3645, 1e-20
      %v3678 = vrcp.pop %v3646
      %v3679 = vrcp.pop %v3647
      %v3680 = vrcp.pop %v3648
      %v3681 = vrcp.pop %v3649
      %v3682 = vrcp.pop %v3650
      %v3683 = vrcp.pop %v3651
      %v3684 = vrcp.pop %v3652
      %v3685 = vrcp.pop %v3653
      %v3686 = vrcp.pop %v3654
      %v3687 = vrcp.pop %v3655
      %v3688 = vrcp.pop %v3656
      %v3689 = vrcp.pop %v3657
      %v3690 = vrcp.pop %v3658
      %v3691 = vrcp.pop %v3659
      %v3692 = vrcp.pop %v3660
      %v3693 = vrcp.pop %v3661
      %v3694 = vrcp.pop %v3662
      %v3695 = vrcp.pop %v3663
      %v3696 = vrcp.pop %v3664
      %v3697 = vrcp.pop %v3665
      %v3698 = vrcp.pop %v3666
      %v3699 = vrcp.pop %v3667
      %v3700 = vrcp.pop %v3668
      %v3701 = vrcp.pop %v3669
      %v3702 = vrcp.pop %v3670
      %v3703 = vrcp.pop %v3671
      %v3704 = vrcp.pop %v3672
      %v3705 = vrcp.pop %v3673
      %v3706 = vrcp.pop %v3674
      %v3707 = vrcp.pop %v3675
      %v3708 = vrcp.pop %v3676
      %v3709 = vrcp.pop %v3677
      %v3710 = vpack.c.bf16 %v3425, %v3423
      %v3711 = vpack.c.bf16 %v3429, %v3427
      %v3712 = vpack.c.bf16 %v3433, %v3431
      %v3713 = vpack.c.bf16 %v3437, %v3435
      %v3714 = vpack.c.bf16 %v3441, %v3439
      %v3715 = vpack.c.bf16 %v3445, %v3443
      %v3716 = vpack.c.bf16 %v3449, %v3447
      %v3717 = vpack.c.bf16 %v3453, %v3451
      %v3718 = vpack.c.bf16 %v3457, %v3455
      %v3719 = vpack.c.bf16 %v3461, %v3459
      %v3720 = vpack.c.bf16 %v3465, %v3463
      %v3721 = vpack.c.bf16 %v3469, %v3467
      %v3722 = vpack.c.bf16 %v3473, %v3471
      %v3723 = vpack.c.bf16 %v3477, %v3475
      %v3724 = vpack.c.bf16 %v3481, %v3479
      %v3725 = vpack.c.bf16 %v3485, %v3483
      %v3726 = vpack.c.bf16 %v3489, %v3487
      %v3727 = vpack.c.bf16 %v3493, %v3491
      %v3728 = vpack.c.bf16 %v3497, %v3495
      %v3729 = vpack.c.bf16 %v3501, %v3499
      %v3730 = vpack.c.bf16 %v3505, %v3503
      %v3731 = vpack.c.bf16 %v3509, %v3507
      %v3732 = vpack.c.bf16 %v3513, %v3511
      %v3733 = vpack.c.bf16 %v3517, %v3515
      %v3734 = vpack.c.bf16 %v3521, %v3519
      %v3735 = vpack.c.bf16 %v3525, %v3523
      %v3736 = vpack.c.bf16 %v3529, %v3527
      %v3737 = vpack.c.bf16 %v3533, %v3531
      %v3738 = vpack.c.bf16 %v3537, %v3535
      %v3739 = vpack.c.bf16 %v3541, %v3539
      %v3740 = vpack.c.bf16 %v3545, %v3543
      %v3741 = vpack.c.bf16 %v3549, %v3547
      %v3742 = vpack.c.bf16 %v2600, %v2600
      %v3743 = vpack.c.bf16 %v2602, %v2602
      %v3744 = vpack.c.bf16 %v2605, %v2605
      %v3745 = vpack.c.bf16 %v2607, %v2607
      %v3746 = vpack.c.bf16 %v2610, %v2610
      %v3747 = vpack.c.bf16 %v2612, %v2612
      %v3748 = vpack.c.bf16 %v2615, %v2615
      %v3749 = vpack.c.bf16 %v2617, %v2617
      %v3750 = vpack.c.bf16 %v2620, %v2620
      %v3751 = vpack.c.bf16 %v2622, %v2622
      %v3752 = vpack.c.bf16 %v2625, %v2625
      %v3753 = vpack.c.bf16 %v2627, %v2627
      %v3754 = vpack.c.bf16 %v2630, %v2630
      %v3755 = vpack.c.bf16 %v2632, %v2632
      %v3756 = vpack.c.bf16 %v2635, %v2635
      %v3757 = vpack.c.bf16 %v2637, %v2637
      %v3758 = vpack.c.bf16 %v2640, %v2640
      %v3759 = vpack.c.bf16 %v2642, %v2642
      %v3760 = vpack.c.bf16 %v2645, %v2645
      %v3761 = vpack.c.bf16 %v2647, %v2647
      %v3762 = vpack.c.bf16 %v2650, %v2650
      %v3763 = vpack.c.bf16 %v2652, %v2652
      %v3764 = vpack.c.bf16 %v2655, %v2655
      %v3765 = vpack.c.bf16 %v2657, %v2657
      %v3766 = vpack.c.bf16 %v2660, %v2660
      %v3767 = vpack.c.bf16 %v2662, %v2662
      %v3768 = vpack.c.bf16 %v2665, %v2665
      %v3769 = vpack.c.bf16 %v2667, %v2667
      %v3770 = vpack.c.bf16 %v2670, %v2670
      %v3771 = vpack.c.bf16 %v2672, %v2672
      %v3772 = vpack.c.bf16 %v2675, %v2675
      %v3773 = vpack.c.bf16 %v2677, %v2677
      %v3790 = vunpack.c.l.b16 %v3710
      %v3791 = vunpack.c.h.b16 %v3710
      %v3792 = vunpack.c.l.b16 %v3711
      %v3793 = vunpack.c.h.b16 %v3711
      %v3794 = vunpack.c.l.b16 %v3712
      %v3795 = vunpack.c.h.b16 %v3712
      %v3796 = vunpack.c.l.b16 %v3713
      %v3797 = vunpack.c.h.b16 %v3713
      %v3798 = vunpack.c.l.b16 %v3714
      %v3799 = vunpack.c.h.b16 %v3714
      %v3800 = vunpack.c.l.b16 %v3715
      %v3801 = vunpack.c.h.b16 %v3715
      %v3802 = vunpack.c.l.b16 %v3716
      %v3803 = vunpack.c.h.b16 %v3716
      %v3804 = vunpack.c.l.b16 %v3717
      %v3805 = vunpack.c.h.b16 %v3717
      %v3806 = vunpack.c.l.b16 %v3718
      %v3807 = vunpack.c.h.b16 %v3718
      %v3808 = vunpack.c.l.b16 %v3719
      %v3809 = vunpack.c.h.b16 %v3719
      %v3810 = vunpack.c.l.b16 %v3720
      %v3811 = vunpack.c.h.b16 %v3720
      %v3812 = vunpack.c.l.b16 %v3721
      %v3813 = vunpack.c.h.b16 %v3721
      %v3814 = vunpack.c.l.b16 %v3722
      %v3815 = vunpack.c.h.b16 %v3722
      %v3816 = vunpack.c.l.b16 %v3723
      %v3817 = vunpack.c.h.b16 %v3723
      %v3818 = vunpack.c.l.b16 %v3724
      %v3819 = vunpack.c.h.b16 %v3724
      %v3820 = vunpack.c.l.b16 %v3725
      %v3821 = vunpack.c.h.b16 %v3725
      %v3822 = vpack.c.b16 %v3792, %v3790
      %v3823 = vpack.c.b16 %v3793, %v3791
      %v3824 = vpack.c.b16 %v3796, %v3794
      %v3825 = vpack.c.b16 %v3797, %v3795
      %v3826 = vpack.c.b16 %v3800, %v3798
      %v3827 = vpack.c.b16 %v3801, %v3799
      %v3828 = vpack.c.b16 %v3804, %v3802
      %v3829 = vpack.c.b16 %v3805, %v3803
      %v3830 = vpack.c.b16 %v3808, %v3806
      %v3831 = vpack.c.b16 %v3809, %v3807
      %v3832 = vpack.c.b16 %v3812, %v3810
      %v3833 = vpack.c.b16 %v3813, %v3811
      %v3834 = vpack.c.b16 %v3816, %v3814
      %v3835 = vpack.c.b16 %v3817, %v3815
      %v3836 = vpack.c.b16 %v3820, %v3818
      %v3837 = vpack.c.b16 %v3821, %v3819
      %v3886 = vunpack.c.l.b16 %v3742
      %v3887 = vunpack.c.l.b16 %v3743
      %v3888 = vunpack.c.l.b16 %v3744
      %v3889 = vunpack.c.l.b16 %v3745
      %v3890 = vunpack.c.l.b16 %v3746
      %v3891 = vunpack.c.l.b16 %v3747
      %v3892 = vunpack.c.l.b16 %v3748
      %v3893 = vunpack.c.l.b16 %v3749
      %v3894 = vunpack.c.l.b16 %v3750
      %v3895 = vunpack.c.l.b16 %v3751
      %v3896 = vunpack.c.l.b16 %v3752
      %v3897 = vunpack.c.l.b16 %v3753
      %v3898 = vunpack.c.l.b16 %v3754
      %v3899 = vunpack.c.l.b16 %v3755
      %v3900 = vunpack.c.l.b16 %v3756
      %v3901 = vunpack.c.l.b16 %v3757
      %v3902 = vunpack.c.l.b16 %v3758
      %v3903 = vunpack.c.l.b16 %v3759
      %v3904 = vunpack.c.l.b16 %v3760
      %v3905 = vunpack.c.l.b16 %v3761
      %v3906 = vunpack.c.l.b16 %v3762
      %v3907 = vunpack.c.l.b16 %v3763
      %v3908 = vunpack.c.l.b16 %v3764
      %v3909 = vunpack.c.l.b16 %v3765
      %v3910 = vunpack.c.l.b16 %v3766
      %v3911 = vunpack.c.l.b16 %v3767
      %v3912 = vunpack.c.l.b16 %v3768
      %v3913 = vunpack.c.l.b16 %v3769
      %v3914 = vunpack.c.l.b16 %v3770
      %v3915 = vunpack.c.l.b16 %v3771
      %v3916 = vunpack.c.l.b16 %v3772
      %v3917 = vunpack.c.l.b16 %v3773
      %v3918 = vpack.c.b16 %v3887, %v3886
      %v3919 = vpack.c.b16 %v3889, %v3888
      %v3920 = vpack.c.b16 %v3891, %v3890
      %v3921 = vpack.c.b16 %v3893, %v3892
      %v3922 = vpack.c.b16 %v3895, %v3894
      %v3923 = vpack.c.b16 %v3897, %v3896
      %v3924 = vpack.c.b16 %v3899, %v3898
      %v3925 = vpack.c.b16 %v3901, %v3900
      %v3926 = vpack.c.b16 %v3903, %v3902
      %v3927 = vpack.c.b16 %v3905, %v3904
      %v3928 = vpack.c.b16 %v3907, %v3906
      %v3929 = vpack.c.b16 %v3909, %v3908
      %v3930 = vpack.c.b16 %v3911, %v3910
      %v3931 = vpack.c.b16 %v3913, %v3912
      %v3932 = vpack.c.b16 %v3915, %v3914
      %v3933 = vpack.c.b16 %v3917, %v3916
      %3950 = vmatpush.bf16.msra.mxu0 %v3925
      %3951 = vmatpush.bf16.msra.mxu0 %v3924
      %3952 = vmatpush.bf16.msra.mxu0 %v3923
      %3953 = vmatpush.bf16.msra.mxu0 %v3922
      %3954 = vmatpush.bf16.msra.mxu0 %v3921
      %3955 = vmatpush.bf16.msra.mxu0 %v3920
      %3956 = vmatpush.bf16.msra.mxu0 %v3919
      %3957 = vmatpush.bf16.msra.mxu0 %v3918
      %3958 = vmatmul.bf16.gmra.mxu0 %v3822
      %v3959 = vpop.f32.mrf.mxu0
      %v3960 = vadd.f32 0.0, %v3959
      %v3961 = vpop.f32.mrf.mxu0
      %v3962 = vadd.f32 0.0, %v3961
      %3963 = vmatmul.bf16.gmra.mxu0 %v3824
      %v3964 = vpop.f32.mrf.mxu0
      %v3965 = vadd.f32 0.0, %v3964
      %v3966 = vpop.f32.mrf.mxu0
      %v3967 = vadd.f32 0.0, %v3966
      %3968 = vmatmul.bf16.gmra.mxu0 %v3826
      %v3969 = vpop.f32.mrf.mxu0
      %v3970 = vadd.f32 0.0, %v3969
      %v3971 = vpop.f32.mrf.mxu0
      %v3972 = vadd.f32 0.0, %v3971
      %3973 = vmatmul.bf16.gmra.mxu0 %v3828
      %v3974 = vpop.f32.mrf.mxu0
      %v3975 = vadd.f32 0.0, %v3974
      %v3976 = vpop.f32.mrf.mxu0
      %v3977 = vadd.f32 0.0, %v3976
      %3978 = vmatmul.bf16.gmra.mxu0 %v3830
      %v3979 = vpop.f32.mrf.mxu0
      %v3980 = vadd.f32 0.0, %v3979
      %v3981 = vpop.f32.mrf.mxu0
      %v3982 = vadd.f32 0.0, %v3981
      %3983 = vmatmul.bf16.gmra.mxu0 %v3832
      %v3984 = vpop.f32.mrf.mxu0
      %v3985 = vadd.f32 0.0, %v3984
      %v3986 = vpop.f32.mrf.mxu0
      %v3987 = vadd.f32 0.0, %v3986
      %3988 = vmatmul.bf16.gmra.mxu0 %v3834
      %v3989 = vpop.f32.mrf.mxu0
      %v3990 = vadd.f32 0.0, %v3989
      %v3991 = vpop.f32.mrf.mxu0
      %v3992 = vadd.f32 0.0, %v3991
      %3993 = vmatmul.bf16.gmra.mxu0 %v3836
      %v3994 = vpop.f32.mrf.mxu0
      %v3995 = vadd.f32 0.0, %v3994
      %v3996 = vpop.f32.mrf.mxu0
      %v3997 = vadd.f32 0.0, %v3996
      %3998 = vdwg.mxu0
      %3999 = vmatpush.bf16.msra.mxu0 %v3933
      %4000 = vmatpush.bf16.msra.mxu0 %v3932
      %4001 = vmatpush.bf16.msra.mxu0 %v3931
      %4002 = vmatpush.bf16.msra.mxu0 %v3930
      %4003 = vmatpush.bf16.msra.mxu0 %v3929
      %4004 = vmatpush.bf16.msra.mxu0 %v3928
      %4005 = vmatpush.bf16.msra.mxu0 %v3927
      %4006 = vmatpush.bf16.msra.mxu0 %v3926
      %4007 = vmatmul.bf16.gmra.mxu0 %v3823
      %v4008 = vpop.f32.mrf.mxu0
      %v4009 = vadd.f32 %v3960, %v4008
      %v4010 = vpop.f32.mrf.mxu0
      %v4011 = vadd.f32 %v3962, %v4010
      %4012 = vmatmul.bf16.gmra.mxu0 %v3825
      %v4013 = vpop.f32.mrf.mxu0
      %v4014 = vadd.f32 %v3965, %v4013
      %v4015 = vpop.f32.mrf.mxu0
      %v4016 = vadd.f32 %v3967, %v4015
      %4017 = vmatmul.bf16.gmra.mxu0 %v3827
      %v4018 = vpop.f32.mrf.mxu0
      %v4019 = vadd.f32 %v3970, %v4018
      %v4020 = vpop.f32.mrf.mxu0
      %v4021 = vadd.f32 %v3972, %v4020
      %4022 = vmatmul.bf16.gmra.mxu0 %v3829
      %v4023 = vpop.f32.mrf.mxu0
      %v4024 = vadd.f32 %v3975, %v4023
      %v4025 = vpop.f32.mrf.mxu0
      %v4026 = vadd.f32 %v3977, %v4025
      %4027 = vmatmul.bf16.gmra.mxu0 %v3831
      %v4028 = vpop.f32.mrf.mxu0
      %v4029 = vadd.f32 %v3980, %v4028
      %v4030 = vpop.f32.mrf.mxu0
      %v4031 = vadd.f32 %v3982, %v4030
      %4032 = vmatmul.bf16.gmra.mxu0 %v3833
      %v4033 = vpop.f32.mrf.mxu0
      %v4034 = vadd.f32 %v3985, %v4033
      %v4035 = vpop.f32.mrf.mxu0
      %v4036 = vadd.f32 %v3987, %v4035
      %4037 = vmatmul.bf16.gmra.mxu0 %v3835
      %v4038 = vpop.f32.mrf.mxu0
      %v4039 = vadd.f32 %v3990, %v4038
      %v4040 = vpop.f32.mrf.mxu0
      %v4041 = vadd.f32 %v3992, %v4040
      %4042 = vmatmul.bf16.gmra.mxu0 %v3837
      %v4043 = vpop.f32.mrf.mxu0
      %v4044 = vadd.f32 %v3995, %v4043
      %v4045 = vpop.f32.mrf.mxu0
      %v4046 = vadd.f32 %v3997, %v4045
      %4047 = vdwg.mxu0
      %v4048 = vmul.f32 %v4009, %v3678
      %v4049 = vmul.f32 %v4011, %v3679
      %v4050 = vmul.f32 %v4014, %v3680
      %v4051 = vmul.f32 %v4016, %v3681
      %v4052 = vmul.f32 %v4019, %v3682
      %v4053 = vmul.f32 %v4021, %v3683
      %v4054 = vmul.f32 %v4024, %v3684
      %v4055 = vmul.f32 %v4026, %v3685
      %v4056 = vmul.f32 %v4029, %v3686
      %v4057 = vmul.f32 %v4031, %v3687
      %v4058 = vmul.f32 %v4034, %v3688
      %v4059 = vmul.f32 %v4036, %v3689
      %v4060 = vmul.f32 %v4039, %v3690
      %v4061 = vmul.f32 %v4041, %v3691
      %v4062 = vmul.f32 %v4044, %v3692
      %v4063 = vmul.f32 %v4046, %v3693
      %v4080 = vunpack.c.l.b16 %v3726
      %v4081 = vunpack.c.h.b16 %v3726
      %v4082 = vunpack.c.l.b16 %v3727
      %v4083 = vunpack.c.h.b16 %v3727
      %v4084 = vunpack.c.l.b16 %v3728
      %v4085 = vunpack.c.h.b16 %v3728
      %v4086 = vunpack.c.l.b16 %v3729
      %v4087 = vunpack.c.h.b16 %v3729
      %v4088 = vunpack.c.l.b16 %v3730
      %v4089 = vunpack.c.h.b16 %v3730
      %v4090 = vunpack.c.l.b16 %v3731
      %v4091 = vunpack.c.h.b16 %v3731
      %v4092 = vunpack.c.l.b16 %v3732
      %v4093 = vunpack.c.h.b16 %v3732
      %v4094 = vunpack.c.l.b16 %v3733
      %v4095 = vunpack.c.h.b16 %v3733
      %v4096 = vunpack.c.l.b16 %v3734
      %v4097 = vunpack.c.h.b16 %v3734
      %v4098 = vunpack.c.l.b16 %v3735
      %v4099 = vunpack.c.h.b16 %v3735
      %v4100 = vunpack.c.l.b16 %v3736
      %v4101 = vunpack.c.h.b16 %v3736
      %v4102 = vunpack.c.l.b16 %v3737
      %v4103 = vunpack.c.h.b16 %v3737
      %v4104 = vunpack.c.l.b16 %v3738
      %v4105 = vunpack.c.h.b16 %v3738
      %v4106 = vunpack.c.l.b16 %v3739
      %v4107 = vunpack.c.h.b16 %v3739
      %v4108 = vunpack.c.l.b16 %v3740
      %v4109 = vunpack.c.h.b16 %v3740
      %v4110 = vunpack.c.l.b16 %v3741
      %v4111 = vunpack.c.h.b16 %v3741
      %v4112 = vpack.c.b16 %v4082, %v4080
      %v4113 = vpack.c.b16 %v4083, %v4081
      %v4114 = vpack.c.b16 %v4086, %v4084
      %v4115 = vpack.c.b16 %v4087, %v4085
      %v4116 = vpack.c.b16 %v4090, %v4088
      %v4117 = vpack.c.b16 %v4091, %v4089
      %v4118 = vpack.c.b16 %v4094, %v4092
      %v4119 = vpack.c.b16 %v4095, %v4093
      %v4120 = vpack.c.b16 %v4098, %v4096
      %v4121 = vpack.c.b16 %v4099, %v4097
      %v4122 = vpack.c.b16 %v4102, %v4100
      %v4123 = vpack.c.b16 %v4103, %v4101
      %v4124 = vpack.c.b16 %v4106, %v4104
      %v4125 = vpack.c.b16 %v4107, %v4105
      %v4126 = vpack.c.b16 %v4110, %v4108
      %v4127 = vpack.c.b16 %v4111, %v4109
      %4144 = vrot.lane.b32.xlu0 %v3918, 96
      %v4145 = vpop.permute.xlu0 %4144
      %4146 = vrot.lane.b32.xlu0 %v3919, 96
      %v4147 = vpop.permute.xlu0 %4146
      %4148 = vrot.lane.b32.xlu0 %v3920, 96
      %v4149 = vpop.permute.xlu0 %4148
      %4150 = vrot.lane.b32.xlu0 %v3921, 96
      %v4151 = vpop.permute.xlu0 %4150
      %4152 = vrot.lane.b32.xlu0 %v3922, 96
      %v4153 = vpop.permute.xlu0 %4152
      %4154 = vrot.lane.b32.xlu0 %v3923, 96
      %v4155 = vpop.permute.xlu0 %4154
      %4156 = vrot.lane.b32.xlu0 %v3924, 96
      %v4157 = vpop.permute.xlu0 %4156
      %4158 = vrot.lane.b32.xlu0 %v3925, 96
      %v4159 = vpop.permute.xlu0 %4158
      %4160 = vrot.lane.b32.xlu0 %v3926, 96
      %v4161 = vpop.permute.xlu0 %4160
      %4162 = vrot.lane.b32.xlu0 %v3927, 96
      %v4163 = vpop.permute.xlu0 %4162
      %4164 = vrot.lane.b32.xlu0 %v3928, 96
      %v4165 = vpop.permute.xlu0 %4164
      %4166 = vrot.lane.b32.xlu0 %v3929, 96
      %v4167 = vpop.permute.xlu0 %4166
      %4168 = vrot.lane.b32.xlu0 %v3930, 96
      %v4169 = vpop.permute.xlu0 %4168
      %4170 = vrot.lane.b32.xlu0 %v3931, 96
      %v4171 = vpop.permute.xlu0 %4170
      %4172 = vrot.lane.b32.xlu0 %v3932, 96
      %v4173 = vpop.permute.xlu0 %4172
      %4174 = vrot.lane.b32.xlu0 %v3933, 96
      %v4175 = vpop.permute.xlu0 %4174
      %4192 = vmatpush.bf16.msra.mxu0 %v4159
      %4193 = vmatpush.bf16.msra.mxu0 %v4157
      %4194 = vmatpush.bf16.msra.mxu0 %v4155
      %4195 = vmatpush.bf16.msra.mxu0 %v4153
      %4196 = vmatpush.bf16.msra.mxu0 %v4151
      %4197 = vmatpush.bf16.msra.mxu0 %v4149
      %4198 = vmatpush.bf16.msra.mxu0 %v4147
      %4199 = vmatpush.bf16.msra.mxu0 %v4145
      %4200 = vmatmul.bf16.gmra.mxu0 %v4112
      %v4201 = vpop.f32.mrf.mxu0
      %v4202 = vadd.f32 0.0, %v4201
      %v4203 = vpop.f32.mrf.mxu0
      %v4204 = vadd.f32 0.0, %v4203
      %4205 = vmatmul.bf16.gmra.mxu0 %v4114
      %v4206 = vpop.f32.mrf.mxu0
      %v4207 = vadd.f32 0.0, %v4206
      %v4208 = vpop.f32.mrf.mxu0
      %v4209 = vadd.f32 0.0, %v4208
      %4210 = vmatmul.bf16.gmra.mxu0 %v4116
      %v4211 = vpop.f32.mrf.mxu0
      %v4212 = vadd.f32 0.0, %v4211
      %v4213 = vpop.f32.mrf.mxu0
      %v4214 = vadd.f32 0.0, %v4213
      %4215 = vmatmul.bf16.gmra.mxu0 %v4118
      %v4216 = vpop.f32.mrf.mxu0
      %v4217 = vadd.f32 0.0, %v4216
      %v4218 = vpop.f32.mrf.mxu0
      %v4219 = vadd.f32 0.0, %v4218
      %4220 = vmatmul.bf16.gmra.mxu0 %v4120
      %v4221 = vpop.f32.mrf.mxu0
      %v4222 = vadd.f32 0.0, %v4221
      %v4223 = vpop.f32.mrf.mxu0
      %v4224 = vadd.f32 0.0, %v4223
      %4225 = vmatmul.bf16.gmra.mxu0 %v4122
      %v4226 = vpop.f32.mrf.mxu0
      %v4227 = vadd.f32 0.0, %v4226
      %v4228 = vpop.f32.mrf.mxu0
      %v4229 = vadd.f32 0.0, %v4228
      %4230 = vmatmul.bf16.gmra.mxu0 %v4124
      %v4231 = vpop.f32.mrf.mxu0
      %v4232 = vadd.f32 0.0, %v4231
      %v4233 = vpop.f32.mrf.mxu0
      %v4234 = vadd.f32 0.0, %v4233
      %4235 = vmatmul.bf16.gmra.mxu0 %v4126
      %v4236 = vpop.f32.mrf.mxu0
      %v4237 = vadd.f32 0.0, %v4236
      %v4238 = vpop.f32.mrf.mxu0
      %v4239 = vadd.f32 0.0, %v4238
      %4240 = vdwg.mxu0
      %4241 = vmatpush.bf16.msra.mxu0 %v4175
      %4242 = vmatpush.bf16.msra.mxu0 %v4173
      %4243 = vmatpush.bf16.msra.mxu0 %v4171
      %4244 = vmatpush.bf16.msra.mxu0 %v4169
      %4245 = vmatpush.bf16.msra.mxu0 %v4167
      %4246 = vmatpush.bf16.msra.mxu0 %v4165
      %4247 = vmatpush.bf16.msra.mxu0 %v4163
      %4248 = vmatpush.bf16.msra.mxu0 %v4161
      %4249 = vmatmul.bf16.gmra.mxu0 %v4113
      %v4250 = vpop.f32.mrf.mxu0
      %v4251 = vadd.f32 %v4202, %v4250
      %v4252 = vpop.f32.mrf.mxu0
      %v4253 = vadd.f32 %v4204, %v4252
      %4254 = vmatmul.bf16.gmra.mxu0 %v4115
      %v4255 = vpop.f32.mrf.mxu0
      %v4256 = vadd.f32 %v4207, %v4255
      %v4257 = vpop.f32.mrf.mxu0
      %v4258 = vadd.f32 %v4209, %v4257
      %4259 = vmatmul.bf16.gmra.mxu0 %v4117
      %v4260 = vpop.f32.mrf.mxu0
      %v4261 = vadd.f32 %v4212, %v4260
      %v4262 = vpop.f32.mrf.mxu0
      %v4263 = vadd.f32 %v4214, %v4262
      %4264 = vmatmul.bf16.gmra.mxu0 %v4119
      %v4265 = vpop.f32.mrf.mxu0
      %v4266 = vadd.f32 %v4217, %v4265
      %v4267 = vpop.f32.mrf.mxu0
      %v4268 = vadd.f32 %v4219, %v4267
      %4269 = vmatmul.bf16.gmra.mxu0 %v4121
      %v4270 = vpop.f32.mrf.mxu0
      %v4271 = vadd.f32 %v4222, %v4270
      %v4272 = vpop.f32.mrf.mxu0
      %v4273 = vadd.f32 %v4224, %v4272
      %4274 = vmatmul.bf16.gmra.mxu0 %v4123
      %v4275 = vpop.f32.mrf.mxu0
      %v4276 = vadd.f32 %v4227, %v4275
      %v4277 = vpop.f32.mrf.mxu0
      %v4278 = vadd.f32 %v4229, %v4277
      %4279 = vmatmul.bf16.gmra.mxu0 %v4125
      %v4280 = vpop.f32.mrf.mxu0
      %v4281 = vadd.f32 %v4232, %v4280
      %v4282 = vpop.f32.mrf.mxu0
      %v4283 = vadd.f32 %v4234, %v4282
      %4284 = vmatmul.bf16.gmra.mxu0 %v4127
      %v4285 = vpop.f32.mrf.mxu0
      %v4286 = vadd.f32 %v4237, %v4285
      %v4287 = vpop.f32.mrf.mxu0
      %v4288 = vadd.f32 %v4239, %v4287
      %4289 = vdwg.mxu0
      %v4290 = vmul.f32 %v4251, %v3694
      %v4291 = vmul.f32 %v4253, %v3695
      %v4292 = vmul.f32 %v4256, %v3696
      %v4293 = vmul.f32 %v4258, %v3697
      %v4294 = vmul.f32 %v4261, %v3698
      %v4295 = vmul.f32 %v4263, %v3699
      %v4296 = vmul.f32 %v4266, %v3700
      %v4297 = vmul.f32 %v4268, %v3701
      %v4298 = vmul.f32 %v4271, %v3702
      %v4299 = vmul.f32 %v4273, %v3703
      %v4300 = vmul.f32 %v4276, %v3704
      %v4301 = vmul.f32 %v4278, %v3705
      %v4302 = vmul.f32 %v4281, %v3706
      %v4303 = vmul.f32 %v4283, %v3707
      %v4304 = vmul.f32 %v4286, %v3708
      %v4305 = vmul.f32 %v4288, %v3709
      %4322 = vrot.lane.b32.xlu0 %v4290, 32
      %v4323 = vpop.permute.xlu0 %4322
      %4324 = vrot.lane.b32.xlu0 %v4291, 32
      %v4325 = vpop.permute.xlu0 %4324
      %4326 = vrot.lane.b32.xlu0 %v4292, 32
      %v4327 = vpop.permute.xlu0 %4326
      %4328 = vrot.lane.b32.xlu0 %v4293, 32
      %v4329 = vpop.permute.xlu0 %4328
      %4330 = vrot.lane.b32.xlu0 %v4294, 32
      %v4331 = vpop.permute.xlu0 %4330
      %4332 = vrot.lane.b32.xlu0 %v4295, 32
      %v4333 = vpop.permute.xlu0 %4332
      %4334 = vrot.lane.b32.xlu0 %v4296, 32
      %v4335 = vpop.permute.xlu0 %4334
      %4336 = vrot.lane.b32.xlu0 %v4297, 32
      %v4337 = vpop.permute.xlu0 %4336
      %4338 = vrot.lane.b32.xlu0 %v4298, 32
      %v4339 = vpop.permute.xlu0 %4338
      %4340 = vrot.lane.b32.xlu0 %v4299, 32
      %v4341 = vpop.permute.xlu0 %4340
      %4342 = vrot.lane.b32.xlu0 %v4300, 32
      %v4343 = vpop.permute.xlu0 %4342
      %4344 = vrot.lane.b32.xlu0 %v4301, 32
      %v4345 = vpop.permute.xlu0 %4344
      %4346 = vrot.lane.b32.xlu0 %v4302, 32
      %v4347 = vpop.permute.xlu0 %4346
      %4348 = vrot.lane.b32.xlu0 %v4303, 32
      %v4349 = vpop.permute.xlu0 %4348
      %4350 = vrot.lane.b32.xlu0 %v4304, 32
      %v4351 = vpop.permute.xlu0 %4350
      %4352 = vrot.lane.b32.xlu0 %v4305, 32
      %v4353 = vpop.permute.xlu0 %4352
      %v4370 = vsel %vm454, %v4048, %v4323
      %v4371 = vsel %vm454, %v4049, %v4325
      %v4372 = vsel %vm454, %v4050, %v4327
      %v4373 = vsel %vm454, %v4051, %v4329
      %v4374 = vsel %vm454, %v4052, %v4331
      %v4375 = vsel %vm454, %v4053, %v4333
      %v4376 = vsel %vm454, %v4054, %v4335
      %v4377 = vsel %vm454, %v4055, %v4337
      %v4378 = vsel %vm454, %v4056, %v4339
      %v4379 = vsel %vm454, %v4057, %v4341
      %v4380 = vsel %vm454, %v4058, %v4343
      %v4381 = vsel %vm454, %v4059, %v4345
      %v4382 = vsel %vm454, %v4060, %v4347
      %v4383 = vsel %vm454, %v4061, %v4349
      %v4384 = vsel %vm454, %v4062, %v4351
      %v4385 = vsel %vm454, %v4063, %v4353
      %v4386 = vadd.f32 %v4370, %v2284
      %v4387 = vadd.f32 %v4371, %v2284
      %v4388 = vadd.f32 %v4372, %v2284
      %v4389 = vadd.f32 %v4373, %v2284
      %v4390 = vadd.f32 %v4374, %v2284
      %v4391 = vadd.f32 %v4375, %v2284
      %v4392 = vadd.f32 %v4376, %v2284
      %v4393 = vadd.f32 %v4377, %v2284
      %v4394 = vadd.f32 %v4378, %v2284
      %v4395 = vadd.f32 %v4379, %v2284
      %v4396 = vadd.f32 %v4380, %v2284
      %v4397 = vadd.f32 %v4381, %v2284
      %v4398 = vadd.f32 %v4382, %v2284
      %v4399 = vadd.f32 %v4383, %v2284
      %v4400 = vadd.f32 %v4384, %v2284
      %v4401 = vadd.f32 %v4385, %v2284
      %vm4402 = vcmp.gt.f32.partialorder %v4386, 0.0
      %vm4403 = vcmp.gt.f32.partialorder %v4387, 0.0
      %vm4404 = vcmp.gt.f32.partialorder %v4388, 0.0
      %vm4405 = vcmp.gt.f32.partialorder %v4389, 0.0
      %vm4406 = vcmp.gt.f32.partialorder %v4390, 0.0
      %vm4407 = vcmp.gt.f32.partialorder %v4391, 0.0
      %vm4408 = vcmp.gt.f32.partialorder %v4392, 0.0
      %vm4409 = vcmp.gt.f32.partialorder %v4393, 0.0
      %vm4410 = vcmp.gt.f32.partialorder %v4394, 0.0
      %vm4411 = vcmp.gt.f32.partialorder %v4395, 0.0
      %vm4412 = vcmp.gt.f32.partialorder %v4396, 0.0
      %vm4413 = vcmp.gt.f32.partialorder %v4397, 0.0
      %vm4414 = vcmp.gt.f32.partialorder %v4398, 0.0
      %vm4415 = vcmp.gt.f32.partialorder %v4399, 0.0
      %vm4416 = vcmp.gt.f32.partialorder %v4400, 0.0
      %vm4417 = vcmp.gt.f32.partialorder %v4401, 0.0
      %v4418 = vmul.f32 %v4386, 1.442695
      %v4419 = vpow.pop %v4418
      %v4420 = vmul.f32 %v4387, 1.442695
      %v4421 = vpow.pop %v4420
      %v4422 = vmul.f32 %v4388, 1.442695
      %v4423 = vpow.pop %v4422
      %v4424 = vmul.f32 %v4389, 1.442695
      %v4425 = vpow.pop %v4424
      %v4426 = vmul.f32 %v4390, 1.442695
      %v4427 = vpow.pop %v4426
      %v4428 = vmul.f32 %v4391, 1.442695
      %v4429 = vpow.pop %v4428
      %v4430 = vmul.f32 %v4392, 1.442695
      %v4431 = vpow.pop %v4430
      %v4432 = vmul.f32 %v4393, 1.442695
      %v4433 = vpow.pop %v4432
      %v4434 = vmul.f32 %v4394, 1.442695
      %v4435 = vpow.pop %v4434
      %v4436 = vmul.f32 %v4395, 1.442695
      %v4437 = vpow.pop %v4436
      %v4438 = vmul.f32 %v4396, 1.442695
      %v4439 = vpow.pop %v4438
      %v4440 = vmul.f32 %v4397, 1.442695
      %v4441 = vpow.pop %v4440
      %v4442 = vmul.f32 %v4398, 1.442695
      %v4443 = vpow.pop %v4442
      %v4444 = vmul.f32 %v4399, 1.442695
      %v4445 = vpow.pop %v4444
      %v4446 = vmul.f32 %v4400, 1.442695
      %v4447 = vpow.pop %v4446
      %v4448 = vmul.f32 %v4401, 1.442695
      %v4449 = vpow.pop %v4448
      %v4450 = vsub.f32 %v4419, 1.0
      %v4451 = vsub.f32 %v4421, 1.0
      %v4452 = vsub.f32 %v4423, 1.0
      %v4453 = vsub.f32 %v4425, 1.0
      %v4454 = vsub.f32 %v4427, 1.0
      %v4455 = vsub.f32 %v4429, 1.0
      %v4456 = vsub.f32 %v4431, 1.0
      %v4457 = vsub.f32 %v4433, 1.0
      %v4458 = vsub.f32 %v4435, 1.0
      %v4459 = vsub.f32 %v4437, 1.0
      %v4460 = vsub.f32 %v4439, 1.0
      %v4461 = vsub.f32 %v4441, 1.0
      %v4462 = vsub.f32 %v4443, 1.0
      %v4463 = vsub.f32 %v4445, 1.0
      %v4464 = vsub.f32 %v4447, 1.0
      %v4465 = vsub.f32 %v4449, 1.0
      %v4466 = vmul.f32 %v4450, 1.6732632
      %v4467 = vmul.f32 %v4451, 1.6732632
      %v4468 = vmul.f32 %v4452, 1.6732632
      %v4469 = vmul.f32 %v4453, 1.6732632
      %v4470 = vmul.f32 %v4454, 1.6732632
      %v4471 = vmul.f32 %v4455, 1.6732632
      %v4472 = vmul.f32 %v4456, 1.6732632
      %v4473 = vmul.f32 %v4457, 1.6732632
      %v4474 = vmul.f32 %v4458, 1.6732632
      %v4475 = vmul.f32 %v4459, 1.6732632
      %v4476 = vmul.f32 %v4460, 1.6732632
      %v4477 = vmul.f32 %v4461, 1.6732632
      %v4478 = vmul.f32 %v4462, 1.6732632
      %v4479 = vmul.f32 %v4463, 1.6732632
      %v4480 = vmul.f32 %v4464, 1.6732632
      %v4481 = vmul.f32 %v4465, 1.6732632
      %v4482 = vsel %vm4402, %v4386, %v4466
      %v4483 = vsel %vm4403, %v4387, %v4467
      %v4484 = vsel %vm4404, %v4388, %v4468
      %v4485 = vsel %vm4405, %v4389, %v4469
      %v4486 = vsel %vm4406, %v4390, %v4470
      %v4487 = vsel %vm4407, %v4391, %v4471
      %v4488 = vsel %vm4408, %v4392, %v4472
      %v4489 = vsel %vm4409, %v4393, %v4473
      %v4490 = vsel %vm4410, %v4394, %v4474
      %v4491 = vsel %vm4411, %v4395, %v4475
      %v4492 = vsel %vm4412, %v4396, %v4476
      %v4493 = vsel %vm4413, %v4397, %v4477
      %v4494 = vsel %vm4414, %v4398, %v4478
      %v4495 = vsel %vm4415, %v4399, %v4479
      %v4496 = vsel %vm4416, %v4400, %v4480
      %v4497 = vsel %vm4417, %v4401, %v4481
      %v4498 = vmul.f32 %v4482, 1.050701
      %v4499 = vmul.f32 %v4483, 1.050701
      %v4500 = vmul.f32 %v4484, 1.050701
      %v4501 = vmul.f32 %v4485, 1.050701
      %v4502 = vmul.f32 %v4486, 1.050701
      %v4503 = vmul.f32 %v4487, 1.050701
      %v4504 = vmul.f32 %v4488, 1.050701
      %v4505 = vmul.f32 %v4489, 1.050701
      %v4506 = vmul.f32 %v4490, 1.050701
      %v4507 = vmul.f32 %v4491, 1.050701
      %v4508 = vmul.f32 %v4492, 1.050701
      %v4509 = vmul.f32 %v4493, 1.050701
      %v4510 = vmul.f32 %v4494, 1.050701
      %v4511 = vmul.f32 %v4495, 1.050701
      %v4512 = vmul.f32 %v4496, 1.050701
      %v4513 = vmul.f32 %v4497, 1.050701
      %v4514 = vadd.f32 %v2478, %v4498
      %v4515 = vadd.f32 %v2479, %v4499
      %v4516 = vadd.f32 %v2480, %v4500
      %v4517 = vadd.f32 %v2481, %v4501
      %v4518 = vadd.f32 %v2482, %v4502
      %v4519 = vadd.f32 %v2483, %v4503
      %v4520 = vadd.f32 %v2484, %v4504
      %v4521 = vadd.f32 %v2485, %v4505
      %v4522 = vadd.f32 %v2486, %v4506
      %v4523 = vadd.f32 %v2487, %v4507
      %v4524 = vadd.f32 %v2488, %v4508
      %v4525 = vadd.f32 %v2489, %v4509
      %v4526 = vadd.f32 %v2490, %v4510
      %v4527 = vadd.f32 %v2491, %v4511
      %v4528 = vadd.f32 %v2492, %v4512
      %v4529 = vadd.f32 %v2493, %v4513
      %4546 = vrot.lane.b32.xlu0 %v4498, 96
      %v4547 = vpop.permute.xlu0 %4546
      %4548 = vrot.lane.b32.xlu0 %v4499, 96
      %v4549 = vpop.permute.xlu0 %4548
      %4550 = vrot.lane.b32.xlu0 %v4500, 96
      %v4551 = vpop.permute.xlu0 %4550
      %4552 = vrot.lane.b32.xlu0 %v4501, 96
      %v4553 = vpop.permute.xlu0 %4552
      %4554 = vrot.lane.b32.xlu0 %v4502, 96
      %v4555 = vpop.permute.xlu0 %4554
      %4556 = vrot.lane.b32.xlu0 %v4503, 96
      %v4557 = vpop.permute.xlu0 %4556
      %4558 = vrot.lane.b32.xlu0 %v4504, 96
      %v4559 = vpop.permute.xlu0 %4558
      %4560 = vrot.lane.b32.xlu0 %v4505, 96
      %v4561 = vpop.permute.xlu0 %4560
      %4562 = vrot.lane.b32.xlu0 %v4506, 96
      %v4563 = vpop.permute.xlu0 %4562
      %4564 = vrot.lane.b32.xlu0 %v4507, 96
      %v4565 = vpop.permute.xlu0 %4564
      %4566 = vrot.lane.b32.xlu0 %v4508, 96
      %v4567 = vpop.permute.xlu0 %4566
      %4568 = vrot.lane.b32.xlu0 %v4509, 96
      %v4569 = vpop.permute.xlu0 %4568
      %4570 = vrot.lane.b32.xlu0 %v4510, 96
      %v4571 = vpop.permute.xlu0 %4570
      %4572 = vrot.lane.b32.xlu0 %v4511, 96
      %v4573 = vpop.permute.xlu0 %4572
      %4574 = vrot.lane.b32.xlu0 %v4512, 96
      %v4575 = vpop.permute.xlu0 %4574
      %4576 = vrot.lane.b32.xlu0 %v4513, 96
      %v4577 = vpop.permute.xlu0 %4576
      %v4594 = vadd.f32 %v4514, %v4547
      %v4595 = vadd.f32 %v4515, %v4549
      %v4596 = vadd.f32 %v4516, %v4551
      %v4597 = vadd.f32 %v4517, %v4553
      %v4598 = vadd.f32 %v4518, %v4555
      %v4599 = vadd.f32 %v4519, %v4557
      %v4600 = vadd.f32 %v4520, %v4559
      %v4601 = vadd.f32 %v4521, %v4561
      %v4602 = vadd.f32 %v4522, %v4563
      %v4603 = vadd.f32 %v4523, %v4565
      %v4604 = vadd.f32 %v4524, %v4567
      %v4605 = vadd.f32 %v4525, %v4569
      %v4606 = vadd.f32 %v4526, %v4571
      %v4607 = vadd.f32 %v4527, %v4573
      %v4608 = vadd.f32 %v4528, %v4575
      %v4609 = vadd.f32 %v4529, %v4577
      %v4610 = vmul.f32 %v4594, 0.25
      %v4611 = vmul.f32 %v4595, 0.25
      %v4612 = vmul.f32 %v4596, 0.25
      %v4613 = vmul.f32 %v4597, 0.25
      %v4614 = vmul.f32 %v4598, 0.25
      %v4615 = vmul.f32 %v4599, 0.25
      %v4616 = vmul.f32 %v4600, 0.25
      %v4617 = vmul.f32 %v4601, 0.25
      %v4618 = vmul.f32 %v4602, 0.25
      %v4619 = vmul.f32 %v4603, 0.25
      %v4620 = vmul.f32 %v4604, 0.25
      %v4621 = vmul.f32 %v4605, 0.25
      %v4622 = vmul.f32 %v4606, 0.25
      %v4623 = vmul.f32 %v4607, 0.25
      %v4624 = vmul.f32 %v4608, 0.25
      %v4625 = vmul.f32 %v4609, 0.25
      %v4626 = vld [vmem:[%s6] sm:$0xff]
      %v4627 = vld [vmem:[%s6 + $0x8] sm:$0xff]
      %v4628 = vld [vmem:[%s6 + $0x10] sm:$0xff]
      %v4629 = vld [vmem:[%s6 + $0x18] sm:$0xff]
      %v4630 = vld [vmem:[%s7] sm:$0x1]
      %v4632 = vperm.slane %v4630, 0
      %v4635 = vsel %vm454, %v4610, 0
      %v4638 = vsel %vm454, %v4611, 0
      %v4641 = vsel %vm454, %v4612, 0
      %v4644 = vsel %vm454, %v4613, 0
      %v4647 = vsel %vm454, %v4614, 0
      %v4650 = vsel %vm454, %v4615, 0
      %v4653 = vsel %vm454, %v4616, 0
      %v4656 = vsel %vm454, %v4617, 0
      %v4659 = vsel %vm454, %v4618, 0
      %v4662 = vsel %vm454, %v4619, 0
      %v4665 = vsel %vm454, %v4620, 0
      %v4668 = vsel %vm454, %v4621, 0
      %v4671 = vsel %vm454, %v4622, 0
      %v4674 = vsel %vm454, %v4623, 0
      %v4677 = vsel %vm454, %v4624, 0
      %v4680 = vsel %vm454, %v4625, 0
      %4682 = vmatpush.msra.mxu0 0.0
      %4683 = vmatpush.msra.mxu0 0.0
      %4684 = vmatpush.msra.mxu0 0.0
      %4685 = vmatpush.msra.mxu0 0.0
      %4686 = vmatpush.msra.mxu0 0.0
      %4687 = vmatpush.msra.mxu0 0.0
      %4688 = vmatpush.msra.mxu0 0.0
      %4689 = vmatpush.msra.mxu0 0.0
      %4690 = vmatpush.msra.mxu0 0.0
      %4691 = vmatpush.msra.mxu0 0.0
      %4692 = vmatpush.msra.mxu0 0.0
      %4693 = vmatpush.msra.mxu0 0.0
      %4694 = vmatpush.msra.mxu0 %v4629
      %4695 = vmatpush.msra.mxu0 %v4628
      %4696 = vmatpush.msra.mxu0 %v4627
      %4697 = vmatpush.msra.mxu0 %v4626
      %4698 = vmatmul.f32.gmra.mxu0 %v4635
      %v4699 = vpop.f32.mrf.mxu0
      %v4700 = vadd.f32 %v4632, %v4699
      %4701 = vmatmul.f32.gmra.mxu0 %v4638
      %v4702 = vpop.f32.mrf.mxu0
      %v4703 = vadd.f32 %v4632, %v4702
      %4704 = vmatmul.f32.gmra.mxu0 %v4641
      %v4705 = vpop.f32.mrf.mxu0
      %v4706 = vadd.f32 %v4632, %v4705
      %4707 = vmatmul.f32.gmra.mxu0 %v4644
      %v4708 = vpop.f32.mrf.mxu0
      %v4709 = vadd.f32 %v4632, %v4708
      %4710 = vmatmul.f32.gmra.mxu0 %v4647
      %v4711 = vpop.f32.mrf.mxu0
      %v4712 = vadd.f32 %v4632, %v4711
      %4713 = vmatmul.f32.gmra.mxu0 %v4650
      %v4714 = vpop.f32.mrf.mxu0
      %v4715 = vadd.f32 %v4632, %v4714
      %4716 = vmatmul.f32.gmra.mxu0 %v4653
      %v4717 = vpop.f32.mrf.mxu0
      %v4718 = vadd.f32 %v4632, %v4717
      %4719 = vmatmul.f32.gmra.mxu0 %v4656
      %v4720 = vpop.f32.mrf.mxu0
      %v4721 = vadd.f32 %v4632, %v4720
      %4722 = vmatmul.f32.gmra.mxu0 %v4659
      %v4723 = vpop.f32.mrf.mxu0
      %v4724 = vadd.f32 %v4632, %v4723
      %4725 = vmatmul.f32.gmra.mxu0 %v4662
      %v4726 = vpop.f32.mrf.mxu0
      %v4727 = vadd.f32 %v4632, %v4726
      %4728 = vmatmul.f32.gmra.mxu0 %v4665
      %v4729 = vpop.f32.mrf.mxu0
      %v4730 = vadd.f32 %v4632, %v4729
      %4731 = vmatmul.f32.gmra.mxu0 %v4668
      %v4732 = vpop.f32.mrf.mxu0
      %v4733 = vadd.f32 %v4632, %v4732
      %4734 = vmatmul.f32.gmra.mxu0 %v4671
      %v4735 = vpop.f32.mrf.mxu0
      %v4736 = vadd.f32 %v4632, %v4735
      %4737 = vmatmul.f32.gmra.mxu0 %v4674
      %v4738 = vpop.f32.mrf.mxu0
      %v4739 = vadd.f32 %v4632, %v4738
      %4740 = vmatmul.f32.gmra.mxu0 %v4677
      %v4741 = vpop.f32.mrf.mxu0
      %v4742 = vadd.f32 %v4632, %v4741
      %4743 = vmatmul.f32.gmra.mxu0 %v4680
      %v4744 = vpop.f32.mrf.mxu0
      %v4745 = vadd.f32 %v4632, %v4744
      %4746 = vdwg.mxu0
      %4747 = vmax.xlane.f32.xlu0 %v4700
      %v4748 = vpop.xlane.xlu0 %4747
      %4749 = vmax.xlane.f32.xlu0 %v4703
      %v4750 = vpop.xlane.xlu0 %4749
      %4751 = vmax.xlane.f32.xlu0 %v4706
      %v4752 = vpop.xlane.xlu0 %4751
      %4753 = vmax.xlane.f32.xlu0 %v4709
      %v4754 = vpop.xlane.xlu0 %4753
      %4755 = vmax.xlane.f32.xlu0 %v4712
      %v4756 = vpop.xlane.xlu0 %4755
      %4757 = vmax.xlane.f32.xlu0 %v4715
      %v4758 = vpop.xlane.xlu0 %4757
      %4759 = vmax.xlane.f32.xlu0 %v4718
      %v4760 = vpop.xlane.xlu0 %4759
      %4761 = vmax.xlane.f32.xlu0 %v4721
      %v4762 = vpop.xlane.xlu0 %4761
      %4763 = vmax.xlane.f32.xlu0 %v4724
      %v4764 = vpop.xlane.xlu0 %4763
      %4765 = vmax.xlane.f32.xlu0 %v4727
      %v4766 = vpop.xlane.xlu0 %4765
      %4767 = vmax.xlane.f32.xlu0 %v4730
      %v4768 = vpop.xlane.xlu0 %4767
      %4769 = vmax.xlane.f32.xlu0 %v4733
      %v4770 = vpop.xlane.xlu0 %4769
      %4771 = vmax.xlane.f32.xlu0 %v4736
      %v4772 = vpop.xlane.xlu0 %4771
      %4773 = vmax.xlane.f32.xlu0 %v4739
      %v4774 = vpop.xlane.xlu0 %4773
      %4775 = vmax.xlane.f32.xlu0 %v4742
      %v4776 = vpop.xlane.xlu0 %4775
      %4777 = vmax.xlane.f32.xlu0 %v4745
      %v4778 = vpop.xlane.xlu0 %4777
      %v4779 = vsub.f32 %v4700, %v4748
      %v4780 = vsub.f32 %v4703, %v4750
      %v4781 = vsub.f32 %v4706, %v4752
      %v4782 = vsub.f32 %v4709, %v4754
      %v4783 = vsub.f32 %v4712, %v4756
      %v4784 = vsub.f32 %v4715, %v4758
      %v4785 = vsub.f32 %v4718, %v4760
      %v4786 = vsub.f32 %v4721, %v4762
      %v4787 = vsub.f32 %v4724, %v4764
      %v4788 = vsub.f32 %v4727, %v4766
      %v4789 = vsub.f32 %v4730, %v4768
      %v4790 = vsub.f32 %v4733, %v4770
      %v4791 = vsub.f32 %v4736, %v4772
      %v4792 = vsub.f32 %v4739, %v4774
      %v4793 = vsub.f32 %v4742, %v4776
      %v4794 = vsub.f32 %v4745, %v4778
      %v4795 = vmul.f32 %v4779, 1.442695
      %v4796 = vpow.pop %v4795
      %v4797 = vmul.f32 %v4780, 1.442695
      %v4798 = vpow.pop %v4797
      %v4799 = vmul.f32 %v4781, 1.442695
      %v4800 = vpow.pop %v4799
      %v4801 = vmul.f32 %v4782, 1.442695
      %v4802 = vpow.pop %v4801
      %v4803 = vmul.f32 %v4783, 1.442695
      %v4804 = vpow.pop %v4803
      %v4805 = vmul.f32 %v4784, 1.442695
      %v4806 = vpow.pop %v4805
      %v4807 = vmul.f32 %v4785, 1.442695
      %v4808 = vpow.pop %v4807
      %v4809 = vmul.f32 %v4786, 1.442695
      %v4810 = vpow.pop %v4809
      %v4811 = vmul.f32 %v4787, 1.442695
      %v4812 = vpow.pop %v4811
      %v4813 = vmul.f32 %v4788, 1.442695
      %v4814 = vpow.pop %v4813
      %v4815 = vmul.f32 %v4789, 1.442695
      %v4816 = vpow.pop %v4815
      %v4817 = vmul.f32 %v4790, 1.442695
      %v4818 = vpow.pop %v4817
      %v4819 = vmul.f32 %v4791, 1.442695
      %v4820 = vpow.pop %v4819
      %v4821 = vmul.f32 %v4792, 1.442695
      %v4822 = vpow.pop %v4821
      %v4823 = vmul.f32 %v4793, 1.442695
      %v4824 = vpow.pop %v4823
      %v4825 = vmul.f32 %v4794, 1.442695
      %v4826 = vpow.pop %v4825
      %4827 = vadd.xlane.f32.xlu0 %v4796
      %v4828 = vpop.xlane.xlu0 %4827
      %4829 = vadd.xlane.f32.xlu0 %v4798
      %v4830 = vpop.xlane.xlu0 %4829
      %4831 = vadd.xlane.f32.xlu0 %v4800
      %v4832 = vpop.xlane.xlu0 %4831
      %4833 = vadd.xlane.f32.xlu0 %v4802
      %v4834 = vpop.xlane.xlu0 %4833
      %4835 = vadd.xlane.f32.xlu0 %v4804
      %v4836 = vpop.xlane.xlu0 %4835
      %4837 = vadd.xlane.f32.xlu0 %v4806
      %v4838 = vpop.xlane.xlu0 %4837
      %4839 = vadd.xlane.f32.xlu0 %v4808
      %v4840 = vpop.xlane.xlu0 %4839
      %4841 = vadd.xlane.f32.xlu0 %v4810
      %v4842 = vpop.xlane.xlu0 %4841
      %4843 = vadd.xlane.f32.xlu0 %v4812
      %v4844 = vpop.xlane.xlu0 %4843
      %4845 = vadd.xlane.f32.xlu0 %v4814
      %v4846 = vpop.xlane.xlu0 %4845
      %4847 = vadd.xlane.f32.xlu0 %v4816
      %v4848 = vpop.xlane.xlu0 %4847
      %4849 = vadd.xlane.f32.xlu0 %v4818
      %v4850 = vpop.xlane.xlu0 %4849
      %4851 = vadd.xlane.f32.xlu0 %v4820
      %v4852 = vpop.xlane.xlu0 %4851
      %4853 = vadd.xlane.f32.xlu0 %v4822
      %v4854 = vpop.xlane.xlu0 %4853
      %4855 = vadd.xlane.f32.xlu0 %v4824
      %v4856 = vpop.xlane.xlu0 %4855
      %4857 = vadd.xlane.f32.xlu0 %v4826
      %v4858 = vpop.xlane.xlu0 %4857
      %v4859 = vrcp.pop %v4828
      %v4860 = vmul.f32 %v4828, %v4859
      %v4861 = vsub.f32 1.0, %v4860
      %v4862 = vmul.f32 %v4859, %v4861
      %v4863 = vadd.f32 %v4859, %v4862
      %vm4864 = vweird.f32 %v4828
      %vm4865 = vweird.f32 %v4859
      %vm4866 = vmor %vm4864, %vm4865
      %v4867 = vsel %vm4866, %v4859, %v4863
      %v4868 = vand.u32 2147483647, %v4828
      %vm4869 = vcmp.eq.f32.partialorder %v4868, 8.507059e+37
      %v4870 = vand.u32 %v4828, 2147483648
      %v4871 = vor.u32 1.1754944e-38, %v4870
      %v4872 = vsel %vm4869, %v4871, %v4867
      %v4873 = vmul.f32 %v4796, %v4872
      %v4874 = vrcp.pop %v4830
      %v4875 = vmul.f32 %v4830, %v4874
      %v4876 = vsub.f32 1.0, %v4875
      %v4877 = vmul.f32 %v4874, %v4876
      %v4878 = vadd.f32 %v4874, %v4877
      %vm4879 = vweird.f32 %v4830
      %vm4880 = vweird.f32 %v4874
      %vm4881 = vmor %vm4879, %vm4880
      %v4882 = vsel %vm4881, %v4874, %v4878
      %v4883 = vand.u32 2147483647, %v4830
      %vm4884 = vcmp.eq.f32.partialorder %v4883, 8.507059e+37
      %v4885 = vand.u32 %v4830, 2147483648
      %v4886 = vor.u32 1.1754944e-38, %v4885
      %v4887 = vsel %vm4884, %v4886, %v4882
      %v4888 = vmul.f32 %v4798, %v4887
      %v4889 = vrcp.pop %v4832
      %v4890 = vmul.f32 %v4832, %v4889
      %v4891 = vsub.f32 1.0, %v4890
      %v4892 = vmul.f32 %v4889, %v4891
      %v4893 = vadd.f32 %v4889, %v4892
      %vm4894 = vweird.f32 %v4832
      %vm4895 = vweird.f32 %v4889
      %vm4896 = vmor %vm4894, %vm4895
      %v4897 = vsel %vm4896, %v4889, %v4893
      %v4898 = vand.u32 2147483647, %v4832
      %vm4899 = vcmp.eq.f32.partialorder %v4898, 8.507059e+37
      %v4900 = vand.u32 %v4832, 2147483648
      %v4901 = vor.u32 1.1754944e-38, %v4900
      %v4902 = vsel %vm4899, %v4901, %v4897
      %v4903 = vmul.f32 %v4800, %v4902
      %v4904 = vrcp.pop %v4834
      %v4905 = vmul.f32 %v4834, %v4904
      %v4906 = vsub.f32 1.0, %v4905
      %v4907 = vmul.f32 %v4904, %v4906
      %v4908 = vadd.f32 %v4904, %v4907
      %vm4909 = vweird.f32 %v4834
      %vm4910 = vweird.f32 %v4904
      %vm4911 = vmor %vm4909, %vm4910
      %v4912 = vsel %vm4911, %v4904, %v4908
      %v4913 = vand.u32 2147483647, %v4834
      %vm4914 = vcmp.eq.f32.partialorder %v4913, 8.507059e+37
      %v4915 = vand.u32 %v4834, 2147483648
      %v4916 = vor.u32 1.1754944e-38, %v4915
      %v4917 = vsel %vm4914, %v4916, %v4912
      %v4918 = vmul.f32 %v4802, %v4917
      %v4919 = vrcp.pop %v4836
      %v4920 = vmul.f32 %v4836, %v4919
      %v4921 = vsub.f32 1.0, %v4920
      %v4922 = vmul.f32 %v4919, %v4921
      %v4923 = vadd.f32 %v4919, %v4922
      %vm4924 = vweird.f32 %v4836
      %vm4925 = vweird.f32 %v4919
      %vm4926 = vmor %vm4924, %vm4925
      %v4927 = vsel %vm4926, %v4919, %v4923
      %v4928 = vand.u32 2147483647, %v4836
      %vm4929 = vcmp.eq.f32.partialorder %v4928, 8.507059e+37
      %v4930 = vand.u32 %v4836, 2147483648
      %v4931 = vor.u32 1.1754944e-38, %v4930
      %v4932 = vsel %vm4929, %v4931, %v4927
      %v4933 = vmul.f32 %v4804, %v4932
      %v4934 = vrcp.pop %v4838
      %v4935 = vmul.f32 %v4838, %v4934
      %v4936 = vsub.f32 1.0, %v4935
      %v4937 = vmul.f32 %v4934, %v4936
      %v4938 = vadd.f32 %v4934, %v4937
      %vm4939 = vweird.f32 %v4838
      %vm4940 = vweird.f32 %v4934
      %vm4941 = vmor %vm4939, %vm4940
      %v4942 = vsel %vm4941, %v4934, %v4938
      %v4943 = vand.u32 2147483647, %v4838
      %vm4944 = vcmp.eq.f32.partialorder %v4943, 8.507059e+37
      %v4945 = vand.u32 %v4838, 2147483648
      %v4946 = vor.u32 1.1754944e-38, %v4945
      %v4947 = vsel %vm4944, %v4946, %v4942
      %v4948 = vmul.f32 %v4806, %v4947
      %v4949 = vrcp.pop %v4840
      %v4950 = vmul.f32 %v4840, %v4949
      %v4951 = vsub.f32 1.0, %v4950
      %v4952 = vmul.f32 %v4949, %v4951
      %v4953 = vadd.f32 %v4949, %v4952
      %vm4954 = vweird.f32 %v4840
      %vm4955 = vweird.f32 %v4949
      %vm4956 = vmor %vm4954, %vm4955
      %v4957 = vsel %vm4956, %v4949, %v4953
      %v4958 = vand.u32 2147483647, %v4840
      %vm4959 = vcmp.eq.f32.partialorder %v4958, 8.507059e+37
      %v4960 = vand.u32 %v4840, 2147483648
      %v4961 = vor.u32 1.1754944e-38, %v4960
      %v4962 = vsel %vm4959, %v4961, %v4957
      %v4963 = vmul.f32 %v4808, %v4962
      %v4964 = vrcp.pop %v4842
      %v4965 = vmul.f32 %v4842, %v4964
      %v4966 = vsub.f32 1.0, %v4965
      %v4967 = vmul.f32 %v4964, %v4966
      %v4968 = vadd.f32 %v4964, %v4967
      %vm4969 = vweird.f32 %v4842
      %vm4970 = vweird.f32 %v4964
      %vm4971 = vmor %vm4969, %vm4970
      %v4972 = vsel %vm4971, %v4964, %v4968
      %v4973 = vand.u32 2147483647, %v4842
      %vm4974 = vcmp.eq.f32.partialorder %v4973, 8.507059e+37
      %v4975 = vand.u32 %v4842, 2147483648
      %v4976 = vor.u32 1.1754944e-38, %v4975
      %v4977 = vsel %vm4974, %v4976, %v4972
      %v4978 = vmul.f32 %v4810, %v4977
      %v4979 = vrcp.pop %v4844
      %v4980 = vmul.f32 %v4844, %v4979
      %v4981 = vsub.f32 1.0, %v4980
      %v4982 = vmul.f32 %v4979, %v4981
      %v4983 = vadd.f32 %v4979, %v4982
      %vm4984 = vweird.f32 %v4844
      %vm4985 = vweird.f32 %v4979
      %vm4986 = vmor %vm4984, %vm4985
      %v4987 = vsel %vm4986, %v4979, %v4983
      %v4988 = vand.u32 2147483647, %v4844
      %vm4989 = vcmp.eq.f32.partialorder %v4988, 8.507059e+37
      %v4990 = vand.u32 %v4844, 2147483648
      %v4991 = vor.u32 1.1754944e-38, %v4990
      %v4992 = vsel %vm4989, %v4991, %v4987
      %v4993 = vmul.f32 %v4812, %v4992
      %v4994 = vrcp.pop %v4846
      %v4995 = vmul.f32 %v4846, %v4994
      %v4996 = vsub.f32 1.0, %v4995
      %v4997 = vmul.f32 %v4994, %v4996
      %v4998 = vadd.f32 %v4994, %v4997
      %vm4999 = vweird.f32 %v4846
      %vm5000 = vweird.f32 %v4994
      %vm5001 = vmor %vm4999, %vm5000
      %v5002 = vsel %vm5001, %v4994, %v4998
      %v5003 = vand.u32 2147483647, %v4846
      %vm5004 = vcmp.eq.f32.partialorder %v5003, 8.507059e+37
      %v5005 = vand.u32 %v4846, 2147483648
      %v5006 = vor.u32 1.1754944e-38, %v5005
      %v5007 = vsel %vm5004, %v5006, %v5002
      %v5008 = vmul.f32 %v4814, %v5007
      %v5009 = vrcp.pop %v4848
      %v5010 = vmul.f32 %v4848, %v5009
      %v5011 = vsub.f32 1.0, %v5010
      %v5012 = vmul.f32 %v5009, %v5011
      %v5013 = vadd.f32 %v5009, %v5012
      %vm5014 = vweird.f32 %v4848
      %vm5015 = vweird.f32 %v5009
      %vm5016 = vmor %vm5014, %vm5015
      %v5017 = vsel %vm5016, %v5009, %v5013
      %v5018 = vand.u32 2147483647, %v4848
      %vm5019 = vcmp.eq.f32.partialorder %v5018, 8.507059e+37
      %v5020 = vand.u32 %v4848, 2147483648
      %v5021 = vor.u32 1.1754944e-38, %v5020
      %v5022 = vsel %vm5019, %v5021, %v5017
      %v5023 = vmul.f32 %v4816, %v5022
      %v5024 = vrcp.pop %v4850
      %v5025 = vmul.f32 %v4850, %v5024
      %v5026 = vsub.f32 1.0, %v5025
      %v5027 = vmul.f32 %v5024, %v5026
      %v5028 = vadd.f32 %v5024, %v5027
      %vm5029 = vweird.f32 %v4850
      %vm5030 = vweird.f32 %v5024
      %vm5031 = vmor %vm5029, %vm5030
      %v5032 = vsel %vm5031, %v5024, %v5028
      %v5033 = vand.u32 2147483647, %v4850
      %vm5034 = vcmp.eq.f32.partialorder %v5033, 8.507059e+37
      %v5035 = vand.u32 %v4850, 2147483648
      %v5036 = vor.u32 1.1754944e-38, %v5035
      %v5037 = vsel %vm5034, %v5036, %v5032
      %v5038 = vmul.f32 %v4818, %v5037
      %v5039 = vrcp.pop %v4852
      %v5040 = vmul.f32 %v4852, %v5039
      %v5041 = vsub.f32 1.0, %v5040
      %v5042 = vmul.f32 %v5039, %v5041
      %v5043 = vadd.f32 %v5039, %v5042
      %vm5044 = vweird.f32 %v4852
      %vm5045 = vweird.f32 %v5039
      %vm5046 = vmor %vm5044, %vm5045
      %v5047 = vsel %vm5046, %v5039, %v5043
      %v5048 = vand.u32 2147483647, %v4852
      %vm5049 = vcmp.eq.f32.partialorder %v5048, 8.507059e+37
      %v5050 = vand.u32 %v4852, 2147483648
      %v5051 = vor.u32 1.1754944e-38, %v5050
      %v5052 = vsel %vm5049, %v5051, %v5047
      %v5053 = vmul.f32 %v4820, %v5052
      %v5054 = vrcp.pop %v4854
      %v5055 = vmul.f32 %v4854, %v5054
      %v5056 = vsub.f32 1.0, %v5055
      %v5057 = vmul.f32 %v5054, %v5056
      %v5058 = vadd.f32 %v5054, %v5057
      %vm5059 = vweird.f32 %v4854
      %vm5060 = vweird.f32 %v5054
      %vm5061 = vmor %vm5059, %vm5060
      %v5062 = vsel %vm5061, %v5054, %v5058
      %v5063 = vand.u32 2147483647, %v4854
      %vm5064 = vcmp.eq.f32.partialorder %v5063, 8.507059e+37
      %v5065 = vand.u32 %v4854, 2147483648
      %v5066 = vor.u32 1.1754944e-38, %v5065
      %v5067 = vsel %vm5064, %v5066, %v5062
      %v5068 = vmul.f32 %v4822, %v5067
      %v5069 = vrcp.pop %v4856
      %v5070 = vmul.f32 %v4856, %v5069
      %v5071 = vsub.f32 1.0, %v5070
      %v5072 = vmul.f32 %v5069, %v5071
      %v5073 = vadd.f32 %v5069, %v5072
      %vm5074 = vweird.f32 %v4856
      %vm5075 = vweird.f32 %v5069
      %vm5076 = vmor %vm5074, %vm5075
      %v5077 = vsel %vm5076, %v5069, %v5073
      %v5078 = vand.u32 2147483647, %v4856
      %vm5079 = vcmp.eq.f32.partialorder %v5078, 8.507059e+37
      %v5080 = vand.u32 %v4856, 2147483648
      %v5081 = vor.u32 1.1754944e-38, %v5080
      %v5082 = vsel %vm5079, %v5081, %v5077
      %v5083 = vmul.f32 %v4824, %v5082
      %v5084 = vrcp.pop %v4858
      %v5085 = vmul.f32 %v4858, %v5084
      %v5086 = vsub.f32 1.0, %v5085
      %v5087 = vmul.f32 %v5084, %v5086
      %v5088 = vadd.f32 %v5084, %v5087
      %vm5089 = vweird.f32 %v4858
      %vm5090 = vweird.f32 %v5084
      %vm5091 = vmor %vm5089, %vm5090
      %v5092 = vsel %vm5091, %v5084, %v5088
      %v5093 = vand.u32 2147483647, %v4858
      %vm5094 = vcmp.eq.f32.partialorder %v5093, 8.507059e+37
      %v5095 = vand.u32 %v4858, 2147483648
      %v5096 = vor.u32 1.1754944e-38, %v5095
      %v5097 = vsel %vm5094, %v5096, %v5092
      %v5098 = vmul.f32 %v4826, %v5097
      %5099 = vst [vmem:[%s310] sm:$0xff] %v4873
      %5100 = vst [vmem:[%s310 + $0x8] sm:$0xff] %v4888
      %5101 = vst [vmem:[%s310 + $0x10] sm:$0xff] %v4903
      %5102 = vst [vmem:[%s310 + $0x18] sm:$0xff] %v4918
      %5103 = vst [vmem:[%s310 + $0x20] sm:$0xff] %v4933
      %5104 = vst [vmem:[%s310 + $0x28] sm:$0xff] %v4948
      %5105 = vst [vmem:[%s310 + $0x30] sm:$0xff] %v4963
      %5106 = vst [vmem:[%s310 + $0x38] sm:$0xff] %v4978
      %5107 = vst [vmem:[%s310 + $0x40] sm:$0xff] %v4993
      %5108 = vst [vmem:[%s310 + $0x48] sm:$0xff] %v5008
      %5109 = vst [vmem:[%s310 + $0x50] sm:$0xff] %v5023
      %5110 = vst [vmem:[%s310 + $0x58] sm:$0xff] %v5038
      %5111 = vst [vmem:[%s310 + $0x60] sm:$0xff] %v5053
      %5112 = vst [vmem:[%s310 + $0x68] sm:$0xff] %v5068
      %5113 = vst [vmem:[%s310 + $0x70] sm:$0xff] %v5083
      %5114 = vst [vmem:[%s310 + $0x78] sm:$0xff] %v5098
      %s5115 = smul.u32 16, %s19
      %p5116 = scmp.lt.s32.totalorder %s5115, 31
      %s5117 = scalar_select %p5116, %s5115, 31
      %s5118 = smul.addr %s5117, 8
      %s5119 = scalar_lea.vmem %s8, %s5118
      // Predicated region
      $region53: #{gat_forward.3} parent=51 // pred_check
        %p5120 = pneg %p210
      $region54: #{gat_forward.3} parent=51 // pred_check_branch
        %5122 = sbr.rel (%p5120) target = $region56
      $region55: #{gat_forward.3} parent=51 // pred_region
        %s5123 = smul.u32 16, %s19
      $region56: #{gat_forward.3} parent=51 // pred_fallthru
        _
    $region52: #{gat_forward.3} parent=5 // pred_fallthru
      _
    %p5124 = scmp.le.s32.totalorder 2, %s14
    // Predicated region
    $region57: #{gat_forward.3} parent=5 // pred_check
      %p5125 = pneg %p5124
    $region58: #{gat_forward.3} parent=5 // pred_check_branch
      %5127 = sbr.rel (%p5125) target = $region60
    $region59: #{gat_forward.3} parent=5 // pred_region
      %s5128 = ssub.s32 %s14, 2
      // Predicated region
      $region61: #{gat_forward.3} parent=59 // pred_check
        %p5129 = pneg %p216
      $region62: #{gat_forward.3} parent=59 // pred_check_branch
        %5131 = sbr.rel (%p5129) target = $region64
      $region63: #{gat_forward.3} parent=59 // pred_region
        %s5132 = smul.u32 16, %s20
        %p5133 = scmp.lt.s32.totalorder %s5132, 31
        %s5134 = scalar_select %p5133, %s5132, 31
        %s5135 = smul.addr %s5134, 8
        %s5136 = scalar_lea.vmem %s8, %s5135
      $region64: #{gat_forward.3} parent=59 // pred_fallthru
        _
    $region60: #{gat_forward.3} parent=5 // pred_fallthru
      _
  $region6: #{gat_forward.3} parent=0 // loop_footer
    %s18 = sadd.s32 1, %s14
  $region7: #{gat_forward.3} parent=0 // loop_footer_branch
    %13 = sbr.rel target = $region3
  $region8: #{gat_forward.3} parent=0 // loop_exit
    _

</llo_original>
